<compile_context>
chip_gen: v5e
topology: v5e:2x2
jax: 0.10.0
libtpu: 0.0.40
codegen_flags: <defaults>
</compile_context>

<pallas_src>
import functools

import jax
import jax.numpy as jnp
from jax.experimental import pallas as pl
from jax.experimental.pallas import tpu as pltpu

INITRANGE = 0.04

# DARTS (2nd-order) recurrent genotype: (activation, predecessor state index)
GENOTYPE_RECURRENT = (
    ("sigmoid", 0), ("relu", 1), ("relu", 1), ("identity", 1),
    ("tanh", 2), ("sigmoid", 5), ("tanh", 3), ("relu", 5),
)
GENOTYPE_CONCAT = tuple(range(1, 9))
STEPS = len(GENOTYPE_RECURRENT)


def _act(name, x):
    if name == "tanh":
        return jnp.tanh(x)
    if name == "relu":
        return jnp.maximum(x, 0.0)
    if name == "sigmoid":
        return jax.nn.sigmoid(x)
    if name == "identity":
        return x
    raise NotImplementedError(name)


# ------------------------------ fused kernel --------------------------------

def _rnn_model_kernel(ids_ref, emb_ref, embT_ref, h0_ref,
                      w0x_ref, w0h_ref, ws0_ref, w123_ref, ws4_ref,
                      ws6_ref, w57_ref, b_ref,
                      logp_ref, hlast_ref,
                      *, T, B, ninp, nhid, ntoken):
    TB = T * B
    f32 = jnp.float32
    bf16 = jnp.bfloat16

    def node(s_prev, ch, name):
        # gate math stays f32 on the VPU/EUP
        c = jax.nn.sigmoid(ch[:, :nhid])
        hh = _act(name, ch[:, nhid:])
        return s_prev + c * (hh - s_prev)

    # ---- embedding lookup as one_hot(ids) @ E (exact gather on the MXU) ----
    ids = ids_ref[...]                                            # (TB, 1) i32
    vocab_iota = jax.lax.broadcasted_iota(jnp.int32, (TB, ntoken), 1)
    onehot = jnp.where(vocab_iota == ids, 1.0, 0.0).astype(bf16)  # (TB, ntoken)
    x_all = jnp.dot(onehot, emb_ref[...],
                    preferred_element_type=f32)                   # (TB, ninp)

    # ---- hoisted input projection: ONE (TB, ninp)@(ninp, 2*nhid) matmul ----
    # (x_all is exactly bf16-representable: it is rows of the bf16 table)
    xw_all = jnp.dot(x_all.astype(bf16), w0x_ref[...],
                     preferred_element_type=f32)                  # (TB, 2*nhid)

    # ---- DARTSCell recurrence, statically unrolled over T ------------------
    h = h0_ref[...]                                               # (B, nhid) f32
    outs = []
    for t in range(T):
        pre = (xw_all[t * B:(t + 1) * B, :]
               + jnp.dot(h.astype(bf16), w0h_ref[...],
                         preferred_element_type=f32))             # (B, 2*nhid)
        c0 = jax.nn.sigmoid(pre[:, :nhid])
        h0t = jnp.tanh(pre[:, nhid:])
        s0 = h + c0 * (h0t - h)

        # node 0: pred s0, sigmoid
        s1 = node(s0, jnp.dot(s0.astype(bf16), ws0_ref[...],
                              preferred_element_type=f32), "sigmoid")
        # nodes 1,2,3: all pred s1 -> one fused (B,nhid)@(nhid,3*2*nhid) matmul
        ch123 = jnp.dot(s1.astype(bf16), w123_ref[...],
                        preferred_element_type=f32)               # (B, 6*nhid)
        s2 = node(s1, ch123[:, 0 * 2 * nhid:1 * 2 * nhid], "relu")
        s3 = node(s1, ch123[:, 1 * 2 * nhid:2 * 2 * nhid], "relu")
        s4 = node(s1, ch123[:, 2 * 2 * nhid:3 * 2 * nhid], "identity")
        # node 4 (pred s2) and node 6 (pred s3) are independent of each other
        s5 = node(s2, jnp.dot(s2.astype(bf16), ws4_ref[...],
                              preferred_element_type=f32), "tanh")
        s7 = node(s3, jnp.dot(s3.astype(bf16), ws6_ref[...],
                              preferred_element_type=f32), "tanh")
        # nodes 5,7: both pred s5 -> one fused (B,nhid)@(nhid,2*2*nhid) matmul
        ch57 = jnp.dot(s5.astype(bf16), w57_ref[...],
                       preferred_element_type=f32)                # (B, 4*nhid)
        s6 = node(s5, ch57[:, :2 * nhid], "sigmoid")
        s8 = node(s5, ch57[:, 2 * nhid:], "relu")

        # mean over GENOTYPE_CONCAT = states[1..8]
        out = (s1 + s2 + s3 + s4 + s5 + s6 + s7 + s8) * (1.0 / 8.0)
        outs.append(out)
        h = out

    hlast_ref[...] = h

    # ---- tied-weight decoder (pre-transposed) + log_softmax ----------------
    hid_all = jnp.concatenate(outs, axis=0)                       # (TB, nhid)
    logits = jnp.dot(hid_all.astype(bf16), embT_ref[...],
                     preferred_element_type=f32) + b_ref[...]     # (TB, ntoken)
    m = jnp.max(logits, axis=-1, keepdims=True)
    lse = m + jnp.log(jnp.sum(jnp.exp(logits - m), axis=-1, keepdims=True))
    logp_ref[...] = logits - lse


# ------------------------------- wrapper -------------------------------------

def _vmem():
    return pl.BlockSpec(memory_space=pltpu.MemorySpace.VMEM)


def rnn_model_forward(input_ids, hidden, params):
    """Eval-mode RNNModel.forward(input, hidden) -> (log_prob, new_hidden)."""
    T, B = input_ids.shape
    emb = params["emb"]                     # (ntoken, ninp), tied decoder weight
    w0 = params["w0"]                       # (ninp+nhid, 2*nhid)
    ws = params["ws"]                       # (STEPS, nhid, 2*nhid)
    ntoken, ninp = emb.shape
    nhid = ninp
    bf16 = jnp.bfloat16

    # MXU operands in bf16 (accumulation stays f32 inside the kernel).
    emb_b = emb.astype(bf16)                                  # encoder table
    embT_b = emb.T.astype(bf16)                               # decoder weight, pre-transposed
    w0x = w0[:ninp, :].astype(bf16)                           # x-projection
    w0h = w0[ninp:ninp + nhid, :].astype(bf16)                # h-projection
    ws0 = ws[0].astype(bf16)
    w123 = jnp.concatenate([ws[1], ws[2], ws[3]], axis=1).astype(bf16)  # (nhid, 6*nhid)
    ws4 = ws[4].astype(bf16)
    ws6 = ws[6].astype(bf16)
    w57 = jnp.concatenate([ws[5], ws[7]], axis=1).astype(bf16)          # (nhid, 4*nhid)
    dec_b = params["dec_b"].reshape(1, ntoken).astype(jnp.float32)

    # NOTE: out-of-range token ids would yield an all-zero embedding row via
    # the one-hot path (PyTorch would raise); callers must pass valid ids.
    ids = input_ids.reshape(T * B, 1).astype(jnp.int32)
    h0 = hidden[0].reshape(B, nhid).astype(jnp.float32)

    kern = functools.partial(_rnn_model_kernel, T=T, B=B,
                             ninp=ninp, nhid=nhid, ntoken=ntoken)
    logp_flat, h_last = pl.pallas_call(
        kern,
        out_shape=(jax.ShapeDtypeStruct((T * B, ntoken), jnp.float32),
                   jax.ShapeDtypeStruct((B, nhid), jnp.float32)),
        in_specs=[_vmem()] * 12,
        out_specs=(_vmem(), _vmem()),
    )(ids, emb_b, embT_b, h0, w0x, w0h, ws0, w123, ws4, ws6, w57, dec_b)

    model_output = logp_flat.reshape(T, B, ntoken)
    new_hidden = [h_last.reshape(1, B, nhid)]
    return model_output, new_hidden


# ----------------------- params / pure-JAX reference -------------------------

def init_params(key, ntoken, ninp, nhid):
    assert ninp == nhid
    k_emb, k_w0, k_ws = jax.random.split(key, 3)

    def u(k, shape):
        return jax.random.uniform(k, shape, jnp.float32, -INITRANGE, INITRANGE)

    return {
        "emb": u(k_emb, (ntoken, ninp)),                  # encoder == decoder.weight
        "w0": u(k_w0, (ninp + nhid, 2 * nhid)),
        "ws": u(k_ws, (STEPS, nhid, 2 * nhid)),
        "dec_b": jnp.zeros((ntoken,), jnp.float32),       # decoder.bias = 0
    }


def _ref_forward(input_ids, hidden, params):
    emb_tbl, w0, ws, b = params["emb"], params["w0"], params["ws"], params["dec_b"]
    ntoken, ninp = emb_tbl.shape
    nhid = ninp
    T, B = input_ids.shape
    hp = jax.lax.Precision.HIGHEST

    x_all = emb_tbl[input_ids]                            # (T, B, ninp)
    h = hidden[0][0]
    hs = []
    for t in range(T):
        xh = jnp.concatenate([x_all[t], h], axis=-1)
        ch0 = jnp.dot(xh, w0, precision=hp)
        c0 = jax.nn.sigmoid(ch0[:, :nhid])
        h0t = jnp.tanh(ch0[:, nhid:])
        s0 = h + c0 * (h0t - h)
        states = [s0]
        for i, (name, pred) in enumerate(GENOTYPE_RECURRENT):
            sp = states[pred]
            ch = jnp.dot(sp, ws[i], precision=hp)
            c = jax.nn.sigmoid(ch[:, :nhid])
            hh = _act(name, ch[:, nhid:])
            states.append(sp + c * (hh - sp))
        h = jnp.mean(jnp.stack([states[i] for i in GENOTYPE_CONCAT], -1), -1)
        hs.append(h)
    raw = jnp.stack(hs)                                   # (T, B, nhid)
    logits = jnp.dot(raw.reshape(T * B, nhid), emb_tbl.T, precision=hp) + b
    logp = jax.nn.log_softmax(logits, axis=-1)
    return logp.reshape(T, B, ntoken), [h[None]]


# --------------------------------- demo --------------------------------------

if __name__ == "__main__":
    key = jax.random.PRNGKey(0)
    k_ids, k_p = jax.random.split(key)

    # small, lane-dense shapes consistent with RNNModel(ntoken, ninp, nhid, nhidlast)
    T, B = 8, 2                     # seq len, batch (B a multiple of 8 would fill sublanes)
    ntoken, ninp = 256, 128         # ninp == nhid == nhidlast
    nhid = ninp

    input_ids = jax.random.randint(k_ids, (T, B), 0, ntoken, jnp.int32)
    hidden0 = [jnp.zeros((1, B, nhid), jnp.float32)]      # init_hidden(bsz)
    params = init_params(k_p, ntoken, ninp, nhid)

    log_prob, new_hidden = rnn_model_forward(input_ids, hidden0, params)
    jax.block_until_ready(log_prob)

    assert log_prob.shape == (T, B, ntoken), log_prob.shape
    assert new_hidden[0].shape == (1, B, nhid), new_hidden[0].shape
    assert bool(jnp.all(jnp.isfinite(log_prob)))
    # log_softmax rows must normalize to 1
    assert bool(jnp.allclose(jax.scipy.special.logsumexp(log_prob, axis=-1),
                             0.0, atol=1e-4))

    # pure-JAX reference check
    ref_lp, ref_hid = _ref_forward(input_ids, hidden0, params)
    assert bool(jnp.allclose(log_prob, ref_lp, atol=1e-2, rtol=1e-2))
    assert bool(jnp.allclose(new_hidden[0], ref_hid[0], atol=1e-2, rtol=1e-2))

    print("KERNEL_OK")
</pallas_src>

<mosaic_0001>
module attributes {stable_mosaic.version = 11 : i64} {
  func.func @_rnn_model_kernel(%arg0: memref<16x1xi32, #tpu.memory_space<vmem>>, %arg1: memref<256x128xbf16, #tpu.memory_space<vmem>>, %arg2: memref<128x256xbf16, #tpu.memory_space<vmem>>, %arg3: memref<2x128xf32, #tpu.memory_space<vmem>>, %arg4: memref<128x256xbf16, #tpu.memory_space<vmem>>, %arg5: memref<128x256xbf16, #tpu.memory_space<vmem>>, %arg6: memref<128x256xbf16, #tpu.memory_space<vmem>>, %arg7: memref<128x768xbf16, #tpu.memory_space<vmem>>, %arg8: memref<128x256xbf16, #tpu.memory_space<vmem>>, %arg9: memref<128x256xbf16, #tpu.memory_space<vmem>>, %arg10: memref<128x512xbf16, #tpu.memory_space<vmem>>, %arg11: memref<1x256xf32, #tpu.memory_space<vmem>>, %arg12: memref<16x256xf32, #tpu.memory_space<vmem>>, %arg13: memref<2x128xf32, #tpu.memory_space<vmem>>) attributes {dimension_semantics = [], scalar_prefetch = 0 : i64, scratch_operands = 0 : i64, tpu.core_type = #tpu.core_type<tc>} {
    %c0 = arith.constant 0 : index
    %c0_0 = arith.constant 0 : index
    %0 = vector.load %arg0[%c0, %c0_0] : memref<16x1xi32, #tpu.memory_space<vmem>>, vector<16x1xi32>
    %1 = tpu.iota {dimensions = array<i32: 1>} : vector<16x256xi32>
    %2 = vector.broadcast %0 : vector<16x1xi32> to vector<16x256xi32>
    %3 = arith.cmpi eq, %1, %2 : vector<16x256xi32>
    %cst = arith.constant 1.000000e+00 : f32
    %cst_1 = arith.constant 0.000000e+00 : f32
    %4 = vector.broadcast %cst : f32 to vector<16x256xf32>
    %5 = vector.broadcast %cst_1 : f32 to vector<16x256xf32>
    %6 = arith.select %3, %4, %5 : vector<16x256xi1>, vector<16x256xf32>
    %7 = arith.truncf %6 : vector<16x256xf32> to vector<16x256xbf16>
    %c0_2 = arith.constant 0 : index
    %c0_3 = arith.constant 0 : index
    %8 = vector.load %arg1[%c0_2, %c0_3] : memref<256x128xbf16, #tpu.memory_space<vmem>>, vector<256x128xbf16>
    %cst_4 = arith.constant dense<0.000000e+00> : vector<16x128xf32>
    %9 = tpu.matmul %7, %8, %cst_4 {dimension_numbers = #tpu.dot_dimension_numbers<[1], [0], [0], [1], [0, 0, 1, 1], [], []>} : vector<16x256xbf16>, vector<256x128xbf16>, vector<16x128xf32> -> vector<16x128xf32>
    %10 = arith.truncf %9 : vector<16x128xf32> to vector<16x128xbf16>
    %c0_5 = arith.constant 0 : index
    %c0_6 = arith.constant 0 : index
    %11 = vector.load %arg4[%c0_5, %c0_6] : memref<128x256xbf16, #tpu.memory_space<vmem>>, vector<128x256xbf16>
    %cst_7 = arith.constant dense<0.000000e+00> : vector<16x256xf32>
    %12 = tpu.matmul %10, %11, %cst_7 {dimension_numbers = #tpu.dot_dimension_numbers<[1], [0], [0], [1], [0, 0, 1, 1], [], []>} : vector<16x128xbf16>, vector<128x256xbf16>, vector<16x256xf32> -> vector<16x256xf32>
    %c0_8 = arith.constant 0 : index
    %c0_9 = arith.constant 0 : index
    %13 = vector.load %arg3[%c0_8, %c0_9] : memref<2x128xf32, #tpu.memory_space<vmem>>, vector<2x128xf32>
    %14 = vector.extract_strided_slice %12 {offsets = [0, 0], sizes = [2, 256], strides = [1, 1]} : vector<16x256xf32> to vector<2x256xf32>
    %15 = arith.truncf %13 : vector<2x128xf32> to vector<2x128xbf16>
    %c0_10 = arith.constant 0 : index
    %c0_11 = arith.constant 0 : index
    %16 = vector.load %arg5[%c0_10, %c0_11] : memref<128x256xbf16, #tpu.memory_space<vmem>>, vector<128x256xbf16>
    %cst_12 = arith.constant dense<0.000000e+00> : vector<2x256xf32>
    %17 = tpu.matmul %15, %16, %cst_12 {dimension_numbers = #tpu.dot_dimension_numbers<[1], [0], [0], [1], [0, 0, 1, 1], [], []>} : vector<2x128xbf16>, vector<128x256xbf16>, vector<2x256xf32> -> vector<2x256xf32>
    %18 = arith.addf %14, %17 : vector<2x256xf32>
    %19 = vector.extract_strided_slice %18 {offsets = [0, 0], sizes = [2, 128], strides = [1, 1]} : vector<2x256xf32> to vector<2x128xf32>
    %20 = arith.negf %19 : vector<2x128xf32>
    %21 = math.exp %20 : vector<2x128xf32>
    %cst_13 = arith.constant 1.000000e+00 : f32
    %22 = vector.broadcast %cst_13 : f32 to vector<2x128xf32>
    %23 = arith.addf %22, %21 : vector<2x128xf32>
    %24 = arith.divf %22, %23 : vector<2x128xf32>
    %25 = vector.extract_strided_slice %18 {offsets = [0, 128], sizes = [2, 128], strides = [1, 1]} : vector<2x256xf32> to vector<2x128xf32>
    %26 = math.tanh %25 : vector<2x128xf32>
    %27 = arith.subf %26, %13 : vector<2x128xf32>
    %28 = arith.mulf %24, %27 : vector<2x128xf32>
    %29 = arith.addf %13, %28 : vector<2x128xf32>
    %30 = arith.truncf %29 : vector<2x128xf32> to vector<2x128xbf16>
    %c0_14 = arith.constant 0 : index
    %c0_15 = arith.constant 0 : index
    %31 = vector.load %arg6[%c0_14, %c0_15] : memref<128x256xbf16, #tpu.memory_space<vmem>>, vector<128x256xbf16>
    %cst_16 = arith.constant dense<0.000000e+00> : vector<2x256xf32>
    %32 = tpu.matmul %30, %31, %cst_16 {dimension_numbers = #tpu.dot_dimension_numbers<[1], [0], [0], [1], [0, 0, 1, 1], [], []>} : vector<2x128xbf16>, vector<128x256xbf16>, vector<2x256xf32> -> vector<2x256xf32>
    %33 = vector.extract_strided_slice %32 {offsets = [0, 0], sizes = [2, 128], strides = [1, 1]} : vector<2x256xf32> to vector<2x128xf32>
    %34 = arith.negf %33 : vector<2x128xf32>
    %35 = math.exp %34 : vector<2x128xf32>
    %cst_17 = arith.constant 1.000000e+00 : f32
    %36 = vector.broadcast %cst_17 : f32 to vector<2x128xf32>
    %37 = arith.addf %36, %35 : vector<2x128xf32>
    %38 = arith.divf %36, %37 : vector<2x128xf32>
    %39 = vector.extract_strided_slice %32 {offsets = [0, 128], sizes = [2, 128], strides = [1, 1]} : vector<2x256xf32> to vector<2x128xf32>
    %40 = arith.negf %39 : vector<2x128xf32>
    %41 = math.exp %40 : vector<2x128xf32>
    %cst_18 = arith.constant 1.000000e+00 : f32
    %42 = vector.broadcast %cst_18 : f32 to vector<2x128xf32>
    %43 = arith.addf %42, %41 : vector<2x128xf32>
    %44 = arith.divf %42, %43 : vector<2x128xf32>
    %45 = arith.subf %44, %29 : vector<2x128xf32>
    %46 = arith.mulf %38, %45 : vector<2x128xf32>
    %47 = arith.addf %29, %46 : vector<2x128xf32>
    %48 = arith.truncf %47 : vector<2x128xf32> to vector<2x128xbf16>
    %c0_19 = arith.constant 0 : index
    %c0_20 = arith.constant 0 : index
    %49 = vector.load %arg7[%c0_19, %c0_20] : memref<128x768xbf16, #tpu.memory_space<vmem>>, vector<128x768xbf16>
    %cst_21 = arith.constant dense<0.000000e+00> : vector<2x768xf32>
    %50 = tpu.matmul %48, %49, %cst_21 {dimension_numbers = #tpu.dot_dimension_numbers<[1], [0], [0], [1], [0, 0, 1, 1], [], []>} : vector<2x128xbf16>, vector<128x768xbf16>, vector<2x768xf32> -> vector<2x768xf32>
    %51 = vector.extract_strided_slice %50 {offsets = [0, 0], sizes = [2, 256], strides = [1, 1]} : vector<2x768xf32> to vector<2x256xf32>
    %52 = vector.extract_strided_slice %51 {offsets = [0, 0], sizes = [2, 128], strides = [1, 1]} : vector<2x256xf32> to vector<2x128xf32>
    %53 = arith.negf %52 : vector<2x128xf32>
    %54 = math.exp %53 : vector<2x128xf32>
    %cst_22 = arith.constant 1.000000e+00 : f32
    %55 = vector.broadcast %cst_22 : f32 to vector<2x128xf32>
    %56 = arith.addf %55, %54 : vector<2x128xf32>
    %57 = arith.divf %55, %56 : vector<2x128xf32>
    %58 = vector.extract_strided_slice %51 {offsets = [0, 128], sizes = [2, 128], strides = [1, 1]} : vector<2x256xf32> to vector<2x128xf32>
    %cst_23 = arith.constant 0.000000e+00 : f32
    %59 = vector.broadcast %cst_23 : f32 to vector<2x128xf32>
    %60 = arith.maximumf %58, %59 : vector<2x128xf32>
    %61 = arith.subf %60, %47 : vector<2x128xf32>
    %62 = arith.mulf %57, %61 : vector<2x128xf32>
    %63 = arith.addf %47, %62 : vector<2x128xf32>
    %64 = vector.extract_strided_slice %50 {offsets = [0, 256], sizes = [2, 256], strides = [1, 1]} : vector<2x768xf32> to vector<2x256xf32>
    %65 = vector.extract_strided_slice %64 {offsets = [0, 0], sizes = [2, 128], strides = [1, 1]} : vector<2x256xf32> to vector<2x128xf32>
    %66 = arith.negf %65 : vector<2x128xf32>
    %67 = math.exp %66 : vector<2x128xf32>
    %cst_24 = arith.constant 1.000000e+00 : f32
    %68 = vector.broadcast %cst_24 : f32 to vector<2x128xf32>
    %69 = arith.addf %68, %67 : vector<2x128xf32>
    %70 = arith.divf %68, %69 : vector<2x128xf32>
    %71 = vector.extract_strided_slice %64 {offsets = [0, 128], sizes = [2, 128], strides = [1, 1]} : vector<2x256xf32> to vector<2x128xf32>
    %cst_25 = arith.constant 0.000000e+00 : f32
    %72 = vector.broadcast %cst_25 : f32 to vector<2x128xf32>
    %73 = arith.maximumf %71, %72 : vector<2x128xf32>
    %74 = arith.subf %73, %47 : vector<2x128xf32>
    %75 = arith.mulf %70, %74 : vector<2x128xf32>
    %76 = arith.addf %47, %75 : vector<2x128xf32>
    %77 = vector.extract_strided_slice %50 {offsets = [0, 512], sizes = [2, 256], strides = [1, 1]} : vector<2x768xf32> to vector<2x256xf32>
    %78 = vector.extract_strided_slice %77 {offsets = [0, 0], sizes = [2, 128], strides = [1, 1]} : vector<2x256xf32> to vector<2x128xf32>
    %79 = arith.negf %78 : vector<2x128xf32>
    %80 = math.exp %79 : vector<2x128xf32>
    %cst_26 = arith.constant 1.000000e+00 : f32
    %81 = vector.broadcast %cst_26 : f32 to vector<2x128xf32>
    %82 = arith.addf %81, %80 : vector<2x128xf32>
    %83 = arith.divf %81, %82 : vector<2x128xf32>
    %84 = vector.extract_strided_slice %77 {offsets = [0, 128], sizes = [2, 128], strides = [1, 1]} : vector<2x256xf32> to vector<2x128xf32>
    %85 = arith.subf %84, %47 : vector<2x128xf32>
    %86 = arith.mulf %83, %85 : vector<2x128xf32>
    %87 = arith.addf %47, %86 : vector<2x128xf32>
    %88 = arith.truncf %63 : vector<2x128xf32> to vector<2x128xbf16>
    %c0_27 = arith.constant 0 : index
    %c0_28 = arith.constant 0 : index
    %89 = vector.load %arg8[%c0_27, %c0_28] : memref<128x256xbf16, #tpu.memory_space<vmem>>, vector<128x256xbf16>
    %cst_29 = arith.constant dense<0.000000e+00> : vector<2x256xf32>
    %90 = tpu.matmul %88, %89, %cst_29 {dimension_numbers = #tpu.dot_dimension_numbers<[1], [0], [0], [1], [0, 0, 1, 1], [], []>} : vector<2x128xbf16>, vector<128x256xbf16>, vector<2x256xf32> -> vector<2x256xf32>
    %91 = vector.extract_strided_slice %90 {offsets = [0, 0], sizes = [2, 128], strides = [1, 1]} : vector<2x256xf32> to vector<2x128xf32>
    %92 = arith.negf %91 : vector<2x128xf32>
    %93 = math.exp %92 : vector<2x128xf32>
    %cst_30 = arith.constant 1.000000e+00 : f32
    %94 = vector.broadcast %cst_30 : f32 to vector<2x128xf32>
    %95 = arith.addf %94, %93 : vector<2x128xf32>
    %96 = arith.divf %94, %95 : vector<2x128xf32>
    %97 = vector.extract_strided_slice %90 {offsets = [0, 128], sizes = [2, 128], strides = [1, 1]} : vector<2x256xf32> to vector<2x128xf32>
    %98 = math.tanh %97 : vector<2x128xf32>
    %99 = arith.subf %98, %63 : vector<2x128xf32>
    %100 = arith.mulf %96, %99 : vector<2x128xf32>
    %101 = arith.addf %63, %100 : vector<2x128xf32>
    %102 = arith.truncf %76 : vector<2x128xf32> to vector<2x128xbf16>
    %c0_31 = arith.constant 0 : index
    %c0_32 = arith.constant 0 : index
    %103 = vector.load %arg9[%c0_31, %c0_32] : memref<128x256xbf16, #tpu.memory_space<vmem>>, vector<128x256xbf16>
    %cst_33 = arith.constant dense<0.000000e+00> : vector<2x256xf32>
    %104 = tpu.matmul %102, %103, %cst_33 {dimension_numbers = #tpu.dot_dimension_numbers<[1], [0], [0], [1], [0, 0, 1, 1], [], []>} : vector<2x128xbf16>, vector<128x256xbf16>, vector<2x256xf32> -> vector<2x256xf32>
    %105 = vector.extract_strided_slice %104 {offsets = [0, 0], sizes = [2, 128], strides = [1, 1]} : vector<2x256xf32> to vector<2x128xf32>
    %106 = arith.negf %105 : vector<2x128xf32>
    %107 = math.exp %106 : vector<2x128xf32>
    %cst_34 = arith.constant 1.000000e+00 : f32
    %108 = vector.broadcast %cst_34 : f32 to vector<2x128xf32>
    %109 = arith.addf %108, %107 : vector<2x128xf32>
    %110 = arith.divf %108, %109 : vector<2x128xf32>
    %111 = vector.extract_strided_slice %104 {offsets = [0, 128], sizes = [2, 128], strides = [1, 1]} : vector<2x256xf32> to vector<2x128xf32>
    %112 = math.tanh %111 : vector<2x128xf32>
    %113 = arith.subf %112, %76 : vector<2x128xf32>
    %114 = arith.mulf %110, %113 : vector<2x128xf32>
    %115 = arith.addf %76, %114 : vector<2x128xf32>
    %116 = arith.truncf %101 : vector<2x128xf32> to vector<2x128xbf16>
    %c0_35 = arith.constant 0 : index
    %c0_36 = arith.constant 0 : index
    %117 = vector.load %arg10[%c0_35, %c0_36] : memref<128x512xbf16, #tpu.memory_space<vmem>>, vector<128x512xbf16>
    %cst_37 = arith.constant dense<0.000000e+00> : vector<2x512xf32>
    %118 = tpu.matmul %116, %117, %cst_37 {dimension_numbers = #tpu.dot_dimension_numbers<[1], [0], [0], [1], [0, 0, 1, 1], [], []>} : vector<2x128xbf16>, vector<128x512xbf16>, vector<2x512xf32> -> vector<2x512xf32>
    %119 = vector.extract_strided_slice %118 {offsets = [0, 0], sizes = [2, 256], strides = [1, 1]} : vector<2x512xf32> to vector<2x256xf32>
    %120 = vector.extract_strided_slice %119 {offsets = [0, 0], sizes = [2, 128], strides = [1, 1]} : vector<2x256xf32> to vector<2x128xf32>
    %121 = arith.negf %120 : vector<2x128xf32>
    %122 = math.exp %121 : vector<2x128xf32>
    %cst_38 = arith.constant 1.000000e+00 : f32
    %123 = vector.broadcast %cst_38 : f32 to vector<2x128xf32>
    %124 = arith.addf %123, %122 : vector<2x128xf32>
    %125 = arith.divf %123, %124 : vector<2x128xf32>
    %126 = vector.extract_strided_slice %119 {offsets = [0, 128], sizes = [2, 128], strides = [1, 1]} : vector<2x256xf32> to vector<2x128xf32>
    %127 = arith.negf %126 : vector<2x128xf32>
    %128 = math.exp %127 : vector<2x128xf32>
    %cst_39 = arith.constant 1.000000e+00 : f32
    %129 = vector.broadcast %cst_39 : f32 to vector<2x128xf32>
    %130 = arith.addf %129, %128 : vector<2x128xf32>
    %131 = arith.divf %129, %130 : vector<2x128xf32>
    %132 = arith.subf %131, %101 : vector<2x128xf32>
    %133 = arith.mulf %125, %132 : vector<2x128xf32>
    %134 = arith.addf %101, %133 : vector<2x128xf32>
    %135 = vector.extract_strided_slice %118 {offsets = [0, 256], sizes = [2, 256], strides = [1, 1]} : vector<2x512xf32> to vector<2x256xf32>
    %136 = vector.extract_strided_slice %135 {offsets = [0, 0], sizes = [2, 128], strides = [1, 1]} : vector<2x256xf32> to vector<2x128xf32>
    %137 = arith.negf %136 : vector<2x128xf32>
    %138 = math.exp %137 : vector<2x128xf32>
    %cst_40 = arith.constant 1.000000e+00 : f32
    %139 = vector.broadcast %cst_40 : f32 to vector<2x128xf32>
    %140 = arith.addf %139, %138 : vector<2x128xf32>
    %141 = arith.divf %139, %140 : vector<2x128xf32>
    %142 = vector.extract_strided_slice %135 {offsets = [0, 128], sizes = [2, 128], strides = [1, 1]} : vector<2x256xf32> to vector<2x128xf32>
    %cst_41 = arith.constant 0.000000e+00 : f32
    %143 = vector.broadcast %cst_41 : f32 to vector<2x128xf32>
    %144 = arith.maximumf %142, %143 : vector<2x128xf32>
    %145 = arith.subf %144, %101 : vector<2x128xf32>
    %146 = arith.mulf %141, %145 : vector<2x128xf32>
    %147 = arith.addf %101, %146 : vector<2x128xf32>
    %148 = arith.addf %47, %63 : vector<2x128xf32>
    %149 = arith.addf %148, %76 : vector<2x128xf32>
    %150 = arith.addf %149, %87 : vector<2x128xf32>
    %151 = arith.addf %150, %101 : vector<2x128xf32>
    %152 = arith.addf %151, %134 : vector<2x128xf32>
    %153 = arith.addf %152, %115 : vector<2x128xf32>
    %154 = arith.addf %153, %147 : vector<2x128xf32>
    %cst_42 = arith.constant 1.250000e-01 : f32
    %155 = vector.broadcast %cst_42 : f32 to vector<2x128xf32>
    %156 = arith.mulf %154, %155 : vector<2x128xf32>
    %157 = vector.extract_strided_slice %12 {offsets = [2, 0], sizes = [2, 256], strides = [1, 1]} : vector<16x256xf32> to vector<2x256xf32>
    %158 = arith.truncf %156 : vector<2x128xf32> to vector<2x128xbf16>
    %c0_43 = arith.constant 0 : index
    %c0_44 = arith.constant 0 : index
    %159 = vector.load %arg5[%c0_43, %c0_44] : memref<128x256xbf16, #tpu.memory_space<vmem>>, vector<128x256xbf16>
    %cst_45 = arith.constant dense<0.000000e+00> : vector<2x256xf32>
    %160 = tpu.matmul %158, %159, %cst_45 {dimension_numbers = #tpu.dot_dimension_numbers<[1], [0], [0], [1], [0, 0, 1, 1], [], []>} : vector<2x128xbf16>, vector<128x256xbf16>, vector<2x256xf32> -> vector<2x256xf32>
    %161 = arith.addf %157, %160 : vector<2x256xf32>
    %162 = vector.extract_strided_slice %161 {offsets = [0, 0], sizes = [2, 128], strides = [1, 1]} : vector<2x256xf32> to vector<2x128xf32>
    %163 = arith.negf %162 : vector<2x128xf32>
    %164 = math.exp %163 : vector<2x128xf32>
    %cst_46 = arith.constant 1.000000e+00 : f32
    %165 = vector.broadcast %cst_46 : f32 to vector<2x128xf32>
    %166 = arith.addf %165, %164 : vector<2x128xf32>
    %167 = arith.divf %165, %166 : vector<2x128xf32>
    %168 = vector.extract_strided_slice %161 {offsets = [0, 128], sizes = [2, 128], strides = [1, 1]} : vector<2x256xf32> to vector<2x128xf32>
    %169 = math.tanh %168 : vector<2x128xf32>
    %170 = arith.subf %169, %156 : vector<2x128xf32>
    %171 = arith.mulf %167, %170 : vector<2x128xf32>
    %172 = arith.addf %156, %171 : vector<2x128xf32>
    %173 = arith.truncf %172 : vector<2x128xf32> to vector<2x128xbf16>
    %c0_47 = arith.constant 0 : index
    %c0_48 = arith.constant 0 : index
    %174 = vector.load %arg6[%c0_47, %c0_48] : memref<128x256xbf16, #tpu.memory_space<vmem>>, vector<128x256xbf16>
    %cst_49 = arith.constant dense<0.000000e+00> : vector<2x256xf32>
    %175 = tpu.matmul %173, %174, %cst_49 {dimension_numbers = #tpu.dot_dimension_numbers<[1], [0], [0], [1], [0, 0, 1, 1], [], []>} : vector<2x128xbf16>, vector<128x256xbf16>, vector<2x256xf32> -> vector<2x256xf32>
    %176 = vector.extract_strided_slice %175 {offsets = [0, 0], sizes = [2, 128], strides = [1, 1]} : vector<2x256xf32> to vector<2x128xf32>
    %177 = arith.negf %176 : vector<2x128xf32>
    %178 = math.exp %177 : vector<2x128xf32>
    %cst_50 = arith.constant 1.000000e+00 : f32
    %179 = vector.broadcast %cst_50 : f32 to vector<2x128xf32>
    %180 = arith.addf %179, %178 : vector<2x128xf32>
    %181 = arith.divf %179, %180 : vector<2x128xf32>
    %182 = vector.extract_strided_slice %175 {offsets = [0, 128], sizes = [2, 128], strides = [1, 1]} : vector<2x256xf32> to vector<2x128xf32>
    %183 = arith.negf %182 : vector<2x128xf32>
    %184 = math.exp %183 : vector<2x128xf32>
    %cst_51 = arith.constant 1.000000e+00 : f32
    %185 = vector.broadcast %cst_51 : f32 to vector<2x128xf32>
    %186 = arith.addf %185, %184 : vector<2x128xf32>
    %187 = arith.divf %185, %186 : vector<2x128xf32>
    %188 = arith.subf %187, %172 : vector<2x128xf32>
    %189 = arith.mulf %181, %188 : vector<2x128xf32>
    %190 = arith.addf %172, %189 : vector<2x128xf32>
    %191 = arith.truncf %190 : vector<2x128xf32> to vector<2x128xbf16>
    %c0_52 = arith.constant 0 : index
    %c0_53 = arith.constant 0 : index
    %192 = vector.load %arg7[%c0_52, %c0_53] : memref<128x768xbf16, #tpu.memory_space<vmem>>, vector<128x768xbf16>
    %cst_54 = arith.constant dense<0.000000e+00> : vector<2x768xf32>
    %193 = tpu.matmul %191, %192, %cst_54 {dimension_numbers = #tpu.dot_dimension_numbers<[1], [0], [0], [1], [0, 0, 1, 1], [], []>} : vector<2x128xbf16>, vector<128x768xbf16>, vector<2x768xf32> -> vector<2x768xf32>
    %194 = vector.extract_strided_slice %193 {offsets = [0, 0], sizes = [2, 256], strides = [1, 1]} : vector<2x768xf32> to vector<2x256xf32>
    %195 = vector.extract_strided_slice %194 {offsets = [0, 0], sizes = [2, 128], strides = [1, 1]} : vector<2x256xf32> to vector<2x128xf32>
    %196 = arith.negf %195 : vector<2x128xf32>
    %197 = math.exp %196 : vector<2x128xf32>
    %cst_55 = arith.constant 1.000000e+00 : f32
    %198 = vector.broadcast %cst_55 : f32 to vector<2x128xf32>
    %199 = arith.addf %198, %197 : vector<2x128xf32>
    %200 = arith.divf %198, %199 : vector<2x128xf32>
    %201 = vector.extract_strided_slice %194 {offsets = [0, 128], sizes = [2, 128], strides = [1, 1]} : vector<2x256xf32> to vector<2x128xf32>
    %cst_56 = arith.constant 0.000000e+00 : f32
    %202 = vector.broadcast %cst_56 : f32 to vector<2x128xf32>
    %203 = arith.maximumf %201, %202 : vector<2x128xf32>
    %204 = arith.subf %203, %190 : vector<2x128xf32>
    %205 = arith.mulf %200, %204 : vector<2x128xf32>
    %206 = arith.addf %190, %205 : vector<2x128xf32>
    %207 = vector.extract_strided_slice %193 {offsets = [0, 256], sizes = [2, 256], strides = [1, 1]} : vector<2x768xf32> to vector<2x256xf32>
    %208 = vector.extract_strided_slice %207 {offsets = [0, 0], sizes = [2, 128], strides = [1, 1]} : vector<2x256xf32> to vector<2x128xf32>
    %209 = arith.negf %208 : vector<2x128xf32>
    %210 = math.exp %209 : vector<2x128xf32>
    %cst_57 = arith.constant 1.000000e+00 : f32
    %211 = vector.broadcast %cst_57 : f32 to vector<2x128xf32>
    %212 = arith.addf %211, %210 : vector<2x128xf32>
    %213 = arith.divf %211, %212 : vector<2x128xf32>
    %214 = vector.extract_strided_slice %207 {offsets = [0, 128], sizes = [2, 128], strides = [1, 1]} : vector<2x256xf32> to vector<2x128xf32>
    %cst_58 = arith.constant 0.000000e+00 : f32
    %215 = vector.broadcast %cst_58 : f32 to vector<2x128xf32>
    %216 = arith.maximumf %214, %215 : vector<2x128xf32>
    %217 = arith.subf %216, %190 : vector<2x128xf32>
    %218 = arith.mulf %213, %217 : vector<2x128xf32>
    %219 = arith.addf %190, %218 : vector<2x128xf32>
    %220 = vector.extract_strided_slice %193 {offsets = [0, 512], sizes = [2, 256], strides = [1, 1]} : vector<2x768xf32> to vector<2x256xf32>
    %221 = vector.extract_strided_slice %220 {offsets = [0, 0], sizes = [2, 128], strides = [1, 1]} : vector<2x256xf32> to vector<2x128xf32>
    %222 = arith.negf %221 : vector<2x128xf32>
    %223 = math.exp %222 : vector<2x128xf32>
    %cst_59 = arith.constant 1.000000e+00 : f32
    %224 = vector.broadcast %cst_59 : f32 to vector<2x128xf32>
    %225 = arith.addf %224, %223 : vector<2x128xf32>
    %226 = arith.divf %224, %225 : vector<2x128xf32>
    %227 = vector.extract_strided_slice %220 {offsets = [0, 128], sizes = [2, 128], strides = [1, 1]} : vector<2x256xf32> to vector<2x128xf32>
    %228 = arith.subf %227, %190 : vector<2x128xf32>
    %229 = arith.mulf %226, %228 : vector<2x128xf32>
    %230 = arith.addf %190, %229 : vector<2x128xf32>
    %231 = arith.truncf %206 : vector<2x128xf32> to vector<2x128xbf16>
    %c0_60 = arith.constant 0 : index
    %c0_61 = arith.constant 0 : index
    %232 = vector.load %arg8[%c0_60, %c0_61] : memref<128x256xbf16, #tpu.memory_space<vmem>>, vector<128x256xbf16>
    %cst_62 = arith.constant dense<0.000000e+00> : vector<2x256xf32>
    %233 = tpu.matmul %231, %232, %cst_62 {dimension_numbers = #tpu.dot_dimension_numbers<[1], [0], [0], [1], [0, 0, 1, 1], [], []>} : vector<2x128xbf16>, vector<128x256xbf16>, vector<2x256xf32> -> vector<2x256xf32>
    %234 = vector.extract_strided_slice %233 {offsets = [0, 0], sizes = [2, 128], strides = [1, 1]} : vector<2x256xf32> to vector<2x128xf32>
    %235 = arith.negf %234 : vector<2x128xf32>
    %236 = math.exp %235 : vector<2x128xf32>
    %cst_63 = arith.constant 1.000000e+00 : f32
    %237 = vector.broadcast %cst_63 : f32 to vector<2x128xf32>
    %238 = arith.addf %237, %236 : vector<2x128xf32>
    %239 = arith.divf %237, %238 : vector<2x128xf32>
    %240 = vector.extract_strided_slice %233 {offsets = [0, 128], sizes = [2, 128], strides = [1, 1]} : vector<2x256xf32> to vector<2x128xf32>
    %241 = math.tanh %240 : vector<2x128xf32>
    %242 = arith.subf %241, %206 : vector<2x128xf32>
    %243 = arith.mulf %239, %242 : vector<2x128xf32>
    %244 = arith.addf %206, %243 : vector<2x128xf32>
    %245 = arith.truncf %219 : vector<2x128xf32> to vector<2x128xbf16>
    %c0_64 = arith.constant 0 : index
    %c0_65 = arith.constant 0 : index
    %246 = vector.load %arg9[%c0_64, %c0_65] : memref<128x256xbf16, #tpu.memory_space<vmem>>, vector<128x256xbf16>
    %cst_66 = arith.constant dense<0.000000e+00> : vector<2x256xf32>
    %247 = tpu.matmul %245, %246, %cst_66 {dimension_numbers = #tpu.dot_dimension_numbers<[1], [0], [0], [1], [0, 0, 1, 1], [], []>} : vector<2x128xbf16>, vector<128x256xbf16>, vector<2x256xf32> -> vector<2x256xf32>
    %248 = vector.extract_strided_slice %247 {offsets = [0, 0], sizes = [2, 128], strides = [1, 1]} : vector<2x256xf32> to vector<2x128xf32>
    %249 = arith.negf %248 : vector<2x128xf32>
    %250 = math.exp %249 : vector<2x128xf32>
    %cst_67 = arith.constant 1.000000e+00 : f32
    %251 = vector.broadcast %cst_67 : f32 to vector<2x128xf32>
    %252 = arith.addf %251, %250 : vector<2x128xf32>
    %253 = arith.divf %251, %252 : vector<2x128xf32>
    %254 = vector.extract_strided_slice %247 {offsets = [0, 128], sizes = [2, 128], strides = [1, 1]} : vector<2x256xf32> to vector<2x128xf32>
    %255 = math.tanh %254 : vector<2x128xf32>
    %256 = arith.subf %255, %219 : vector<2x128xf32>
    %257 = arith.mulf %253, %256 : vector<2x128xf32>
    %258 = arith.addf %219, %257 : vector<2x128xf32>
    %259 = arith.truncf %244 : vector<2x128xf32> to vector<2x128xbf16>
    %c0_68 = arith.constant 0 : index
    %c0_69 = arith.constant 0 : index
    %260 = vector.load %arg10[%c0_68, %c0_69] : memref<128x512xbf16, #tpu.memory_space<vmem>>, vector<128x512xbf16>
    %cst_70 = arith.constant dense<0.000000e+00> : vector<2x512xf32>
    %261 = tpu.matmul %259, %260, %cst_70 {dimension_numbers = #tpu.dot_dimension_numbers<[1], [0], [0], [1], [0, 0, 1, 1], [], []>} : vector<2x128xbf16>, vector<128x512xbf16>, vector<2x512xf32> -> vector<2x512xf32>
    %262 = vector.extract_strided_slice %261 {offsets = [0, 0], sizes = [2, 256], strides = [1, 1]} : vector<2x512xf32> to vector<2x256xf32>
    %263 = vector.extract_strided_slice %262 {offsets = [0, 0], sizes = [2, 128], strides = [1, 1]} : vector<2x256xf32> to vector<2x128xf32>
    %264 = arith.negf %263 : vector<2x128xf32>
    %265 = math.exp %264 : vector<2x128xf32>
    %cst_71 = arith.constant 1.000000e+00 : f32
    %266 = vector.broadcast %cst_71 : f32 to vector<2x128xf32>
    %267 = arith.addf %266, %265 : vector<2x128xf32>
    %268 = arith.divf %266, %267 : vector<2x128xf32>
    %269 = vector.extract_strided_slice %262 {offsets = [0, 128], sizes = [2, 128], strides = [1, 1]} : vector<2x256xf32> to vector<2x128xf32>
    %270 = arith.negf %269 : vector<2x128xf32>
    %271 = math.exp %270 : vector<2x128xf32>
    %cst_72 = arith.constant 1.000000e+00 : f32
    %272 = vector.broadcast %cst_72 : f32 to vector<2x128xf32>
    %273 = arith.addf %272, %271 : vector<2x128xf32>
    %274 = arith.divf %272, %273 : vector<2x128xf32>
    %275 = arith.subf %274, %244 : vector<2x128xf32>
    %276 = arith.mulf %268, %275 : vector<2x128xf32>
    %277 = arith.addf %244, %276 : vector<2x128xf32>
    %278 = vector.extract_strided_slice %261 {offsets = [0, 256], sizes = [2, 256], strides = [1, 1]} : vector<2x512xf32> to vector<2x256xf32>
    %279 = vector.extract_strided_slice %278 {offsets = [0, 0], sizes = [2, 128], strides = [1, 1]} : vector<2x256xf32> to vector<2x128xf32>
    %280 = arith.negf %279 : vector<2x128xf32>
    %281 = math.exp %280 : vector<2x128xf32>
    %cst_73 = arith.constant 1.000000e+00 : f32
    %282 = vector.broadcast %cst_73 : f32 to vector<2x128xf32>
    %283 = arith.addf %282, %281 : vector<2x128xf32>
    %284 = arith.divf %282, %283 : vector<2x128xf32>
    %285 = vector.extract_strided_slice %278 {offsets = [0, 128], sizes = [2, 128], strides = [1, 1]} : vector<2x256xf32> to vector<2x128xf32>
    %cst_74 = arith.constant 0.000000e+00 : f32
    %286 = vector.broadcast %cst_74 : f32 to vector<2x128xf32>
    %287 = arith.maximumf %285, %286 : vector<2x128xf32>
    %288 = arith.subf %287, %244 : vector<2x128xf32>
    %289 = arith.mulf %284, %288 : vector<2x128xf32>
    %290 = arith.addf %244, %289 : vector<2x128xf32>
    %291 = arith.addf %190, %206 : vector<2x128xf32>
    %292 = arith.addf %291, %219 : vector<2x128xf32>
    %293 = arith.addf %292, %230 : vector<2x128xf32>
    %294 = arith.addf %293, %244 : vector<2x128xf32>
    %295 = arith.addf %294, %277 : vector<2x128xf32>
    %296 = arith.addf %295, %258 : vector<2x128xf32>
    %297 = arith.addf %296, %290 : vector<2x128xf32>
    %cst_75 = arith.constant 1.250000e-01 : f32
    %298 = vector.broadcast %cst_75 : f32 to vector<2x128xf32>
    %299 = arith.mulf %297, %298 : vector<2x128xf32>
    %300 = vector.extract_strided_slice %12 {offsets = [4, 0], sizes = [2, 256], strides = [1, 1]} : vector<16x256xf32> to vector<2x256xf32>
    %301 = arith.truncf %299 : vector<2x128xf32> to vector<2x128xbf16>
    %c0_76 = arith.constant 0 : index
    %c0_77 = arith.constant 0 : index
    %302 = vector.load %arg5[%c0_76, %c0_77] : memref<128x256xbf16, #tpu.memory_space<vmem>>, vector<128x256xbf16>
    %cst_78 = arith.constant dense<0.000000e+00> : vector<2x256xf32>
    %303 = tpu.matmul %301, %302, %cst_78 {dimension_numbers = #tpu.dot_dimension_numbers<[1], [0], [0], [1], [0, 0, 1, 1], [], []>} : vector<2x128xbf16>, vector<128x256xbf16>, vector<2x256xf32> -> vector<2x256xf32>
    %304 = arith.addf %300, %303 : vector<2x256xf32>
    %305 = vector.extract_strided_slice %304 {offsets = [0, 0], sizes = [2, 128], strides = [1, 1]} : vector<2x256xf32> to vector<2x128xf32>
    %306 = arith.negf %305 : vector<2x128xf32>
    %307 = math.exp %306 : vector<2x128xf32>
    %cst_79 = arith.constant 1.000000e+00 : f32
    %308 = vector.broadcast %cst_79 : f32 to vector<2x128xf32>
    %309 = arith.addf %308, %307 : vector<2x128xf32>
    %310 = arith.divf %308, %309 : vector<2x128xf32>
    %311 = vector.extract_strided_slice %304 {offsets = [0, 128], sizes = [2, 128], strides = [1, 1]} : vector<2x256xf32> to vector<2x128xf32>
    %312 = math.tanh %311 : vector<2x128xf32>
    %313 = arith.subf %312, %299 : vector<2x128xf32>
    %314 = arith.mulf %310, %313 : vector<2x128xf32>
    %315 = arith.addf %299, %314 : vector<2x128xf32>
    %316 = arith.truncf %315 : vector<2x128xf32> to vector<2x128xbf16>
    %c0_80 = arith.constant 0 : index
    %c0_81 = arith.constant 0 : index
    %317 = vector.load %arg6[%c0_80, %c0_81] : memref<128x256xbf16, #tpu.memory_space<vmem>>, vector<128x256xbf16>
    %cst_82 = arith.constant dense<0.000000e+00> : vector<2x256xf32>
    %318 = tpu.matmul %316, %317, %cst_82 {dimension_numbers = #tpu.dot_dimension_numbers<[1], [0], [0], [1], [0, 0, 1, 1], [], []>} : vector<2x128xbf16>, vector<128x256xbf16>, vector<2x256xf32> -> vector<2x256xf32>
    %319 = vector.extract_strided_slice %318 {offsets = [0, 0], sizes = [2, 128], strides = [1, 1]} : vector<2x256xf32> to vector<2x128xf32>
    %320 = arith.negf %319 : vector<2x128xf32>
    %321 = math.exp %320 : vector<2x128xf32>
    %cst_83 = arith.constant 1.000000e+00 : f32
    %322 = vector.broadcast %cst_83 : f32 to vector<2x128xf32>
    %323 = arith.addf %322, %321 : vector<2x128xf32>
    %324 = arith.divf %322, %323 : vector<2x128xf32>
    %325 = vector.extract_strided_slice %318 {offsets = [0, 128], sizes = [2, 128], strides = [1, 1]} : vector<2x256xf32> to vector<2x128xf32>
    %326 = arith.negf %325 : vector<2x128xf32>
    %327 = math.exp %326 : vector<2x128xf32>
    %cst_84 = arith.constant 1.000000e+00 : f32
    %328 = vector.broadcast %cst_84 : f32 to vector<2x128xf32>
    %329 = arith.addf %328, %327 : vector<2x128xf32>
    %330 = arith.divf %328, %329 : vector<2x128xf32>
    %331 = arith.subf %330, %315 : vector<2x128xf32>
    %332 = arith.mulf %324, %331 : vector<2x128xf32>
    %333 = arith.addf %315, %332 : vector<2x128xf32>
    %334 = arith.truncf %333 : vector<2x128xf32> to vector<2x128xbf16>
    %c0_85 = arith.constant 0 : index
    %c0_86 = arith.constant 0 : index
    %335 = vector.load %arg7[%c0_85, %c0_86] : memref<128x768xbf16, #tpu.memory_space<vmem>>, vector<128x768xbf16>
    %cst_87 = arith.constant dense<0.000000e+00> : vector<2x768xf32>
    %336 = tpu.matmul %334, %335, %cst_87 {dimension_numbers = #tpu.dot_dimension_numbers<[1], [0], [0], [1], [0, 0, 1, 1], [], []>} : vector<2x128xbf16>, vector<128x768xbf16>, vector<2x768xf32> -> vector<2x768xf32>
    %337 = vector.extract_strided_slice %336 {offsets = [0, 0], sizes = [2, 256], strides = [1, 1]} : vector<2x768xf32> to vector<2x256xf32>
    %338 = vector.extract_strided_slice %337 {offsets = [0, 0], sizes = [2, 128], strides = [1, 1]} : vector<2x256xf32> to vector<2x128xf32>
    %339 = arith.negf %338 : vector<2x128xf32>
    %340 = math.exp %339 : vector<2x128xf32>
    %cst_88 = arith.constant 1.000000e+00 : f32
    %341 = vector.broadcast %cst_88 : f32 to vector<2x128xf32>
    %342 = arith.addf %341, %340 : vector<2x128xf32>
    %343 = arith.divf %341, %342 : vector<2x128xf32>
    %344 = vector.extract_strided_slice %337 {offsets = [0, 128], sizes = [2, 128], strides = [1, 1]} : vector<2x256xf32> to vector<2x128xf32>
    %cst_89 = arith.constant 0.000000e+00 : f32
    %345 = vector.broadcast %cst_89 : f32 to vector<2x128xf32>
    %346 = arith.maximumf %344, %345 : vector<2x128xf32>
    %347 = arith.subf %346, %333 : vector<2x128xf32>
    %348 = arith.mulf %343, %347 : vector<2x128xf32>
    %349 = arith.addf %333, %348 : vector<2x128xf32>
    %350 = vector.extract_strided_slice %336 {offsets = [0, 256], sizes = [2, 256], strides = [1, 1]} : vector<2x768xf32> to vector<2x256xf32>
    %351 = vector.extract_strided_slice %350 {offsets = [0, 0], sizes = [2, 128], strides = [1, 1]} : vector<2x256xf32> to vector<2x128xf32>
    %352 = arith.negf %351 : vector<2x128xf32>
    %353 = math.exp %352 : vector<2x128xf32>
    %cst_90 = arith.constant 1.000000e+00 : f32
    %354 = vector.broadcast %cst_90 : f32 to vector<2x128xf32>
    %355 = arith.addf %354, %353 : vector<2x128xf32>
    %356 = arith.divf %354, %355 : vector<2x128xf32>
    %357 = vector.extract_strided_slice %350 {offsets = [0, 128], sizes = [2, 128], strides = [1, 1]} : vector<2x256xf32> to vector<2x128xf32>
    %cst_91 = arith.constant 0.000000e+00 : f32
    %358 = vector.broadcast %cst_91 : f32 to vector<2x128xf32>
    %359 = arith.maximumf %357, %358 : vector<2x128xf32>
    %360 = arith.subf %359, %333 : vector<2x128xf32>
    %361 = arith.mulf %356, %360 : vector<2x128xf32>
    %362 = arith.addf %333, %361 : vector<2x128xf32>
    %363 = vector.extract_strided_slice %336 {offsets = [0, 512], sizes = [2, 256], strides = [1, 1]} : vector<2x768xf32> to vector<2x256xf32>
    %364 = vector.extract_strided_slice %363 {offsets = [0, 0], sizes = [2, 128], strides = [1, 1]} : vector<2x256xf32> to vector<2x128xf32>
    %365 = arith.negf %364 : vector<2x128xf32>
    %366 = math.exp %365 : vector<2x128xf32>
    %cst_92 = arith.constant 1.000000e+00 : f32
    %367 = vector.broadcast %cst_92 : f32 to vector<2x128xf32>
    %368 = arith.addf %367, %366 : vector<2x128xf32>
    %369 = arith.divf %367, %368 : vector<2x128xf32>
    %370 = vector.extract_strided_slice %363 {offsets = [0, 128], sizes = [2, 128], strides = [1, 1]} : vector<2x256xf32> to vector<2x128xf32>
    %371 = arith.subf %370, %333 : vector<2x128xf32>
    %372 = arith.mulf %369, %371 : vector<2x128xf32>
    %373 = arith.addf %333, %372 : vector<2x128xf32>
    %374 = arith.truncf %349 : vector<2x128xf32> to vector<2x128xbf16>
    %c0_93 = arith.constant 0 : index
    %c0_94 = arith.constant 0 : index
    %375 = vector.load %arg8[%c0_93, %c0_94] : memref<128x256xbf16, #tpu.memory_space<vmem>>, vector<128x256xbf16>
    %cst_95 = arith.constant dense<0.000000e+00> : vector<2x256xf32>
    %376 = tpu.matmul %374, %375, %cst_95 {dimension_numbers = #tpu.dot_dimension_numbers<[1], [0], [0], [1], [0, 0, 1, 1], [], []>} : vector<2x128xbf16>, vector<128x256xbf16>, vector<2x256xf32> -> vector<2x256xf32>
    %377 = vector.extract_strided_slice %376 {offsets = [0, 0], sizes = [2, 128], strides = [1, 1]} : vector<2x256xf32> to vector<2x128xf32>
    %378 = arith.negf %377 : vector<2x128xf32>
    %379 = math.exp %378 : vector<2x128xf32>
    %cst_96 = arith.constant 1.000000e+00 : f32
    %380 = vector.broadcast %cst_96 : f32 to vector<2x128xf32>
    %381 = arith.addf %380, %379 : vector<2x128xf32>
    %382 = arith.divf %380, %381 : vector<2x128xf32>
    %383 = vector.extract_strided_slice %376 {offsets = [0, 128], sizes = [2, 128], strides = [1, 1]} : vector<2x256xf32> to vector<2x128xf32>
    %384 = math.tanh %383 : vector<2x128xf32>
    %385 = arith.subf %384, %349 : vector<2x128xf32>
    %386 = arith.mulf %382, %385 : vector<2x128xf32>
    %387 = arith.addf %349, %386 : vector<2x128xf32>
    %388 = arith.truncf %362 : vector<2x128xf32> to vector<2x128xbf16>
    %c0_97 = arith.constant 0 : index
    %c0_98 = arith.constant 0 : index
    %389 = vector.load %arg9[%c0_97, %c0_98] : memref<128x256xbf16, #tpu.memory_space<vmem>>, vector<128x256xbf16>
    %cst_99 = arith.constant dense<0.000000e+00> : vector<2x256xf32>
    %390 = tpu.matmul %388, %389, %cst_99 {dimension_numbers = #tpu.dot_dimension_numbers<[1], [0], [0], [1], [0, 0, 1, 1], [], []>} : vector<2x128xbf16>, vector<128x256xbf16>, vector<2x256xf32> -> vector<2x256xf32>
    %391 = vector.extract_strided_slice %390 {offsets = [0, 0], sizes = [2, 128], strides = [1, 1]} : vector<2x256xf32> to vector<2x128xf32>
    %392 = arith.negf %391 : vector<2x128xf32>
    %393 = math.exp %392 : vector<2x128xf32>
    %cst_100 = arith.constant 1.000000e+00 : f32
    %394 = vector.broadcast %cst_100 : f32 to vector<2x128xf32>
    %395 = arith.addf %394, %393 : vector<2x128xf32>
    %396 = arith.divf %394, %395 : vector<2x128xf32>
    %397 = vector.extract_strided_slice %390 {offsets = [0, 128], sizes = [2, 128], strides = [1, 1]} : vector<2x256xf32> to vector<2x128xf32>
    %398 = math.tanh %397 : vector<2x128xf32>
    %399 = arith.subf %398, %362 : vector<2x128xf32>
    %400 = arith.mulf %396, %399 : vector<2x128xf32>
    %401 = arith.addf %362, %400 : vector<2x128xf32>
    %402 = arith.truncf %387 : vector<2x128xf32> to vector<2x128xbf16>
    %c0_101 = arith.constant 0 : index
    %c0_102 = arith.constant 0 : index
    %403 = vector.load %arg10[%c0_101, %c0_102] : memref<128x512xbf16, #tpu.memory_space<vmem>>, vector<128x512xbf16>
    %cst_103 = arith.constant dense<0.000000e+00> : vector<2x512xf32>
    %404 = tpu.matmul %402, %403, %cst_103 {dimension_numbers = #tpu.dot_dimension_numbers<[1], [0], [0], [1], [0, 0, 1, 1], [], []>} : vector<2x128xbf16>, vector<128x512xbf16>, vector<2x512xf32> -> vector<2x512xf32>
    %405 = vector.extract_strided_slice %404 {offsets = [0, 0], sizes = [2, 256], strides = [1, 1]} : vector<2x512xf32> to vector<2x256xf32>
    %406 = vector.extract_strided_slice %405 {offsets = [0, 0], sizes = [2, 128], strides = [1, 1]} : vector<2x256xf32> to vector<2x128xf32>
    %407 = arith.negf %406 : vector<2x128xf32>
    %408 = math.exp %407 : vector<2x128xf32>
    %cst_104 = arith.constant 1.000000e+00 : f32
    %409 = vector.broadcast %cst_104 : f32 to vector<2x128xf32>
    %410 = arith.addf %409, %408 : vector<2x128xf32>
    %411 = arith.divf %409, %410 : vector<2x128xf32>
    %412 = vector.extract_strided_slice %405 {offsets = [0, 128], sizes = [2, 128], strides = [1, 1]} : vector<2x256xf32> to vector<2x128xf32>
    %413 = arith.negf %412 : vector<2x128xf32>
    %414 = math.exp %413 : vector<2x128xf32>
    %cst_105 = arith.constant 1.000000e+00 : f32
    %415 = vector.broadcast %cst_105 : f32 to vector<2x128xf32>
    %416 = arith.addf %415, %414 : vector<2x128xf32>
    %417 = arith.divf %415, %416 : vector<2x128xf32>
    %418 = arith.subf %417, %387 : vector<2x128xf32>
    %419 = arith.mulf %411, %418 : vector<2x128xf32>
    %420 = arith.addf %387, %419 : vector<2x128xf32>
    %421 = vector.extract_strided_slice %404 {offsets = [0, 256], sizes = [2, 256], strides = [1, 1]} : vector<2x512xf32> to vector<2x256xf32>
    %422 = vector.extract_strided_slice %421 {offsets = [0, 0], sizes = [2, 128], strides = [1, 1]} : vector<2x256xf32> to vector<2x128xf32>
    %423 = arith.negf %422 : vector<2x128xf32>
    %424 = math.exp %423 : vector<2x128xf32>
    %cst_106 = arith.constant 1.000000e+00 : f32
    %425 = vector.broadcast %cst_106 : f32 to vector<2x128xf32>
    %426 = arith.addf %425, %424 : vector<2x128xf32>
    %427 = arith.divf %425, %426 : vector<2x128xf32>
    %428 = vector.extract_strided_slice %421 {offsets = [0, 128], sizes = [2, 128], strides = [1, 1]} : vector<2x256xf32> to vector<2x128xf32>
    %cst_107 = arith.constant 0.000000e+00 : f32
    %429 = vector.broadcast %cst_107 : f32 to vector<2x128xf32>
    %430 = arith.maximumf %428, %429 : vector<2x128xf32>
    %431 = arith.subf %430, %387 : vector<2x128xf32>
    %432 = arith.mulf %427, %431 : vector<2x128xf32>
    %433 = arith.addf %387, %432 : vector<2x128xf32>
    %434 = arith.addf %333, %349 : vector<2x128xf32>
    %435 = arith.addf %434, %362 : vector<2x128xf32>
    %436 = arith.addf %435, %373 : vector<2x128xf32>
    %437 = arith.addf %436, %387 : vector<2x128xf32>
    %438 = arith.addf %437, %420 : vector<2x128xf32>
    %439 = arith.addf %438, %401 : vector<2x128xf32>
    %440 = arith.addf %439, %433 : vector<2x128xf32>
    %cst_108 = arith.constant 1.250000e-01 : f32
    %441 = vector.broadcast %cst_108 : f32 to vector<2x128xf32>
    %442 = arith.mulf %440, %441 : vector<2x128xf32>
    %443 = vector.extract_strided_slice %12 {offsets = [6, 0], sizes = [2, 256], strides = [1, 1]} : vector<16x256xf32> to vector<2x256xf32>
    %444 = arith.truncf %442 : vector<2x128xf32> to vector<2x128xbf16>
    %c0_109 = arith.constant 0 : index
    %c0_110 = arith.constant 0 : index
    %445 = vector.load %arg5[%c0_109, %c0_110] : memref<128x256xbf16, #tpu.memory_space<vmem>>, vector<128x256xbf16>
    %cst_111 = arith.constant dense<0.000000e+00> : vector<2x256xf32>
    %446 = tpu.matmul %444, %445, %cst_111 {dimension_numbers = #tpu.dot_dimension_numbers<[1], [0], [0], [1], [0, 0, 1, 1], [], []>} : vector<2x128xbf16>, vector<128x256xbf16>, vector<2x256xf32> -> vector<2x256xf32>
    %447 = arith.addf %443, %446 : vector<2x256xf32>
    %448 = vector.extract_strided_slice %447 {offsets = [0, 0], sizes = [2, 128], strides = [1, 1]} : vector<2x256xf32> to vector<2x128xf32>
    %449 = arith.negf %448 : vector<2x128xf32>
    %450 = math.exp %449 : vector<2x128xf32>
    %cst_112 = arith.constant 1.000000e+00 : f32
    %451 = vector.broadcast %cst_112 : f32 to vector<2x128xf32>
    %452 = arith.addf %451, %450 : vector<2x128xf32>
    %453 = arith.divf %451, %452 : vector<2x128xf32>
    %454 = vector.extract_strided_slice %447 {offsets = [0, 128], sizes = [2, 128], strides = [1, 1]} : vector<2x256xf32> to vector<2x128xf32>
    %455 = math.tanh %454 : vector<2x128xf32>
    %456 = arith.subf %455, %442 : vector<2x128xf32>
    %457 = arith.mulf %453, %456 : vector<2x128xf32>
    %458 = arith.addf %442, %457 : vector<2x128xf32>
    %459 = arith.truncf %458 : vector<2x128xf32> to vector<2x128xbf16>
    %c0_113 = arith.constant 0 : index
    %c0_114 = arith.constant 0 : index
    %460 = vector.load %arg6[%c0_113, %c0_114] : memref<128x256xbf16, #tpu.memory_space<vmem>>, vector<128x256xbf16>
    %cst_115 = arith.constant dense<0.000000e+00> : vector<2x256xf32>
    %461 = tpu.matmul %459, %460, %cst_115 {dimension_numbers = #tpu.dot_dimension_numbers<[1], [0], [0], [1], [0, 0, 1, 1], [], []>} : vector<2x128xbf16>, vector<128x256xbf16>, vector<2x256xf32> -> vector<2x256xf32>
    %462 = vector.extract_strided_slice %461 {offsets = [0, 0], sizes = [2, 128], strides = [1, 1]} : vector<2x256xf32> to vector<2x128xf32>
    %463 = arith.negf %462 : vector<2x128xf32>
    %464 = math.exp %463 : vector<2x128xf32>
    %cst_116 = arith.constant 1.000000e+00 : f32
    %465 = vector.broadcast %cst_116 : f32 to vector<2x128xf32>
    %466 = arith.addf %465, %464 : vector<2x128xf32>
    %467 = arith.divf %465, %466 : vector<2x128xf32>
    %468 = vector.extract_strided_slice %461 {offsets = [0, 128], sizes = [2, 128], strides = [1, 1]} : vector<2x256xf32> to vector<2x128xf32>
    %469 = arith.negf %468 : vector<2x128xf32>
    %470 = math.exp %469 : vector<2x128xf32>
    %cst_117 = arith.constant 1.000000e+00 : f32
    %471 = vector.broadcast %cst_117 : f32 to vector<2x128xf32>
    %472 = arith.addf %471, %470 : vector<2x128xf32>
    %473 = arith.divf %471, %472 : vector<2x128xf32>
    %474 = arith.subf %473, %458 : vector<2x128xf32>
    %475 = arith.mulf %467, %474 : vector<2x128xf32>
    %476 = arith.addf %458, %475 : vector<2x128xf32>
    %477 = arith.truncf %476 : vector<2x128xf32> to vector<2x128xbf16>
    %c0_118 = arith.constant 0 : index
    %c0_119 = arith.constant 0 : index
    %478 = vector.load %arg7[%c0_118, %c0_119] : memref<128x768xbf16, #tpu.memory_space<vmem>>, vector<128x768xbf16>
    %cst_120 = arith.constant dense<0.000000e+00> : vector<2x768xf32>
    %479 = tpu.matmul %477, %478, %cst_120 {dimension_numbers = #tpu.dot_dimension_numbers<[1], [0], [0], [1], [0, 0, 1, 1], [], []>} : vector<2x128xbf16>, vector<128x768xbf16>, vector<2x768xf32> -> vector<2x768xf32>
    %480 = vector.extract_strided_slice %479 {offsets = [0, 0], sizes = [2, 256], strides = [1, 1]} : vector<2x768xf32> to vector<2x256xf32>
    %481 = vector.extract_strided_slice %480 {offsets = [0, 0], sizes = [2, 128], strides = [1, 1]} : vector<2x256xf32> to vector<2x128xf32>
    %482 = arith.negf %481 : vector<2x128xf32>
    %483 = math.exp %482 : vector<2x128xf32>
    %cst_121 = arith.constant 1.000000e+00 : f32
    %484 = vector.broadcast %cst_121 : f32 to vector<2x128xf32>
    %485 = arith.addf %484, %483 : vector<2x128xf32>
    %486 = arith.divf %484, %485 : vector<2x128xf32>
    %487 = vector.extract_strided_slice %480 {offsets = [0, 128], sizes = [2, 128], strides = [1, 1]} : vector<2x256xf32> to vector<2x128xf32>
    %cst_122 = arith.constant 0.000000e+00 : f32
    %488 = vector.broadcast %cst_122 : f32 to vector<2x128xf32>
    %489 = arith.maximumf %487, %488 : vector<2x128xf32>
    %490 = arith.subf %489, %476 : vector<2x128xf32>
    %491 = arith.mulf %486, %490 : vector<2x128xf32>
    %492 = arith.addf %476, %491 : vector<2x128xf32>
    %493 = vector.extract_strided_slice %479 {offsets = [0, 256], sizes = [2, 256], strides = [1, 1]} : vector<2x768xf32> to vector<2x256xf32>
    %494 = vector.extract_strided_slice %493 {offsets = [0, 0], sizes = [2, 128], strides = [1, 1]} : vector<2x256xf32> to vector<2x128xf32>
    %495 = arith.negf %494 : vector<2x128xf32>
    %496 = math.exp %495 : vector<2x128xf32>
    %cst_123 = arith.constant 1.000000e+00 : f32
    %497 = vector.broadcast %cst_123 : f32 to vector<2x128xf32>
    %498 = arith.addf %497, %496 : vector<2x128xf32>
    %499 = arith.divf %497, %498 : vector<2x128xf32>
    %500 = vector.extract_strided_slice %493 {offsets = [0, 128], sizes = [2, 128], strides = [1, 1]} : vector<2x256xf32> to vector<2x128xf32>
    %cst_124 = arith.constant 0.000000e+00 : f32
    %501 = vector.broadcast %cst_124 : f32 to vector<2x128xf32>
    %502 = arith.maximumf %500, %501 : vector<2x128xf32>
    %503 = arith.subf %502, %476 : vector<2x128xf32>
    %504 = arith.mulf %499, %503 : vector<2x128xf32>
    %505 = arith.addf %476, %504 : vector<2x128xf32>
    %506 = vector.extract_strided_slice %479 {offsets = [0, 512], sizes = [2, 256], strides = [1, 1]} : vector<2x768xf32> to vector<2x256xf32>
    %507 = vector.extract_strided_slice %506 {offsets = [0, 0], sizes = [2, 128], strides = [1, 1]} : vector<2x256xf32> to vector<2x128xf32>
    %508 = arith.negf %507 : vector<2x128xf32>
    %509 = math.exp %508 : vector<2x128xf32>
    %cst_125 = arith.constant 1.000000e+00 : f32
    %510 = vector.broadcast %cst_125 : f32 to vector<2x128xf32>
    %511 = arith.addf %510, %509 : vector<2x128xf32>
    %512 = arith.divf %510, %511 : vector<2x128xf32>
    %513 = vector.extract_strided_slice %506 {offsets = [0, 128], sizes = [2, 128], strides = [1, 1]} : vector<2x256xf32> to vector<2x128xf32>
    %514 = arith.subf %513, %476 : vector<2x128xf32>
    %515 = arith.mulf %512, %514 : vector<2x128xf32>
    %516 = arith.addf %476, %515 : vector<2x128xf32>
    %517 = arith.truncf %492 : vector<2x128xf32> to vector<2x128xbf16>
    %c0_126 = arith.constant 0 : index
    %c0_127 = arith.constant 0 : index
    %518 = vector.load %arg8[%c0_126, %c0_127] : memref<128x256xbf16, #tpu.memory_space<vmem>>, vector<128x256xbf16>
    %cst_128 = arith.constant dense<0.000000e+00> : vector<2x256xf32>
    %519 = tpu.matmul %517, %518, %cst_128 {dimension_numbers = #tpu.dot_dimension_numbers<[1], [0], [0], [1], [0, 0, 1, 1], [], []>} : vector<2x128xbf16>, vector<128x256xbf16>, vector<2x256xf32> -> vector<2x256xf32>
    %520 = vector.extract_strided_slice %519 {offsets = [0, 0], sizes = [2, 128], strides = [1, 1]} : vector<2x256xf32> to vector<2x128xf32>
    %521 = arith.negf %520 : vector<2x128xf32>
    %522 = math.exp %521 : vector<2x128xf32>
    %cst_129 = arith.constant 1.000000e+00 : f32
    %523 = vector.broadcast %cst_129 : f32 to vector<2x128xf32>
    %524 = arith.addf %523, %522 : vector<2x128xf32>
    %525 = arith.divf %523, %524 : vector<2x128xf32>
    %526 = vector.extract_strided_slice %519 {offsets = [0, 128], sizes = [2, 128], strides = [1, 1]} : vector<2x256xf32> to vector<2x128xf32>
    %527 = math.tanh %526 : vector<2x128xf32>
    %528 = arith.subf %527, %492 : vector<2x128xf32>
    %529 = arith.mulf %525, %528 : vector<2x128xf32>
    %530 = arith.addf %492, %529 : vector<2x128xf32>
    %531 = arith.truncf %505 : vector<2x128xf32> to vector<2x128xbf16>
    %c0_130 = arith.constant 0 : index
    %c0_131 = arith.constant 0 : index
    %532 = vector.load %arg9[%c0_130, %c0_131] : memref<128x256xbf16, #tpu.memory_space<vmem>>, vector<128x256xbf16>
    %cst_132 = arith.constant dense<0.000000e+00> : vector<2x256xf32>
    %533 = tpu.matmul %531, %532, %cst_132 {dimension_numbers = #tpu.dot_dimension_numbers<[1], [0], [0], [1], [0, 0, 1, 1], [], []>} : vector<2x128xbf16>, vector<128x256xbf16>, vector<2x256xf32> -> vector<2x256xf32>
    %534 = vector.extract_strided_slice %533 {offsets = [0, 0], sizes = [2, 128], strides = [1, 1]} : vector<2x256xf32> to vector<2x128xf32>
    %535 = arith.negf %534 : vector<2x128xf32>
    %536 = math.exp %535 : vector<2x128xf32>
    %cst_133 = arith.constant 1.000000e+00 : f32
    %537 = vector.broadcast %cst_133 : f32 to vector<2x128xf32>
    %538 = arith.addf %537, %536 : vector<2x128xf32>
    %539 = arith.divf %537, %538 : vector<2x128xf32>
    %540 = vector.extract_strided_slice %533 {offsets = [0, 128], sizes = [2, 128], strides = [1, 1]} : vector<2x256xf32> to vector<2x128xf32>
    %541 = math.tanh %540 : vector<2x128xf32>
    %542 = arith.subf %541, %505 : vector<2x128xf32>
    %543 = arith.mulf %539, %542 : vector<2x128xf32>
    %544 = arith.addf %505, %543 : vector<2x128xf32>
    %545 = arith.truncf %530 : vector<2x128xf32> to vector<2x128xbf16>
    %c0_134 = arith.constant 0 : index
    %c0_135 = arith.constant 0 : index
    %546 = vector.load %arg10[%c0_134, %c0_135] : memref<128x512xbf16, #tpu.memory_space<vmem>>, vector<128x512xbf16>
    %cst_136 = arith.constant dense<0.000000e+00> : vector<2x512xf32>
    %547 = tpu.matmul %545, %546, %cst_136 {dimension_numbers = #tpu.dot_dimension_numbers<[1], [0], [0], [1], [0, 0, 1, 1], [], []>} : vector<2x128xbf16>, vector<128x512xbf16>, vector<2x512xf32> -> vector<2x512xf32>
    %548 = vector.extract_strided_slice %547 {offsets = [0, 0], sizes = [2, 256], strides = [1, 1]} : vector<2x512xf32> to vector<2x256xf32>
    %549 = vector.extract_strided_slice %548 {offsets = [0, 0], sizes = [2, 128], strides = [1, 1]} : vector<2x256xf32> to vector<2x128xf32>
    %550 = arith.negf %549 : vector<2x128xf32>
    %551 = math.exp %550 : vector<2x128xf32>
    %cst_137 = arith.constant 1.000000e+00 : f32
    %552 = vector.broadcast %cst_137 : f32 to vector<2x128xf32>
    %553 = arith.addf %552, %551 : vector<2x128xf32>
    %554 = arith.divf %552, %553 : vector<2x128xf32>
    %555 = vector.extract_strided_slice %548 {offsets = [0, 128], sizes = [2, 128], strides = [1, 1]} : vector<2x256xf32> to vector<2x128xf32>
    %556 = arith.negf %555 : vector<2x128xf32>
    %557 = math.exp %556 : vector<2x128xf32>
    %cst_138 = arith.constant 1.000000e+00 : f32
    %558 = vector.broadcast %cst_138 : f32 to vector<2x128xf32>
    %559 = arith.addf %558, %557 : vector<2x128xf32>
    %560 = arith.divf %558, %559 : vector<2x128xf32>
    %561 = arith.subf %560, %530 : vector<2x128xf32>
    %562 = arith.mulf %554, %561 : vector<2x128xf32>
    %563 = arith.addf %530, %562 : vector<2x128xf32>
    %564 = vector.extract_strided_slice %547 {offsets = [0, 256], sizes = [2, 256], strides = [1, 1]} : vector<2x512xf32> to vector<2x256xf32>
    %565 = vector.extract_strided_slice %564 {offsets = [0, 0], sizes = [2, 128], strides = [1, 1]} : vector<2x256xf32> to vector<2x128xf32>
    %566 = arith.negf %565 : vector<2x128xf32>
    %567 = math.exp %566 : vector<2x128xf32>
    %cst_139 = arith.constant 1.000000e+00 : f32
    %568 = vector.broadcast %cst_139 : f32 to vector<2x128xf32>
    %569 = arith.addf %568, %567 : vector<2x128xf32>
    %570 = arith.divf %568, %569 : vector<2x128xf32>
    %571 = vector.extract_strided_slice %564 {offsets = [0, 128], sizes = [2, 128], strides = [1, 1]} : vector<2x256xf32> to vector<2x128xf32>
    %cst_140 = arith.constant 0.000000e+00 : f32
    %572 = vector.broadcast %cst_140 : f32 to vector<2x128xf32>
    %573 = arith.maximumf %571, %572 : vector<2x128xf32>
    %574 = arith.subf %573, %530 : vector<2x128xf32>
    %575 = arith.mulf %570, %574 : vector<2x128xf32>
    %576 = arith.addf %530, %575 : vector<2x128xf32>
    %577 = arith.addf %476, %492 : vector<2x128xf32>
    %578 = arith.addf %577, %505 : vector<2x128xf32>
    %579 = arith.addf %578, %516 : vector<2x128xf32>
    %580 = arith.addf %579, %530 : vector<2x128xf32>
    %581 = arith.addf %580, %563 : vector<2x128xf32>
    %582 = arith.addf %581, %544 : vector<2x128xf32>
    %583 = arith.addf %582, %576 : vector<2x128xf32>
    %cst_141 = arith.constant 1.250000e-01 : f32
    %584 = vector.broadcast %cst_141 : f32 to vector<2x128xf32>
    %585 = arith.mulf %583, %584 : vector<2x128xf32>
    %586 = vector.extract_strided_slice %12 {offsets = [8, 0], sizes = [2, 256], strides = [1, 1]} : vector<16x256xf32> to vector<2x256xf32>
    %587 = arith.truncf %585 : vector<2x128xf32> to vector<2x128xbf16>
    %c0_142 = arith.constant 0 : index
    %c0_143 = arith.constant 0 : index
    %588 = vector.load %arg5[%c0_142, %c0_143] : memref<128x256xbf16, #tpu.memory_space<vmem>>, vector<128x256xbf16>
    %cst_144 = arith.constant dense<0.000000e+00> : vector<2x256xf32>
    %589 = tpu.matmul %587, %588, %cst_144 {dimension_numbers = #tpu.dot_dimension_numbers<[1], [0], [0], [1], [0, 0, 1, 1], [], []>} : vector<2x128xbf16>, vector<128x256xbf16>, vector<2x256xf32> -> vector<2x256xf32>
    %590 = arith.addf %586, %589 : vector<2x256xf32>
    %591 = vector.extract_strided_slice %590 {offsets = [0, 0], sizes = [2, 128], strides = [1, 1]} : vector<2x256xf32> to vector<2x128xf32>
    %592 = arith.negf %591 : vector<2x128xf32>
    %593 = math.exp %592 : vector<2x128xf32>
    %cst_145 = arith.constant 1.000000e+00 : f32
    %594 = vector.broadcast %cst_145 : f32 to vector<2x128xf32>
    %595 = arith.addf %594, %593 : vector<2x128xf32>
    %596 = arith.divf %594, %595 : vector<2x128xf32>
    %597 = vector.extract_strided_slice %590 {offsets = [0, 128], sizes = [2, 128], strides = [1, 1]} : vector<2x256xf32> to vector<2x128xf32>
    %598 = math.tanh %597 : vector<2x128xf32>
    %599 = arith.subf %598, %585 : vector<2x128xf32>
    %600 = arith.mulf %596, %599 : vector<2x128xf32>
    %601 = arith.addf %585, %600 : vector<2x128xf32>
    %602 = arith.truncf %601 : vector<2x128xf32> to vector<2x128xbf16>
    %c0_146 = arith.constant 0 : index
    %c0_147 = arith.constant 0 : index
    %603 = vector.load %arg6[%c0_146, %c0_147] : memref<128x256xbf16, #tpu.memory_space<vmem>>, vector<128x256xbf16>
    %cst_148 = arith.constant dense<0.000000e+00> : vector<2x256xf32>
    %604 = tpu.matmul %602, %603, %cst_148 {dimension_numbers = #tpu.dot_dimension_numbers<[1], [0], [0], [1], [0, 0, 1, 1], [], []>} : vector<2x128xbf16>, vector<128x256xbf16>, vector<2x256xf32> -> vector<2x256xf32>
    %605 = vector.extract_strided_slice %604 {offsets = [0, 0], sizes = [2, 128], strides = [1, 1]} : vector<2x256xf32> to vector<2x128xf32>
    %606 = arith.negf %605 : vector<2x128xf32>
    %607 = math.exp %606 : vector<2x128xf32>
    %cst_149 = arith.constant 1.000000e+00 : f32
    %608 = vector.broadcast %cst_149 : f32 to vector<2x128xf32>
    %609 = arith.addf %608, %607 : vector<2x128xf32>
    %610 = arith.divf %608, %609 : vector<2x128xf32>
    %611 = vector.extract_strided_slice %604 {offsets = [0, 128], sizes = [2, 128], strides = [1, 1]} : vector<2x256xf32> to vector<2x128xf32>
    %612 = arith.negf %611 : vector<2x128xf32>
    %613 = math.exp %612 : vector<2x128xf32>
    %cst_150 = arith.constant 1.000000e+00 : f32
    %614 = vector.broadcast %cst_150 : f32 to vector<2x128xf32>
    %615 = arith.addf %614, %613 : vector<2x128xf32>
    %616 = arith.divf %614, %615 : vector<2x128xf32>
    %617 = arith.subf %616, %601 : vector<2x128xf32>
    %618 = arith.mulf %610, %617 : vector<2x128xf32>
    %619 = arith.addf %601, %618 : vector<2x128xf32>
    %620 = arith.truncf %619 : vector<2x128xf32> to vector<2x128xbf16>
    %c0_151 = arith.constant 0 : index
    %c0_152 = arith.constant 0 : index
    %621 = vector.load %arg7[%c0_151, %c0_152] : memref<128x768xbf16, #tpu.memory_space<vmem>>, vector<128x768xbf16>
    %cst_153 = arith.constant dense<0.000000e+00> : vector<2x768xf32>
    %622 = tpu.matmul %620, %621, %cst_153 {dimension_numbers = #tpu.dot_dimension_numbers<[1], [0], [0], [1], [0, 0, 1, 1], [], []>} : vector<2x128xbf16>, vector<128x768xbf16>, vector<2x768xf32> -> vector<2x768xf32>
    %623 = vector.extract_strided_slice %622 {offsets = [0, 0], sizes = [2, 256], strides = [1, 1]} : vector<2x768xf32> to vector<2x256xf32>
    %624 = vector.extract_strided_slice %623 {offsets = [0, 0], sizes = [2, 128], strides = [1, 1]} : vector<2x256xf32> to vector<2x128xf32>
    %625 = arith.negf %624 : vector<2x128xf32>
    %626 = math.exp %625 : vector<2x128xf32>
    %cst_154 = arith.constant 1.000000e+00 : f32
    %627 = vector.broadcast %cst_154 : f32 to vector<2x128xf32>
    %628 = arith.addf %627, %626 : vector<2x128xf32>
    %629 = arith.divf %627, %628 : vector<2x128xf32>
    %630 = vector.extract_strided_slice %623 {offsets = [0, 128], sizes = [2, 128], strides = [1, 1]} : vector<2x256xf32> to vector<2x128xf32>
    %cst_155 = arith.constant 0.000000e+00 : f32
    %631 = vector.broadcast %cst_155 : f32 to vector<2x128xf32>
    %632 = arith.maximumf %630, %631 : vector<2x128xf32>
    %633 = arith.subf %632, %619 : vector<2x128xf32>
    %634 = arith.mulf %629, %633 : vector<2x128xf32>
    %635 = arith.addf %619, %634 : vector<2x128xf32>
    %636 = vector.extract_strided_slice %622 {offsets = [0, 256], sizes = [2, 256], strides = [1, 1]} : vector<2x768xf32> to vector<2x256xf32>
    %637 = vector.extract_strided_slice %636 {offsets = [0, 0], sizes = [2, 128], strides = [1, 1]} : vector<2x256xf32> to vector<2x128xf32>
    %638 = arith.negf %637 : vector<2x128xf32>
    %639 = math.exp %638 : vector<2x128xf32>
    %cst_156 = arith.constant 1.000000e+00 : f32
    %640 = vector.broadcast %cst_156 : f32 to vector<2x128xf32>
    %641 = arith.addf %640, %639 : vector<2x128xf32>
    %642 = arith.divf %640, %641 : vector<2x128xf32>
    %643 = vector.extract_strided_slice %636 {offsets = [0, 128], sizes = [2, 128], strides = [1, 1]} : vector<2x256xf32> to vector<2x128xf32>
    %cst_157 = arith.constant 0.000000e+00 : f32
    %644 = vector.broadcast %cst_157 : f32 to vector<2x128xf32>
    %645 = arith.maximumf %643, %644 : vector<2x128xf32>
    %646 = arith.subf %645, %619 : vector<2x128xf32>
    %647 = arith.mulf %642, %646 : vector<2x128xf32>
    %648 = arith.addf %619, %647 : vector<2x128xf32>
    %649 = vector.extract_strided_slice %622 {offsets = [0, 512], sizes = [2, 256], strides = [1, 1]} : vector<2x768xf32> to vector<2x256xf32>
    %650 = vector.extract_strided_slice %649 {offsets = [0, 0], sizes = [2, 128], strides = [1, 1]} : vector<2x256xf32> to vector<2x128xf32>
    %651 = arith.negf %650 : vector<2x128xf32>
    %652 = math.exp %651 : vector<2x128xf32>
    %cst_158 = arith.constant 1.000000e+00 : f32
    %653 = vector.broadcast %cst_158 : f32 to vector<2x128xf32>
    %654 = arith.addf %653, %652 : vector<2x128xf32>
    %655 = arith.divf %653, %654 : vector<2x128xf32>
    %656 = vector.extract_strided_slice %649 {offsets = [0, 128], sizes = [2, 128], strides = [1, 1]} : vector<2x256xf32> to vector<2x128xf32>
    %657 = arith.subf %656, %619 : vector<2x128xf32>
    %658 = arith.mulf %655, %657 : vector<2x128xf32>
    %659 = arith.addf %619, %658 : vector<2x128xf32>
    %660 = arith.truncf %635 : vector<2x128xf32> to vector<2x128xbf16>
    %c0_159 = arith.constant 0 : index
    %c0_160 = arith.constant 0 : index
    %661 = vector.load %arg8[%c0_159, %c0_160] : memref<128x256xbf16, #tpu.memory_space<vmem>>, vector<128x256xbf16>
    %cst_161 = arith.constant dense<0.000000e+00> : vector<2x256xf32>
    %662 = tpu.matmul %660, %661, %cst_161 {dimension_numbers = #tpu.dot_dimension_numbers<[1], [0], [0], [1], [0, 0, 1, 1], [], []>} : vector<2x128xbf16>, vector<128x256xbf16>, vector<2x256xf32> -> vector<2x256xf32>
    %663 = vector.extract_strided_slice %662 {offsets = [0, 0], sizes = [2, 128], strides = [1, 1]} : vector<2x256xf32> to vector<2x128xf32>
    %664 = arith.negf %663 : vector<2x128xf32>
    %665 = math.exp %664 : vector<2x128xf32>
    %cst_162 = arith.constant 1.000000e+00 : f32
    %666 = vector.broadcast %cst_162 : f32 to vector<2x128xf32>
    %667 = arith.addf %666, %665 : vector<2x128xf32>
    %668 = arith.divf %666, %667 : vector<2x128xf32>
    %669 = vector.extract_strided_slice %662 {offsets = [0, 128], sizes = [2, 128], strides = [1, 1]} : vector<2x256xf32> to vector<2x128xf32>
    %670 = math.tanh %669 : vector<2x128xf32>
    %671 = arith.subf %670, %635 : vector<2x128xf32>
    %672 = arith.mulf %668, %671 : vector<2x128xf32>
    %673 = arith.addf %635, %672 : vector<2x128xf32>
    %674 = arith.truncf %648 : vector<2x128xf32> to vector<2x128xbf16>
    %c0_163 = arith.constant 0 : index
    %c0_164 = arith.constant 0 : index
    %675 = vector.load %arg9[%c0_163, %c0_164] : memref<128x256xbf16, #tpu.memory_space<vmem>>, vector<128x256xbf16>
    %cst_165 = arith.constant dense<0.000000e+00> : vector<2x256xf32>
    %676 = tpu.matmul %674, %675, %cst_165 {dimension_numbers = #tpu.dot_dimension_numbers<[1], [0], [0], [1], [0, 0, 1, 1], [], []>} : vector<2x128xbf16>, vector<128x256xbf16>, vector<2x256xf32> -> vector<2x256xf32>
    %677 = vector.extract_strided_slice %676 {offsets = [0, 0], sizes = [2, 128], strides = [1, 1]} : vector<2x256xf32> to vector<2x128xf32>
    %678 = arith.negf %677 : vector<2x128xf32>
    %679 = math.exp %678 : vector<2x128xf32>
    %cst_166 = arith.constant 1.000000e+00 : f32
    %680 = vector.broadcast %cst_166 : f32 to vector<2x128xf32>
    %681 = arith.addf %680, %679 : vector<2x128xf32>
    %682 = arith.divf %680, %681 : vector<2x128xf32>
    %683 = vector.extract_strided_slice %676 {offsets = [0, 128], sizes = [2, 128], strides = [1, 1]} : vector<2x256xf32> to vector<2x128xf32>
    %684 = math.tanh %683 : vector<2x128xf32>
    %685 = arith.subf %684, %648 : vector<2x128xf32>
    %686 = arith.mulf %682, %685 : vector<2x128xf32>
    %687 = arith.addf %648, %686 : vector<2x128xf32>
    %688 = arith.truncf %673 : vector<2x128xf32> to vector<2x128xbf16>
    %c0_167 = arith.constant 0 : index
    %c0_168 = arith.constant 0 : index
    %689 = vector.load %arg10[%c0_167, %c0_168] : memref<128x512xbf16, #tpu.memory_space<vmem>>, vector<128x512xbf16>
    %cst_169 = arith.constant dense<0.000000e+00> : vector<2x512xf32>
    %690 = tpu.matmul %688, %689, %cst_169 {dimension_numbers = #tpu.dot_dimension_numbers<[1], [0], [0], [1], [0, 0, 1, 1], [], []>} : vector<2x128xbf16>, vector<128x512xbf16>, vector<2x512xf32> -> vector<2x512xf32>
    %691 = vector.extract_strided_slice %690 {offsets = [0, 0], sizes = [2, 256], strides = [1, 1]} : vector<2x512xf32> to vector<2x256xf32>
    %692 = vector.extract_strided_slice %691 {offsets = [0, 0], sizes = [2, 128], strides = [1, 1]} : vector<2x256xf32> to vector<2x128xf32>
    %693 = arith.negf %692 : vector<2x128xf32>
    %694 = math.exp %693 : vector<2x128xf32>
    %cst_170 = arith.constant 1.000000e+00 : f32
    %695 = vector.broadcast %cst_170 : f32 to vector<2x128xf32>
    %696 = arith.addf %695, %694 : vector<2x128xf32>
    %697 = arith.divf %695, %696 : vector<2x128xf32>
    %698 = vector.extract_strided_slice %691 {offsets = [0, 128], sizes = [2, 128], strides = [1, 1]} : vector<2x256xf32> to vector<2x128xf32>
    %699 = arith.negf %698 : vector<2x128xf32>
    %700 = math.exp %699 : vector<2x128xf32>
    %cst_171 = arith.constant 1.000000e+00 : f32
    %701 = vector.broadcast %cst_171 : f32 to vector<2x128xf32>
    %702 = arith.addf %701, %700 : vector<2x128xf32>
    %703 = arith.divf %701, %702 : vector<2x128xf32>
    %704 = arith.subf %703, %673 : vector<2x128xf32>
    %705 = arith.mulf %697, %704 : vector<2x128xf32>
    %706 = arith.addf %673, %705 : vector<2x128xf32>
    %707 = vector.extract_strided_slice %690 {offsets = [0, 256], sizes = [2, 256], strides = [1, 1]} : vector<2x512xf32> to vector<2x256xf32>
    %708 = vector.extract_strided_slice %707 {offsets = [0, 0], sizes = [2, 128], strides = [1, 1]} : vector<2x256xf32> to vector<2x128xf32>
    %709 = arith.negf %708 : vector<2x128xf32>
    %710 = math.exp %709 : vector<2x128xf32>
    %cst_172 = arith.constant 1.000000e+00 : f32
    %711 = vector.broadcast %cst_172 : f32 to vector<2x128xf32>
    %712 = arith.addf %711, %710 : vector<2x128xf32>
    %713 = arith.divf %711, %712 : vector<2x128xf32>
    %714 = vector.extract_strided_slice %707 {offsets = [0, 128], sizes = [2, 128], strides = [1, 1]} : vector<2x256xf32> to vector<2x128xf32>
    %cst_173 = arith.constant 0.000000e+00 : f32
    %715 = vector.broadcast %cst_173 : f32 to vector<2x128xf32>
    %716 = arith.maximumf %714, %715 : vector<2x128xf32>
    %717 = arith.subf %716, %673 : vector<2x128xf32>
    %718 = arith.mulf %713, %717 : vector<2x128xf32>
    %719 = arith.addf %673, %718 : vector<2x128xf32>
    %720 = arith.addf %619, %635 : vector<2x128xf32>
    %721 = arith.addf %720, %648 : vector<2x128xf32>
    %722 = arith.addf %721, %659 : vector<2x128xf32>
    %723 = arith.addf %722, %673 : vector<2x128xf32>
    %724 = arith.addf %723, %706 : vector<2x128xf32>
    %725 = arith.addf %724, %687 : vector<2x128xf32>
    %726 = arith.addf %725, %719 : vector<2x128xf32>
    %cst_174 = arith.constant 1.250000e-01 : f32
    %727 = vector.broadcast %cst_174 : f32 to vector<2x128xf32>
    %728 = arith.mulf %726, %727 : vector<2x128xf32>
    %729 = vector.extract_strided_slice %12 {offsets = [10, 0], sizes = [2, 256], strides = [1, 1]} : vector<16x256xf32> to vector<2x256xf32>
    %730 = arith.truncf %728 : vector<2x128xf32> to vector<2x128xbf16>
    %c0_175 = arith.constant 0 : index
    %c0_176 = arith.constant 0 : index
    %731 = vector.load %arg5[%c0_175, %c0_176] : memref<128x256xbf16, #tpu.memory_space<vmem>>, vector<128x256xbf16>
    %cst_177 = arith.constant dense<0.000000e+00> : vector<2x256xf32>
    %732 = tpu.matmul %730, %731, %cst_177 {dimension_numbers = #tpu.dot_dimension_numbers<[1], [0], [0], [1], [0, 0, 1, 1], [], []>} : vector<2x128xbf16>, vector<128x256xbf16>, vector<2x256xf32> -> vector<2x256xf32>
    %733 = arith.addf %729, %732 : vector<2x256xf32>
    %734 = vector.extract_strided_slice %733 {offsets = [0, 0], sizes = [2, 128], strides = [1, 1]} : vector<2x256xf32> to vector<2x128xf32>
    %735 = arith.negf %734 : vector<2x128xf32>
    %736 = math.exp %735 : vector<2x128xf32>
    %cst_178 = arith.constant 1.000000e+00 : f32
    %737 = vector.broadcast %cst_178 : f32 to vector<2x128xf32>
    %738 = arith.addf %737, %736 : vector<2x128xf32>
    %739 = arith.divf %737, %738 : vector<2x128xf32>
    %740 = vector.extract_strided_slice %733 {offsets = [0, 128], sizes = [2, 128], strides = [1, 1]} : vector<2x256xf32> to vector<2x128xf32>
    %741 = math.tanh %740 : vector<2x128xf32>
    %742 = arith.subf %741, %728 : vector<2x128xf32>
    %743 = arith.mulf %739, %742 : vector<2x128xf32>
    %744 = arith.addf %728, %743 : vector<2x128xf32>
    %745 = arith.truncf %744 : vector<2x128xf32> to vector<2x128xbf16>
    %c0_179 = arith.constant 0 : index
    %c0_180 = arith.constant 0 : index
    %746 = vector.load %arg6[%c0_179, %c0_180] : memref<128x256xbf16, #tpu.memory_space<vmem>>, vector<128x256xbf16>
    %cst_181 = arith.constant dense<0.000000e+00> : vector<2x256xf32>
    %747 = tpu.matmul %745, %746, %cst_181 {dimension_numbers = #tpu.dot_dimension_numbers<[1], [0], [0], [1], [0, 0, 1, 1], [], []>} : vector<2x128xbf16>, vector<128x256xbf16>, vector<2x256xf32> -> vector<2x256xf32>
    %748 = vector.extract_strided_slice %747 {offsets = [0, 0], sizes = [2, 128], strides = [1, 1]} : vector<2x256xf32> to vector<2x128xf32>
    %749 = arith.negf %748 : vector<2x128xf32>
    %750 = math.exp %749 : vector<2x128xf32>
    %cst_182 = arith.constant 1.000000e+00 : f32
    %751 = vector.broadcast %cst_182 : f32 to vector<2x128xf32>
    %752 = arith.addf %751, %750 : vector<2x128xf32>
    %753 = arith.divf %751, %752 : vector<2x128xf32>
    %754 = vector.extract_strided_slice %747 {offsets = [0, 128], sizes = [2, 128], strides = [1, 1]} : vector<2x256xf32> to vector<2x128xf32>
    %755 = arith.negf %754 : vector<2x128xf32>
    %756 = math.exp %755 : vector<2x128xf32>
    %cst_183 = arith.constant 1.000000e+00 : f32
    %757 = vector.broadcast %cst_183 : f32 to vector<2x128xf32>
    %758 = arith.addf %757, %756 : vector<2x128xf32>
    %759 = arith.divf %757, %758 : vector<2x128xf32>
    %760 = arith.subf %759, %744 : vector<2x128xf32>
    %761 = arith.mulf %753, %760 : vector<2x128xf32>
    %762 = arith.addf %744, %761 : vector<2x128xf32>
    %763 = arith.truncf %762 : vector<2x128xf32> to vector<2x128xbf16>
    %c0_184 = arith.constant 0 : index
    %c0_185 = arith.constant 0 : index
    %764 = vector.load %arg7[%c0_184, %c0_185] : memref<128x768xbf16, #tpu.memory_space<vmem>>, vector<128x768xbf16>
    %cst_186 = arith.constant dense<0.000000e+00> : vector<2x768xf32>
    %765 = tpu.matmul %763, %764, %cst_186 {dimension_numbers = #tpu.dot_dimension_numbers<[1], [0], [0], [1], [0, 0, 1, 1], [], []>} : vector<2x128xbf16>, vector<128x768xbf16>, vector<2x768xf32> -> vector<2x768xf32>
    %766 = vector.extract_strided_slice %765 {offsets = [0, 0], sizes = [2, 256], strides = [1, 1]} : vector<2x768xf32> to vector<2x256xf32>
    %767 = vector.extract_strided_slice %766 {offsets = [0, 0], sizes = [2, 128], strides = [1, 1]} : vector<2x256xf32> to vector<2x128xf32>
    %768 = arith.negf %767 : vector<2x128xf32>
    %769 = math.exp %768 : vector<2x128xf32>
    %cst_187 = arith.constant 1.000000e+00 : f32
    %770 = vector.broadcast %cst_187 : f32 to vector<2x128xf32>
    %771 = arith.addf %770, %769 : vector<2x128xf32>
    %772 = arith.divf %770, %771 : vector<2x128xf32>
    %773 = vector.extract_strided_slice %766 {offsets = [0, 128], sizes = [2, 128], strides = [1, 1]} : vector<2x256xf32> to vector<2x128xf32>
    %cst_188 = arith.constant 0.000000e+00 : f32
    %774 = vector.broadcast %cst_188 : f32 to vector<2x128xf32>
    %775 = arith.maximumf %773, %774 : vector<2x128xf32>
    %776 = arith.subf %775, %762 : vector<2x128xf32>
    %777 = arith.mulf %772, %776 : vector<2x128xf32>
    %778 = arith.addf %762, %777 : vector<2x128xf32>
    %779 = vector.extract_strided_slice %765 {offsets = [0, 256], sizes = [2, 256], strides = [1, 1]} : vector<2x768xf32> to vector<2x256xf32>
    %780 = vector.extract_strided_slice %779 {offsets = [0, 0], sizes = [2, 128], strides = [1, 1]} : vector<2x256xf32> to vector<2x128xf32>
    %781 = arith.negf %780 : vector<2x128xf32>
    %782 = math.exp %781 : vector<2x128xf32>
    %cst_189 = arith.constant 1.000000e+00 : f32
    %783 = vector.broadcast %cst_189 : f32 to vector<2x128xf32>
    %784 = arith.addf %783, %782 : vector<2x128xf32>
    %785 = arith.divf %783, %784 : vector<2x128xf32>
    %786 = vector.extract_strided_slice %779 {offsets = [0, 128], sizes = [2, 128], strides = [1, 1]} : vector<2x256xf32> to vector<2x128xf32>
    %cst_190 = arith.constant 0.000000e+00 : f32
    %787 = vector.broadcast %cst_190 : f32 to vector<2x128xf32>
    %788 = arith.maximumf %786, %787 : vector<2x128xf32>
    %789 = arith.subf %788, %762 : vector<2x128xf32>
    %790 = arith.mulf %785, %789 : vector<2x128xf32>
    %791 = arith.addf %762, %790 : vector<2x128xf32>
    %792 = vector.extract_strided_slice %765 {offsets = [0, 512], sizes = [2, 256], strides = [1, 1]} : vector<2x768xf32> to vector<2x256xf32>
    %793 = vector.extract_strided_slice %792 {offsets = [0, 0], sizes = [2, 128], strides = [1, 1]} : vector<2x256xf32> to vector<2x128xf32>
    %794 = arith.negf %793 : vector<2x128xf32>
    %795 = math.exp %794 : vector<2x128xf32>
    %cst_191 = arith.constant 1.000000e+00 : f32
    %796 = vector.broadcast %cst_191 : f32 to vector<2x128xf32>
    %797 = arith.addf %796, %795 : vector<2x128xf32>
    %798 = arith.divf %796, %797 : vector<2x128xf32>
    %799 = vector.extract_strided_slice %792 {offsets = [0, 128], sizes = [2, 128], strides = [1, 1]} : vector<2x256xf32> to vector<2x128xf32>
    %800 = arith.subf %799, %762 : vector<2x128xf32>
    %801 = arith.mulf %798, %800 : vector<2x128xf32>
    %802 = arith.addf %762, %801 : vector<2x128xf32>
    %803 = arith.truncf %778 : vector<2x128xf32> to vector<2x128xbf16>
    %c0_192 = arith.constant 0 : index
    %c0_193 = arith.constant 0 : index
    %804 = vector.load %arg8[%c0_192, %c0_193] : memref<128x256xbf16, #tpu.memory_space<vmem>>, vector<128x256xbf16>
    %cst_194 = arith.constant dense<0.000000e+00> : vector<2x256xf32>
    %805 = tpu.matmul %803, %804, %cst_194 {dimension_numbers = #tpu.dot_dimension_numbers<[1], [0], [0], [1], [0, 0, 1, 1], [], []>} : vector<2x128xbf16>, vector<128x256xbf16>, vector<2x256xf32> -> vector<2x256xf32>
    %806 = vector.extract_strided_slice %805 {offsets = [0, 0], sizes = [2, 128], strides = [1, 1]} : vector<2x256xf32> to vector<2x128xf32>
    %807 = arith.negf %806 : vector<2x128xf32>
    %808 = math.exp %807 : vector<2x128xf32>
    %cst_195 = arith.constant 1.000000e+00 : f32
    %809 = vector.broadcast %cst_195 : f32 to vector<2x128xf32>
    %810 = arith.addf %809, %808 : vector<2x128xf32>
    %811 = arith.divf %809, %810 : vector<2x128xf32>
    %812 = vector.extract_strided_slice %805 {offsets = [0, 128], sizes = [2, 128], strides = [1, 1]} : vector<2x256xf32> to vector<2x128xf32>
    %813 = math.tanh %812 : vector<2x128xf32>
    %814 = arith.subf %813, %778 : vector<2x128xf32>
    %815 = arith.mulf %811, %814 : vector<2x128xf32>
    %816 = arith.addf %778, %815 : vector<2x128xf32>
    %817 = arith.truncf %791 : vector<2x128xf32> to vector<2x128xbf16>
    %c0_196 = arith.constant 0 : index
    %c0_197 = arith.constant 0 : index
    %818 = vector.load %arg9[%c0_196, %c0_197] : memref<128x256xbf16, #tpu.memory_space<vmem>>, vector<128x256xbf16>
    %cst_198 = arith.constant dense<0.000000e+00> : vector<2x256xf32>
    %819 = tpu.matmul %817, %818, %cst_198 {dimension_numbers = #tpu.dot_dimension_numbers<[1], [0], [0], [1], [0, 0, 1, 1], [], []>} : vector<2x128xbf16>, vector<128x256xbf16>, vector<2x256xf32> -> vector<2x256xf32>
    %820 = vector.extract_strided_slice %819 {offsets = [0, 0], sizes = [2, 128], strides = [1, 1]} : vector<2x256xf32> to vector<2x128xf32>
    %821 = arith.negf %820 : vector<2x128xf32>
    %822 = math.exp %821 : vector<2x128xf32>
    %cst_199 = arith.constant 1.000000e+00 : f32
    %823 = vector.broadcast %cst_199 : f32 to vector<2x128xf32>
    %824 = arith.addf %823, %822 : vector<2x128xf32>
    %825 = arith.divf %823, %824 : vector<2x128xf32>
    %826 = vector.extract_strided_slice %819 {offsets = [0, 128], sizes = [2, 128], strides = [1, 1]} : vector<2x256xf32> to vector<2x128xf32>
    %827 = math.tanh %826 : vector<2x128xf32>
    %828 = arith.subf %827, %791 : vector<2x128xf32>
    %829 = arith.mulf %825, %828 : vector<2x128xf32>
    %830 = arith.addf %791, %829 : vector<2x128xf32>
    %831 = arith.truncf %816 : vector<2x128xf32> to vector<2x128xbf16>
    %c0_200 = arith.constant 0 : index
    %c0_201 = arith.constant 0 : index
    %832 = vector.load %arg10[%c0_200, %c0_201] : memref<128x512xbf16, #tpu.memory_space<vmem>>, vector<128x512xbf16>
    %cst_202 = arith.constant dense<0.000000e+00> : vector<2x512xf32>
    %833 = tpu.matmul %831, %832, %cst_202 {dimension_numbers = #tpu.dot_dimension_numbers<[1], [0], [0], [1], [0, 0, 1, 1], [], []>} : vector<2x128xbf16>, vector<128x512xbf16>, vector<2x512xf32> -> vector<2x512xf32>
    %834 = vector.extract_strided_slice %833 {offsets = [0, 0], sizes = [2, 256], strides = [1, 1]} : vector<2x512xf32> to vector<2x256xf32>
    %835 = vector.extract_strided_slice %834 {offsets = [0, 0], sizes = [2, 128], strides = [1, 1]} : vector<2x256xf32> to vector<2x128xf32>
    %836 = arith.negf %835 : vector<2x128xf32>
    %837 = math.exp %836 : vector<2x128xf32>
    %cst_203 = arith.constant 1.000000e+00 : f32
    %838 = vector.broadcast %cst_203 : f32 to vector<2x128xf32>
    %839 = arith.addf %838, %837 : vector<2x128xf32>
    %840 = arith.divf %838, %839 : vector<2x128xf32>
    %841 = vector.extract_strided_slice %834 {offsets = [0, 128], sizes = [2, 128], strides = [1, 1]} : vector<2x256xf32> to vector<2x128xf32>
    %842 = arith.negf %841 : vector<2x128xf32>
    %843 = math.exp %842 : vector<2x128xf32>
    %cst_204 = arith.constant 1.000000e+00 : f32
    %844 = vector.broadcast %cst_204 : f32 to vector<2x128xf32>
    %845 = arith.addf %844, %843 : vector<2x128xf32>
    %846 = arith.divf %844, %845 : vector<2x128xf32>
    %847 = arith.subf %846, %816 : vector<2x128xf32>
    %848 = arith.mulf %840, %847 : vector<2x128xf32>
    %849 = arith.addf %816, %848 : vector<2x128xf32>
    %850 = vector.extract_strided_slice %833 {offsets = [0, 256], sizes = [2, 256], strides = [1, 1]} : vector<2x512xf32> to vector<2x256xf32>
    %851 = vector.extract_strided_slice %850 {offsets = [0, 0], sizes = [2, 128], strides = [1, 1]} : vector<2x256xf32> to vector<2x128xf32>
    %852 = arith.negf %851 : vector<2x128xf32>
    %853 = math.exp %852 : vector<2x128xf32>
    %cst_205 = arith.constant 1.000000e+00 : f32
    %854 = vector.broadcast %cst_205 : f32 to vector<2x128xf32>
    %855 = arith.addf %854, %853 : vector<2x128xf32>
    %856 = arith.divf %854, %855 : vector<2x128xf32>
    %857 = vector.extract_strided_slice %850 {offsets = [0, 128], sizes = [2, 128], strides = [1, 1]} : vector<2x256xf32> to vector<2x128xf32>
    %cst_206 = arith.constant 0.000000e+00 : f32
    %858 = vector.broadcast %cst_206 : f32 to vector<2x128xf32>
    %859 = arith.maximumf %857, %858 : vector<2x128xf32>
    %860 = arith.subf %859, %816 : vector<2x128xf32>
    %861 = arith.mulf %856, %860 : vector<2x128xf32>
    %862 = arith.addf %816, %861 : vector<2x128xf32>
    %863 = arith.addf %762, %778 : vector<2x128xf32>
    %864 = arith.addf %863, %791 : vector<2x128xf32>
    %865 = arith.addf %864, %802 : vector<2x128xf32>
    %866 = arith.addf %865, %816 : vector<2x128xf32>
    %867 = arith.addf %866, %849 : vector<2x128xf32>
    %868 = arith.addf %867, %830 : vector<2x128xf32>
    %869 = arith.addf %868, %862 : vector<2x128xf32>
    %cst_207 = arith.constant 1.250000e-01 : f32
    %870 = vector.broadcast %cst_207 : f32 to vector<2x128xf32>
    %871 = arith.mulf %869, %870 : vector<2x128xf32>
    %872 = vector.extract_strided_slice %12 {offsets = [12, 0], sizes = [2, 256], strides = [1, 1]} : vector<16x256xf32> to vector<2x256xf32>
    %873 = arith.truncf %871 : vector<2x128xf32> to vector<2x128xbf16>
    %c0_208 = arith.constant 0 : index
    %c0_209 = arith.constant 0 : index
    %874 = vector.load %arg5[%c0_208, %c0_209] : memref<128x256xbf16, #tpu.memory_space<vmem>>, vector<128x256xbf16>
    %cst_210 = arith.constant dense<0.000000e+00> : vector<2x256xf32>
    %875 = tpu.matmul %873, %874, %cst_210 {dimension_numbers = #tpu.dot_dimension_numbers<[1], [0], [0], [1], [0, 0, 1, 1], [], []>} : vector<2x128xbf16>, vector<128x256xbf16>, vector<2x256xf32> -> vector<2x256xf32>
    %876 = arith.addf %872, %875 : vector<2x256xf32>
    %877 = vector.extract_strided_slice %876 {offsets = [0, 0], sizes = [2, 128], strides = [1, 1]} : vector<2x256xf32> to vector<2x128xf32>
    %878 = arith.negf %877 : vector<2x128xf32>
    %879 = math.exp %878 : vector<2x128xf32>
    %cst_211 = arith.constant 1.000000e+00 : f32
    %880 = vector.broadcast %cst_211 : f32 to vector<2x128xf32>
    %881 = arith.addf %880, %879 : vector<2x128xf32>
    %882 = arith.divf %880, %881 : vector<2x128xf32>
    %883 = vector.extract_strided_slice %876 {offsets = [0, 128], sizes = [2, 128], strides = [1, 1]} : vector<2x256xf32> to vector<2x128xf32>
    %884 = math.tanh %883 : vector<2x128xf32>
    %885 = arith.subf %884, %871 : vector<2x128xf32>
    %886 = arith.mulf %882, %885 : vector<2x128xf32>
    %887 = arith.addf %871, %886 : vector<2x128xf32>
    %888 = arith.truncf %887 : vector<2x128xf32> to vector<2x128xbf16>
    %c0_212 = arith.constant 0 : index
    %c0_213 = arith.constant 0 : index
    %889 = vector.load %arg6[%c0_212, %c0_213] : memref<128x256xbf16, #tpu.memory_space<vmem>>, vector<128x256xbf16>
    %cst_214 = arith.constant dense<0.000000e+00> : vector<2x256xf32>
    %890 = tpu.matmul %888, %889, %cst_214 {dimension_numbers = #tpu.dot_dimension_numbers<[1], [0], [0], [1], [0, 0, 1, 1], [], []>} : vector<2x128xbf16>, vector<128x256xbf16>, vector<2x256xf32> -> vector<2x256xf32>
    %891 = vector.extract_strided_slice %890 {offsets = [0, 0], sizes = [2, 128], strides = [1, 1]} : vector<2x256xf32> to vector<2x128xf32>
    %892 = arith.negf %891 : vector<2x128xf32>
    %893 = math.exp %892 : vector<2x128xf32>
    %cst_215 = arith.constant 1.000000e+00 : f32
    %894 = vector.broadcast %cst_215 : f32 to vector<2x128xf32>
    %895 = arith.addf %894, %893 : vector<2x128xf32>
    %896 = arith.divf %894, %895 : vector<2x128xf32>
    %897 = vector.extract_strided_slice %890 {offsets = [0, 128], sizes = [2, 128], strides = [1, 1]} : vector<2x256xf32> to vector<2x128xf32>
    %898 = arith.negf %897 : vector<2x128xf32>
    %899 = math.exp %898 : vector<2x128xf32>
    %cst_216 = arith.constant 1.000000e+00 : f32
    %900 = vector.broadcast %cst_216 : f32 to vector<2x128xf32>
    %901 = arith.addf %900, %899 : vector<2x128xf32>
    %902 = arith.divf %900, %901 : vector<2x128xf32>
    %903 = arith.subf %902, %887 : vector<2x128xf32>
    %904 = arith.mulf %896, %903 : vector<2x128xf32>
    %905 = arith.addf %887, %904 : vector<2x128xf32>
    %906 = arith.truncf %905 : vector<2x128xf32> to vector<2x128xbf16>
    %c0_217 = arith.constant 0 : index
    %c0_218 = arith.constant 0 : index
    %907 = vector.load %arg7[%c0_217, %c0_218] : memref<128x768xbf16, #tpu.memory_space<vmem>>, vector<128x768xbf16>
    %cst_219 = arith.constant dense<0.000000e+00> : vector<2x768xf32>
    %908 = tpu.matmul %906, %907, %cst_219 {dimension_numbers = #tpu.dot_dimension_numbers<[1], [0], [0], [1], [0, 0, 1, 1], [], []>} : vector<2x128xbf16>, vector<128x768xbf16>, vector<2x768xf32> -> vector<2x768xf32>
    %909 = vector.extract_strided_slice %908 {offsets = [0, 0], sizes = [2, 256], strides = [1, 1]} : vector<2x768xf32> to vector<2x256xf32>
    %910 = vector.extract_strided_slice %909 {offsets = [0, 0], sizes = [2, 128], strides = [1, 1]} : vector<2x256xf32> to vector<2x128xf32>
    %911 = arith.negf %910 : vector<2x128xf32>
    %912 = math.exp %911 : vector<2x128xf32>
    %cst_220 = arith.constant 1.000000e+00 : f32
    %913 = vector.broadcast %cst_220 : f32 to vector<2x128xf32>
    %914 = arith.addf %913, %912 : vector<2x128xf32>
    %915 = arith.divf %913, %914 : vector<2x128xf32>
    %916 = vector.extract_strided_slice %909 {offsets = [0, 128], sizes = [2, 128], strides = [1, 1]} : vector<2x256xf32> to vector<2x128xf32>
    %cst_221 = arith.constant 0.000000e+00 : f32
    %917 = vector.broadcast %cst_221 : f32 to vector<2x128xf32>
    %918 = arith.maximumf %916, %917 : vector<2x128xf32>
    %919 = arith.subf %918, %905 : vector<2x128xf32>
    %920 = arith.mulf %915, %919 : vector<2x128xf32>
    %921 = arith.addf %905, %920 : vector<2x128xf32>
    %922 = vector.extract_strided_slice %908 {offsets = [0, 256], sizes = [2, 256], strides = [1, 1]} : vector<2x768xf32> to vector<2x256xf32>
    %923 = vector.extract_strided_slice %922 {offsets = [0, 0], sizes = [2, 128], strides = [1, 1]} : vector<2x256xf32> to vector<2x128xf32>
    %924 = arith.negf %923 : vector<2x128xf32>
    %925 = math.exp %924 : vector<2x128xf32>
    %cst_222 = arith.constant 1.000000e+00 : f32
    %926 = vector.broadcast %cst_222 : f32 to vector<2x128xf32>
    %927 = arith.addf %926, %925 : vector<2x128xf32>
    %928 = arith.divf %926, %927 : vector<2x128xf32>
    %929 = vector.extract_strided_slice %922 {offsets = [0, 128], sizes = [2, 128], strides = [1, 1]} : vector<2x256xf32> to vector<2x128xf32>
    %cst_223 = arith.constant 0.000000e+00 : f32
    %930 = vector.broadcast %cst_223 : f32 to vector<2x128xf32>
    %931 = arith.maximumf %929, %930 : vector<2x128xf32>
    %932 = arith.subf %931, %905 : vector<2x128xf32>
    %933 = arith.mulf %928, %932 : vector<2x128xf32>
    %934 = arith.addf %905, %933 : vector<2x128xf32>
    %935 = vector.extract_strided_slice %908 {offsets = [0, 512], sizes = [2, 256], strides = [1, 1]} : vector<2x768xf32> to vector<2x256xf32>
    %936 = vector.extract_strided_slice %935 {offsets = [0, 0], sizes = [2, 128], strides = [1, 1]} : vector<2x256xf32> to vector<2x128xf32>
    %937 = arith.negf %936 : vector<2x128xf32>
    %938 = math.exp %937 : vector<2x128xf32>
    %cst_224 = arith.constant 1.000000e+00 : f32
    %939 = vector.broadcast %cst_224 : f32 to vector<2x128xf32>
    %940 = arith.addf %939, %938 : vector<2x128xf32>
    %941 = arith.divf %939, %940 : vector<2x128xf32>
    %942 = vector.extract_strided_slice %935 {offsets = [0, 128], sizes = [2, 128], strides = [1, 1]} : vector<2x256xf32> to vector<2x128xf32>
    %943 = arith.subf %942, %905 : vector<2x128xf32>
    %944 = arith.mulf %941, %943 : vector<2x128xf32>
    %945 = arith.addf %905, %944 : vector<2x128xf32>
    %946 = arith.truncf %921 : vector<2x128xf32> to vector<2x128xbf16>
    %c0_225 = arith.constant 0 : index
    %c0_226 = arith.constant 0 : index
    %947 = vector.load %arg8[%c0_225, %c0_226] : memref<128x256xbf16, #tpu.memory_space<vmem>>, vector<128x256xbf16>
    %cst_227 = arith.constant dense<0.000000e+00> : vector<2x256xf32>
    %948 = tpu.matmul %946, %947, %cst_227 {dimension_numbers = #tpu.dot_dimension_numbers<[1], [0], [0], [1], [0, 0, 1, 1], [], []>} : vector<2x128xbf16>, vector<128x256xbf16>, vector<2x256xf32> -> vector<2x256xf32>
    %949 = vector.extract_strided_slice %948 {offsets = [0, 0], sizes = [2, 128], strides = [1, 1]} : vector<2x256xf32> to vector<2x128xf32>
    %950 = arith.negf %949 : vector<2x128xf32>
    %951 = math.exp %950 : vector<2x128xf32>
    %cst_228 = arith.constant 1.000000e+00 : f32
    %952 = vector.broadcast %cst_228 : f32 to vector<2x128xf32>
    %953 = arith.addf %952, %951 : vector<2x128xf32>
    %954 = arith.divf %952, %953 : vector<2x128xf32>
    %955 = vector.extract_strided_slice %948 {offsets = [0, 128], sizes = [2, 128], strides = [1, 1]} : vector<2x256xf32> to vector<2x128xf32>
    %956 = math.tanh %955 : vector<2x128xf32>
    %957 = arith.subf %956, %921 : vector<2x128xf32>
    %958 = arith.mulf %954, %957 : vector<2x128xf32>
    %959 = arith.addf %921, %958 : vector<2x128xf32>
    %960 = arith.truncf %934 : vector<2x128xf32> to vector<2x128xbf16>
    %c0_229 = arith.constant 0 : index
    %c0_230 = arith.constant 0 : index
    %961 = vector.load %arg9[%c0_229, %c0_230] : memref<128x256xbf16, #tpu.memory_space<vmem>>, vector<128x256xbf16>
    %cst_231 = arith.constant dense<0.000000e+00> : vector<2x256xf32>
    %962 = tpu.matmul %960, %961, %cst_231 {dimension_numbers = #tpu.dot_dimension_numbers<[1], [0], [0], [1], [0, 0, 1, 1], [], []>} : vector<2x128xbf16>, vector<128x256xbf16>, vector<2x256xf32> -> vector<2x256xf32>
    %963 = vector.extract_strided_slice %962 {offsets = [0, 0], sizes = [2, 128], strides = [1, 1]} : vector<2x256xf32> to vector<2x128xf32>
    %964 = arith.negf %963 : vector<2x128xf32>
    %965 = math.exp %964 : vector<2x128xf32>
    %cst_232 = arith.constant 1.000000e+00 : f32
    %966 = vector.broadcast %cst_232 : f32 to vector<2x128xf32>
    %967 = arith.addf %966, %965 : vector<2x128xf32>
    %968 = arith.divf %966, %967 : vector<2x128xf32>
    %969 = vector.extract_strided_slice %962 {offsets = [0, 128], sizes = [2, 128], strides = [1, 1]} : vector<2x256xf32> to vector<2x128xf32>
    %970 = math.tanh %969 : vector<2x128xf32>
    %971 = arith.subf %970, %934 : vector<2x128xf32>
    %972 = arith.mulf %968, %971 : vector<2x128xf32>
    %973 = arith.addf %934, %972 : vector<2x128xf32>
    %974 = arith.truncf %959 : vector<2x128xf32> to vector<2x128xbf16>
    %c0_233 = arith.constant 0 : index
    %c0_234 = arith.constant 0 : index
    %975 = vector.load %arg10[%c0_233, %c0_234] : memref<128x512xbf16, #tpu.memory_space<vmem>>, vector<128x512xbf16>
    %cst_235 = arith.constant dense<0.000000e+00> : vector<2x512xf32>
    %976 = tpu.matmul %974, %975, %cst_235 {dimension_numbers = #tpu.dot_dimension_numbers<[1], [0], [0], [1], [0, 0, 1, 1], [], []>} : vector<2x128xbf16>, vector<128x512xbf16>, vector<2x512xf32> -> vector<2x512xf32>
    %977 = vector.extract_strided_slice %976 {offsets = [0, 0], sizes = [2, 256], strides = [1, 1]} : vector<2x512xf32> to vector<2x256xf32>
    %978 = vector.extract_strided_slice %977 {offsets = [0, 0], sizes = [2, 128], strides = [1, 1]} : vector<2x256xf32> to vector<2x128xf32>
    %979 = arith.negf %978 : vector<2x128xf32>
    %980 = math.exp %979 : vector<2x128xf32>
    %cst_236 = arith.constant 1.000000e+00 : f32
    %981 = vector.broadcast %cst_236 : f32 to vector<2x128xf32>
    %982 = arith.addf %981, %980 : vector<2x128xf32>
    %983 = arith.divf %981, %982 : vector<2x128xf32>
    %984 = vector.extract_strided_slice %977 {offsets = [0, 128], sizes = [2, 128], strides = [1, 1]} : vector<2x256xf32> to vector<2x128xf32>
    %985 = arith.negf %984 : vector<2x128xf32>
    %986 = math.exp %985 : vector<2x128xf32>
    %cst_237 = arith.constant 1.000000e+00 : f32
    %987 = vector.broadcast %cst_237 : f32 to vector<2x128xf32>
    %988 = arith.addf %987, %986 : vector<2x128xf32>
    %989 = arith.divf %987, %988 : vector<2x128xf32>
    %990 = arith.subf %989, %959 : vector<2x128xf32>
    %991 = arith.mulf %983, %990 : vector<2x128xf32>
    %992 = arith.addf %959, %991 : vector<2x128xf32>
    %993 = vector.extract_strided_slice %976 {offsets = [0, 256], sizes = [2, 256], strides = [1, 1]} : vector<2x512xf32> to vector<2x256xf32>
    %994 = vector.extract_strided_slice %993 {offsets = [0, 0], sizes = [2, 128], strides = [1, 1]} : vector<2x256xf32> to vector<2x128xf32>
    %995 = arith.negf %994 : vector<2x128xf32>
    %996 = math.exp %995 : vector<2x128xf32>
    %cst_238 = arith.constant 1.000000e+00 : f32
    %997 = vector.broadcast %cst_238 : f32 to vector<2x128xf32>
    %998 = arith.addf %997, %996 : vector<2x128xf32>
    %999 = arith.divf %997, %998 : vector<2x128xf32>
    %1000 = vector.extract_strided_slice %993 {offsets = [0, 128], sizes = [2, 128], strides = [1, 1]} : vector<2x256xf32> to vector<2x128xf32>
    %cst_239 = arith.constant 0.000000e+00 : f32
    %1001 = vector.broadcast %cst_239 : f32 to vector<2x128xf32>
    %1002 = arith.maximumf %1000, %1001 : vector<2x128xf32>
    %1003 = arith.subf %1002, %959 : vector<2x128xf32>
    %1004 = arith.mulf %999, %1003 : vector<2x128xf32>
    %1005 = arith.addf %959, %1004 : vector<2x128xf32>
    %1006 = arith.addf %905, %921 : vector<2x128xf32>
    %1007 = arith.addf %1006, %934 : vector<2x128xf32>
    %1008 = arith.addf %1007, %945 : vector<2x128xf32>
    %1009 = arith.addf %1008, %959 : vector<2x128xf32>
    %1010 = arith.addf %1009, %992 : vector<2x128xf32>
    %1011 = arith.addf %1010, %973 : vector<2x128xf32>
    %1012 = arith.addf %1011, %1005 : vector<2x128xf32>
    %cst_240 = arith.constant 1.250000e-01 : f32
    %1013 = vector.broadcast %cst_240 : f32 to vector<2x128xf32>
    %1014 = arith.mulf %1012, %1013 : vector<2x128xf32>
    %1015 = vector.extract_strided_slice %12 {offsets = [14, 0], sizes = [2, 256], strides = [1, 1]} : vector<16x256xf32> to vector<2x256xf32>
    %1016 = arith.truncf %1014 : vector<2x128xf32> to vector<2x128xbf16>
    %c0_241 = arith.constant 0 : index
    %c0_242 = arith.constant 0 : index
    %1017 = vector.load %arg5[%c0_241, %c0_242] : memref<128x256xbf16, #tpu.memory_space<vmem>>, vector<128x256xbf16>
    %cst_243 = arith.constant dense<0.000000e+00> : vector<2x256xf32>
    %1018 = tpu.matmul %1016, %1017, %cst_243 {dimension_numbers = #tpu.dot_dimension_numbers<[1], [0], [0], [1], [0, 0, 1, 1], [], []>} : vector<2x128xbf16>, vector<128x256xbf16>, vector<2x256xf32> -> vector<2x256xf32>
    %1019 = arith.addf %1015, %1018 : vector<2x256xf32>
    %1020 = vector.extract_strided_slice %1019 {offsets = [0, 0], sizes = [2, 128], strides = [1, 1]} : vector<2x256xf32> to vector<2x128xf32>
    %1021 = arith.negf %1020 : vector<2x128xf32>
    %1022 = math.exp %1021 : vector<2x128xf32>
    %cst_244 = arith.constant 1.000000e+00 : f32
    %1023 = vector.broadcast %cst_244 : f32 to vector<2x128xf32>
    %1024 = arith.addf %1023, %1022 : vector<2x128xf32>
    %1025 = arith.divf %1023, %1024 : vector<2x128xf32>
    %1026 = vector.extract_strided_slice %1019 {offsets = [0, 128], sizes = [2, 128], strides = [1, 1]} : vector<2x256xf32> to vector<2x128xf32>
    %1027 = math.tanh %1026 : vector<2x128xf32>
    %1028 = arith.subf %1027, %1014 : vector<2x128xf32>
    %1029 = arith.mulf %1025, %1028 : vector<2x128xf32>
    %1030 = arith.addf %1014, %1029 : vector<2x128xf32>
    %1031 = arith.truncf %1030 : vector<2x128xf32> to vector<2x128xbf16>
    %c0_245 = arith.constant 0 : index
    %c0_246 = arith.constant 0 : index
    %1032 = vector.load %arg6[%c0_245, %c0_246] : memref<128x256xbf16, #tpu.memory_space<vmem>>, vector<128x256xbf16>
    %cst_247 = arith.constant dense<0.000000e+00> : vector<2x256xf32>
    %1033 = tpu.matmul %1031, %1032, %cst_247 {dimension_numbers = #tpu.dot_dimension_numbers<[1], [0], [0], [1], [0, 0, 1, 1], [], []>} : vector<2x128xbf16>, vector<128x256xbf16>, vector<2x256xf32> -> vector<2x256xf32>
    %1034 = vector.extract_strided_slice %1033 {offsets = [0, 0], sizes = [2, 128], strides = [1, 1]} : vector<2x256xf32> to vector<2x128xf32>
    %1035 = arith.negf %1034 : vector<2x128xf32>
    %1036 = math.exp %1035 : vector<2x128xf32>
    %cst_248 = arith.constant 1.000000e+00 : f32
    %1037 = vector.broadcast %cst_248 : f32 to vector<2x128xf32>
    %1038 = arith.addf %1037, %1036 : vector<2x128xf32>
    %1039 = arith.divf %1037, %1038 : vector<2x128xf32>
    %1040 = vector.extract_strided_slice %1033 {offsets = [0, 128], sizes = [2, 128], strides = [1, 1]} : vector<2x256xf32> to vector<2x128xf32>
    %1041 = arith.negf %1040 : vector<2x128xf32>
    %1042 = math.exp %1041 : vector<2x128xf32>
    %cst_249 = arith.constant 1.000000e+00 : f32
    %1043 = vector.broadcast %cst_249 : f32 to vector<2x128xf32>
    %1044 = arith.addf %1043, %1042 : vector<2x128xf32>
    %1045 = arith.divf %1043, %1044 : vector<2x128xf32>
    %1046 = arith.subf %1045, %1030 : vector<2x128xf32>
    %1047 = arith.mulf %1039, %1046 : vector<2x128xf32>
    %1048 = arith.addf %1030, %1047 : vector<2x128xf32>
    %1049 = arith.truncf %1048 : vector<2x128xf32> to vector<2x128xbf16>
    %c0_250 = arith.constant 0 : index
    %c0_251 = arith.constant 0 : index
    %1050 = vector.load %arg7[%c0_250, %c0_251] : memref<128x768xbf16, #tpu.memory_space<vmem>>, vector<128x768xbf16>
    %cst_252 = arith.constant dense<0.000000e+00> : vector<2x768xf32>
    %1051 = tpu.matmul %1049, %1050, %cst_252 {dimension_numbers = #tpu.dot_dimension_numbers<[1], [0], [0], [1], [0, 0, 1, 1], [], []>} : vector<2x128xbf16>, vector<128x768xbf16>, vector<2x768xf32> -> vector<2x768xf32>
    %1052 = vector.extract_strided_slice %1051 {offsets = [0, 0], sizes = [2, 256], strides = [1, 1]} : vector<2x768xf32> to vector<2x256xf32>
    %1053 = vector.extract_strided_slice %1052 {offsets = [0, 0], sizes = [2, 128], strides = [1, 1]} : vector<2x256xf32> to vector<2x128xf32>
    %1054 = arith.negf %1053 : vector<2x128xf32>
    %1055 = math.exp %1054 : vector<2x128xf32>
    %cst_253 = arith.constant 1.000000e+00 : f32
    %1056 = vector.broadcast %cst_253 : f32 to vector<2x128xf32>
    %1057 = arith.addf %1056, %1055 : vector<2x128xf32>
    %1058 = arith.divf %1056, %1057 : vector<2x128xf32>
    %1059 = vector.extract_strided_slice %1052 {offsets = [0, 128], sizes = [2, 128], strides = [1, 1]} : vector<2x256xf32> to vector<2x128xf32>
    %cst_254 = arith.constant 0.000000e+00 : f32
    %1060 = vector.broadcast %cst_254 : f32 to vector<2x128xf32>
    %1061 = arith.maximumf %1059, %1060 : vector<2x128xf32>
    %1062 = arith.subf %1061, %1048 : vector<2x128xf32>
    %1063 = arith.mulf %1058, %1062 : vector<2x128xf32>
    %1064 = arith.addf %1048, %1063 : vector<2x128xf32>
    %1065 = vector.extract_strided_slice %1051 {offsets = [0, 256], sizes = [2, 256], strides = [1, 1]} : vector<2x768xf32> to vector<2x256xf32>
    %1066 = vector.extract_strided_slice %1065 {offsets = [0, 0], sizes = [2, 128], strides = [1, 1]} : vector<2x256xf32> to vector<2x128xf32>
    %1067 = arith.negf %1066 : vector<2x128xf32>
    %1068 = math.exp %1067 : vector<2x128xf32>
    %cst_255 = arith.constant 1.000000e+00 : f32
    %1069 = vector.broadcast %cst_255 : f32 to vector<2x128xf32>
    %1070 = arith.addf %1069, %1068 : vector<2x128xf32>
    %1071 = arith.divf %1069, %1070 : vector<2x128xf32>
    %1072 = vector.extract_strided_slice %1065 {offsets = [0, 128], sizes = [2, 128], strides = [1, 1]} : vector<2x256xf32> to vector<2x128xf32>
    %cst_256 = arith.constant 0.000000e+00 : f32
    %1073 = vector.broadcast %cst_256 : f32 to vector<2x128xf32>
    %1074 = arith.maximumf %1072, %1073 : vector<2x128xf32>
    %1075 = arith.subf %1074, %1048 : vector<2x128xf32>
    %1076 = arith.mulf %1071, %1075 : vector<2x128xf32>
    %1077 = arith.addf %1048, %1076 : vector<2x128xf32>
    %1078 = vector.extract_strided_slice %1051 {offsets = [0, 512], sizes = [2, 256], strides = [1, 1]} : vector<2x768xf32> to vector<2x256xf32>
    %1079 = vector.extract_strided_slice %1078 {offsets = [0, 0], sizes = [2, 128], strides = [1, 1]} : vector<2x256xf32> to vector<2x128xf32>
    %1080 = arith.negf %1079 : vector<2x128xf32>
    %1081 = math.exp %1080 : vector<2x128xf32>
    %cst_257 = arith.constant 1.000000e+00 : f32
    %1082 = vector.broadcast %cst_257 : f32 to vector<2x128xf32>
    %1083 = arith.addf %1082, %1081 : vector<2x128xf32>
    %1084 = arith.divf %1082, %1083 : vector<2x128xf32>
    %1085 = vector.extract_strided_slice %1078 {offsets = [0, 128], sizes = [2, 128], strides = [1, 1]} : vector<2x256xf32> to vector<2x128xf32>
    %1086 = arith.subf %1085, %1048 : vector<2x128xf32>
    %1087 = arith.mulf %1084, %1086 : vector<2x128xf32>
    %1088 = arith.addf %1048, %1087 : vector<2x128xf32>
    %1089 = arith.truncf %1064 : vector<2x128xf32> to vector<2x128xbf16>
    %c0_258 = arith.constant 0 : index
    %c0_259 = arith.constant 0 : index
    %1090 = vector.load %arg8[%c0_258, %c0_259] : memref<128x256xbf16, #tpu.memory_space<vmem>>, vector<128x256xbf16>
    %cst_260 = arith.constant dense<0.000000e+00> : vector<2x256xf32>
    %1091 = tpu.matmul %1089, %1090, %cst_260 {dimension_numbers = #tpu.dot_dimension_numbers<[1], [0], [0], [1], [0, 0, 1, 1], [], []>} : vector<2x128xbf16>, vector<128x256xbf16>, vector<2x256xf32> -> vector<2x256xf32>
    %1092 = vector.extract_strided_slice %1091 {offsets = [0, 0], sizes = [2, 128], strides = [1, 1]} : vector<2x256xf32> to vector<2x128xf32>
    %1093 = arith.negf %1092 : vector<2x128xf32>
    %1094 = math.exp %1093 : vector<2x128xf32>
    %cst_261 = arith.constant 1.000000e+00 : f32
    %1095 = vector.broadcast %cst_261 : f32 to vector<2x128xf32>
    %1096 = arith.addf %1095, %1094 : vector<2x128xf32>
    %1097 = arith.divf %1095, %1096 : vector<2x128xf32>
    %1098 = vector.extract_strided_slice %1091 {offsets = [0, 128], sizes = [2, 128], strides = [1, 1]} : vector<2x256xf32> to vector<2x128xf32>
    %1099 = math.tanh %1098 : vector<2x128xf32>
    %1100 = arith.subf %1099, %1064 : vector<2x128xf32>
    %1101 = arith.mulf %1097, %1100 : vector<2x128xf32>
    %1102 = arith.addf %1064, %1101 : vector<2x128xf32>
    %1103 = arith.truncf %1077 : vector<2x128xf32> to vector<2x128xbf16>
    %c0_262 = arith.constant 0 : index
    %c0_263 = arith.constant 0 : index
    %1104 = vector.load %arg9[%c0_262, %c0_263] : memref<128x256xbf16, #tpu.memory_space<vmem>>, vector<128x256xbf16>
    %cst_264 = arith.constant dense<0.000000e+00> : vector<2x256xf32>
    %1105 = tpu.matmul %1103, %1104, %cst_264 {dimension_numbers = #tpu.dot_dimension_numbers<[1], [0], [0], [1], [0, 0, 1, 1], [], []>} : vector<2x128xbf16>, vector<128x256xbf16>, vector<2x256xf32> -> vector<2x256xf32>
    %1106 = vector.extract_strided_slice %1105 {offsets = [0, 0], sizes = [2, 128], strides = [1, 1]} : vector<2x256xf32> to vector<2x128xf32>
    %1107 = arith.negf %1106 : vector<2x128xf32>
    %1108 = math.exp %1107 : vector<2x128xf32>
    %cst_265 = arith.constant 1.000000e+00 : f32
    %1109 = vector.broadcast %cst_265 : f32 to vector<2x128xf32>
    %1110 = arith.addf %1109, %1108 : vector<2x128xf32>
    %1111 = arith.divf %1109, %1110 : vector<2x128xf32>
    %1112 = vector.extract_strided_slice %1105 {offsets = [0, 128], sizes = [2, 128], strides = [1, 1]} : vector<2x256xf32> to vector<2x128xf32>
    %1113 = math.tanh %1112 : vector<2x128xf32>
    %1114 = arith.subf %1113, %1077 : vector<2x128xf32>
    %1115 = arith.mulf %1111, %1114 : vector<2x128xf32>
    %1116 = arith.addf %1077, %1115 : vector<2x128xf32>
    %1117 = arith.truncf %1102 : vector<2x128xf32> to vector<2x128xbf16>
    %c0_266 = arith.constant 0 : index
    %c0_267 = arith.constant 0 : index
    %1118 = vector.load %arg10[%c0_266, %c0_267] : memref<128x512xbf16, #tpu.memory_space<vmem>>, vector<128x512xbf16>
    %cst_268 = arith.constant dense<0.000000e+00> : vector<2x512xf32>
    %1119 = tpu.matmul %1117, %1118, %cst_268 {dimension_numbers = #tpu.dot_dimension_numbers<[1], [0], [0], [1], [0, 0, 1, 1], [], []>} : vector<2x128xbf16>, vector<128x512xbf16>, vector<2x512xf32> -> vector<2x512xf32>
    %1120 = vector.extract_strided_slice %1119 {offsets = [0, 0], sizes = [2, 256], strides = [1, 1]} : vector<2x512xf32> to vector<2x256xf32>
    %1121 = vector.extract_strided_slice %1120 {offsets = [0, 0], sizes = [2, 128], strides = [1, 1]} : vector<2x256xf32> to vector<2x128xf32>
    %1122 = arith.negf %1121 : vector<2x128xf32>
    %1123 = math.exp %1122 : vector<2x128xf32>
    %cst_269 = arith.constant 1.000000e+00 : f32
    %1124 = vector.broadcast %cst_269 : f32 to vector<2x128xf32>
    %1125 = arith.addf %1124, %1123 : vector<2x128xf32>
    %1126 = arith.divf %1124, %1125 : vector<2x128xf32>
    %1127 = vector.extract_strided_slice %1120 {offsets = [0, 128], sizes = [2, 128], strides = [1, 1]} : vector<2x256xf32> to vector<2x128xf32>
    %1128 = arith.negf %1127 : vector<2x128xf32>
    %1129 = math.exp %1128 : vector<2x128xf32>
    %cst_270 = arith.constant 1.000000e+00 : f32
    %1130 = vector.broadcast %cst_270 : f32 to vector<2x128xf32>
    %1131 = arith.addf %1130, %1129 : vector<2x128xf32>
    %1132 = arith.divf %1130, %1131 : vector<2x128xf32>
    %1133 = arith.subf %1132, %1102 : vector<2x128xf32>
    %1134 = arith.mulf %1126, %1133 : vector<2x128xf32>
    %1135 = arith.addf %1102, %1134 : vector<2x128xf32>
    %1136 = vector.extract_strided_slice %1119 {offsets = [0, 256], sizes = [2, 256], strides = [1, 1]} : vector<2x512xf32> to vector<2x256xf32>
    %1137 = vector.extract_strided_slice %1136 {offsets = [0, 0], sizes = [2, 128], strides = [1, 1]} : vector<2x256xf32> to vector<2x128xf32>
    %1138 = arith.negf %1137 : vector<2x128xf32>
    %1139 = math.exp %1138 : vector<2x128xf32>
    %cst_271 = arith.constant 1.000000e+00 : f32
    %1140 = vector.broadcast %cst_271 : f32 to vector<2x128xf32>
    %1141 = arith.addf %1140, %1139 : vector<2x128xf32>
    %1142 = arith.divf %1140, %1141 : vector<2x128xf32>
    %1143 = vector.extract_strided_slice %1136 {offsets = [0, 128], sizes = [2, 128], strides = [1, 1]} : vector<2x256xf32> to vector<2x128xf32>
    %cst_272 = arith.constant 0.000000e+00 : f32
    %1144 = vector.broadcast %cst_272 : f32 to vector<2x128xf32>
    %1145 = arith.maximumf %1143, %1144 : vector<2x128xf32>
    %1146 = arith.subf %1145, %1102 : vector<2x128xf32>
    %1147 = arith.mulf %1142, %1146 : vector<2x128xf32>
    %1148 = arith.addf %1102, %1147 : vector<2x128xf32>
    %1149 = arith.addf %1048, %1064 : vector<2x128xf32>
    %1150 = arith.addf %1149, %1077 : vector<2x128xf32>
    %1151 = arith.addf %1150, %1088 : vector<2x128xf32>
    %1152 = arith.addf %1151, %1102 : vector<2x128xf32>
    %1153 = arith.addf %1152, %1135 : vector<2x128xf32>
    %1154 = arith.addf %1153, %1116 : vector<2x128xf32>
    %1155 = arith.addf %1154, %1148 : vector<2x128xf32>
    %cst_273 = arith.constant 1.250000e-01 : f32
    %1156 = vector.broadcast %cst_273 : f32 to vector<2x128xf32>
    %1157 = arith.mulf %1155, %1156 : vector<2x128xf32>
    %c0_274 = arith.constant 0 : index
    %c0_275 = arith.constant 0 : index
    %1158 = vector.load %arg13[%c0_274, %c0_275] : memref<2x128xf32, #tpu.memory_space<vmem>>, vector<2x128xf32>
    tpu.vector_store %arg13[%c0_274, %c0_275], %1157 {strides = array<i32>} : memref<2x128xf32, #tpu.memory_space<vmem>>, vector<2x128xf32>,
    %1159 = tpu.concatenate %156, %299, %442, %585, %728, %871, %1014, %1157 in 0 : vector<2x128xf32>, vector<2x128xf32>, vector<2x128xf32>, vector<2x128xf32>, vector<2x128xf32>, vector<2x128xf32>, vector<2x128xf32>, vector<2x128xf32> -> vector<16x128xf32>
    %1160 = arith.truncf %1159 : vector<16x128xf32> to vector<16x128xbf16>
    %c0_276 = arith.constant 0 : index
    %c0_277 = arith.constant 0 : index
    %1161 = vector.load %arg2[%c0_276, %c0_277] : memref<128x256xbf16, #tpu.memory_space<vmem>>, vector<128x256xbf16>
    %cst_278 = arith.constant dense<0.000000e+00> : vector<16x256xf32>
    %1162 = tpu.matmul %1160, %1161, %cst_278 {dimension_numbers = #tpu.dot_dimension_numbers<[1], [0], [0], [1], [0, 0, 1, 1], [], []>} : vector<16x128xbf16>, vector<128x256xbf16>, vector<16x256xf32> -> vector<16x256xf32>
    %c0_279 = arith.constant 0 : index
    %c0_280 = arith.constant 0 : index
    %1163 = vector.load %arg11[%c0_279, %c0_280] : memref<1x256xf32, #tpu.memory_space<vmem>>, vector<1x256xf32>
    %1164 = vector.broadcast %1163 : vector<1x256xf32> to vector<16x256xf32>
    %1165 = arith.addf %1162, %1164 : vector<16x256xf32>
    %cst_281 = arith.constant dense<0xFF800000> : vector<16xf32>
    %1166 = vector.multi_reduction <maximumf>, %1165, %cst_281 [1] : vector<16x256xf32> to vector<16xf32>
    %1167 = vector.shape_cast %1166 : vector<16xf32> to vector<16x1xf32>
    %1168 = vector.broadcast %1167 : vector<16x1xf32> to vector<16x256xf32>
    %1169 = arith.subf %1165, %1168 : vector<16x256xf32>
    %1170 = math.exp %1169 : vector<16x256xf32>
    %cst_282 = arith.constant dense<0.000000e+00> : vector<16xf32>
    %1171 = vector.multi_reduction <add>, %1170, %cst_282 [1] : vector<16x256xf32> to vector<16xf32>
    %1172 = vector.shape_cast %1171 : vector<16xf32> to vector<16x1xf32>
    %1173 = math.log %1172 : vector<16x1xf32>
    %1174 = arith.addf %1167, %1173 : vector<16x1xf32>
    %1175 = vector.broadcast %1174 : vector<16x1xf32> to vector<16x256xf32>
    %1176 = arith.subf %1165, %1175 : vector<16x256xf32>
    %c0_283 = arith.constant 0 : index
    %c0_284 = arith.constant 0 : index
    %1177 = vector.load %arg12[%c0_283, %c0_284] : memref<16x256xf32, #tpu.memory_space<vmem>>, vector<16x256xf32>
    tpu.vector_store %arg12[%c0_283, %c0_284], %1176 {strides = array<i32>} : memref<16x256xf32, #tpu.memory_space<vmem>>, vector<16x256xf32>,
    return
  }
}

</mosaic_0001>

<llo_original>
// kernel: tpu_custom_call.1
$region0: #{tpu_custom_call.1}
  #allocation0 [shape = 'u32[]', space=smem, size = 0x4, offset = 0x4, fixed_abs, tag = 'smem constant byte address 0x4 - core index']
  #allocation1 [shape = 'u32[72,128]{1,0:T(1,128)}', space=vmem, size = 0x9000, scoped, tag = 'internal scratch']
  %s0 = inlined_call_operand.vmem [shape: s32[16,1], index: 0, kind: input, shape index: {}]
  %s1 = inlined_call_operand.hbm [shape: bf16[256,128], index: 1, kind: input, shape index: {}]
  %s2 = inlined_call_operand.hbm [shape: bf16[128,256], index: 2, kind: input, shape index: {}]
  %s3 = inlined_call_operand.vmem [shape: f32[2,128], index: 3, kind: input, shape index: {}]
  %s4 = inlined_call_operand.hbm [shape: bf16[128,256], index: 4, kind: input, shape index: {}]
  %s5 = inlined_call_operand.hbm [shape: bf16[128,256], index: 5, kind: input, shape index: {}]
  %s6 = inlined_call_operand.hbm [shape: bf16[128,256], index: 6, kind: input, shape index: {}]
  %s7 = inlined_call_operand.hbm [shape: bf16[128,768], index: 7, kind: input, shape index: {}]
  %s8 = inlined_call_operand.hbm [shape: bf16[128,256], index: 8, kind: input, shape index: {}]
  %s9 = inlined_call_operand.hbm [shape: bf16[128,256], index: 9, kind: input, shape index: {}]
  %s10 = inlined_call_operand.hbm [shape: bf16[128,512], index: 10, kind: input, shape index: {}]
  %s11 = inlined_call_operand.vmem [shape: f32[1,256], index: 11, kind: input, shape index: {}]
  %s12 = inlined_call_operand.hbm [shape: f32[16,256], index: 12, kind: output, shape index: {0}]
  %s13 = inlined_call_operand.hbm [shape: f32[2,128], index: 13, kind: output, shape index: {1}]
  %14 = xla_tuple %s12, %s13
  %s15 = sld [smem:[#allocation0]]
  $region102: #{tpu_custom_call.1} parent=0
    _
  %s17 = ssub.s32 1, %s15
  %s18 = scalar_select 0, %s17, %s15
  $region1: #{tpu_custom_call.1} parent=0
    #allocation2 [shape = 'u8[65536]{0}', space=vmem, size = 0x10000, scoped, tag = 'input window, operand 1, single buffered']
    #allocation3 [shape = 's32[1]{0}', space=sflag, size = 0x4, scoped, tag = 'scoped memory for tpu_custom_call.1']
    #allocation4 [shape = 's32[1]{0}', space=sflag, size = 0x4, scoped, tag = 'scoped memory for tpu_custom_call.1']
    #allocation5 [shape = 'u8[65536]{0}', space=vmem, size = 0x10000, scoped, tag = 'input window, operand 2, single buffered']
    #allocation6 [shape = 's32[1]{0}', space=sflag, size = 0x4, scoped, tag = 'scoped memory for tpu_custom_call.1']
    #allocation7 [shape = 'u8[65536]{0}', space=vmem, size = 0x10000, scoped, tag = 'input window, operand 4, single buffered']
    #allocation8 [shape = 'u8[65536]{0}', space=vmem, size = 0x10000, scoped, tag = 'input window, operand 5, single buffered']
    #allocation9 [shape = 's32[1]{0}', space=sflag, size = 0x4, scoped, tag = 'scoped memory for tpu_custom_call.1']
    #allocation10 [shape = 'u8[65536]{0}', space=vmem, size = 0x10000, scoped, tag = 'input window, operand 6, single buffered']
    #allocation11 [shape = 'u8[196608]{0}', space=vmem, size = 0x30000, scoped, tag = 'input window, operand 7, single buffered']
    #allocation12 [shape = 's32[1]{0}', space=sflag, size = 0x4, scoped, tag = 'scoped memory for tpu_custom_call.1']
    #allocation13 [shape = 'u8[65536]{0}', space=vmem, size = 0x10000, scoped, tag = 'input window, operand 8, single buffered']
    #allocation14 [shape = 'u8[65536]{0}', space=vmem, size = 0x10000, scoped, tag = 'input window, operand 9, single buffered']
    #allocation15 [shape = 's32[1]{0}', space=sflag, size = 0x4, scoped, tag = 'scoped memory for tpu_custom_call.1']
    #allocation16 [shape = 'u8[131072]{0}', space=vmem, size = 0x20000, scoped, tag = 'input window, operand 10, single buffered']
    #allocation17 [shape = 'u8[16384]{0}', space=vmem, size = 0x4000, scoped, tag = 'output window, operand 0, single buffered']
    #allocation18 [shape = 'u8[1024]{0}', space=vmem, size = 0x400, scoped, tag = 'output window, operand 1, single buffered']
    #allocation19 [shape = 's32[1]{0}', space=sflag, size = 0x4, scoped, tag = 'scoped memory for tpu_custom_call.1']
    %19 = vsyncpa [#allocation3], 0
    %20 = vsyncpa [#allocation6], 0
    %21 = vsyncpa [#allocation9], 0
    %22 = vsyncpa [#allocation12], 0
    %23 = vsyncpa [#allocation15], 0
    %24 = vsyncpa [#allocation4], 0
    %25 = vsyncpa [#allocation19], 0
    // Predicated region
    $region2: #{tpu_custom_call.1} parent=1 // pred_check
      _
    $region3: #{tpu_custom_call.1} parent=1 // pred_check_branch
      %27 = sbr.rel (0) target = $region5
    $region4: #{tpu_custom_call.1} parent=1 // pred_region
      _
    $region5: #{tpu_custom_call.1} parent=1 // pred_fallthru
      _
    // Predicated region
    $region6: #{tpu_custom_call.1} parent=1 // pred_check
      _
    $region7: #{tpu_custom_call.1} parent=1 // pred_check_branch
      %29 = sbr.rel (0) target = $region9
    $region8: #{tpu_custom_call.1} parent=1 // pred_region
      %31 = vsyncadd [#allocation3], 0
      %s32 = sshll.u32 %s1, 4
      %s33 = int_to_ptr.hbm [resolvable:$true] %s32
      %s34 = sshll.u32 [#allocation2], 4
      %s35 = int_to_ptr.vmem [resolvable:$true] %s34
      %40 = dma.hbm_to_vmem [thread:$0]  %s33, 2048, %s35, [#allocation3], 64, 64, 4
    $region9: #{tpu_custom_call.1} parent=1 // pred_fallthru
      _
    // Predicated region
    $region10: #{tpu_custom_call.1} parent=1 // pred_check
      _
    $region11: #{tpu_custom_call.1} parent=1 // pred_check_branch
      %42 = sbr.rel (0) target = $region13
    $region12: #{tpu_custom_call.1} parent=1 // pred_region
      %44 = vsyncadd [#allocation6], 0
      %s45 = sshll.u32 %s2, 4
      %s46 = int_to_ptr.hbm [resolvable:$true] %s45
      %s47 = sshll.u32 [#allocation5], 4
      %s48 = int_to_ptr.vmem [resolvable:$true] %s47
      %53 = dma.hbm_to_vmem [thread:$0]  %s46, 2048, %s48, [#allocation6], 128, 128, 8
    $region13: #{tpu_custom_call.1} parent=1 // pred_fallthru
      _
    // Predicated region
    $region14: #{tpu_custom_call.1} parent=1 // pred_check
      _
    $region15: #{tpu_custom_call.1} parent=1 // pred_check_branch
      %55 = sbr.rel (0) target = $region17
    $region16: #{tpu_custom_call.1} parent=1 // pred_region
      _
    $region17: #{tpu_custom_call.1} parent=1 // pred_fallthru
      _
    // Predicated region
    $region18: #{tpu_custom_call.1} parent=1 // pred_check
      _
    $region19: #{tpu_custom_call.1} parent=1 // pred_check_branch
      %57 = sbr.rel (0) target = $region21
    $region20: #{tpu_custom_call.1} parent=1 // pred_region
      %59 = vsyncadd [#allocation6], 0
      %s60 = sshll.u32 %s4, 4
      %s61 = int_to_ptr.hbm [resolvable:$true] %s60
      %s62 = sshll.u32 [#allocation7], 4
      %s63 = int_to_ptr.vmem [resolvable:$true] %s62
      %68 = dma.hbm_to_vmem [thread:$0]  %s61, 2048, %s63, [#allocation6], 128, 128, 8
    $region21: #{tpu_custom_call.1} parent=1 // pred_fallthru
      _
    // Predicated region
    $region22: #{tpu_custom_call.1} parent=1 // pred_check
      _
    $region23: #{tpu_custom_call.1} parent=1 // pred_check_branch
      %70 = sbr.rel (0) target = $region25
    $region24: #{tpu_custom_call.1} parent=1 // pred_region
      %72 = vsyncadd [#allocation9], 0
      %s73 = sshll.u32 %s5, 4
      %s74 = int_to_ptr.hbm [resolvable:$true] %s73
      %s75 = sshll.u32 [#allocation8], 4
      %s76 = int_to_ptr.vmem [resolvable:$true] %s75
      %81 = dma.hbm_to_vmem [thread:$0]  %s74, 2048, %s76, [#allocation9], 128, 128, 8
    $region25: #{tpu_custom_call.1} parent=1 // pred_fallthru
      _
    // Predicated region
    $region26: #{tpu_custom_call.1} parent=1 // pred_check
      _
    $region27: #{tpu_custom_call.1} parent=1 // pred_check_branch
      %83 = sbr.rel (0) target = $region29
    $region28: #{tpu_custom_call.1} parent=1 // pred_region
      %85 = vsyncadd [#allocation9], 0
      %s86 = sshll.u32 %s6, 4
      %s87 = int_to_ptr.hbm [resolvable:$true] %s86
      %s88 = sshll.u32 [#allocation10], 4
      %s89 = int_to_ptr.vmem [resolvable:$true] %s88
      %94 = dma.hbm_to_vmem [thread:$0]  %s87, 2048, %s89, [#allocation9], 128, 128, 8
    $region29: #{tpu_custom_call.1} parent=1 // pred_fallthru
      _
    // Predicated region
    $region30: #{tpu_custom_call.1} parent=1 // pred_check
      _
    $region31: #{tpu_custom_call.1} parent=1 // pred_check_branch
      %96 = sbr.rel (0) target = $region33
    $region32: #{tpu_custom_call.1} parent=1 // pred_region
      %98 = vsyncadd [#allocation12], 0
      %s99 = sshll.u32 %s7, 4
      %s100 = int_to_ptr.hbm [resolvable:$true] %s99
      %s101 = sshll.u32 [#allocation11], 4
      %s102 = int_to_ptr.vmem [resolvable:$true] %s101
      %107 = dma.hbm_to_vmem [thread:$0]  %s100, 6144, %s102, [#allocation12], 384, 384, 24
    $region33: #{tpu_custom_call.1} parent=1 // pred_fallthru
      _
    // Predicated region
    $region34: #{tpu_custom_call.1} parent=1 // pred_check
      _
    $region35: #{tpu_custom_call.1} parent=1 // pred_check_branch
      %109 = sbr.rel (0) target = $region37
    $region36: #{tpu_custom_call.1} parent=1 // pred_region
      %111 = vsyncadd [#allocation12], 0
      %s112 = sshll.u32 %s8, 4
      %s113 = int_to_ptr.hbm [resolvable:$true] %s112
      %s114 = sshll.u32 [#allocation13], 4
      %s115 = int_to_ptr.vmem [resolvable:$true] %s114
      %120 = dma.hbm_to_vmem [thread:$0]  %s113, 2048, %s115, [#allocation12], 128, 128, 8
    $region37: #{tpu_custom_call.1} parent=1 // pred_fallthru
      _
    // Predicated region
    $region38: #{tpu_custom_call.1} parent=1 // pred_check
      _
    $region39: #{tpu_custom_call.1} parent=1 // pred_check_branch
      %122 = sbr.rel (0) target = $region41
    $region40: #{tpu_custom_call.1} parent=1 // pred_region
      %124 = vsyncadd [#allocation15], 0
      %s125 = sshll.u32 %s9, 4
      %s126 = int_to_ptr.hbm [resolvable:$true] %s125
      %s127 = sshll.u32 [#allocation14], 4
      %s128 = int_to_ptr.vmem [resolvable:$true] %s127
      %133 = dma.hbm_to_vmem [thread:$0]  %s126, 2048, %s128, [#allocation15], 128, 128, 8
    $region41: #{tpu_custom_call.1} parent=1 // pred_fallthru
      _
    // Predicated region
    $region42: #{tpu_custom_call.1} parent=1 // pred_check
      _
    $region43: #{tpu_custom_call.1} parent=1 // pred_check_branch
      %135 = sbr.rel (0) target = $region45
    $region44: #{tpu_custom_call.1} parent=1 // pred_region
      %137 = vsyncadd [#allocation15], 0
      %s138 = sshll.u32 %s10, 4
      %s139 = int_to_ptr.hbm [resolvable:$true] %s138
      %s140 = sshll.u32 [#allocation16], 4
      %s141 = int_to_ptr.vmem [resolvable:$true] %s140
      %146 = dma.hbm_to_vmem [thread:$0]  %s139, 4096, %s141, [#allocation15], 256, 256, 16
    $region45: #{tpu_custom_call.1} parent=1 // pred_fallthru
      _
    // Predicated region
    $region46: #{tpu_custom_call.1} parent=1 // pred_check
      _
    $region47: #{tpu_custom_call.1} parent=1 // pred_check_branch
      %148 = sbr.rel (0) target = $region49
    $region48: #{tpu_custom_call.1} parent=1 // pred_region
      _
    $region49: #{tpu_custom_call.1} parent=1 // pred_fallthru
      _
    // Predicated region
    $region50: #{tpu_custom_call.1} parent=1 // pred_check
      _
    $region51: #{tpu_custom_call.1} parent=1 // pred_check_branch
      %150 = sbr.rel (0) target = $region53
    $region52: #{tpu_custom_call.1} parent=1 // pred_region
      %152 = dma.done [#allocation3], 2048
    $region53: #{tpu_custom_call.1} parent=1 // pred_fallthru
      _
    // Predicated region
    $region54: #{tpu_custom_call.1} parent=1 // pred_check
      _
    $region55: #{tpu_custom_call.1} parent=1 // pred_check_branch
      %154 = sbr.rel (0) target = $region57
    $region56: #{tpu_custom_call.1} parent=1 // pred_region
      %156 = dma.done [#allocation6], 2048
    $region57: #{tpu_custom_call.1} parent=1 // pred_fallthru
      _
    // Predicated region
    $region58: #{tpu_custom_call.1} parent=1 // pred_check
      _
    $region59: #{tpu_custom_call.1} parent=1 // pred_check_branch
      %158 = sbr.rel (0) target = $region61
    $region60: #{tpu_custom_call.1} parent=1 // pred_region
      %160 = dma.done [#allocation6], 2048
    $region61: #{tpu_custom_call.1} parent=1 // pred_fallthru
      _
    // Predicated region
    $region62: #{tpu_custom_call.1} parent=1 // pred_check
      _
    $region63: #{tpu_custom_call.1} parent=1 // pred_check_branch
      %162 = sbr.rel (0) target = $region65
    $region64: #{tpu_custom_call.1} parent=1 // pred_region
      %164 = dma.done [#allocation9], 2048
    $region65: #{tpu_custom_call.1} parent=1 // pred_fallthru
      _
    // Predicated region
    $region66: #{tpu_custom_call.1} parent=1 // pred_check
      _
    $region67: #{tpu_custom_call.1} parent=1 // pred_check_branch
      %166 = sbr.rel (0) target = $region69
    $region68: #{tpu_custom_call.1} parent=1 // pred_region
      %168 = dma.done [#allocation9], 2048
    $region69: #{tpu_custom_call.1} parent=1 // pred_fallthru
      _
    // Predicated region
    $region70: #{tpu_custom_call.1} parent=1 // pred_check
      _
    $region71: #{tpu_custom_call.1} parent=1 // pred_check_branch
      %170 = sbr.rel (0) target = $region73
    $region72: #{tpu_custom_call.1} parent=1 // pred_region
      %172 = dma.done [#allocation12], 6144
    $region73: #{tpu_custom_call.1} parent=1 // pred_fallthru
      _
    // Predicated region
    $region74: #{tpu_custom_call.1} parent=1 // pred_check
      _
    $region75: #{tpu_custom_call.1} parent=1 // pred_check_branch
      %174 = sbr.rel (0) target = $region77
    $region76: #{tpu_custom_call.1} parent=1 // pred_region
      %176 = dma.done [#allocation12], 2048
    $region77: #{tpu_custom_call.1} parent=1 // pred_fallthru
      _
    // Predicated region
    $region78: #{tpu_custom_call.1} parent=1 // pred_check
      _
    $region79: #{tpu_custom_call.1} parent=1 // pred_check_branch
      %178 = sbr.rel (0) target = $region81
    $region80: #{tpu_custom_call.1} parent=1 // pred_region
      %180 = dma.done [#allocation15], 2048
    $region81: #{tpu_custom_call.1} parent=1 // pred_fallthru
      _
    // Predicated region
    $region82: #{tpu_custom_call.1} parent=1 // pred_check
      _
    $region83: #{tpu_custom_call.1} parent=1 // pred_check_branch
      %182 = sbr.rel (0) target = $region85
    $region84: #{tpu_custom_call.1} parent=1 // pred_region
      %184 = dma.done [#allocation15], 4096
    $region85: #{tpu_custom_call.1} parent=1 // pred_fallthru
      _
    %v185 = vld [vmem:[%s0] sm:$0xff]
    %v186 = vld [vmem:[%s0 + $0x8] sm:$0xff]
    %v187 = vlaneseq
    %v188 = vand.u32 %v187, 127
    %v189 = vadd.s32 %v188, 128
    %190 = vset.pattern.permute.xlu0 0
    %191 = vperm.xlu0 %190, %v185
    %v192 = vpop.permute.xlu0 %191
    %193 = vset.pattern.permute.xlu0 0
    %194 = vperm.xlu0 %193, %v186
    %v195 = vpop.permute.xlu0 %194
    %vm196 = vcmp.eq.s32.totalorder %v188, %v192
    %vm197 = vcmp.eq.s32.totalorder %v189, %v192
    %vm198 = vcmp.eq.s32.totalorder %v188, %v195
    %vm199 = vcmp.eq.s32.totalorder %v189, %v195
    %v200 = vsel %vm196, 1.0, 0.0
    %v201 = vsel %vm197, 1.0, 0.0
    %v202 = vsel %vm198, 1.0, 0.0
    %v203 = vsel %vm199, 1.0, 0.0
    %v204 = vpack.c.bf16 %v202, %v200
    %v205 = vpack.c.bf16 %v203, %v201
    %v206 = vld [vmem:[#allocation2] sm:$0xf]
    %v207 = vld [vmem:[#allocation2 + $0x4] sm:$0xf]
    %v208 = vld [vmem:[#allocation2 + $0x8] sm:$0xf]
    %v209 = vld [vmem:[#allocation2 + $0xc] sm:$0xf]
    %v210 = vld [vmem:[#allocation2 + $0x10] sm:$0xf]
    %v211 = vld [vmem:[#allocation2 + $0x14] sm:$0xf]
    %v212 = vld [vmem:[#allocation2 + $0x18] sm:$0xf]
    %v213 = vld [vmem:[#allocation2 + $0x1c] sm:$0xf]
    %v214 = vld [vmem:[#allocation2 + $0x20] sm:$0xf]
    %v215 = vld [vmem:[#allocation2 + $0x24] sm:$0xf]
    %v216 = vld [vmem:[#allocation2 + $0x28] sm:$0xf]
    %v217 = vld [vmem:[#allocation2 + $0x2c] sm:$0xf]
    %v218 = vld [vmem:[#allocation2 + $0x30] sm:$0xf]
    %v219 = vld [vmem:[#allocation2 + $0x34] sm:$0xf]
    %v220 = vld [vmem:[#allocation2 + $0x38] sm:$0xf]
    %v221 = vld [vmem:[#allocation2 + $0x3c] sm:$0xf]
    %v222 = vld [vmem:[#allocation2 + $0x40] sm:$0xf]
    %v223 = vld [vmem:[#allocation2 + $0x44] sm:$0xf]
    %v224 = vld [vmem:[#allocation2 + $0x48] sm:$0xf]
    %v225 = vld [vmem:[#allocation2 + $0x4c] sm:$0xf]
    %v226 = vld [vmem:[#allocation2 + $0x50] sm:$0xf]
    %v227 = vld [vmem:[#allocation2 + $0x54] sm:$0xf]
    %v228 = vld [vmem:[#allocation2 + $0x58] sm:$0xf]
    %v229 = vld [vmem:[#allocation2 + $0x5c] sm:$0xf]
    %v230 = vld [vmem:[#allocation2 + $0x60] sm:$0xf]
    %v231 = vld [vmem:[#allocation2 + $0x64] sm:$0xf]
    %v232 = vld [vmem:[#allocation2 + $0x68] sm:$0xf]
    %v233 = vld [vmem:[#allocation2 + $0x6c] sm:$0xf]
    %v234 = vld [vmem:[#allocation2 + $0x70] sm:$0xf]
    %v235 = vld [vmem:[#allocation2 + $0x74] sm:$0xf]
    %v236 = vld [vmem:[#allocation2 + $0x78] sm:$0xf]
    %v237 = vld [vmem:[#allocation2 + $0x7c] sm:$0xf]
    %v270 = vunpack.c.l.b16 %v206
    %v271 = vunpack.c.l.b16 %v207
    %v272 = vunpack.c.l.b16 %v208
    %v273 = vunpack.c.l.b16 %v209
    %v274 = vunpack.c.l.b16 %v210
    %v275 = vunpack.c.l.b16 %v211
    %v276 = vunpack.c.l.b16 %v212
    %v277 = vunpack.c.l.b16 %v213
    %v278 = vunpack.c.l.b16 %v214
    %v279 = vunpack.c.l.b16 %v215
    %v280 = vunpack.c.l.b16 %v216
    %v281 = vunpack.c.l.b16 %v217
    %v282 = vunpack.c.l.b16 %v218
    %v283 = vunpack.c.l.b16 %v219
    %v284 = vunpack.c.l.b16 %v220
    %v285 = vunpack.c.l.b16 %v221
    %v286 = vunpack.c.l.b16 %v222
    %v287 = vunpack.c.l.b16 %v223
    %v288 = vunpack.c.l.b16 %v224
    %v289 = vunpack.c.l.b16 %v225
    %v290 = vunpack.c.l.b16 %v226
    %v291 = vunpack.c.l.b16 %v227
    %v292 = vunpack.c.l.b16 %v228
    %v293 = vunpack.c.l.b16 %v229
    %v294 = vunpack.c.l.b16 %v230
    %v295 = vunpack.c.l.b16 %v231
    %v296 = vunpack.c.l.b16 %v232
    %v297 = vunpack.c.l.b16 %v233
    %v298 = vunpack.c.l.b16 %v234
    %v299 = vunpack.c.l.b16 %v235
    %v300 = vunpack.c.l.b16 %v236
    %v301 = vunpack.c.l.b16 %v237
    %v302 = vpack.c.b16 %v271, %v270
    %v303 = vpack.c.b16 %v273, %v272
    %v304 = vpack.c.b16 %v275, %v274
    %v305 = vpack.c.b16 %v277, %v276
    %v306 = vpack.c.b16 %v279, %v278
    %v307 = vpack.c.b16 %v281, %v280
    %v308 = vpack.c.b16 %v283, %v282
    %v309 = vpack.c.b16 %v285, %v284
    %v310 = vpack.c.b16 %v287, %v286
    %v311 = vpack.c.b16 %v289, %v288
    %v312 = vpack.c.b16 %v291, %v290
    %v313 = vpack.c.b16 %v293, %v292
    %v314 = vpack.c.b16 %v295, %v294
    %v315 = vpack.c.b16 %v297, %v296
    %v316 = vpack.c.b16 %v299, %v298
    %v317 = vpack.c.b16 %v301, %v300
    %334 = vmatpush.bf16.msra.mxu0 %v309
    %335 = vmatpush.bf16.msra.mxu0 %v308
    %336 = vmatpush.bf16.msra.mxu0 %v307
    %337 = vmatpush.bf16.msra.mxu0 %v306
    %338 = vmatpush.bf16.msra.mxu0 %v305
    %339 = vmatpush.bf16.msra.mxu0 %v304
    %340 = vmatpush.bf16.msra.mxu0 %v303
    %341 = vmatpush.bf16.msra.mxu0 %v302
    %342 = vmatmul.bf16.gmra.mxu0 %v204
    %v343 = vpop.f32.mrf.mxu0
    %v344 = vadd.f32 0.0, %v343
    %v345 = vpop.f32.mrf.mxu0
    %v346 = vadd.f32 0.0, %v345
    %347 = vdwg.mxu0
    %348 = vmatpush.bf16.msra.mxu0 %v317
    %349 = vmatpush.bf16.msra.mxu0 %v316
    %350 = vmatpush.bf16.msra.mxu0 %v315
    %351 = vmatpush.bf16.msra.mxu0 %v314
    %352 = vmatpush.bf16.msra.mxu0 %v313
    %353 = vmatpush.bf16.msra.mxu0 %v312
    %354 = vmatpush.bf16.msra.mxu0 %v311
    %355 = vmatpush.bf16.msra.mxu0 %v310
    %356 = vmatmul.bf16.gmra.mxu0 %v205
    %v357 = vpop.f32.mrf.mxu0
    %v358 = vadd.f32 %v344, %v357
    %v359 = vpop.f32.mrf.mxu0
    %v360 = vadd.f32 %v346, %v359
    %361 = vdwg.mxu0
    %v362 = vpack.c.bf16 %v360, %v358
    %v363 = vld [vmem:[#allocation7] sm:$0xff]
    %v364 = vld [vmem:[#allocation7 + $0x8] sm:$0xff]
    %v365 = vld [vmem:[#allocation7 + $0x10] sm:$0xff]
    %v366 = vld [vmem:[#allocation7 + $0x18] sm:$0xff]
    %v367 = vld [vmem:[#allocation7 + $0x20] sm:$0xff]
    %v368 = vld [vmem:[#allocation7 + $0x28] sm:$0xff]
    %v369 = vld [vmem:[#allocation7 + $0x30] sm:$0xff]
    %v370 = vld [vmem:[#allocation7 + $0x38] sm:$0xff]
    %v371 = vld [vmem:[#allocation7 + $0x40] sm:$0xff]
    %v372 = vld [vmem:[#allocation7 + $0x48] sm:$0xff]
    %v373 = vld [vmem:[#allocation7 + $0x50] sm:$0xff]
    %v374 = vld [vmem:[#allocation7 + $0x58] sm:$0xff]
    %v375 = vld [vmem:[#allocation7 + $0x60] sm:$0xff]
    %v376 = vld [vmem:[#allocation7 + $0x68] sm:$0xff]
    %v377 = vld [vmem:[#allocation7 + $0x70] sm:$0xff]
    %v378 = vld [vmem:[#allocation7 + $0x78] sm:$0xff]
    %v395 = vunpack.c.l.b16 %v363
    %v396 = vunpack.c.h.b16 %v363
    %v397 = vunpack.c.l.b16 %v364
    %v398 = vunpack.c.h.b16 %v364
    %v399 = vunpack.c.l.b16 %v365
    %v400 = vunpack.c.h.b16 %v365
    %v401 = vunpack.c.l.b16 %v366
    %v402 = vunpack.c.h.b16 %v366
    %v403 = vunpack.c.l.b16 %v367
    %v404 = vunpack.c.h.b16 %v367
    %v405 = vunpack.c.l.b16 %v368
    %v406 = vunpack.c.h.b16 %v368
    %v407 = vunpack.c.l.b16 %v369
    %v408 = vunpack.c.h.b16 %v369
    %v409 = vunpack.c.l.b16 %v370
    %v410 = vunpack.c.h.b16 %v370
    %v411 = vunpack.c.l.b16 %v371
    %v412 = vunpack.c.h.b16 %v371
    %v413 = vunpack.c.l.b16 %v372
    %v414 = vunpack.c.h.b16 %v372
    %v415 = vunpack.c.l.b16 %v373
    %v416 = vunpack.c.h.b16 %v373
    %v417 = vunpack.c.l.b16 %v374
    %v418 = vunpack.c.h.b16 %v374
    %v419 = vunpack.c.l.b16 %v375
    %v420 = vunpack.c.h.b16 %v375
    %v421 = vunpack.c.l.b16 %v376
    %v422 = vunpack.c.h.b16 %v376
    %v423 = vunpack.c.l.b16 %v377
    %v424 = vunpack.c.h.b16 %v377
    %v425 = vunpack.c.l.b16 %v378
    %v426 = vunpack.c.h.b16 %v378
    %v427 = vpack.c.b16 %v397, %v395
    %v428 = vpack.c.b16 %v398, %v396
    %v429 = vpack.c.b16 %v401, %v399
    %v430 = vpack.c.b16 %v402, %v400
    %v431 = vpack.c.b16 %v405, %v403
    %v432 = vpack.c.b16 %v406, %v404
    %v433 = vpack.c.b16 %v409, %v407
    %v434 = vpack.c.b16 %v410, %v408
    %v435 = vpack.c.b16 %v413, %v411
    %v436 = vpack.c.b16 %v414, %v412
    %v437 = vpack.c.b16 %v417, %v415
    %v438 = vpack.c.b16 %v418, %v416
    %v439 = vpack.c.b16 %v421, %v419
    %v440 = vpack.c.b16 %v422, %v420
    %v441 = vpack.c.b16 %v425, %v423
    %v442 = vpack.c.b16 %v426, %v424
    %459 = vmatpush.bf16.msra.mxu0 %v441
    %460 = vmatpush.bf16.msra.mxu0 %v439
    %461 = vmatpush.bf16.msra.mxu0 %v437
    %462 = vmatpush.bf16.msra.mxu0 %v435
    %463 = vmatpush.bf16.msra.mxu0 %v433
    %464 = vmatpush.bf16.msra.mxu0 %v431
    %465 = vmatpush.bf16.msra.mxu0 %v429
    %466 = vmatpush.bf16.msra.mxu0 %v427
    %467 = vmatmul.bf16.gmra.mxu0 %v362
    %v468 = vpop.f32.mrf.mxu0
    %v469 = vadd.f32 0.0, %v468
    %v470 = vpop.f32.mrf.mxu0
    %v471 = vadd.f32 0.0, %v470
    %472 = vdwg.mxu0
    %473 = vmatpush.bf16.msra.mxu0 %v442
    %474 = vmatpush.bf16.msra.mxu0 %v440
    %475 = vmatpush.bf16.msra.mxu0 %v438
    %476 = vmatpush.bf16.msra.mxu0 %v436
    %477 = vmatpush.bf16.msra.mxu0 %v434
    %478 = vmatpush.bf16.msra.mxu0 %v432
    %479 = vmatpush.bf16.msra.mxu0 %v430
    %480 = vmatpush.bf16.msra.mxu0 %v428
    %481 = vmatmul.bf16.gmra.mxu0 %v362
    %v482 = vpop.f32.mrf.mxu0
    %v483 = vadd.f32 0.0, %v482
    %v484 = vpop.f32.mrf.mxu0
    %v485 = vadd.f32 0.0, %v484
    %486 = vdwg.mxu0
    %v487 = vld [vmem:[%s3] sm:$0x3]
    %v488 = vpack.c.bf16 %v487, %v487
    %v489 = vld [vmem:[#allocation8] sm:$0xff]
    %v490 = vld [vmem:[#allocation8 + $0x8] sm:$0xff]
    %v491 = vld [vmem:[#allocation8 + $0x10] sm:$0xff]
    %v492 = vld [vmem:[#allocation8 + $0x18] sm:$0xff]
    %v493 = vld [vmem:[#allocation8 + $0x20] sm:$0xff]
    %v494 = vld [vmem:[#allocation8 + $0x28] sm:$0xff]
    %v495 = vld [vmem:[#allocation8 + $0x30] sm:$0xff]
    %v496 = vld [vmem:[#allocation8 + $0x38] sm:$0xff]
    %v497 = vld [vmem:[#allocation8 + $0x40] sm:$0xff]
    %v498 = vld [vmem:[#allocation8 + $0x48] sm:$0xff]
    %v499 = vld [vmem:[#allocation8 + $0x50] sm:$0xff]
    %v500 = vld [vmem:[#allocation8 + $0x58] sm:$0xff]
    %v501 = vld [vmem:[#allocation8 + $0x60] sm:$0xff]
    %v502 = vld [vmem:[#allocation8 + $0x68] sm:$0xff]
    %v503 = vld [vmem:[#allocation8 + $0x70] sm:$0xff]
    %v504 = vld [vmem:[#allocation8 + $0x78] sm:$0xff]
    %v521 = vunpack.c.l.b16 %v489
    %v522 = vunpack.c.h.b16 %v489
    %v523 = vunpack.c.l.b16 %v490
    %v524 = vunpack.c.h.b16 %v490
    %v525 = vunpack.c.l.b16 %v491
    %v526 = vunpack.c.h.b16 %v491
    %v527 = vunpack.c.l.b16 %v492
    %v528 = vunpack.c.h.b16 %v492
    %v529 = vunpack.c.l.b16 %v493
    %v530 = vunpack.c.h.b16 %v493
    %v531 = vunpack.c.l.b16 %v494
    %v532 = vunpack.c.h.b16 %v494
    %v533 = vunpack.c.l.b16 %v495
    %v534 = vunpack.c.h.b16 %v495
    %v535 = vunpack.c.l.b16 %v496
    %v536 = vunpack.c.h.b16 %v496
    %v537 = vunpack.c.l.b16 %v497
    %v538 = vunpack.c.h.b16 %v497
    %v539 = vunpack.c.l.b16 %v498
    %v540 = vunpack.c.h.b16 %v498
    %v541 = vunpack.c.l.b16 %v499
    %v542 = vunpack.c.h.b16 %v499
    %v543 = vunpack.c.l.b16 %v500
    %v544 = vunpack.c.h.b16 %v500
    %v545 = vunpack.c.l.b16 %v501
    %v546 = vunpack.c.h.b16 %v501
    %v547 = vunpack.c.l.b16 %v502
    %v548 = vunpack.c.h.b16 %v502
    %v549 = vunpack.c.l.b16 %v503
    %v550 = vunpack.c.h.b16 %v503
    %v551 = vunpack.c.l.b16 %v504
    %v552 = vunpack.c.h.b16 %v504
    %v553 = vpack.c.b16 %v523, %v521
    %v554 = vpack.c.b16 %v524, %v522
    %v555 = vpack.c.b16 %v527, %v525
    %v556 = vpack.c.b16 %v528, %v526
    %v557 = vpack.c.b16 %v531, %v529
    %v558 = vpack.c.b16 %v532, %v530
    %v559 = vpack.c.b16 %v535, %v533
    %v560 = vpack.c.b16 %v536, %v534
    %v561 = vpack.c.b16 %v539, %v537
    %v562 = vpack.c.b16 %v540, %v538
    %v563 = vpack.c.b16 %v543, %v541
    %v564 = vpack.c.b16 %v544, %v542
    %v565 = vpack.c.b16 %v547, %v545
    %v566 = vpack.c.b16 %v548, %v546
    %v567 = vpack.c.b16 %v551, %v549
    %v568 = vpack.c.b16 %v552, %v550
    %585 = vmatpush.bf16.msra.mxu0 %v567
    %586 = vmatpush.bf16.msra.mxu0 %v565
    %587 = vmatpush.bf16.msra.mxu0 %v563
    %588 = vmatpush.bf16.msra.mxu0 %v561
    %589 = vmatpush.bf16.msra.mxu0 %v559
    %590 = vmatpush.bf16.msra.mxu0 %v557
    %591 = vmatpush.bf16.msra.mxu0 %v555
    %592 = vmatpush.bf16.msra.mxu0 %v553
    %593 = vmatmul.bf16.gmra.mxu0 %v488
    %v594 = vpop.f32.mrf.mxu0
    %v595 = vadd.f32 0.0, %v594
    %v596 = vpop.f32.mrf.mxu0
    %597 = vdwg.mxu0
    %598 = vmatpush.bf16.msra.mxu0 %v568
    %599 = vmatpush.bf16.msra.mxu0 %v566
    %600 = vmatpush.bf16.msra.mxu0 %v564
    %601 = vmatpush.bf16.msra.mxu0 %v562
    %602 = vmatpush.bf16.msra.mxu0 %v560
    %603 = vmatpush.bf16.msra.mxu0 %v558
    %604 = vmatpush.bf16.msra.mxu0 %v556
    %605 = vmatpush.bf16.msra.mxu0 %v554
    %606 = vmatmul.bf16.gmra.mxu0 %v488
    %v607 = vpop.f32.mrf.mxu0
    %v608 = vadd.f32 0.0, %v607
    %v609 = vpop.f32.mrf.mxu0
    %610 = vdwg.mxu0
    %v611 = vadd.f32 %v469, %v595
    %v612 = vadd.f32 %v483, %v608
    %v613 = vxor.u32 %v611, 2147483648
    %v614 = vmul.f32 %v613, 1.442695
    %v615 = vpow.pop %v614
    %v616 = vadd.f32 %v615, 1.0
    %v617 = vrcp.pop %v616
    %v618 = vmul.f32 %v616, %v617
    %v619 = vsub.f32 1.0, %v618
    %v620 = vmul.f32 %v617, %v619
    %v621 = vadd.f32 %v617, %v620
    %vm622 = vweird.f32 %v616
    %vm623 = vweird.f32 %v617
    %vm624 = vmor %vm622, %vm623
    %v625 = vsel %vm624, %v617, %v621
    %v626 = vand.u32 2147483647, %v616
    %vm627 = vcmp.eq.f32.partialorder %v626, 8.507059e+37
    %v628 = vand.u32 %v616, 2147483648
    %v629 = vor.u32 1.1754944e-38, %v628
    %v630 = vsel %vm627, %v629, %v625
    %v631 = vmul.f32 1.0, %v630
    %v632 = vtanh.pop %v612
    %v633 = vsub.f32 %v632, %v487
    %v634 = vmul.f32 %v631, %v633
    %v635 = vadd.f32 %v487, %v634
    %v636 = vpack.c.bf16 %v635, %v635
    %v637 = vld [vmem:[#allocation10] sm:$0xff]
    %v638 = vld [vmem:[#allocation10 + $0x8] sm:$0xff]
    %v639 = vld [vmem:[#allocation10 + $0x10] sm:$0xff]
    %v640 = vld [vmem:[#allocation10 + $0x18] sm:$0xff]
    %v641 = vld [vmem:[#allocation10 + $0x20] sm:$0xff]
    %v642 = vld [vmem:[#allocation10 + $0x28] sm:$0xff]
    %v643 = vld [vmem:[#allocation10 + $0x30] sm:$0xff]
    %v644 = vld [vmem:[#allocation10 + $0x38] sm:$0xff]
    %v645 = vld [vmem:[#allocation10 + $0x40] sm:$0xff]
    %v646 = vld [vmem:[#allocation10 + $0x48] sm:$0xff]
    %v647 = vld [vmem:[#allocation10 + $0x50] sm:$0xff]
    %v648 = vld [vmem:[#allocation10 + $0x58] sm:$0xff]
    %v649 = vld [vmem:[#allocation10 + $0x60] sm:$0xff]
    %v650 = vld [vmem:[#allocation10 + $0x68] sm:$0xff]
    %v651 = vld [vmem:[#allocation10 + $0x70] sm:$0xff]
    %v652 = vld [vmem:[#allocation10 + $0x78] sm:$0xff]
    %v669 = vunpack.c.l.b16 %v637
    %v670 = vunpack.c.h.b16 %v637
    %v671 = vunpack.c.l.b16 %v638
    %v672 = vunpack.c.h.b16 %v638
    %v673 = vunpack.c.l.b16 %v639
    %v674 = vunpack.c.h.b16 %v639
    %v675 = vunpack.c.l.b16 %v640
    %v676 = vunpack.c.h.b16 %v640
    %v677 = vunpack.c.l.b16 %v641
    %v678 = vunpack.c.h.b16 %v641
    %v679 = vunpack.c.l.b16 %v642
    %v680 = vunpack.c.h.b16 %v642
    %v681 = vunpack.c.l.b16 %v643
    %v682 = vunpack.c.h.b16 %v643
    %v683 = vunpack.c.l.b16 %v644
    %v684 = vunpack.c.h.b16 %v644
    %v685 = vunpack.c.l.b16 %v645
    %v686 = vunpack.c.h.b16 %v645
    %v687 = vunpack.c.l.b16 %v646
    %v688 = vunpack.c.h.b16 %v646
    %v689 = vunpack.c.l.b16 %v647
    %v690 = vunpack.c.h.b16 %v647
    %v691 = vunpack.c.l.b16 %v648
    %v692 = vunpack.c.h.b16 %v648
    %v693 = vunpack.c.l.b16 %v649
    %v694 = vunpack.c.h.b16 %v649
    %v695 = vunpack.c.l.b16 %v650
    %v696 = vunpack.c.h.b16 %v650
    %v697 = vunpack.c.l.b16 %v651
    %v698 = vunpack.c.h.b16 %v651
    %v699 = vunpack.c.l.b16 %v652
    %v700 = vunpack.c.h.b16 %v652
    %v701 = vpack.c.b16 %v671, %v669
    %v702 = vpack.c.b16 %v672, %v670
    %v703 = vpack.c.b16 %v675, %v673
    %v704 = vpack.c.b16 %v676, %v674
    %v705 = vpack.c.b16 %v679, %v677
    %v706 = vpack.c.b16 %v680, %v678
    %v707 = vpack.c.b16 %v683, %v681
    %v708 = vpack.c.b16 %v684, %v682
    %v709 = vpack.c.b16 %v687, %v685
    %v710 = vpack.c.b16 %v688, %v686
    %v711 = vpack.c.b16 %v691, %v689
    %v712 = vpack.c.b16 %v692, %v690
    %v713 = vpack.c.b16 %v695, %v693
    %v714 = vpack.c.b16 %v696, %v694
    %v715 = vpack.c.b16 %v699, %v697
    %v716 = vpack.c.b16 %v700, %v698
    %733 = vmatpush.bf16.msra.mxu0 %v715
    %734 = vmatpush.bf16.msra.mxu0 %v713
    %735 = vmatpush.bf16.msra.mxu0 %v711
    %736 = vmatpush.bf16.msra.mxu0 %v709
    %737 = vmatpush.bf16.msra.mxu0 %v707
    %738 = vmatpush.bf16.msra.mxu0 %v705
    %739 = vmatpush.bf16.msra.mxu0 %v703
    %740 = vmatpush.bf16.msra.mxu0 %v701
    %741 = vmatmul.bf16.gmra.mxu0 %v636
    %v742 = vpop.f32.mrf.mxu0
    %v743 = vadd.f32 0.0, %v742
    %v744 = vpop.f32.mrf.mxu0
    %745 = vdwg.mxu0
    %746 = vmatpush.bf16.msra.mxu0 %v716
    %747 = vmatpush.bf16.msra.mxu0 %v714
    %748 = vmatpush.bf16.msra.mxu0 %v712
    %749 = vmatpush.bf16.msra.mxu0 %v710
    %750 = vmatpush.bf16.msra.mxu0 %v708
    %751 = vmatpush.bf16.msra.mxu0 %v706
    %752 = vmatpush.bf16.msra.mxu0 %v704
    %753 = vmatpush.bf16.msra.mxu0 %v702
    %754 = vmatmul.bf16.gmra.mxu0 %v636
    %v755 = vpop.f32.mrf.mxu0
    %v756 = vadd.f32 0.0, %v755
    %v757 = vpop.f32.mrf.mxu0
    %758 = vdwg.mxu0
    %v759 = vxor.u32 %v743, 2147483648
    %v760 = vmul.f32 %v759, 1.442695
    %v761 = vpow.pop %v760
    %v762 = vadd.f32 %v761, 1.0
    %v763 = vrcp.pop %v762
    %v764 = vmul.f32 %v762, %v763
    %v765 = vsub.f32 1.0, %v764
    %v766 = vmul.f32 %v763, %v765
    %v767 = vadd.f32 %v763, %v766
    %vm768 = vweird.f32 %v762
    %vm769 = vweird.f32 %v763
    %vm770 = vmor %vm768, %vm769
    %v771 = vsel %vm770, %v763, %v767
    %v772 = vand.u32 2147483647, %v762
    %vm773 = vcmp.eq.f32.partialorder %v772, 8.507059e+37
    %v774 = vand.u32 %v762, 2147483648
    %v775 = vor.u32 1.1754944e-38, %v774
    %v776 = vsel %vm773, %v775, %v771
    %v777 = vmul.f32 1.0, %v776
    %v778 = vxor.u32 %v756, 2147483648
    %v779 = vmul.f32 %v778, 1.442695
    %v780 = vpow.pop %v779
    %v781 = vadd.f32 %v780, 1.0
    %v782 = vrcp.pop %v781
    %v783 = vmul.f32 %v781, %v782
    %v784 = vsub.f32 1.0, %v783
    %v785 = vmul.f32 %v782, %v784
    %v786 = vadd.f32 %v782, %v785
    %vm787 = vweird.f32 %v781
    %vm788 = vweird.f32 %v782
    %vm789 = vmor %vm787, %vm788
    %v790 = vsel %vm789, %v782, %v786
    %v791 = vand.u32 2147483647, %v781
    %vm792 = vcmp.eq.f32.partialorder %v791, 8.507059e+37
    %v793 = vand.u32 %v781, 2147483648
    %v794 = vor.u32 1.1754944e-38, %v793
    %v795 = vsel %vm792, %v794, %v790
    %v796 = vmul.f32 1.0, %v795
    %v797 = vsub.f32 %v796, %v635
    %v798 = vmul.f32 %v777, %v797
    %v799 = vadd.f32 %v635, %v798
    %v800 = vpack.c.bf16 %v799, %v799
    %v801 = vld [vmem:[#allocation11] sm:$0xff]
    %v802 = vld [vmem:[#allocation11 + $0x8] sm:$0xff]
    %v803 = vld [vmem:[#allocation11 + $0x10] sm:$0xff]
    %v804 = vld [vmem:[#allocation11 + $0x18] sm:$0xff]
    %v805 = vld [vmem:[#allocation11 + $0x20] sm:$0xff]
    %v806 = vld [vmem:[#allocation11 + $0x28] sm:$0xff]
    %v807 = vld [vmem:[#allocation11 + $0x30] sm:$0xff]
    %v808 = vld [vmem:[#allocation11 + $0x38] sm:$0xff]
    %v809 = vld [vmem:[#allocation11 + $0x40] sm:$0xff]
    %v810 = vld [vmem:[#allocation11 + $0x48] sm:$0xff]
    %v811 = vld [vmem:[#allocation11 + $0x50] sm:$0xff]
    %v812 = vld [vmem:[#allocation11 + $0x58] sm:$0xff]
    %v813 = vld [vmem:[#allocation11 + $0x60] sm:$0xff]
    %v814 = vld [vmem:[#allocation11 + $0x68] sm:$0xff]
    %v815 = vld [vmem:[#allocation11 + $0x70] sm:$0xff]
    %v816 = vld [vmem:[#allocation11 + $0x78] sm:$0xff]
    %v817 = vld [vmem:[#allocation11 + $0x80] sm:$0xff]
    %v818 = vld [vmem:[#allocation11 + $0x88] sm:$0xff]
    %v819 = vld [vmem:[#allocation11 + $0x90] sm:$0xff]
    %v820 = vld [vmem:[#allocation11 + $0x98] sm:$0xff]
    %v821 = vld [vmem:[#allocation11 + $0xa0] sm:$0xff]
    %v822 = vld [vmem:[#allocation11 + $0xa8] sm:$0xff]
    %v823 = vld [vmem:[#allocation11 + $0xb0] sm:$0xff]
    %v824 = vld [vmem:[#allocation11 + $0xb8] sm:$0xff]
    %v825 = vld [vmem:[#allocation11 + $0xc0] sm:$0xff]
    %v826 = vld [vmem:[#allocation11 + $0xc8] sm:$0xff]
    %v827 = vld [vmem:[#allocation11 + $0xd0] sm:$0xff]
    %v828 = vld [vmem:[#allocation11 + $0xd8] sm:$0xff]
    %v829 = vld [vmem:[#allocation11 + $0xe0] sm:$0xff]
    %v830 = vld [vmem:[#allocation11 + $0xe8] sm:$0xff]
    %v831 = vld [vmem:[#allocation11 + $0xf0] sm:$0xff]
    %v832 = vld [vmem:[#allocation11 + $0xf8] sm:$0xff]
    %v833 = vld [vmem:[#allocation11 + $0x100] sm:$0xff]
    %v834 = vld [vmem:[#allocation11 + $0x108] sm:$0xff]
    %v835 = vld [vmem:[#allocation11 + $0x110] sm:$0xff]
    %v836 = vld [vmem:[#allocation11 + $0x118] sm:$0xff]
    %v837 = vld [vmem:[#allocation11 + $0x120] sm:$0xff]
    %v838 = vld [vmem:[#allocation11 + $0x128] sm:$0xff]
    %v839 = vld [vmem:[#allocation11 + $0x130] sm:$0xff]
    %v840 = vld [vmem:[#allocation11 + $0x138] sm:$0xff]
    %v841 = vld [vmem:[#allocation11 + $0x140] sm:$0xff]
    %v842 = vld [vmem:[#allocation11 + $0x148] sm:$0xff]
    %v843 = vld [vmem:[#allocation11 + $0x150] sm:$0xff]
    %v844 = vld [vmem:[#allocation11 + $0x158] sm:$0xff]
    %v845 = vld [vmem:[#allocation11 + $0x160] sm:$0xff]
    %v846 = vld [vmem:[#allocation11 + $0x168] sm:$0xff]
    %v847 = vld [vmem:[#allocation11 + $0x170] sm:$0xff]
    %v848 = vld [vmem:[#allocation11 + $0x178] sm:$0xff]
    %v897 = vunpack.c.l.b16 %v801
    %v898 = vunpack.c.h.b16 %v801
    %v899 = vunpack.c.l.b16 %v802
    %v900 = vunpack.c.h.b16 %v802
    %v901 = vunpack.c.l.b16 %v803
    %v902 = vunpack.c.h.b16 %v803
    %v903 = vunpack.c.l.b16 %v804
    %v904 = vunpack.c.h.b16 %v804
    %v905 = vunpack.c.l.b16 %v805
    %v906 = vunpack.c.h.b16 %v805
    %v907 = vunpack.c.l.b16 %v806
    %v908 = vunpack.c.h.b16 %v806
    %v909 = vunpack.c.l.b16 %v807
    %v910 = vunpack.c.h.b16 %v807
    %v911 = vunpack.c.l.b16 %v808
    %v912 = vunpack.c.h.b16 %v808
    %v913 = vunpack.c.l.b16 %v809
    %v914 = vunpack.c.h.b16 %v809
    %v915 = vunpack.c.l.b16 %v810
    %v916 = vunpack.c.h.b16 %v810
    %v917 = vunpack.c.l.b16 %v811
    %v918 = vunpack.c.h.b16 %v811
    %v919 = vunpack.c.l.b16 %v812
    %v920 = vunpack.c.h.b16 %v812
    %v921 = vunpack.c.l.b16 %v813
    %v922 = vunpack.c.h.b16 %v813
    %v923 = vunpack.c.l.b16 %v814
    %v924 = vunpack.c.h.b16 %v814
    %v925 = vunpack.c.l.b16 %v815
    %v926 = vunpack.c.h.b16 %v815
    %v927 = vunpack.c.l.b16 %v816
    %v928 = vunpack.c.h.b16 %v816
    %v929 = vunpack.c.l.b16 %v817
    %v930 = vunpack.c.h.b16 %v817
    %v931 = vunpack.c.l.b16 %v818
    %v932 = vunpack.c.h.b16 %v818
    %v933 = vunpack.c.l.b16 %v819
    %v934 = vunpack.c.h.b16 %v819
    %v935 = vunpack.c.l.b16 %v820
    %v936 = vunpack.c.h.b16 %v820
    %v937 = vunpack.c.l.b16 %v821
    %v938 = vunpack.c.h.b16 %v821
    %v939 = vunpack.c.l.b16 %v822
    %v940 = vunpack.c.h.b16 %v822
    %v941 = vunpack.c.l.b16 %v823
    %v942 = vunpack.c.h.b16 %v823
    %v943 = vunpack.c.l.b16 %v824
    %v944 = vunpack.c.h.b16 %v824
    %v945 = vunpack.c.l.b16 %v825
    %v946 = vunpack.c.h.b16 %v825
    %v947 = vunpack.c.l.b16 %v826
    %v948 = vunpack.c.h.b16 %v826
    %v949 = vunpack.c.l.b16 %v827
    %v950 = vunpack.c.h.b16 %v827
    %v951 = vunpack.c.l.b16 %v828
    %v952 = vunpack.c.h.b16 %v828
    %v953 = vunpack.c.l.b16 %v829
    %v954 = vunpack.c.h.b16 %v829
    %v955 = vunpack.c.l.b16 %v830
    %v956 = vunpack.c.h.b16 %v830
    %v957 = vunpack.c.l.b16 %v831
    %v958 = vunpack.c.h.b16 %v831
    %v959 = vunpack.c.l.b16 %v832
    %v960 = vunpack.c.h.b16 %v832
    %v961 = vunpack.c.l.b16 %v833
    %v962 = vunpack.c.h.b16 %v833
    %v963 = vunpack.c.l.b16 %v834
    %v964 = vunpack.c.h.b16 %v834
    %v965 = vunpack.c.l.b16 %v835
    %v966 = vunpack.c.h.b16 %v835
    %v967 = vunpack.c.l.b16 %v836
    %v968 = vunpack.c.h.b16 %v836
    %v969 = vunpack.c.l.b16 %v837
    %v970 = vunpack.c.h.b16 %v837
    %v971 = vunpack.c.l.b16 %v838
    %v972 = vunpack.c.h.b16 %v838
    %v973 = vunpack.c.l.b16 %v839
    %v974 = vunpack.c.h.b16 %v839
    %v975 = vunpack.c.l.b16 %v840
    %v976 = vunpack.c.h.b16 %v840
    %v977 = vunpack.c.l.b16 %v841
    %v978 = vunpack.c.h.b16 %v841
    %v979 = vunpack.c.l.b16 %v842
    %v980 = vunpack.c.h.b16 %v842
    %v981 = vunpack.c.l.b16 %v843
    %v982 = vunpack.c.h.b16 %v843
    %v983 = vunpack.c.l.b16 %v844
    %v984 = vunpack.c.h.b16 %v844
    %v985 = vunpack.c.l.b16 %v845
    %v986 = vunpack.c.h.b16 %v845
    %v987 = vunpack.c.l.b16 %v846
    %v988 = vunpack.c.h.b16 %v846
    %v989 = vunpack.c.l.b16 %v847
    %v990 = vunpack.c.h.b16 %v847
    %v991 = vunpack.c.l.b16 %v848
    %v992 = vunpack.c.h.b16 %v848
    %v993 = vpack.c.b16 %v903, %v897
    %v994 = vpack.c.b16 %v904, %v898
    %v995 = vpack.c.b16 %v905, %v899
    %v996 = vpack.c.b16 %v906, %v900
    %v997 = vpack.c.b16 %v907, %v901
    %v998 = vpack.c.b16 %v908, %v902
    %v999 = vpack.c.b16 %v915, %v909
    %v1000 = vpack.c.b16 %v916, %v910
    %v1001 = vpack.c.b16 %v917, %v911
    %v1002 = vpack.c.b16 %v918, %v912
    %v1003 = vpack.c.b16 %v919, %v913
    %v1004 = vpack.c.b16 %v920, %v914
    %v1005 = vpack.c.b16 %v927, %v921
    %v1006 = vpack.c.b16 %v928, %v922
    %v1007 = vpack.c.b16 %v929, %v923
    %v1008 = vpack.c.b16 %v930, %v924
    %v1009 = vpack.c.b16 %v931, %v925
    %v1010 = vpack.c.b16 %v932, %v926
    %v1011 = vpack.c.b16 %v939, %v933
    %v1012 = vpack.c.b16 %v940, %v934
    %v1013 = vpack.c.b16 %v941, %v935
    %v1014 = vpack.c.b16 %v942, %v936
    %v1015 = vpack.c.b16 %v943, %v937
    %v1016 = vpack.c.b16 %v944, %v938
    %v1017 = vpack.c.b16 %v951, %v945
    %v1018 = vpack.c.b16 %v952, %v946
    %v1019 = vpack.c.b16 %v953, %v947
    %v1020 = vpack.c.b16 %v954, %v948
    %v1021 = vpack.c.b16 %v955, %v949
    %v1022 = vpack.c.b16 %v956, %v950
    %v1023 = vpack.c.b16 %v963, %v957
    %v1024 = vpack.c.b16 %v964, %v958
    %v1025 = vpack.c.b16 %v965, %v959
    %v1026 = vpack.c.b16 %v966, %v960
    %v1027 = vpack.c.b16 %v967, %v961
    %v1028 = vpack.c.b16 %v968, %v962
    %v1029 = vpack.c.b16 %v975, %v969
    %v1030 = vpack.c.b16 %v976, %v970
    %v1031 = vpack.c.b16 %v977, %v971
    %v1032 = vpack.c.b16 %v978, %v972
    %v1033 = vpack.c.b16 %v979, %v973
    %v1034 = vpack.c.b16 %v980, %v974
    %v1035 = vpack.c.b16 %v987, %v981
    %v1036 = vpack.c.b16 %v988, %v982
    %v1037 = vpack.c.b16 %v989, %v983
    %v1038 = vpack.c.b16 %v990, %v984
    %v1039 = vpack.c.b16 %v991, %v985
    %v1040 = vpack.c.b16 %v992, %v986
    %1089 = vmatpush.bf16.msra.mxu0 %v1035
    %1090 = vmatpush.bf16.msra.mxu0 %v1029
    %1091 = vmatpush.bf16.msra.mxu0 %v1023
    %1092 = vmatpush.bf16.msra.mxu0 %v1017
    %1093 = vmatpush.bf16.msra.mxu0 %v1011
    %1094 = vmatpush.bf16.msra.mxu0 %v1005
    %1095 = vmatpush.bf16.msra.mxu0 %v999
    %1096 = vmatpush.bf16.msra.mxu0 %v993
    %1097 = vmatmul.bf16.gmra.mxu0 %v800
    %v1098 = vpop.f32.mrf.mxu0
    %v1099 = vadd.f32 0.0, %v1098
    %v1100 = vpop.f32.mrf.mxu0
    %1101 = vdwg.mxu0
    %1102 = vmatpush.bf16.msra.mxu0 %v1036
    %1103 = vmatpush.bf16.msra.mxu0 %v1030
    %1104 = vmatpush.bf16.msra.mxu0 %v1024
    %1105 = vmatpush.bf16.msra.mxu0 %v1018
    %1106 = vmatpush.bf16.msra.mxu0 %v1012
    %1107 = vmatpush.bf16.msra.mxu0 %v1006
    %1108 = vmatpush.bf16.msra.mxu0 %v1000
    %1109 = vmatpush.bf16.msra.mxu0 %v994
    %1110 = vmatmul.bf16.gmra.mxu0 %v800
    %v1111 = vpop.f32.mrf.mxu0
    %v1112 = vadd.f32 0.0, %v1111
    %v1113 = vpop.f32.mrf.mxu0
    %1114 = vdwg.mxu0
    %1115 = vmatpush.bf16.msra.mxu0 %v1037
    %1116 = vmatpush.bf16.msra.mxu0 %v1031
    %1117 = vmatpush.bf16.msra.mxu0 %v1025
    %1118 = vmatpush.bf16.msra.mxu0 %v1019
    %1119 = vmatpush.bf16.msra.mxu0 %v1013
    %1120 = vmatpush.bf16.msra.mxu0 %v1007
    %1121 = vmatpush.bf16.msra.mxu0 %v1001
    %1122 = vmatpush.bf16.msra.mxu0 %v995
    %1123 = vmatmul.bf16.gmra.mxu0 %v800
    %v1124 = vpop.f32.mrf.mxu0
    %v1125 = vadd.f32 0.0, %v1124
    %v1126 = vpop.f32.mrf.mxu0
    %1127 = vdwg.mxu0
    %1128 = vmatpush.bf16.msra.mxu0 %v1038
    %1129 = vmatpush.bf16.msra.mxu0 %v1032
    %1130 = vmatpush.bf16.msra.mxu0 %v1026
    %1131 = vmatpush.bf16.msra.mxu0 %v1020
    %1132 = vmatpush.bf16.msra.mxu0 %v1014
    %1133 = vmatpush.bf16.msra.mxu0 %v1008
    %1134 = vmatpush.bf16.msra.mxu0 %v1002
    %1135 = vmatpush.bf16.msra.mxu0 %v996
    %1136 = vmatmul.bf16.gmra.mxu0 %v800
    %v1137 = vpop.f32.mrf.mxu0
    %v1138 = vadd.f32 0.0, %v1137
    %v1139 = vpop.f32.mrf.mxu0
    %1140 = vdwg.mxu0
    %1141 = vmatpush.bf16.msra.mxu0 %v1039
    %1142 = vmatpush.bf16.msra.mxu0 %v1033
    %1143 = vmatpush.bf16.msra.mxu0 %v1027
    %1144 = vmatpush.bf16.msra.mxu0 %v1021
    %1145 = vmatpush.bf16.msra.mxu0 %v1015
    %1146 = vmatpush.bf16.msra.mxu0 %v1009
    %1147 = vmatpush.bf16.msra.mxu0 %v1003
    %1148 = vmatpush.bf16.msra.mxu0 %v997
    %1149 = vmatmul.bf16.gmra.mxu0 %v800
    %v1150 = vpop.f32.mrf.mxu0
    %v1151 = vadd.f32 0.0, %v1150
    %v1152 = vpop.f32.mrf.mxu0
    %1153 = vdwg.mxu0
    %1154 = vmatpush.bf16.msra.mxu0 %v1040
    %1155 = vmatpush.bf16.msra.mxu0 %v1034
    %1156 = vmatpush.bf16.msra.mxu0 %v1028
    %1157 = vmatpush.bf16.msra.mxu0 %v1022
    %1158 = vmatpush.bf16.msra.mxu0 %v1016
    %1159 = vmatpush.bf16.msra.mxu0 %v1010
    %1160 = vmatpush.bf16.msra.mxu0 %v1004
    %1161 = vmatpush.bf16.msra.mxu0 %v998
    %1162 = vmatmul.bf16.gmra.mxu0 %v800
    %v1163 = vpop.f32.mrf.mxu0
    %v1164 = vadd.f32 0.0, %v1163
    %v1165 = vpop.f32.mrf.mxu0
    %1166 = vdwg.mxu0
    %v1167 = vxor.u32 %v1099, 2147483648
    %v1168 = vmul.f32 %v1167, 1.442695
    %v1169 = vpow.pop %v1168
    %v1170 = vadd.f32 %v1169, 1.0
    %v1171 = vrcp.pop %v1170
    %v1172 = vmul.f32 %v1170, %v1171
    %v1173 = vsub.f32 1.0, %v1172
    %v1174 = vmul.f32 %v1171, %v1173
    %v1175 = vadd.f32 %v1171, %v1174
    %vm1176 = vweird.f32 %v1170
    %vm1177 = vweird.f32 %v1171
    %vm1178 = vmor %vm1176, %vm1177
    %v1179 = vsel %vm1178, %v1171, %v1175
    %v1180 = vand.u32 2147483647, %v1170
    %vm1181 = vcmp.eq.f32.partialorder %v1180, 8.507059e+37
    %v1182 = vand.u32 %v1170, 2147483648
    %v1183 = vor.u32 1.1754944e-38, %v1182
    %v1184 = vsel %vm1181, %v1183, %v1179
    %v1185 = vmul.f32 1.0, %v1184
    %v1186 = vmax.f32 %v1112, 0.0
    %v1187 = vsub.f32 %v1186, %v799
    %v1188 = vmul.f32 %v1185, %v1187
    %v1189 = vadd.f32 %v799, %v1188
    %v1190 = vxor.u32 %v1125, 2147483648
    %v1191 = vmul.f32 %v1190, 1.442695
    %v1192 = vpow.pop %v1191
    %v1193 = vadd.f32 %v1192, 1.0
    %v1194 = vrcp.pop %v1193
    %v1195 = vmul.f32 %v1193, %v1194
    %v1196 = vsub.f32 1.0, %v1195
    %v1197 = vmul.f32 %v1194, %v1196
    %v1198 = vadd.f32 %v1194, %v1197
    %vm1199 = vweird.f32 %v1193
    %vm1200 = vweird.f32 %v1194
    %vm1201 = vmor %vm1199, %vm1200
    %v1202 = vsel %vm1201, %v1194, %v1198
    %v1203 = vand.u32 2147483647, %v1193
    %vm1204 = vcmp.eq.f32.partialorder %v1203, 8.507059e+37
    %v1205 = vand.u32 %v1193, 2147483648
    %v1206 = vor.u32 1.1754944e-38, %v1205
    %v1207 = vsel %vm1204, %v1206, %v1202
    %v1208 = vmul.f32 1.0, %v1207
    %v1209 = vmax.f32 %v1138, 0.0
    %v1210 = vsub.f32 %v1209, %v799
    %v1211 = vmul.f32 %v1208, %v1210
    %v1212 = vadd.f32 %v799, %v1211
    %v1213 = vxor.u32 %v1151, 2147483648
    %v1214 = vmul.f32 %v1213, 1.442695
    %v1215 = vpow.pop %v1214
    %v1216 = vadd.f32 %v1215, 1.0
    %v1217 = vrcp.pop %v1216
    %v1218 = vmul.f32 %v1216, %v1217
    %v1219 = vsub.f32 1.0, %v1218
    %v1220 = vmul.f32 %v1217, %v1219
    %v1221 = vadd.f32 %v1217, %v1220
    %vm1222 = vweird.f32 %v1216
    %vm1223 = vweird.f32 %v1217
    %vm1224 = vmor %vm1222, %vm1223
    %v1225 = vsel %vm1224, %v1217, %v1221
    %v1226 = vand.u32 2147483647, %v1216
    %vm1227 = vcmp.eq.f32.partialorder %v1226, 8.507059e+37
    %v1228 = vand.u32 %v1216, 2147483648
    %v1229 = vor.u32 1.1754944e-38, %v1228
    %v1230 = vsel %vm1227, %v1229, %v1225
    %v1231 = vmul.f32 1.0, %v1230
    %v1232 = vsub.f32 %v1164, %v799
    %v1233 = vmul.f32 %v1231, %v1232
    %v1234 = vadd.f32 %v799, %v1233
    %v1235 = vpack.c.bf16 %v1189, %v1189
    %v1236 = vld [vmem:[#allocation13] sm:$0xff]
    %v1237 = vld [vmem:[#allocation13 + $0x8] sm:$0xff]
    %v1238 = vld [vmem:[#allocation13 + $0x10] sm:$0xff]
    %v1239 = vld [vmem:[#allocation13 + $0x18] sm:$0xff]
    %v1240 = vld [vmem:[#allocation13 + $0x20] sm:$0xff]
    %v1241 = vld [vmem:[#allocation13 + $0x28] sm:$0xff]
    %v1242 = vld [vmem:[#allocation13 + $0x30] sm:$0xff]
    %v1243 = vld [vmem:[#allocation13 + $0x38] sm:$0xff]
    %v1244 = vld [vmem:[#allocation13 + $0x40] sm:$0xff]
    %v1245 = vld [vmem:[#allocation13 + $0x48] sm:$0xff]
    %v1246 = vld [vmem:[#allocation13 + $0x50] sm:$0xff]
    %v1247 = vld [vmem:[#allocation13 + $0x58] sm:$0xff]
    %v1248 = vld [vmem:[#allocation13 + $0x60] sm:$0xff]
    %v1249 = vld [vmem:[#allocation13 + $0x68] sm:$0xff]
    %v1250 = vld [vmem:[#allocation13 + $0x70] sm:$0xff]
    %v1251 = vld [vmem:[#allocation13 + $0x78] sm:$0xff]
    %v1268 = vunpack.c.l.b16 %v1236
    %v1269 = vunpack.c.h.b16 %v1236
    %v1270 = vunpack.c.l.b16 %v1237
    %v1271 = vunpack.c.h.b16 %v1237
    %v1272 = vunpack.c.l.b16 %v1238
    %v1273 = vunpack.c.h.b16 %v1238
    %v1274 = vunpack.c.l.b16 %v1239
    %v1275 = vunpack.c.h.b16 %v1239
    %v1276 = vunpack.c.l.b16 %v1240
    %v1277 = vunpack.c.h.b16 %v1240
    %v1278 = vunpack.c.l.b16 %v1241
    %v1279 = vunpack.c.h.b16 %v1241
    %v1280 = vunpack.c.l.b16 %v1242
    %v1281 = vunpack.c.h.b16 %v1242
    %v1282 = vunpack.c.l.b16 %v1243
    %v1283 = vunpack.c.h.b16 %v1243
    %v1284 = vunpack.c.l.b16 %v1244
    %v1285 = vunpack.c.h.b16 %v1244
    %v1286 = vunpack.c.l.b16 %v1245
    %v1287 = vunpack.c.h.b16 %v1245
    %v1288 = vunpack.c.l.b16 %v1246
    %v1289 = vunpack.c.h.b16 %v1246
    %v1290 = vunpack.c.l.b16 %v1247
    %v1291 = vunpack.c.h.b16 %v1247
    %v1292 = vunpack.c.l.b16 %v1248
    %v1293 = vunpack.c.h.b16 %v1248
    %v1294 = vunpack.c.l.b16 %v1249
    %v1295 = vunpack.c.h.b16 %v1249
    %v1296 = vunpack.c.l.b16 %v1250
    %v1297 = vunpack.c.h.b16 %v1250
    %v1298 = vunpack.c.l.b16 %v1251
    %v1299 = vunpack.c.h.b16 %v1251
    %v1300 = vpack.c.b16 %v1270, %v1268
    %v1301 = vpack.c.b16 %v1271, %v1269
    %v1302 = vpack.c.b16 %v1274, %v1272
    %v1303 = vpack.c.b16 %v1275, %v1273
    %v1304 = vpack.c.b16 %v1278, %v1276
    %v1305 = vpack.c.b16 %v1279, %v1277
    %v1306 = vpack.c.b16 %v1282, %v1280
    %v1307 = vpack.c.b16 %v1283, %v1281
    %v1308 = vpack.c.b16 %v1286, %v1284
    %v1309 = vpack.c.b16 %v1287, %v1285
    %v1310 = vpack.c.b16 %v1290, %v1288
    %v1311 = vpack.c.b16 %v1291, %v1289
    %v1312 = vpack.c.b16 %v1294, %v1292
    %v1313 = vpack.c.b16 %v1295, %v1293
    %v1314 = vpack.c.b16 %v1298, %v1296
    %v1315 = vpack.c.b16 %v1299, %v1297
    %1332 = vmatpush.bf16.msra.mxu0 %v1314
    %1333 = vmatpush.bf16.msra.mxu0 %v1312
    %1334 = vmatpush.bf16.msra.mxu0 %v1310
    %1335 = vmatpush.bf16.msra.mxu0 %v1308
    %1336 = vmatpush.bf16.msra.mxu0 %v1306
    %1337 = vmatpush.bf16.msra.mxu0 %v1304
    %1338 = vmatpush.bf16.msra.mxu0 %v1302
    %1339 = vmatpush.bf16.msra.mxu0 %v1300
    %1340 = vmatmul.bf16.gmra.mxu0 %v1235
    %v1341 = vpop.f32.mrf.mxu0
    %v1342 = vadd.f32 0.0, %v1341
    %v1343 = vpop.f32.mrf.mxu0
    %1344 = vdwg.mxu0
    %1345 = vmatpush.bf16.msra.mxu0 %v1315
    %1346 = vmatpush.bf16.msra.mxu0 %v1313
    %1347 = vmatpush.bf16.msra.mxu0 %v1311
    %1348 = vmatpush.bf16.msra.mxu0 %v1309
    %1349 = vmatpush.bf16.msra.mxu0 %v1307
    %1350 = vmatpush.bf16.msra.mxu0 %v1305
    %1351 = vmatpush.bf16.msra.mxu0 %v1303
    %1352 = vmatpush.bf16.msra.mxu0 %v1301
    %1353 = vmatmul.bf16.gmra.mxu0 %v1235
    %v1354 = vpop.f32.mrf.mxu0
    %v1355 = vadd.f32 0.0, %v1354
    %v1356 = vpop.f32.mrf.mxu0
    %1357 = vdwg.mxu0
    %v1358 = vxor.u32 %v1342, 2147483648
    %v1359 = vmul.f32 %v1358, 1.442695
    %v1360 = vpow.pop %v1359
    %v1361 = vadd.f32 %v1360, 1.0
    %v1362 = vrcp.pop %v1361
    %v1363 = vmul.f32 %v1361, %v1362
    %v1364 = vsub.f32 1.0, %v1363
    %v1365 = vmul.f32 %v1362, %v1364
    %v1366 = vadd.f32 %v1362, %v1365
    %vm1367 = vweird.f32 %v1361
    %vm1368 = vweird.f32 %v1362
    %vm1369 = vmor %vm1367, %vm1368
    %v1370 = vsel %vm1369, %v1362, %v1366
    %v1371 = vand.u32 2147483647, %v1361
    %vm1372 = vcmp.eq.f32.partialorder %v1371, 8.507059e+37
    %v1373 = vand.u32 %v1361, 2147483648
    %v1374 = vor.u32 1.1754944e-38, %v1373
    %v1375 = vsel %vm1372, %v1374, %v1370
    %v1376 = vmul.f32 1.0, %v1375
    %v1377 = vtanh.pop %v1355
    %v1378 = vsub.f32 %v1377, %v1189
    %v1379 = vmul.f32 %v1376, %v1378
    %v1380 = vadd.f32 %v1189, %v1379
    %v1381 = vpack.c.bf16 %v1212, %v1212
    %v1382 = vld [vmem:[#allocation14] sm:$0xff]
    %v1383 = vld [vmem:[#allocation14 + $0x8] sm:$0xff]
    %v1384 = vld [vmem:[#allocation14 + $0x10] sm:$0xff]
    %v1385 = vld [vmem:[#allocation14 + $0x18] sm:$0xff]
    %v1386 = vld [vmem:[#allocation14 + $0x20] sm:$0xff]
    %v1387 = vld [vmem:[#allocation14 + $0x28] sm:$0xff]
    %v1388 = vld [vmem:[#allocation14 + $0x30] sm:$0xff]
    %v1389 = vld [vmem:[#allocation14 + $0x38] sm:$0xff]
    %v1390 = vld [vmem:[#allocation14 + $0x40] sm:$0xff]
    %v1391 = vld [vmem:[#allocation14 + $0x48] sm:$0xff]
    %v1392 = vld [vmem:[#allocation14 + $0x50] sm:$0xff]
    %v1393 = vld [vmem:[#allocation14 + $0x58] sm:$0xff]
    %v1394 = vld [vmem:[#allocation14 + $0x60] sm:$0xff]
    %v1395 = vld [vmem:[#allocation14 + $0x68] sm:$0xff]
    %v1396 = vld [vmem:[#allocation14 + $0x70] sm:$0xff]
    %v1397 = vld [vmem:[#allocation14 + $0x78] sm:$0xff]
    %v1414 = vunpack.c.l.b16 %v1382
    %v1415 = vunpack.c.h.b16 %v1382
    %v1416 = vunpack.c.l.b16 %v1383
    %v1417 = vunpack.c.h.b16 %v1383
    %v1418 = vunpack.c.l.b16 %v1384
    %v1419 = vunpack.c.h.b16 %v1384
    %v1420 = vunpack.c.l.b16 %v1385
    %v1421 = vunpack.c.h.b16 %v1385
    %v1422 = vunpack.c.l.b16 %v1386
    %v1423 = vunpack.c.h.b16 %v1386
    %v1424 = vunpack.c.l.b16 %v1387
    %v1425 = vunpack.c.h.b16 %v1387
    %v1426 = vunpack.c.l.b16 %v1388
    %v1427 = vunpack.c.h.b16 %v1388
    %v1428 = vunpack.c.l.b16 %v1389
    %v1429 = vunpack.c.h.b16 %v1389
    %v1430 = vunpack.c.l.b16 %v1390
    %v1431 = vunpack.c.h.b16 %v1390
    %v1432 = vunpack.c.l.b16 %v1391
    %v1433 = vunpack.c.h.b16 %v1391
    %v1434 = vunpack.c.l.b16 %v1392
    %v1435 = vunpack.c.h.b16 %v1392
    %v1436 = vunpack.c.l.b16 %v1393
    %v1437 = vunpack.c.h.b16 %v1393
    %v1438 = vunpack.c.l.b16 %v1394
    %v1439 = vunpack.c.h.b16 %v1394
    %v1440 = vunpack.c.l.b16 %v1395
    %v1441 = vunpack.c.h.b16 %v1395
    %v1442 = vunpack.c.l.b16 %v1396
    %v1443 = vunpack.c.h.b16 %v1396
    %v1444 = vunpack.c.l.b16 %v1397
    %v1445 = vunpack.c.h.b16 %v1397
    %v1446 = vpack.c.b16 %v1416, %v1414
    %v1447 = vpack.c.b16 %v1417, %v1415
    %v1448 = vpack.c.b16 %v1420, %v1418
    %v1449 = vpack.c.b16 %v1421, %v1419
    %v1450 = vpack.c.b16 %v1424, %v1422
    %v1451 = vpack.c.b16 %v1425, %v1423
    %v1452 = vpack.c.b16 %v1428, %v1426
    %v1453 = vpack.c.b16 %v1429, %v1427
    %v1454 = vpack.c.b16 %v1432, %v1430
    %v1455 = vpack.c.b16 %v1433, %v1431
    %v1456 = vpack.c.b16 %v1436, %v1434
    %v1457 = vpack.c.b16 %v1437, %v1435
    %v1458 = vpack.c.b16 %v1440, %v1438
    %v1459 = vpack.c.b16 %v1441, %v1439
    %v1460 = vpack.c.b16 %v1444, %v1442
    %v1461 = vpack.c.b16 %v1445, %v1443
    %1478 = vmatpush.bf16.msra.mxu0 %v1460
    %1479 = vmatpush.bf16.msra.mxu0 %v1458
    %1480 = vmatpush.bf16.msra.mxu0 %v1456
    %1481 = vmatpush.bf16.msra.mxu0 %v1454
    %1482 = vmatpush.bf16.msra.mxu0 %v1452
    %1483 = vmatpush.bf16.msra.mxu0 %v1450
    %1484 = vmatpush.bf16.msra.mxu0 %v1448
    %1485 = vmatpush.bf16.msra.mxu0 %v1446
    %1486 = vmatmul.bf16.gmra.mxu0 %v1381
    %v1487 = vpop.f32.mrf.mxu0
    %v1488 = vadd.f32 0.0, %v1487
    %v1489 = vpop.f32.mrf.mxu0
    %1490 = vdwg.mxu0
    %1491 = vmatpush.bf16.msra.mxu0 %v1461
    %1492 = vmatpush.bf16.msra.mxu0 %v1459
    %1493 = vmatpush.bf16.msra.mxu0 %v1457
    %1494 = vmatpush.bf16.msra.mxu0 %v1455
    %1495 = vmatpush.bf16.msra.mxu0 %v1453
    %1496 = vmatpush.bf16.msra.mxu0 %v1451
    %1497 = vmatpush.bf16.msra.mxu0 %v1449
    %1498 = vmatpush.bf16.msra.mxu0 %v1447
    %1499 = vmatmul.bf16.gmra.mxu0 %v1381
    %v1500 = vpop.f32.mrf.mxu0
    %v1501 = vadd.f32 0.0, %v1500
    %v1502 = vpop.f32.mrf.mxu0
    %1503 = vdwg.mxu0
    %v1504 = vxor.u32 %v1488, 2147483648
    %v1505 = vmul.f32 %v1504, 1.442695
    %v1506 = vpow.pop %v1505
    %v1507 = vadd.f32 %v1506, 1.0
    %v1508 = vrcp.pop %v1507
    %v1509 = vmul.f32 %v1507, %v1508
    %v1510 = vsub.f32 1.0, %v1509
    %v1511 = vmul.f32 %v1508, %v1510
    %v1512 = vadd.f32 %v1508, %v1511
    %vm1513 = vweird.f32 %v1507
    %vm1514 = vweird.f32 %v1508
    %vm1515 = vmor %vm1513, %vm1514
    %v1516 = vsel %vm1515, %v1508, %v1512
    %v1517 = vand.u32 2147483647, %v1507
    %vm1518 = vcmp.eq.f32.partialorder %v1517, 8.507059e+37
    %v1519 = vand.u32 %v1507, 2147483648
    %v1520 = vor.u32 1.1754944e-38, %v1519
    %v1521 = vsel %vm1518, %v1520, %v1516
    %v1522 = vmul.f32 1.0, %v1521
    %v1523 = vtanh.pop %v1501
    %v1524 = vsub.f32 %v1523, %v1212
    %v1525 = vmul.f32 %v1522, %v1524
    %v1526 = vadd.f32 %v1212, %v1525
    %v1527 = vpack.c.bf16 %v1380, %v1380
    %v1528 = vld [vmem:[#allocation16] sm:$0xff]
    %v1529 = vld [vmem:[#allocation16 + $0x8] sm:$0xff]
    %v1530 = vld [vmem:[#allocation16 + $0x10] sm:$0xff]
    %v1531 = vld [vmem:[#allocation16 + $0x18] sm:$0xff]
    %v1532 = vld [vmem:[#allocation16 + $0x20] sm:$0xff]
    %v1533 = vld [vmem:[#allocation16 + $0x28] sm:$0xff]
    %v1534 = vld [vmem:[#allocation16 + $0x30] sm:$0xff]
    %v1535 = vld [vmem:[#allocation16 + $0x38] sm:$0xff]
    %v1536 = vld [vmem:[#allocation16 + $0x40] sm:$0xff]
    %v1537 = vld [vmem:[#allocation16 + $0x48] sm:$0xff]
    %v1538 = vld [vmem:[#allocation16 + $0x50] sm:$0xff]
    %v1539 = vld [vmem:[#allocation16 + $0x58] sm:$0xff]
    %v1540 = vld [vmem:[#allocation16 + $0x60] sm:$0xff]
    %v1541 = vld [vmem:[#allocation16 + $0x68] sm:$0xff]
    %v1542 = vld [vmem:[#allocation16 + $0x70] sm:$0xff]
    %v1543 = vld [vmem:[#allocation16 + $0x78] sm:$0xff]
    %v1544 = vld [vmem:[#allocation16 + $0x80] sm:$0xff]
    %v1545 = vld [vmem:[#allocation16 + $0x88] sm:$0xff]
    %v1546 = vld [vmem:[#allocation16 + $0x90] sm:$0xff]
    %v1547 = vld [vmem:[#allocation16 + $0x98] sm:$0xff]
    %v1548 = vld [vmem:[#allocation16 + $0xa0] sm:$0xff]
    %v1549 = vld [vmem:[#allocation16 + $0xa8] sm:$0xff]
    %v1550 = vld [vmem:[#allocation16 + $0xb0] sm:$0xff]
    %v1551 = vld [vmem:[#allocation16 + $0xb8] sm:$0xff]
    %v1552 = vld [vmem:[#allocation16 + $0xc0] sm:$0xff]
    %v1553 = vld [vmem:[#allocation16 + $0xc8] sm:$0xff]
    %v1554 = vld [vmem:[#allocation16 + $0xd0] sm:$0xff]
    %v1555 = vld [vmem:[#allocation16 + $0xd8] sm:$0xff]
    %v1556 = vld [vmem:[#allocation16 + $0xe0] sm:$0xff]
    %v1557 = vld [vmem:[#allocation16 + $0xe8] sm:$0xff]
    %v1558 = vld [vmem:[#allocation16 + $0xf0] sm:$0xff]
    %v1559 = vld [vmem:[#allocation16 + $0xf8] sm:$0xff]
    %v1592 = vunpack.c.l.b16 %v1528
    %v1593 = vunpack.c.h.b16 %v1528
    %v1594 = vunpack.c.l.b16 %v1529
    %v1595 = vunpack.c.h.b16 %v1529
    %v1596 = vunpack.c.l.b16 %v1530
    %v1597 = vunpack.c.h.b16 %v1530
    %v1598 = vunpack.c.l.b16 %v1531
    %v1599 = vunpack.c.h.b16 %v1531
    %v1600 = vunpack.c.l.b16 %v1532
    %v1601 = vunpack.c.h.b16 %v1532
    %v1602 = vunpack.c.l.b16 %v1533
    %v1603 = vunpack.c.h.b16 %v1533
    %v1604 = vunpack.c.l.b16 %v1534
    %v1605 = vunpack.c.h.b16 %v1534
    %v1606 = vunpack.c.l.b16 %v1535
    %v1607 = vunpack.c.h.b16 %v1535
    %v1608 = vunpack.c.l.b16 %v1536
    %v1609 = vunpack.c.h.b16 %v1536
    %v1610 = vunpack.c.l.b16 %v1537
    %v1611 = vunpack.c.h.b16 %v1537
    %v1612 = vunpack.c.l.b16 %v1538
    %v1613 = vunpack.c.h.b16 %v1538
    %v1614 = vunpack.c.l.b16 %v1539
    %v1615 = vunpack.c.h.b16 %v1539
    %v1616 = vunpack.c.l.b16 %v1540
    %v1617 = vunpack.c.h.b16 %v1540
    %v1618 = vunpack.c.l.b16 %v1541
    %v1619 = vunpack.c.h.b16 %v1541
    %v1620 = vunpack.c.l.b16 %v1542
    %v1621 = vunpack.c.h.b16 %v1542
    %v1622 = vunpack.c.l.b16 %v1543
    %v1623 = vunpack.c.h.b16 %v1543
    %v1624 = vunpack.c.l.b16 %v1544
    %v1625 = vunpack.c.h.b16 %v1544
    %v1626 = vunpack.c.l.b16 %v1545
    %v1627 = vunpack.c.h.b16 %v1545
    %v1628 = vunpack.c.l.b16 %v1546
    %v1629 = vunpack.c.h.b16 %v1546
    %v1630 = vunpack.c.l.b16 %v1547
    %v1631 = vunpack.c.h.b16 %v1547
    %v1632 = vunpack.c.l.b16 %v1548
    %v1633 = vunpack.c.h.b16 %v1548
    %v1634 = vunpack.c.l.b16 %v1549
    %v1635 = vunpack.c.h.b16 %v1549
    %v1636 = vunpack.c.l.b16 %v1550
    %v1637 = vunpack.c.h.b16 %v1550
    %v1638 = vunpack.c.l.b16 %v1551
    %v1639 = vunpack.c.h.b16 %v1551
    %v1640 = vunpack.c.l.b16 %v1552
    %v1641 = vunpack.c.h.b16 %v1552
    %v1642 = vunpack.c.l.b16 %v1553
    %v1643 = vunpack.c.h.b16 %v1553
    %v1644 = vunpack.c.l.b16 %v1554
    %v1645 = vunpack.c.h.b16 %v1554
    %v1646 = vunpack.c.l.b16 %v1555
    %v1647 = vunpack.c.h.b16 %v1555
    %v1648 = vunpack.c.l.b16 %v1556
    %v1649 = vunpack.c.h.b16 %v1556
    %v1650 = vunpack.c.l.b16 %v1557
    %v1651 = vunpack.c.h.b16 %v1557
    %v1652 = vunpack.c.l.b16 %v1558
    %v1653 = vunpack.c.h.b16 %v1558
    %v1654 = vunpack.c.l.b16 %v1559
    %v1655 = vunpack.c.h.b16 %v1559
    %v1656 = vpack.c.b16 %v1596, %v1592
    %v1657 = vpack.c.b16 %v1597, %v1593
    %v1658 = vpack.c.b16 %v1598, %v1594
    %v1659 = vpack.c.b16 %v1599, %v1595
    %v1660 = vpack.c.b16 %v1604, %v1600
    %v1661 = vpack.c.b16 %v1605, %v1601
    %v1662 = vpack.c.b16 %v1606, %v1602
    %v1663 = vpack.c.b16 %v1607, %v1603
    %v1664 = vpack.c.b16 %v1612, %v1608
    %v1665 = vpack.c.b16 %v1613, %v1609
    %v1666 = vpack.c.b16 %v1614, %v1610
    %v1667 = vpack.c.b16 %v1615, %v1611
    %v1668 = vpack.c.b16 %v1620, %v1616
    %v1669 = vpack.c.b16 %v1621, %v1617
    %v1670 = vpack.c.b16 %v1622, %v1618
    %v1671 = vpack.c.b16 %v1623, %v1619
    %v1672 = vpack.c.b16 %v1628, %v1624
    %v1673 = vpack.c.b16 %v1629, %v1625
    %v1674 = vpack.c.b16 %v1630, %v1626
    %v1675 = vpack.c.b16 %v1631, %v1627
    %v1676 = vpack.c.b16 %v1636, %v1632
    %v1677 = vpack.c.b16 %v1637, %v1633
    %v1678 = vpack.c.b16 %v1638, %v1634
    %v1679 = vpack.c.b16 %v1639, %v1635
    %v1680 = vpack.c.b16 %v1644, %v1640
    %v1681 = vpack.c.b16 %v1645, %v1641
    %v1682 = vpack.c.b16 %v1646, %v1642
    %v1683 = vpack.c.b16 %v1647, %v1643
    %v1684 = vpack.c.b16 %v1652, %v1648
    %v1685 = vpack.c.b16 %v1653, %v1649
    %v1686 = vpack.c.b16 %v1654, %v1650
    %v1687 = vpack.c.b16 %v1655, %v1651
    %1720 = vmatpush.bf16.msra.mxu0 %v1684
    %1721 = vmatpush.bf16.msra.mxu0 %v1680
    %1722 = vmatpush.bf16.msra.mxu0 %v1676
    %1723 = vmatpush.bf16.msra.mxu0 %v1672
    %1724 = vmatpush.bf16.msra.mxu0 %v1668
    %1725 = vmatpush.bf16.msra.mxu0 %v1664
    %1726 = vmatpush.bf16.msra.mxu0 %v1660
    %1727 = vmatpush.bf16.msra.mxu0 %v1656
    %1728 = vmatmul.bf16.gmra.mxu0 %v1527
    %v1729 = vpop.f32.mrf.mxu0
    %v1730 = vadd.f32 0.0, %v1729
    %v1731 = vpop.f32.mrf.mxu0
    %1732 = vdwg.mxu0
    %1733 = vmatpush.bf16.msra.mxu0 %v1685
    %1734 = vmatpush.bf16.msra.mxu0 %v1681
    %1735 = vmatpush.bf16.msra.mxu0 %v1677
    %1736 = vmatpush.bf16.msra.mxu0 %v1673
    %1737 = vmatpush.bf16.msra.mxu0 %v1669
    %1738 = vmatpush.bf16.msra.mxu0 %v1665
    %1739 = vmatpush.bf16.msra.mxu0 %v1661
    %1740 = vmatpush.bf16.msra.mxu0 %v1657
    %1741 = vmatmul.bf16.gmra.mxu0 %v1527
    %v1742 = vpop.f32.mrf.mxu0
    %v1743 = vadd.f32 0.0, %v1742
    %v1744 = vpop.f32.mrf.mxu0
    %1745 = vdwg.mxu0
    %1746 = vmatpush.bf16.msra.mxu0 %v1686
    %1747 = vmatpush.bf16.msra.mxu0 %v1682
    %1748 = vmatpush.bf16.msra.mxu0 %v1678
    %1749 = vmatpush.bf16.msra.mxu0 %v1674
    %1750 = vmatpush.bf16.msra.mxu0 %v1670
    %1751 = vmatpush.bf16.msra.mxu0 %v1666
    %1752 = vmatpush.bf16.msra.mxu0 %v1662
    %1753 = vmatpush.bf16.msra.mxu0 %v1658
    %1754 = vmatmul.bf16.gmra.mxu0 %v1527
    %v1755 = vpop.f32.mrf.mxu0
    %v1756 = vadd.f32 0.0, %v1755
    %v1757 = vpop.f32.mrf.mxu0
    %1758 = vdwg.mxu0
    %1759 = vmatpush.bf16.msra.mxu0 %v1687
    %1760 = vmatpush.bf16.msra.mxu0 %v1683
    %1761 = vmatpush.bf16.msra.mxu0 %v1679
    %1762 = vmatpush.bf16.msra.mxu0 %v1675
    %1763 = vmatpush.bf16.msra.mxu0 %v1671
    %1764 = vmatpush.bf16.msra.mxu0 %v1667
    %1765 = vmatpush.bf16.msra.mxu0 %v1663
    %1766 = vmatpush.bf16.msra.mxu0 %v1659
    %1767 = vmatmul.bf16.gmra.mxu0 %v1527
    %v1768 = vpop.f32.mrf.mxu0
    %v1769 = vadd.f32 0.0, %v1768
    %v1770 = vpop.f32.mrf.mxu0
    %1771 = vdwg.mxu0
    %v1772 = vxor.u32 %v1730, 2147483648
    %v1773 = vmul.f32 %v1772, 1.442695
    %v1774 = vpow.pop %v1773
    %v1775 = vadd.f32 %v1774, 1.0
    %v1776 = vrcp.pop %v1775
    %v1777 = vmul.f32 %v1775, %v1776
    %v1778 = vsub.f32 1.0, %v1777
    %v1779 = vmul.f32 %v1776, %v1778
    %v1780 = vadd.f32 %v1776, %v1779
    %vm1781 = vweird.f32 %v1775
    %vm1782 = vweird.f32 %v1776
    %vm1783 = vmor %vm1781, %vm1782
    %v1784 = vsel %vm1783, %v1776, %v1780
    %v1785 = vand.u32 2147483647, %v1775
    %vm1786 = vcmp.eq.f32.partialorder %v1785, 8.507059e+37
    %v1787 = vand.u32 %v1775, 2147483648
    %v1788 = vor.u32 1.1754944e-38, %v1787
    %v1789 = vsel %vm1786, %v1788, %v1784
    %v1790 = vmul.f32 1.0, %v1789
    %v1791 = vxor.u32 %v1743, 2147483648
    %v1792 = vmul.f32 %v1791, 1.442695
    %v1793 = vpow.pop %v1792
    %v1794 = vadd.f32 %v1793, 1.0
    %v1795 = vrcp.pop %v1794
    %v1796 = vmul.f32 %v1794, %v1795
    %v1797 = vsub.f32 1.0, %v1796
    %v1798 = vmul.f32 %v1795, %v1797
    %v1799 = vadd.f32 %v1795, %v1798
    %vm1800 = vweird.f32 %v1794
    %vm1801 = vweird.f32 %v1795
    %vm1802 = vmor %vm1800, %vm1801
    %v1803 = vsel %vm1802, %v1795, %v1799
    %v1804 = vand.u32 2147483647, %v1794
    %vm1805 = vcmp.eq.f32.partialorder %v1804, 8.507059e+37
    %v1806 = vand.u32 %v1794, 2147483648
    %v1807 = vor.u32 1.1754944e-38, %v1806
    %v1808 = vsel %vm1805, %v1807, %v1803
    %v1809 = vmul.f32 1.0, %v1808
    %v1810 = vsub.f32 %v1809, %v1380
    %v1811 = vmul.f32 %v1790, %v1810
    %v1812 = vadd.f32 %v1380, %v1811
    %v1813 = vxor.u32 %v1756, 2147483648
    %v1814 = vmul.f32 %v1813, 1.442695
    %v1815 = vpow.pop %v1814
    %v1816 = vadd.f32 %v1815, 1.0
    %v1817 = vrcp.pop %v1816
    %v1818 = vmul.f32 %v1816, %v1817
    %v1819 = vsub.f32 1.0, %v1818
    %v1820 = vmul.f32 %v1817, %v1819
    %v1821 = vadd.f32 %v1817, %v1820
    %vm1822 = vweird.f32 %v1816
    %vm1823 = vweird.f32 %v1817
    %vm1824 = vmor %vm1822, %vm1823
    %v1825 = vsel %vm1824, %v1817, %v1821
    %v1826 = vand.u32 2147483647, %v1816
    %vm1827 = vcmp.eq.f32.partialorder %v1826, 8.507059e+37
    %v1828 = vand.u32 %v1816, 2147483648
    %v1829 = vor.u32 1.1754944e-38, %v1828
    %v1830 = vsel %vm1827, %v1829, %v1825
    %v1831 = vmul.f32 1.0, %v1830
    %v1832 = vmax.f32 %v1769, 0.0
    %v1833 = vsub.f32 %v1832, %v1380
    %v1834 = vmul.f32 %v1831, %v1833
    %v1835 = vadd.f32 %v1380, %v1834
    %v1836 = vadd.f32 %v799, %v1189
    %v1837 = vadd.f32 %v1836, %v1212
    %v1838 = vadd.f32 %v1837, %v1234
    %v1839 = vadd.f32 %v1838, %v1380
    %v1840 = vadd.f32 %v1839, %v1812
    %v1841 = vadd.f32 %v1840, %v1526
    %v1842 = vadd.f32 %v1841, %v1835
    %v1843 = vmul.f32 %v1842, 0.125
    %v1844 = vpack.c.bf16 %v1843, %v1843
    %1845 = vmatpush.bf16.msra.mxu0 %v567
    %1846 = vmatpush.bf16.msra.mxu0 %v565
    %1847 = vmatpush.bf16.msra.mxu0 %v563
    %1848 = vmatpush.bf16.msra.mxu0 %v561
    %1849 = vmatpush.bf16.msra.mxu0 %v559
    %1850 = vmatpush.bf16.msra.mxu0 %v557
    %1851 = vmatpush.bf16.msra.mxu0 %v555
    %1852 = vmatpush.bf16.msra.mxu0 %v553
    %1853 = vmatmul.bf16.gmra.mxu0 %v1844
    %v1854 = vpop.f32.mrf.mxu0
    %v1855 = vadd.f32 0.0, %v1854
    %v1856 = vpop.f32.mrf.mxu0
    %1857 = vdwg.mxu0
    %1858 = vmatpush.bf16.msra.mxu0 %v568
    %1859 = vmatpush.bf16.msra.mxu0 %v566
    %1860 = vmatpush.bf16.msra.mxu0 %v564
    %1861 = vmatpush.bf16.msra.mxu0 %v562
    %1862 = vmatpush.bf16.msra.mxu0 %v560
    %1863 = vmatpush.bf16.msra.mxu0 %v558
    %1864 = vmatpush.bf16.msra.mxu0 %v556
    %1865 = vmatpush.bf16.msra.mxu0 %v554
    %1866 = vmatmul.bf16.gmra.mxu0 %v1844
    %v1867 = vpop.f32.mrf.mxu0
    %v1868 = vadd.f32 0.0, %v1867
    %v1869 = vpop.f32.mrf.mxu0
    %1870 = vdwg.mxu0
    %v1873 = vrot.slane %v1855, 6
    %v1874 = vrot.slane %v1868, 6
    %v1877 = vadd.f32 %v469, %v1873
    %v1878 = vadd.f32 %v483, %v1874
    %v1879 = vxor.u32 %v1877, 2147483648
    %v1880 = vmul.f32 %v1879, 1.442695
    %v1881 = vpow.pop %v1880
    %v1882 = vadd.f32 %v1881, 1.0
    %v1883 = vrcp.pop %v1882
    %v1884 = vmul.f32 %v1882, %v1883
    %v1885 = vsub.f32 1.0, %v1884
    %v1886 = vmul.f32 %v1883, %v1885
    %v1887 = vadd.f32 %v1883, %v1886
    %vm1888 = vweird.f32 %v1882
    %vm1889 = vweird.f32 %v1883
    %vm1890 = vmor %vm1888, %vm1889
    %v1891 = vsel %vm1890, %v1883, %v1887
    %v1892 = vand.u32 2147483647, %v1882
    %vm1893 = vcmp.eq.f32.partialorder %v1892, 8.507059e+37
    %v1894 = vand.u32 %v1882, 2147483648
    %v1895 = vor.u32 1.1754944e-38, %v1894
    %v1896 = vsel %vm1893, %v1895, %v1891
    %v1897 = vmul.f32 1.0, %v1896
    %v1898 = vtanh.pop %v1878
    %v1900 = vrot.slane %v1843, 6
    %v1902 = vsub.f32 %v1898, %v1900
    %v1903 = vmul.f32 %v1897, %v1902
    %v1905 = vrot.slane %v1903, 2
    %v1907 = vadd.f32 %v1843, %v1905
    %v1908 = vpack.c.bf16 %v1907, %v1907
    %1909 = vmatpush.bf16.msra.mxu0 %v715
    %1910 = vmatpush.bf16.msra.mxu0 %v713
    %1911 = vmatpush.bf16.msra.mxu0 %v711
    %1912 = vmatpush.bf16.msra.mxu0 %v709
    %1913 = vmatpush.bf16.msra.mxu0 %v707
    %1914 = vmatpush.bf16.msra.mxu0 %v705
    %1915 = vmatpush.bf16.msra.mxu0 %v703
    %1916 = vmatpush.bf16.msra.mxu0 %v701
    %1917 = vmatmul.bf16.gmra.mxu0 %v1908
    %v1918 = vpop.f32.mrf.mxu0
    %v1919 = vadd.f32 0.0, %v1918
    %v1920 = vpop.f32.mrf.mxu0
    %1921 = vdwg.mxu0
    %1922 = vmatpush.bf16.msra.mxu0 %v716
    %1923 = vmatpush.bf16.msra.mxu0 %v714
    %1924 = vmatpush.bf16.msra.mxu0 %v712
    %1925 = vmatpush.bf16.msra.mxu0 %v710
    %1926 = vmatpush.bf16.msra.mxu0 %v708
    %1927 = vmatpush.bf16.msra.mxu0 %v706
    %1928 = vmatpush.bf16.msra.mxu0 %v704
    %1929 = vmatpush.bf16.msra.mxu0 %v702
    %1930 = vmatmul.bf16.gmra.mxu0 %v1908
    %v1931 = vpop.f32.mrf.mxu0
    %v1932 = vadd.f32 0.0, %v1931
    %v1933 = vpop.f32.mrf.mxu0
    %1934 = vdwg.mxu0
    %v1935 = vxor.u32 %v1919, 2147483648
    %v1936 = vmul.f32 %v1935, 1.442695
    %v1937 = vpow.pop %v1936
    %v1938 = vadd.f32 %v1937, 1.0
    %v1939 = vrcp.pop %v1938
    %v1940 = vmul.f32 %v1938, %v1939
    %v1941 = vsub.f32 1.0, %v1940
    %v1942 = vmul.f32 %v1939, %v1941
    %v1943 = vadd.f32 %v1939, %v1942
    %vm1944 = vweird.f32 %v1938
    %vm1945 = vweird.f32 %v1939
    %vm1946 = vmor %vm1944, %vm1945
    %v1947 = vsel %vm1946, %v1939, %v1943
    %v1948 = vand.u32 2147483647, %v1938
    %vm1949 = vcmp.eq.f32.partialorder %v1948, 8.507059e+37
    %v1950 = vand.u32 %v1938, 2147483648
    %v1951 = vor.u32 1.1754944e-38, %v1950
    %v1952 = vsel %vm1949, %v1951, %v1947
    %v1953 = vmul.f32 1.0, %v1952
    %v1954 = vxor.u32 %v1932, 2147483648
    %v1955 = vmul.f32 %v1954, 1.442695
    %v1956 = vpow.pop %v1955
    %v1957 = vadd.f32 %v1956, 1.0
    %v1958 = vrcp.pop %v1957
    %v1959 = vmul.f32 %v1957, %v1958
    %v1960 = vsub.f32 1.0, %v1959
    %v1961 = vmul.f32 %v1958, %v1960
    %v1962 = vadd.f32 %v1958, %v1961
    %vm1963 = vweird.f32 %v1957
    %vm1964 = vweird.f32 %v1958
    %vm1965 = vmor %vm1963, %vm1964
    %v1966 = vsel %vm1965, %v1958, %v1962
    %v1967 = vand.u32 2147483647, %v1957
    %vm1968 = vcmp.eq.f32.partialorder %v1967, 8.507059e+37
    %v1969 = vand.u32 %v1957, 2147483648
    %v1970 = vor.u32 1.1754944e-38, %v1969
    %v1971 = vsel %vm1968, %v1970, %v1966
    %v1972 = vmul.f32 1.0, %v1971
    %v1973 = vsub.f32 %v1972, %v1907
    %v1974 = vmul.f32 %v1953, %v1973
    %v1975 = vadd.f32 %v1907, %v1974
    %v1976 = vpack.c.bf16 %v1975, %v1975
    %1977 = vmatpush.bf16.msra.mxu0 %v1035
    %1978 = vmatpush.bf16.msra.mxu0 %v1029
    %1979 = vmatpush.bf16.msra.mxu0 %v1023
    %1980 = vmatpush.bf16.msra.mxu0 %v1017
    %1981 = vmatpush.bf16.msra.mxu0 %v1011
    %1982 = vmatpush.bf16.msra.mxu0 %v1005
    %1983 = vmatpush.bf16.msra.mxu0 %v999
    %1984 = vmatpush.bf16.msra.mxu0 %v993
    %1985 = vmatmul.bf16.gmra.mxu0 %v1976
    %v1986 = vpop.f32.mrf.mxu0
    %v1987 = vadd.f32 0.0, %v1986
    %v1988 = vpop.f32.mrf.mxu0
    %1989 = vdwg.mxu0
    %1990 = vmatpush.bf16.msra.mxu0 %v1036
    %1991 = vmatpush.bf16.msra.mxu0 %v1030
    %1992 = vmatpush.bf16.msra.mxu0 %v1024
    %1993 = vmatpush.bf16.msra.mxu0 %v1018
    %1994 = vmatpush.bf16.msra.mxu0 %v1012
    %1995 = vmatpush.bf16.msra.mxu0 %v1006
    %1996 = vmatpush.bf16.msra.mxu0 %v1000
    %1997 = vmatpush.bf16.msra.mxu0 %v994
    %1998 = vmatmul.bf16.gmra.mxu0 %v1976
    %v1999 = vpop.f32.mrf.mxu0
    %v2000 = vadd.f32 0.0, %v1999
    %v2001 = vpop.f32.mrf.mxu0
    %2002 = vdwg.mxu0
    %2003 = vmatpush.bf16.msra.mxu0 %v1037
    %2004 = vmatpush.bf16.msra.mxu0 %v1031
    %2005 = vmatpush.bf16.msra.mxu0 %v1025
    %2006 = vmatpush.bf16.msra.mxu0 %v1019
    %2007 = vmatpush.bf16.msra.mxu0 %v1013
    %2008 = vmatpush.bf16.msra.mxu0 %v1007
    %2009 = vmatpush.bf16.msra.mxu0 %v1001
    %2010 = vmatpush.bf16.msra.mxu0 %v995
    %2011 = vmatmul.bf16.gmra.mxu0 %v1976
    %v2012 = vpop.f32.mrf.mxu0
    %v2013 = vadd.f32 0.0, %v2012
    %v2014 = vpop.f32.mrf.mxu0
    %2015 = vdwg.mxu0
    %2016 = vmatpush.bf16.msra.mxu0 %v1038
    %2017 = vmatpush.bf16.msra.mxu0 %v1032
    %2018 = vmatpush.bf16.msra.mxu0 %v1026
    %2019 = vmatpush.bf16.msra.mxu0 %v1020
    %2020 = vmatpush.bf16.msra.mxu0 %v1014
    %2021 = vmatpush.bf16.msra.mxu0 %v1008
    %2022 = vmatpush.bf16.msra.mxu0 %v1002
    %2023 = vmatpush.bf16.msra.mxu0 %v996
    %2024 = vmatmul.bf16.gmra.mxu0 %v1976
    %v2025 = vpop.f32.mrf.mxu0
    %v2026 = vadd.f32 0.0, %v2025
    %v2027 = vpop.f32.mrf.mxu0
    %2028 = vdwg.mxu0
    %2029 = vmatpush.bf16.msra.mxu0 %v1039
    %2030 = vmatpush.bf16.msra.mxu0 %v1033
    %2031 = vmatpush.bf16.msra.mxu0 %v1027
    %2032 = vmatpush.bf16.msra.mxu0 %v1021
    %2033 = vmatpush.bf16.msra.mxu0 %v1015
    %2034 = vmatpush.bf16.msra.mxu0 %v1009
    %2035 = vmatpush.bf16.msra.mxu0 %v1003
    %2036 = vmatpush.bf16.msra.mxu0 %v997
    %2037 = vmatmul.bf16.gmra.mxu0 %v1976
    %v2038 = vpop.f32.mrf.mxu0
    %v2039 = vadd.f32 0.0, %v2038
    %v2040 = vpop.f32.mrf.mxu0
    %2041 = vdwg.mxu0
    %2042 = vmatpush.bf16.msra.mxu0 %v1040
    %2043 = vmatpush.bf16.msra.mxu0 %v1034
    %2044 = vmatpush.bf16.msra.mxu0 %v1028
    %2045 = vmatpush.bf16.msra.mxu0 %v1022
    %2046 = vmatpush.bf16.msra.mxu0 %v1016
    %2047 = vmatpush.bf16.msra.mxu0 %v1010
    %2048 = vmatpush.bf16.msra.mxu0 %v1004
    %2049 = vmatpush.bf16.msra.mxu0 %v998
    %2050 = vmatmul.bf16.gmra.mxu0 %v1976
    %v2051 = vpop.f32.mrf.mxu0
    %v2052 = vadd.f32 0.0, %v2051
    %v2053 = vpop.f32.mrf.mxu0
    %2054 = vdwg.mxu0
    %v2055 = vxor.u32 %v1987, 2147483648
    %v2056 = vmul.f32 %v2055, 1.442695
    %v2057 = vpow.pop %v2056
    %v2058 = vadd.f32 %v2057, 1.0
    %v2059 = vrcp.pop %v2058
    %v2060 = vmul.f32 %v2058, %v2059
    %v2061 = vsub.f32 1.0, %v2060
    %v2062 = vmul.f32 %v2059, %v2061
    %v2063 = vadd.f32 %v2059, %v2062
    %vm2064 = vweird.f32 %v2058
    %vm2065 = vweird.f32 %v2059
    %vm2066 = vmor %vm2064, %vm2065
    %v2067 = vsel %vm2066, %v2059, %v2063
    %v2068 = vand.u32 2147483647, %v2058
    %vm2069 = vcmp.eq.f32.partialorder %v2068, 8.507059e+37
    %v2070 = vand.u32 %v2058, 2147483648
    %v2071 = vor.u32 1.1754944e-38, %v2070
    %v2072 = vsel %vm2069, %v2071, %v2067
    %v2073 = vmul.f32 1.0, %v2072
    %v2074 = vmax.f32 %v2000, 0.0
    %v2075 = vsub.f32 %v2074, %v1975
    %v2076 = vmul.f32 %v2073, %v2075
    %v2077 = vadd.f32 %v1975, %v2076
    %v2078 = vxor.u32 %v2013, 2147483648
    %v2079 = vmul.f32 %v2078, 1.442695
    %v2080 = vpow.pop %v2079
    %v2081 = vadd.f32 %v2080, 1.0
    %v2082 = vrcp.pop %v2081
    %v2083 = vmul.f32 %v2081, %v2082
    %v2084 = vsub.f32 1.0, %v2083
    %v2085 = vmul.f32 %v2082, %v2084
    %v2086 = vadd.f32 %v2082, %v2085
    %vm2087 = vweird.f32 %v2081
    %vm2088 = vweird.f32 %v2082
    %vm2089 = vmor %vm2087, %vm2088
    %v2090 = vsel %vm2089, %v2082, %v2086
    %v2091 = vand.u32 2147483647, %v2081
    %vm2092 = vcmp.eq.f32.partialorder %v2091, 8.507059e+37
    %v2093 = vand.u32 %v2081, 2147483648
    %v2094 = vor.u32 1.1754944e-38, %v2093
    %v2095 = vsel %vm2092, %v2094, %v2090
    %v2096 = vmul.f32 1.0, %v2095
    %v2097 = vmax.f32 %v2026, 0.0
    %v2098 = vsub.f32 %v2097, %v1975
    %v2099 = vmul.f32 %v2096, %v2098
    %v2100 = vadd.f32 %v1975, %v2099
    %v2101 = vxor.u32 %v2039, 2147483648
    %v2102 = vmul.f32 %v2101, 1.442695
    %v2103 = vpow.pop %v2102
    %v2104 = vadd.f32 %v2103, 1.0
    %v2105 = vrcp.pop %v2104
    %v2106 = vmul.f32 %v2104, %v2105
    %v2107 = vsub.f32 1.0, %v2106
    %v2108 = vmul.f32 %v2105, %v2107
    %v2109 = vadd.f32 %v2105, %v2108
    %vm2110 = vweird.f32 %v2104
    %vm2111 = vweird.f32 %v2105
    %vm2112 = vmor %vm2110, %vm2111
    %v2113 = vsel %vm2112, %v2105, %v2109
    %v2114 = vand.u32 2147483647, %v2104
    %vm2115 = vcmp.eq.f32.partialorder %v2114, 8.507059e+37
    %v2116 = vand.u32 %v2104, 2147483648
    %v2117 = vor.u32 1.1754944e-38, %v2116
    %v2118 = vsel %vm2115, %v2117, %v2113
    %v2119 = vmul.f32 1.0, %v2118
    %v2120 = vsub.f32 %v2052, %v1975
    %v2121 = vmul.f32 %v2119, %v2120
    %v2122 = vadd.f32 %v1975, %v2121
    %v2123 = vpack.c.bf16 %v2077, %v2077
    %2124 = vmatpush.bf16.msra.mxu0 %v1314
    %2125 = vmatpush.bf16.msra.mxu0 %v1312
    %2126 = vmatpush.bf16.msra.mxu0 %v1310
    %2127 = vmatpush.bf16.msra.mxu0 %v1308
    %2128 = vmatpush.bf16.msra.mxu0 %v1306
    %2129 = vmatpush.bf16.msra.mxu0 %v1304
    %2130 = vmatpush.bf16.msra.mxu0 %v1302
    %2131 = vmatpush.bf16.msra.mxu0 %v1300
    %2132 = vmatmul.bf16.gmra.mxu0 %v2123
    %v2133 = vpop.f32.mrf.mxu0
    %v2134 = vadd.f32 0.0, %v2133
    %v2135 = vpop.f32.mrf.mxu0
    %2136 = vdwg.mxu0
    %2137 = vmatpush.bf16.msra.mxu0 %v1315
    %2138 = vmatpush.bf16.msra.mxu0 %v1313
    %2139 = vmatpush.bf16.msra.mxu0 %v1311
    %2140 = vmatpush.bf16.msra.mxu0 %v1309
    %2141 = vmatpush.bf16.msra.mxu0 %v1307
    %2142 = vmatpush.bf16.msra.mxu0 %v1305
    %2143 = vmatpush.bf16.msra.mxu0 %v1303
    %2144 = vmatpush.bf16.msra.mxu0 %v1301
    %2145 = vmatmul.bf16.gmra.mxu0 %v2123
    %v2146 = vpop.f32.mrf.mxu0
    %v2147 = vadd.f32 0.0, %v2146
    %v2148 = vpop.f32.mrf.mxu0
    %2149 = vdwg.mxu0
    %v2150 = vxor.u32 %v2134, 2147483648
    %v2151 = vmul.f32 %v2150, 1.442695
    %v2152 = vpow.pop %v2151
    %v2153 = vadd.f32 %v2152, 1.0
    %v2154 = vrcp.pop %v2153
    %v2155 = vmul.f32 %v2153, %v2154
    %v2156 = vsub.f32 1.0, %v2155
    %v2157 = vmul.f32 %v2154, %v2156
    %v2158 = vadd.f32 %v2154, %v2157
    %vm2159 = vweird.f32 %v2153
    %vm2160 = vweird.f32 %v2154
    %vm2161 = vmor %vm2159, %vm2160
    %v2162 = vsel %vm2161, %v2154, %v2158
    %v2163 = vand.u32 2147483647, %v2153
    %vm2164 = vcmp.eq.f32.partialorder %v2163, 8.507059e+37
    %v2165 = vand.u32 %v2153, 2147483648
    %v2166 = vor.u32 1.1754944e-38, %v2165
    %v2167 = vsel %vm2164, %v2166, %v2162
    %v2168 = vmul.f32 1.0, %v2167
    %v2169 = vtanh.pop %v2147
    %v2170 = vsub.f32 %v2169, %v2077
    %v2171 = vmul.f32 %v2168, %v2170
    %v2172 = vadd.f32 %v2077, %v2171
    %v2173 = vpack.c.bf16 %v2100, %v2100
    %2174 = vmatpush.bf16.msra.mxu0 %v1460
    %2175 = vmatpush.bf16.msra.mxu0 %v1458
    %2176 = vmatpush.bf16.msra.mxu0 %v1456
    %2177 = vmatpush.bf16.msra.mxu0 %v1454
    %2178 = vmatpush.bf16.msra.mxu0 %v1452
    %2179 = vmatpush.bf16.msra.mxu0 %v1450
    %2180 = vmatpush.bf16.msra.mxu0 %v1448
    %2181 = vmatpush.bf16.msra.mxu0 %v1446
    %2182 = vmatmul.bf16.gmra.mxu0 %v2173
    %v2183 = vpop.f32.mrf.mxu0
    %v2184 = vadd.f32 0.0, %v2183
    %v2185 = vpop.f32.mrf.mxu0
    %2186 = vdwg.mxu0
    %2187 = vmatpush.bf16.msra.mxu0 %v1461
    %2188 = vmatpush.bf16.msra.mxu0 %v1459
    %2189 = vmatpush.bf16.msra.mxu0 %v1457
    %2190 = vmatpush.bf16.msra.mxu0 %v1455
    %2191 = vmatpush.bf16.msra.mxu0 %v1453
    %2192 = vmatpush.bf16.msra.mxu0 %v1451
    %2193 = vmatpush.bf16.msra.mxu0 %v1449
    %2194 = vmatpush.bf16.msra.mxu0 %v1447
    %2195 = vmatmul.bf16.gmra.mxu0 %v2173
    %v2196 = vpop.f32.mrf.mxu0
    %v2197 = vadd.f32 0.0, %v2196
    %v2198 = vpop.f32.mrf.mxu0
    %2199 = vdwg.mxu0
    %v2200 = vxor.u32 %v2184, 2147483648
    %v2201 = vmul.f32 %v2200, 1.442695
    %v2202 = vpow.pop %v2201
    %v2203 = vadd.f32 %v2202, 1.0
    %v2204 = vrcp.pop %v2203
    %v2205 = vmul.f32 %v2203, %v2204
    %v2206 = vsub.f32 1.0, %v2205
    %v2207 = vmul.f32 %v2204, %v2206
    %v2208 = vadd.f32 %v2204, %v2207
    %vm2209 = vweird.f32 %v2203
    %vm2210 = vweird.f32 %v2204
    %vm2211 = vmor %vm2209, %vm2210
    %v2212 = vsel %vm2211, %v2204, %v2208
    %v2213 = vand.u32 2147483647, %v2203
    %vm2214 = vcmp.eq.f32.partialorder %v2213, 8.507059e+37
    %v2215 = vand.u32 %v2203, 2147483648
    %v2216 = vor.u32 1.1754944e-38, %v2215
    %v2217 = vsel %vm2214, %v2216, %v2212
    %v2218 = vmul.f32 1.0, %v2217
    %v2219 = vtanh.pop %v2197
    %v2220 = vsub.f32 %v2219, %v2100
    %v2221 = vmul.f32 %v2218, %v2220
    %v2222 = vadd.f32 %v2100, %v2221
    %v2223 = vpack.c.bf16 %v2172, %v2172
    %2224 = vmatpush.bf16.msra.mxu0 %v1684
    %2225 = vmatpush.bf16.msra.mxu0 %v1680
    %2226 = vmatpush.bf16.msra.mxu0 %v1676
    %2227 = vmatpush.bf16.msra.mxu0 %v1672
    %2228 = vmatpush.bf16.msra.mxu0 %v1668
    %2229 = vmatpush.bf16.msra.mxu0 %v1664
    %2230 = vmatpush.bf16.msra.mxu0 %v1660
    %2231 = vmatpush.bf16.msra.mxu0 %v1656
    %2232 = vmatmul.bf16.gmra.mxu0 %v2223
    %v2233 = vpop.f32.mrf.mxu0
    %v2234 = vadd.f32 0.0, %v2233
    %v2235 = vpop.f32.mrf.mxu0
    %2236 = vdwg.mxu0
    %2237 = vmatpush.bf16.msra.mxu0 %v1685
    %2238 = vmatpush.bf16.msra.mxu0 %v1681
    %2239 = vmatpush.bf16.msra.mxu0 %v1677
    %2240 = vmatpush.bf16.msra.mxu0 %v1673
    %2241 = vmatpush.bf16.msra.mxu0 %v1669
    %2242 = vmatpush.bf16.msra.mxu0 %v1665
    %2243 = vmatpush.bf16.msra.mxu0 %v1661
    %2244 = vmatpush.bf16.msra.mxu0 %v1657
    %2245 = vmatmul.bf16.gmra.mxu0 %v2223
    %v2246 = vpop.f32.mrf.mxu0
    %v2247 = vadd.f32 0.0, %v2246
    %v2248 = vpop.f32.mrf.mxu0
    %2249 = vdwg.mxu0
    %2250 = vmatpush.bf16.msra.mxu0 %v1686
    %2251 = vmatpush.bf16.msra.mxu0 %v1682
    %2252 = vmatpush.bf16.msra.mxu0 %v1678
    %2253 = vmatpush.bf16.msra.mxu0 %v1674
    %2254 = vmatpush.bf16.msra.mxu0 %v1670
    %2255 = vmatpush.bf16.msra.mxu0 %v1666
    %2256 = vmatpush.bf16.msra.mxu0 %v1662
    %2257 = vmatpush.bf16.msra.mxu0 %v1658
    %2258 = vmatmul.bf16.gmra.mxu0 %v2223
    %v2259 = vpop.f32.mrf.mxu0
    %v2260 = vadd.f32 0.0, %v2259
    %v2261 = vpop.f32.mrf.mxu0
    %2262 = vdwg.mxu0
    %2263 = vmatpush.bf16.msra.mxu0 %v1687
    %2264 = vmatpush.bf16.msra.mxu0 %v1683
    %2265 = vmatpush.bf16.msra.mxu0 %v1679
    %2266 = vmatpush.bf16.msra.mxu0 %v1675
    %2267 = vmatpush.bf16.msra.mxu0 %v1671
    %2268 = vmatpush.bf16.msra.mxu0 %v1667
    %2269 = vmatpush.bf16.msra.mxu0 %v1663
    %2270 = vmatpush.bf16.msra.mxu0 %v1659
    %2271 = vmatmul.bf16.gmra.mxu0 %v2223
    %v2272 = vpop.f32.mrf.mxu0
    %v2273 = vadd.f32 0.0, %v2272
    %v2274 = vpop.f32.mrf.mxu0
    %2275 = vdwg.mxu0
    %v2276 = vxor.u32 %v2234, 2147483648
    %v2277 = vmul.f32 %v2276, 1.442695
    %v2278 = vpow.pop %v2277
    %v2279 = vadd.f32 %v2278, 1.0
    %v2280 = vrcp.pop %v2279
    %v2281 = vmul.f32 %v2279, %v2280
    %v2282 = vsub.f32 1.0, %v2281
    %v2283 = vmul.f32 %v2280, %v2282
    %v2284 = vadd.f32 %v2280, %v2283
    %vm2285 = vweird.f32 %v2279
    %vm2286 = vweird.f32 %v2280
    %vm2287 = vmor %vm2285, %vm2286
    %v2288 = vsel %vm2287, %v2280, %v2284
    %v2289 = vand.u32 2147483647, %v2279
    %vm2290 = vcmp.eq.f32.partialorder %v2289, 8.507059e+37
    %v2291 = vand.u32 %v2279, 2147483648
    %v2292 = vor.u32 1.1754944e-38, %v2291
    %v2293 = vsel %vm2290, %v2292, %v2288
    %v2294 = vmul.f32 1.0, %v2293
    %v2295 = vxor.u32 %v2247, 2147483648
    %v2296 = vmul.f32 %v2295, 1.442695
    %v2297 = vpow.pop %v2296
    %v2298 = vadd.f32 %v2297, 1.0
    %v2299 = vrcp.pop %v2298
    %v2300 = vmul.f32 %v2298, %v2299
    %v2301 = vsub.f32 1.0, %v2300
    %v2302 = vmul.f32 %v2299, %v2301
    %v2303 = vadd.f32 %v2299, %v2302
    %vm2304 = vweird.f32 %v2298
    %vm2305 = vweird.f32 %v2299
    %vm2306 = vmor %vm2304, %vm2305
    %v2307 = vsel %vm2306, %v2299, %v2303
    %v2308 = vand.u32 2147483647, %v2298
    %vm2309 = vcmp.eq.f32.partialorder %v2308, 8.507059e+37
    %v2310 = vand.u32 %v2298, 2147483648
    %v2311 = vor.u32 1.1754944e-38, %v2310
    %v2312 = vsel %vm2309, %v2311, %v2307
    %v2313 = vmul.f32 1.0, %v2312
    %v2314 = vsub.f32 %v2313, %v2172
    %v2315 = vmul.f32 %v2294, %v2314
    %v2316 = vadd.f32 %v2172, %v2315
    %v2317 = vxor.u32 %v2260, 2147483648
    %v2318 = vmul.f32 %v2317, 1.442695
    %v2319 = vpow.pop %v2318
    %v2320 = vadd.f32 %v2319, 1.0
    %v2321 = vrcp.pop %v2320
    %v2322 = vmul.f32 %v2320, %v2321
    %v2323 = vsub.f32 1.0, %v2322
    %v2324 = vmul.f32 %v2321, %v2323
    %v2325 = vadd.f32 %v2321, %v2324
    %vm2326 = vweird.f32 %v2320
    %vm2327 = vweird.f32 %v2321
    %vm2328 = vmor %vm2326, %vm2327
    %v2329 = vsel %vm2328, %v2321, %v2325
    %v2330 = vand.u32 2147483647, %v2320
    %vm2331 = vcmp.eq.f32.partialorder %v2330, 8.507059e+37
    %v2332 = vand.u32 %v2320, 2147483648
    %v2333 = vor.u32 1.1754944e-38, %v2332
    %v2334 = vsel %vm2331, %v2333, %v2329
    %v2335 = vmul.f32 1.0, %v2334
    %v2336 = vmax.f32 %v2273, 0.0
    %v2337 = vsub.f32 %v2336, %v2172
    %v2338 = vmul.f32 %v2335, %v2337
    %v2339 = vadd.f32 %v2172, %v2338
    %v2340 = vadd.f32 %v1975, %v2077
    %v2341 = vadd.f32 %v2340, %v2100
    %v2342 = vadd.f32 %v2341, %v2122
    %v2343 = vadd.f32 %v2342, %v2172
    %v2344 = vadd.f32 %v2343, %v2316
    %v2345 = vadd.f32 %v2344, %v2222
    %v2346 = vadd.f32 %v2345, %v2339
    %v2347 = vmul.f32 %v2346, 0.125
    %v2348 = vpack.c.bf16 %v2347, %v2347
    %2349 = vmatpush.bf16.msra.mxu0 %v567
    %2350 = vmatpush.bf16.msra.mxu0 %v565
    %2351 = vmatpush.bf16.msra.mxu0 %v563
    %2352 = vmatpush.bf16.msra.mxu0 %v561
    %2353 = vmatpush.bf16.msra.mxu0 %v559
    %2354 = vmatpush.bf16.msra.mxu0 %v557
    %2355 = vmatpush.bf16.msra.mxu0 %v555
    %2356 = vmatpush.bf16.msra.mxu0 %v553
    %2357 = vmatmul.bf16.gmra.mxu0 %v2348
    %v2358 = vpop.f32.mrf.mxu0
    %v2359 = vadd.f32 0.0, %v2358
    %v2360 = vpop.f32.mrf.mxu0
    %2361 = vdwg.mxu0
    %2362 = vmatpush.bf16.msra.mxu0 %v568
    %2363 = vmatpush.bf16.msra.mxu0 %v566
    %2364 = vmatpush.bf16.msra.mxu0 %v564
    %2365 = vmatpush.bf16.msra.mxu0 %v562
    %2366 = vmatpush.bf16.msra.mxu0 %v560
    %2367 = vmatpush.bf16.msra.mxu0 %v558
    %2368 = vmatpush.bf16.msra.mxu0 %v556
    %2369 = vmatpush.bf16.msra.mxu0 %v554
    %2370 = vmatmul.bf16.gmra.mxu0 %v2348
    %v2371 = vpop.f32.mrf.mxu0
    %v2372 = vadd.f32 0.0, %v2371
    %v2373 = vpop.f32.mrf.mxu0
    %2374 = vdwg.mxu0
    %v2377 = vrot.slane %v2359, 4
    %v2378 = vrot.slane %v2372, 4
    %v2381 = vadd.f32 %v469, %v2377
    %v2382 = vadd.f32 %v483, %v2378
    %v2383 = vxor.u32 %v2381, 2147483648
    %v2384 = vmul.f32 %v2383, 1.442695
    %v2385 = vpow.pop %v2384
    %v2386 = vadd.f32 %v2385, 1.0
    %v2387 = vrcp.pop %v2386
    %v2388 = vmul.f32 %v2386, %v2387
    %v2389 = vsub.f32 1.0, %v2388
    %v2390 = vmul.f32 %v2387, %v2389
    %v2391 = vadd.f32 %v2387, %v2390
    %vm2392 = vweird.f32 %v2386
    %vm2393 = vweird.f32 %v2387
    %vm2394 = vmor %vm2392, %vm2393
    %v2395 = vsel %vm2394, %v2387, %v2391
    %v2396 = vand.u32 2147483647, %v2386
    %vm2397 = vcmp.eq.f32.partialorder %v2396, 8.507059e+37
    %v2398 = vand.u32 %v2386, 2147483648
    %v2399 = vor.u32 1.1754944e-38, %v2398
    %v2400 = vsel %vm2397, %v2399, %v2395
    %v2401 = vmul.f32 1.0, %v2400
    %v2402 = vtanh.pop %v2382
    %v2404 = vrot.slane %v2347, 4
    %v2406 = vsub.f32 %v2402, %v2404
    %v2407 = vmul.f32 %v2401, %v2406
    %v2409 = vrot.slane %v2407, 4
    %v2411 = vadd.f32 %v2347, %v2409
    %v2412 = vpack.c.bf16 %v2411, %v2411
    %2413 = vmatpush.bf16.msra.mxu0 %v715
    %2414 = vmatpush.bf16.msra.mxu0 %v713
    %2415 = vmatpush.bf16.msra.mxu0 %v711
    %2416 = vmatpush.bf16.msra.mxu0 %v709
    %2417 = vmatpush.bf16.msra.mxu0 %v707
    %2418 = vmatpush.bf16.msra.mxu0 %v705
    %2419 = vmatpush.bf16.msra.mxu0 %v703
    %2420 = vmatpush.bf16.msra.mxu0 %v701
    %2421 = vmatmul.bf16.gmra.mxu0 %v2412
    %v2422 = vpop.f32.mrf.mxu0
    %v2423 = vadd.f32 0.0, %v2422
    %v2424 = vpop.f32.mrf.mxu0
    %2425 = vdwg.mxu0
    %2426 = vmatpush.bf16.msra.mxu0 %v716
    %2427 = vmatpush.bf16.msra.mxu0 %v714
    %2428 = vmatpush.bf16.msra.mxu0 %v712
    %2429 = vmatpush.bf16.msra.mxu0 %v710
    %2430 = vmatpush.bf16.msra.mxu0 %v708
    %2431 = vmatpush.bf16.msra.mxu0 %v706
    %2432 = vmatpush.bf16.msra.mxu0 %v704
    %2433 = vmatpush.bf16.msra.mxu0 %v702
    %2434 = vmatmul.bf16.gmra.mxu0 %v2412
    %v2435 = vpop.f32.mrf.mxu0
    %v2436 = vadd.f32 0.0, %v2435
    %v2437 = vpop.f32.mrf.mxu0
    %2438 = vdwg.mxu0
    %v2439 = vxor.u32 %v2423, 2147483648
    %v2440 = vmul.f32 %v2439, 1.442695
    %v2441 = vpow.pop %v2440
    %v2442 = vadd.f32 %v2441, 1.0
    %v2443 = vrcp.pop %v2442
    %v2444 = vmul.f32 %v2442, %v2443
    %v2445 = vsub.f32 1.0, %v2444
    %v2446 = vmul.f32 %v2443, %v2445
    %v2447 = vadd.f32 %v2443, %v2446
    %vm2448 = vweird.f32 %v2442
    %vm2449 = vweird.f32 %v2443
    %vm2450 = vmor %vm2448, %vm2449
    %v2451 = vsel %vm2450, %v2443, %v2447
    %v2452 = vand.u32 2147483647, %v2442
    %vm2453 = vcmp.eq.f32.partialorder %v2452, 8.507059e+37
    %v2454 = vand.u32 %v2442, 2147483648
    %v2455 = vor.u32 1.1754944e-38, %v2454
    %v2456 = vsel %vm2453, %v2455, %v2451
    %v2457 = vmul.f32 1.0, %v2456
    %v2458 = vxor.u32 %v2436, 2147483648
    %v2459 = vmul.f32 %v2458, 1.442695
    %v2460 = vpow.pop %v2459
    %v2461 = vadd.f32 %v2460, 1.0
    %v2462 = vrcp.pop %v2461
    %v2463 = vmul.f32 %v2461, %v2462
    %v2464 = vsub.f32 1.0, %v2463
    %v2465 = vmul.f32 %v2462, %v2464
    %v2466 = vadd.f32 %v2462, %v2465
    %vm2467 = vweird.f32 %v2461
    %vm2468 = vweird.f32 %v2462
    %vm2469 = vmor %vm2467, %vm2468
    %v2470 = vsel %vm2469, %v2462, %v2466
    %v2471 = vand.u32 2147483647, %v2461
    %vm2472 = vcmp.eq.f32.partialorder %v2471, 8.507059e+37
    %v2473 = vand.u32 %v2461, 2147483648
    %v2474 = vor.u32 1.1754944e-38, %v2473
    %v2475 = vsel %vm2472, %v2474, %v2470
    %v2476 = vmul.f32 1.0, %v2475
    %v2477 = vsub.f32 %v2476, %v2411
    %v2478 = vmul.f32 %v2457, %v2477
    %v2479 = vadd.f32 %v2411, %v2478
    %v2480 = vpack.c.bf16 %v2479, %v2479
    %2481 = vmatpush.bf16.msra.mxu0 %v1035
    %2482 = vmatpush.bf16.msra.mxu0 %v1029
    %2483 = vmatpush.bf16.msra.mxu0 %v1023
    %2484 = vmatpush.bf16.msra.mxu0 %v1017
    %2485 = vmatpush.bf16.msra.mxu0 %v1011
    %2486 = vmatpush.bf16.msra.mxu0 %v1005
    %2487 = vmatpush.bf16.msra.mxu0 %v999
    %2488 = vmatpush.bf16.msra.mxu0 %v993
    %2489 = vmatmul.bf16.gmra.mxu0 %v2480
    %v2490 = vpop.f32.mrf.mxu0
    %v2491 = vadd.f32 0.0, %v2490
    %v2492 = vpop.f32.mrf.mxu0
    %2493 = vdwg.mxu0
    %2494 = vmatpush.bf16.msra.mxu0 %v1036
    %2495 = vmatpush.bf16.msra.mxu0 %v1030
    %2496 = vmatpush.bf16.msra.mxu0 %v1024
    %2497 = vmatpush.bf16.msra.mxu0 %v1018
    %2498 = vmatpush.bf16.msra.mxu0 %v1012
    %2499 = vmatpush.bf16.msra.mxu0 %v1006
    %2500 = vmatpush.bf16.msra.mxu0 %v1000
    %2501 = vmatpush.bf16.msra.mxu0 %v994
    %2502 = vmatmul.bf16.gmra.mxu0 %v2480
    %v2503 = vpop.f32.mrf.mxu0
    %v2504 = vadd.f32 0.0, %v2503
    %v2505 = vpop.f32.mrf.mxu0
    %2506 = vdwg.mxu0
    %2507 = vmatpush.bf16.msra.mxu0 %v1037
    %2508 = vmatpush.bf16.msra.mxu0 %v1031
    %2509 = vmatpush.bf16.msra.mxu0 %v1025
    %2510 = vmatpush.bf16.msra.mxu0 %v1019
    %2511 = vmatpush.bf16.msra.mxu0 %v1013
    %2512 = vmatpush.bf16.msra.mxu0 %v1007
    %2513 = vmatpush.bf16.msra.mxu0 %v1001
    %2514 = vmatpush.bf16.msra.mxu0 %v995
    %2515 = vmatmul.bf16.gmra.mxu0 %v2480
    %v2516 = vpop.f32.mrf.mxu0
    %v2517 = vadd.f32 0.0, %v2516
    %v2518 = vpop.f32.mrf.mxu0
    %2519 = vdwg.mxu0
    %2520 = vmatpush.bf16.msra.mxu0 %v1038
    %2521 = vmatpush.bf16.msra.mxu0 %v1032
    %2522 = vmatpush.bf16.msra.mxu0 %v1026
    %2523 = vmatpush.bf16.msra.mxu0 %v1020
    %2524 = vmatpush.bf16.msra.mxu0 %v1014
    %2525 = vmatpush.bf16.msra.mxu0 %v1008
    %2526 = vmatpush.bf16.msra.mxu0 %v1002
    %2527 = vmatpush.bf16.msra.mxu0 %v996
    %2528 = vmatmul.bf16.gmra.mxu0 %v2480
    %v2529 = vpop.f32.mrf.mxu0
    %v2530 = vadd.f32 0.0, %v2529
    %v2531 = vpop.f32.mrf.mxu0
    %2532 = vdwg.mxu0
    %2533 = vmatpush.bf16.msra.mxu0 %v1039
    %2534 = vmatpush.bf16.msra.mxu0 %v1033
    %2535 = vmatpush.bf16.msra.mxu0 %v1027
    %2536 = vmatpush.bf16.msra.mxu0 %v1021
    %2537 = vmatpush.bf16.msra.mxu0 %v1015
    %2538 = vmatpush.bf16.msra.mxu0 %v1009
    %2539 = vmatpush.bf16.msra.mxu0 %v1003
    %2540 = vmatpush.bf16.msra.mxu0 %v997
    %2541 = vmatmul.bf16.gmra.mxu0 %v2480
    %v2542 = vpop.f32.mrf.mxu0
    %v2543 = vadd.f32 0.0, %v2542
    %v2544 = vpop.f32.mrf.mxu0
    %2545 = vdwg.mxu0
    %2546 = vmatpush.bf16.msra.mxu0 %v1040
    %2547 = vmatpush.bf16.msra.mxu0 %v1034
    %2548 = vmatpush.bf16.msra.mxu0 %v1028
    %2549 = vmatpush.bf16.msra.mxu0 %v1022
    %2550 = vmatpush.bf16.msra.mxu0 %v1016
    %2551 = vmatpush.bf16.msra.mxu0 %v1010
    %2552 = vmatpush.bf16.msra.mxu0 %v1004
    %2553 = vmatpush.bf16.msra.mxu0 %v998
    %2554 = vmatmul.bf16.gmra.mxu0 %v2480
    %v2555 = vpop.f32.mrf.mxu0
    %v2556 = vadd.f32 0.0, %v2555
    %v2557 = vpop.f32.mrf.mxu0
    %2558 = vdwg.mxu0
    %v2559 = vxor.u32 %v2491, 2147483648
    %v2560 = vmul.f32 %v2559, 1.442695
    %v2561 = vpow.pop %v2560
    %v2562 = vadd.f32 %v2561, 1.0
    %v2563 = vrcp.pop %v2562
    %v2564 = vmul.f32 %v2562, %v2563
    %v2565 = vsub.f32 1.0, %v2564
    %v2566 = vmul.f32 %v2563, %v2565
    %v2567 = vadd.f32 %v2563, %v2566
    %vm2568 = vweird.f32 %v2562
    %vm2569 = vweird.f32 %v2563
    %vm2570 = vmor %vm2568, %vm2569
    %v2571 = vsel %vm2570, %v2563, %v2567
    %v2572 = vand.u32 2147483647, %v2562
    %vm2573 = vcmp.eq.f32.partialorder %v2572, 8.507059e+37
    %v2574 = vand.u32 %v2562, 2147483648
    %v2575 = vor.u32 1.1754944e-38, %v2574
    %v2576 = vsel %vm2573, %v2575, %v2571
    %v2577 = vmul.f32 1.0, %v2576
    %v2578 = vmax.f32 %v2504, 0.0
    %v2579 = vsub.f32 %v2578, %v2479
    %v2580 = vmul.f32 %v2577, %v2579
    %v2581 = vadd.f32 %v2479, %v2580
    %v2582 = vxor.u32 %v2517, 2147483648
    %v2583 = vmul.f32 %v2582, 1.442695
    %v2584 = vpow.pop %v2583
    %v2585 = vadd.f32 %v2584, 1.0
    %v2586 = vrcp.pop %v2585
    %v2587 = vmul.f32 %v2585, %v2586
    %v2588 = vsub.f32 1.0, %v2587
    %v2589 = vmul.f32 %v2586, %v2588
    %v2590 = vadd.f32 %v2586, %v2589
    %vm2591 = vweird.f32 %v2585
    %vm2592 = vweird.f32 %v2586
    %vm2593 = vmor %vm2591, %vm2592
    %v2594 = vsel %vm2593, %v2586, %v2590
    %v2595 = vand.u32 2147483647, %v2585
    %vm2596 = vcmp.eq.f32.partialorder %v2595, 8.507059e+37
    %v2597 = vand.u32 %v2585, 2147483648
    %v2598 = vor.u32 1.1754944e-38, %v2597
    %v2599 = vsel %vm2596, %v2598, %v2594
    %v2600 = vmul.f32 1.0, %v2599
    %v2601 = vmax.f32 %v2530, 0.0
    %v2602 = vsub.f32 %v2601, %v2479
    %v2603 = vmul.f32 %v2600, %v2602
    %v2604 = vadd.f32 %v2479, %v2603
    %v2605 = vxor.u32 %v2543, 2147483648
    %v2606 = vmul.f32 %v2605, 1.442695
    %v2607 = vpow.pop %v2606
    %v2608 = vadd.f32 %v2607, 1.0
    %v2609 = vrcp.pop %v2608
    %v2610 = vmul.f32 %v2608, %v2609
    %v2611 = vsub.f32 1.0, %v2610
    %v2612 = vmul.f32 %v2609, %v2611
    %v2613 = vadd.f32 %v2609, %v2612
    %vm2614 = vweird.f32 %v2608
    %vm2615 = vweird.f32 %v2609
    %vm2616 = vmor %vm2614, %vm2615
    %v2617 = vsel %vm2616, %v2609, %v2613
    %v2618 = vand.u32 2147483647, %v2608
    %vm2619 = vcmp.eq.f32.partialorder %v2618, 8.507059e+37
    %v2620 = vand.u32 %v2608, 2147483648
    %v2621 = vor.u32 1.1754944e-38, %v2620
    %v2622 = vsel %vm2619, %v2621, %v2617
    %v2623 = vmul.f32 1.0, %v2622
    %v2624 = vsub.f32 %v2556, %v2479
    %v2625 = vmul.f32 %v2623, %v2624
    %v2626 = vadd.f32 %v2479, %v2625
    %v2627 = vpack.c.bf16 %v2581, %v2581
    %2628 = vmatpush.bf16.msra.mxu0 %v1314
    %2629 = vmatpush.bf16.msra.mxu0 %v1312
    %2630 = vmatpush.bf16.msra.mxu0 %v1310
    %2631 = vmatpush.bf16.msra.mxu0 %v1308
    %2632 = vmatpush.bf16.msra.mxu0 %v1306
    %2633 = vmatpush.bf16.msra.mxu0 %v1304
    %2634 = vmatpush.bf16.msra.mxu0 %v1302
    %2635 = vmatpush.bf16.msra.mxu0 %v1300
    %2636 = vmatmul.bf16.gmra.mxu0 %v2627
    %v2637 = vpop.f32.mrf.mxu0
    %v2638 = vadd.f32 0.0, %v2637
    %v2639 = vpop.f32.mrf.mxu0
    %2640 = vdwg.mxu0
    %2641 = vmatpush.bf16.msra.mxu0 %v1315
    %2642 = vmatpush.bf16.msra.mxu0 %v1313
    %2643 = vmatpush.bf16.msra.mxu0 %v1311
    %2644 = vmatpush.bf16.msra.mxu0 %v1309
    %2645 = vmatpush.bf16.msra.mxu0 %v1307
    %2646 = vmatpush.bf16.msra.mxu0 %v1305
    %2647 = vmatpush.bf16.msra.mxu0 %v1303
    %2648 = vmatpush.bf16.msra.mxu0 %v1301
    %2649 = vmatmul.bf16.gmra.mxu0 %v2627
    %v2650 = vpop.f32.mrf.mxu0
    %v2651 = vadd.f32 0.0, %v2650
    %v2652 = vpop.f32.mrf.mxu0
    %2653 = vdwg.mxu0
    %v2654 = vxor.u32 %v2638, 2147483648
    %v2655 = vmul.f32 %v2654, 1.442695
    %v2656 = vpow.pop %v2655
    %v2657 = vadd.f32 %v2656, 1.0
    %v2658 = vrcp.pop %v2657
    %v2659 = vmul.f32 %v2657, %v2658
    %v2660 = vsub.f32 1.0, %v2659
    %v2661 = vmul.f32 %v2658, %v2660
    %v2662 = vadd.f32 %v2658, %v2661
    %vm2663 = vweird.f32 %v2657
    %vm2664 = vweird.f32 %v2658
    %vm2665 = vmor %vm2663, %vm2664
    %v2666 = vsel %vm2665, %v2658, %v2662
    %v2667 = vand.u32 2147483647, %v2657
    %vm2668 = vcmp.eq.f32.partialorder %v2667, 8.507059e+37
    %v2669 = vand.u32 %v2657, 2147483648
    %v2670 = vor.u32 1.1754944e-38, %v2669
    %v2671 = vsel %vm2668, %v2670, %v2666
    %v2672 = vmul.f32 1.0, %v2671
    %v2673 = vtanh.pop %v2651
    %v2674 = vsub.f32 %v2673, %v2581
    %v2675 = vmul.f32 %v2672, %v2674
    %v2676 = vadd.f32 %v2581, %v2675
    %v2677 = vpack.c.bf16 %v2604, %v2604
    %2678 = vmatpush.bf16.msra.mxu0 %v1460
    %2679 = vmatpush.bf16.msra.mxu0 %v1458
    %2680 = vmatpush.bf16.msra.mxu0 %v1456
    %2681 = vmatpush.bf16.msra.mxu0 %v1454
    %2682 = vmatpush.bf16.msra.mxu0 %v1452
    %2683 = vmatpush.bf16.msra.mxu0 %v1450
    %2684 = vmatpush.bf16.msra.mxu0 %v1448
    %2685 = vmatpush.bf16.msra.mxu0 %v1446
    %2686 = vmatmul.bf16.gmra.mxu0 %v2677
    %v2687 = vpop.f32.mrf.mxu0
    %v2688 = vadd.f32 0.0, %v2687
    %v2689 = vpop.f32.mrf.mxu0
    %2690 = vdwg.mxu0
    %2691 = vmatpush.bf16.msra.mxu0 %v1461
    %2692 = vmatpush.bf16.msra.mxu0 %v1459
    %2693 = vmatpush.bf16.msra.mxu0 %v1457
    %2694 = vmatpush.bf16.msra.mxu0 %v1455
    %2695 = vmatpush.bf16.msra.mxu0 %v1453
    %2696 = vmatpush.bf16.msra.mxu0 %v1451
    %2697 = vmatpush.bf16.msra.mxu0 %v1449
    %2698 = vmatpush.bf16.msra.mxu0 %v1447
    %2699 = vmatmul.bf16.gmra.mxu0 %v2677
    %v2700 = vpop.f32.mrf.mxu0
    %v2701 = vadd.f32 0.0, %v2700
    %v2702 = vpop.f32.mrf.mxu0
    %2703 = vdwg.mxu0
    %v2704 = vxor.u32 %v2688, 2147483648
    %v2705 = vmul.f32 %v2704, 1.442695
    %v2706 = vpow.pop %v2705
    %v2707 = vadd.f32 %v2706, 1.0
    %v2708 = vrcp.pop %v2707
    %v2709 = vmul.f32 %v2707, %v2708
    %v2710 = vsub.f32 1.0, %v2709
    %v2711 = vmul.f32 %v2708, %v2710
    %v2712 = vadd.f32 %v2708, %v2711
    %vm2713 = vweird.f32 %v2707
    %vm2714 = vweird.f32 %v2708
    %vm2715 = vmor %vm2713, %vm2714
    %v2716 = vsel %vm2715, %v2708, %v2712
    %v2717 = vand.u32 2147483647, %v2707
    %vm2718 = vcmp.eq.f32.partialorder %v2717, 8.507059e+37
    %v2719 = vand.u32 %v2707, 2147483648
    %v2720 = vor.u32 1.1754944e-38, %v2719
    %v2721 = vsel %vm2718, %v2720, %v2716
    %v2722 = vmul.f32 1.0, %v2721
    %v2723 = vtanh.pop %v2701
    %v2724 = vsub.f32 %v2723, %v2604
    %v2725 = vmul.f32 %v2722, %v2724
    %v2726 = vadd.f32 %v2604, %v2725
    %v2727 = vpack.c.bf16 %v2676, %v2676
    %2728 = vmatpush.bf16.msra.mxu0 %v1684
    %2729 = vmatpush.bf16.msra.mxu0 %v1680
    %2730 = vmatpush.bf16.msra.mxu0 %v1676
    %2731 = vmatpush.bf16.msra.mxu0 %v1672
    %2732 = vmatpush.bf16.msra.mxu0 %v1668
    %2733 = vmatpush.bf16.msra.mxu0 %v1664
    %2734 = vmatpush.bf16.msra.mxu0 %v1660
    %2735 = vmatpush.bf16.msra.mxu0 %v1656
    %2736 = vmatmul.bf16.gmra.mxu0 %v2727
    %v2737 = vpop.f32.mrf.mxu0
    %v2738 = vadd.f32 0.0, %v2737
    %v2739 = vpop.f32.mrf.mxu0
    %2740 = vdwg.mxu0
    %2741 = vmatpush.bf16.msra.mxu0 %v1685
    %2742 = vmatpush.bf16.msra.mxu0 %v1681
    %2743 = vmatpush.bf16.msra.mxu0 %v1677
    %2744 = vmatpush.bf16.msra.mxu0 %v1673
    %2745 = vmatpush.bf16.msra.mxu0 %v1669
    %2746 = vmatpush.bf16.msra.mxu0 %v1665
    %2747 = vmatpush.bf16.msra.mxu0 %v1661
    %2748 = vmatpush.bf16.msra.mxu0 %v1657
    %2749 = vmatmul.bf16.gmra.mxu0 %v2727
    %v2750 = vpop.f32.mrf.mxu0
    %v2751 = vadd.f32 0.0, %v2750
    %v2752 = vpop.f32.mrf.mxu0
    %2753 = vdwg.mxu0
    %2754 = vmatpush.bf16.msra.mxu0 %v1686
    %2755 = vmatpush.bf16.msra.mxu0 %v1682
    %2756 = vmatpush.bf16.msra.mxu0 %v1678
    %2757 = vmatpush.bf16.msra.mxu0 %v1674
    %2758 = vmatpush.bf16.msra.mxu0 %v1670
    %2759 = vmatpush.bf16.msra.mxu0 %v1666
    %2760 = vmatpush.bf16.msra.mxu0 %v1662
    %2761 = vmatpush.bf16.msra.mxu0 %v1658
    %2762 = vmatmul.bf16.gmra.mxu0 %v2727
    %v2763 = vpop.f32.mrf.mxu0
    %v2764 = vadd.f32 0.0, %v2763
    %v2765 = vpop.f32.mrf.mxu0
    %2766 = vdwg.mxu0
    %2767 = vmatpush.bf16.msra.mxu0 %v1687
    %2768 = vmatpush.bf16.msra.mxu0 %v1683
    %2769 = vmatpush.bf16.msra.mxu0 %v1679
    %2770 = vmatpush.bf16.msra.mxu0 %v1675
    %2771 = vmatpush.bf16.msra.mxu0 %v1671
    %2772 = vmatpush.bf16.msra.mxu0 %v1667
    %2773 = vmatpush.bf16.msra.mxu0 %v1663
    %2774 = vmatpush.bf16.msra.mxu0 %v1659
    %2775 = vmatmul.bf16.gmra.mxu0 %v2727
    %v2776 = vpop.f32.mrf.mxu0
    %v2777 = vadd.f32 0.0, %v2776
    %v2778 = vpop.f32.mrf.mxu0
    %2779 = vdwg.mxu0
    %v2780 = vxor.u32 %v2738, 2147483648
    %v2781 = vmul.f32 %v2780, 1.442695
    %v2782 = vpow.pop %v2781
    %v2783 = vadd.f32 %v2782, 1.0
    %v2784 = vrcp.pop %v2783
    %v2785 = vmul.f32 %v2783, %v2784
    %v2786 = vsub.f32 1.0, %v2785
    %v2787 = vmul.f32 %v2784, %v2786
    %v2788 = vadd.f32 %v2784, %v2787
    %vm2789 = vweird.f32 %v2783
    %vm2790 = vweird.f32 %v2784
    %vm2791 = vmor %vm2789, %vm2790
    %v2792 = vsel %vm2791, %v2784, %v2788
    %v2793 = vand.u32 2147483647, %v2783
    %vm2794 = vcmp.eq.f32.partialorder %v2793, 8.507059e+37
    %v2795 = vand.u32 %v2783, 2147483648
    %v2796 = vor.u32 1.1754944e-38, %v2795
    %v2797 = vsel %vm2794, %v2796, %v2792
    %v2798 = vmul.f32 1.0, %v2797
    %v2799 = vxor.u32 %v2751, 2147483648
    %v2800 = vmul.f32 %v2799, 1.442695
    %v2801 = vpow.pop %v2800
    %v2802 = vadd.f32 %v2801, 1.0
    %v2803 = vrcp.pop %v2802
    %v2804 = vmul.f32 %v2802, %v2803
    %v2805 = vsub.f32 1.0, %v2804
    %v2806 = vmul.f32 %v2803, %v2805
    %v2807 = vadd.f32 %v2803, %v2806
    %vm2808 = vweird.f32 %v2802
    %vm2809 = vweird.f32 %v2803
    %vm2810 = vmor %vm2808, %vm2809
    %v2811 = vsel %vm2810, %v2803, %v2807
    %v2812 = vand.u32 2147483647, %v2802
    %vm2813 = vcmp.eq.f32.partialorder %v2812, 8.507059e+37
    %v2814 = vand.u32 %v2802, 2147483648
    %v2815 = vor.u32 1.1754944e-38, %v2814
    %v2816 = vsel %vm2813, %v2815, %v2811
    %v2817 = vmul.f32 1.0, %v2816
    %v2818 = vsub.f32 %v2817, %v2676
    %v2819 = vmul.f32 %v2798, %v2818
    %v2820 = vadd.f32 %v2676, %v2819
    %v2821 = vxor.u32 %v2764, 2147483648
    %v2822 = vmul.f32 %v2821, 1.442695
    %v2823 = vpow.pop %v2822
    %v2824 = vadd.f32 %v2823, 1.0
    %v2825 = vrcp.pop %v2824
    %v2826 = vmul.f32 %v2824, %v2825
    %v2827 = vsub.f32 1.0, %v2826
    %v2828 = vmul.f32 %v2825, %v2827
    %v2829 = vadd.f32 %v2825, %v2828
    %vm2830 = vweird.f32 %v2824
    %vm2831 = vweird.f32 %v2825
    %vm2832 = vmor %vm2830, %vm2831
    %v2833 = vsel %vm2832, %v2825, %v2829
    %v2834 = vand.u32 2147483647, %v2824
    %vm2835 = vcmp.eq.f32.partialorder %v2834, 8.507059e+37
    %v2836 = vand.u32 %v2824, 2147483648
    %v2837 = vor.u32 1.1754944e-38, %v2836
    %v2838 = vsel %vm2835, %v2837, %v2833
    %v2839 = vmul.f32 1.0, %v2838
    %v2840 = vmax.f32 %v2777, 0.0
    %v2841 = vsub.f32 %v2840, %v2676
    %v2842 = vmul.f32 %v2839, %v2841
    %v2843 = vadd.f32 %v2676, %v2842
    %v2844 = vadd.f32 %v2479, %v2581
    %v2845 = vadd.f32 %v2844, %v2604
    %v2846 = vadd.f32 %v2845, %v2626
    %v2847 = vadd.f32 %v2846, %v2676
    %v2848 = vadd.f32 %v2847, %v2820
    %v2849 = vadd.f32 %v2848, %v2726
    %v2850 = vadd.f32 %v2849, %v2843
    %v2851 = vmul.f32 %v2850, 0.125
    %v2852 = vpack.c.bf16 %v2851, %v2851
    %2853 = vmatpush.bf16.msra.mxu0 %v567
    %2854 = vmatpush.bf16.msra.mxu0 %v565
    %2855 = vmatpush.bf16.msra.mxu0 %v563
    %2856 = vmatpush.bf16.msra.mxu0 %v561
    %2857 = vmatpush.bf16.msra.mxu0 %v559
    %2858 = vmatpush.bf16.msra.mxu0 %v557
    %2859 = vmatpush.bf16.msra.mxu0 %v555
    %2860 = vmatpush.bf16.msra.mxu0 %v553
    %2861 = vmatmul.bf16.gmra.mxu0 %v2852
    %v2862 = vpop.f32.mrf.mxu0
    %v2863 = vadd.f32 0.0, %v2862
    %v2864 = vpop.f32.mrf.mxu0
    %2865 = vdwg.mxu0
    %2866 = vmatpush.bf16.msra.mxu0 %v568
    %2867 = vmatpush.bf16.msra.mxu0 %v566
    %2868 = vmatpush.bf16.msra.mxu0 %v564
    %2869 = vmatpush.bf16.msra.mxu0 %v562
    %2870 = vmatpush.bf16.msra.mxu0 %v560
    %2871 = vmatpush.bf16.msra.mxu0 %v558
    %2872 = vmatpush.bf16.msra.mxu0 %v556
    %2873 = vmatpush.bf16.msra.mxu0 %v554
    %2874 = vmatmul.bf16.gmra.mxu0 %v2852
    %v2875 = vpop.f32.mrf.mxu0
    %v2876 = vadd.f32 0.0, %v2875
    %v2877 = vpop.f32.mrf.mxu0
    %2878 = vdwg.mxu0
    %v2881 = vrot.slane %v2863, 2
    %v2882 = vrot.slane %v2876, 2
    %v2885 = vadd.f32 %v469, %v2881
    %v2886 = vadd.f32 %v483, %v2882
    %v2887 = vxor.u32 %v2885, 2147483648
    %v2888 = vmul.f32 %v2887, 1.442695
    %v2889 = vpow.pop %v2888
    %v2890 = vadd.f32 %v2889, 1.0
    %v2891 = vrcp.pop %v2890
    %v2892 = vmul.f32 %v2890, %v2891
    %v2893 = vsub.f32 1.0, %v2892
    %v2894 = vmul.f32 %v2891, %v2893
    %v2895 = vadd.f32 %v2891, %v2894
    %vm2896 = vweird.f32 %v2890
    %vm2897 = vweird.f32 %v2891
    %vm2898 = vmor %vm2896, %vm2897
    %v2899 = vsel %vm2898, %v2891, %v2895
    %v2900 = vand.u32 2147483647, %v2890
    %vm2901 = vcmp.eq.f32.partialorder %v2900, 8.507059e+37
    %v2902 = vand.u32 %v2890, 2147483648
    %v2903 = vor.u32 1.1754944e-38, %v2902
    %v2904 = vsel %vm2901, %v2903, %v2899
    %v2905 = vmul.f32 1.0, %v2904
    %v2906 = vtanh.pop %v2886
    %v2908 = vrot.slane %v2851, 2
    %v2910 = vsub.f32 %v2906, %v2908
    %v2911 = vmul.f32 %v2905, %v2910
    %v2913 = vrot.slane %v2911, 6
    %v2915 = vadd.f32 %v2851, %v2913
    %v2916 = vpack.c.bf16 %v2915, %v2915
    %2917 = vmatpush.bf16.msra.mxu0 %v715
    %2918 = vmatpush.bf16.msra.mxu0 %v713
    %2919 = vmatpush.bf16.msra.mxu0 %v711
    %2920 = vmatpush.bf16.msra.mxu0 %v709
    %2921 = vmatpush.bf16.msra.mxu0 %v707
    %2922 = vmatpush.bf16.msra.mxu0 %v705
    %2923 = vmatpush.bf16.msra.mxu0 %v703
    %2924 = vmatpush.bf16.msra.mxu0 %v701
    %2925 = vmatmul.bf16.gmra.mxu0 %v2916
    %v2926 = vpop.f32.mrf.mxu0
    %v2927 = vadd.f32 0.0, %v2926
    %v2928 = vpop.f32.mrf.mxu0
    %2929 = vdwg.mxu0
    %2930 = vmatpush.bf16.msra.mxu0 %v716
    %2931 = vmatpush.bf16.msra.mxu0 %v714
    %2932 = vmatpush.bf16.msra.mxu0 %v712
    %2933 = vmatpush.bf16.msra.mxu0 %v710
    %2934 = vmatpush.bf16.msra.mxu0 %v708
    %2935 = vmatpush.bf16.msra.mxu0 %v706
    %2936 = vmatpush.bf16.msra.mxu0 %v704
    %2937 = vmatpush.bf16.msra.mxu0 %v702
    %2938 = vmatmul.bf16.gmra.mxu0 %v2916
    %v2939 = vpop.f32.mrf.mxu0
    %v2940 = vadd.f32 0.0, %v2939
    %v2941 = vpop.f32.mrf.mxu0
    %2942 = vdwg.mxu0
    %v2943 = vxor.u32 %v2927, 2147483648
    %v2944 = vmul.f32 %v2943, 1.442695
    %v2945 = vpow.pop %v2944
    %v2946 = vadd.f32 %v2945, 1.0
    %v2947 = vrcp.pop %v2946
    %v2948 = vmul.f32 %v2946, %v2947
    %v2949 = vsub.f32 1.0, %v2948
    %v2950 = vmul.f32 %v2947, %v2949
    %v2951 = vadd.f32 %v2947, %v2950
    %vm2952 = vweird.f32 %v2946
    %vm2953 = vweird.f32 %v2947
    %vm2954 = vmor %vm2952, %vm2953
    %v2955 = vsel %vm2954, %v2947, %v2951
    %v2956 = vand.u32 2147483647, %v2946
    %vm2957 = vcmp.eq.f32.partialorder %v2956, 8.507059e+37
    %v2958 = vand.u32 %v2946, 2147483648
    %v2959 = vor.u32 1.1754944e-38, %v2958
    %v2960 = vsel %vm2957, %v2959, %v2955
    %v2961 = vmul.f32 1.0, %v2960
    %v2962 = vxor.u32 %v2940, 2147483648
    %v2963 = vmul.f32 %v2962, 1.442695
    %v2964 = vpow.pop %v2963
    %v2965 = vadd.f32 %v2964, 1.0
    %v2966 = vrcp.pop %v2965
    %v2967 = vmul.f32 %v2965, %v2966
    %v2968 = vsub.f32 1.0, %v2967
    %v2969 = vmul.f32 %v2966, %v2968
    %v2970 = vadd.f32 %v2966, %v2969
    %vm2971 = vweird.f32 %v2965
    %vm2972 = vweird.f32 %v2966
    %vm2973 = vmor %vm2971, %vm2972
    %v2974 = vsel %vm2973, %v2966, %v2970
    %v2975 = vand.u32 2147483647, %v2965
    %vm2976 = vcmp.eq.f32.partialorder %v2975, 8.507059e+37
    %v2977 = vand.u32 %v2965, 2147483648
    %v2978 = vor.u32 1.1754944e-38, %v2977
    %v2979 = vsel %vm2976, %v2978, %v2974
    %v2980 = vmul.f32 1.0, %v2979
    %v2981 = vsub.f32 %v2980, %v2915
    %v2982 = vmul.f32 %v2961, %v2981
    %v2983 = vadd.f32 %v2915, %v2982
    %v2984 = vpack.c.bf16 %v2983, %v2983
    %2985 = vmatpush.bf16.msra.mxu0 %v1035
    %2986 = vmatpush.bf16.msra.mxu0 %v1029
    %2987 = vmatpush.bf16.msra.mxu0 %v1023
    %2988 = vmatpush.bf16.msra.mxu0 %v1017
    %2989 = vmatpush.bf16.msra.mxu0 %v1011
    %2990 = vmatpush.bf16.msra.mxu0 %v1005
    %2991 = vmatpush.bf16.msra.mxu0 %v999
    %2992 = vmatpush.bf16.msra.mxu0 %v993
    %2993 = vmatmul.bf16.gmra.mxu0 %v2984
    %v2994 = vpop.f32.mrf.mxu0
    %v2995 = vadd.f32 0.0, %v2994
    %v2996 = vpop.f32.mrf.mxu0
    %2997 = vdwg.mxu0
    %2998 = vmatpush.bf16.msra.mxu0 %v1036
    %2999 = vmatpush.bf16.msra.mxu0 %v1030
    %3000 = vmatpush.bf16.msra.mxu0 %v1024
    %3001 = vmatpush.bf16.msra.mxu0 %v1018
    %3002 = vmatpush.bf16.msra.mxu0 %v1012
    %3003 = vmatpush.bf16.msra.mxu0 %v1006
    %3004 = vmatpush.bf16.msra.mxu0 %v1000
    %3005 = vmatpush.bf16.msra.mxu0 %v994
    %3006 = vmatmul.bf16.gmra.mxu0 %v2984
    %v3007 = vpop.f32.mrf.mxu0
    %v3008 = vadd.f32 0.0, %v3007
    %v3009 = vpop.f32.mrf.mxu0
    %3010 = vdwg.mxu0
    %3011 = vmatpush.bf16.msra.mxu0 %v1037
    %3012 = vmatpush.bf16.msra.mxu0 %v1031
    %3013 = vmatpush.bf16.msra.mxu0 %v1025
    %3014 = vmatpush.bf16.msra.mxu0 %v1019
    %3015 = vmatpush.bf16.msra.mxu0 %v1013
    %3016 = vmatpush.bf16.msra.mxu0 %v1007
    %3017 = vmatpush.bf16.msra.mxu0 %v1001
    %3018 = vmatpush.bf16.msra.mxu0 %v995
    %3019 = vmatmul.bf16.gmra.mxu0 %v2984
    %v3020 = vpop.f32.mrf.mxu0
    %v3021 = vadd.f32 0.0, %v3020
    %v3022 = vpop.f32.mrf.mxu0
    %3023 = vdwg.mxu0
    %3024 = vmatpush.bf16.msra.mxu0 %v1038
    %3025 = vmatpush.bf16.msra.mxu0 %v1032
    %3026 = vmatpush.bf16.msra.mxu0 %v1026
    %3027 = vmatpush.bf16.msra.mxu0 %v1020
    %3028 = vmatpush.bf16.msra.mxu0 %v1014
    %3029 = vmatpush.bf16.msra.mxu0 %v1008
    %3030 = vmatpush.bf16.msra.mxu0 %v1002
    %3031 = vmatpush.bf16.msra.mxu0 %v996
    %3032 = vmatmul.bf16.gmra.mxu0 %v2984
    %v3033 = vpop.f32.mrf.mxu0
    %v3034 = vadd.f32 0.0, %v3033
    %v3035 = vpop.f32.mrf.mxu0
    %3036 = vdwg.mxu0
    %3037 = vmatpush.bf16.msra.mxu0 %v1039
    %3038 = vmatpush.bf16.msra.mxu0 %v1033
    %3039 = vmatpush.bf16.msra.mxu0 %v1027
    %3040 = vmatpush.bf16.msra.mxu0 %v1021
    %3041 = vmatpush.bf16.msra.mxu0 %v1015
    %3042 = vmatpush.bf16.msra.mxu0 %v1009
    %3043 = vmatpush.bf16.msra.mxu0 %v1003
    %3044 = vmatpush.bf16.msra.mxu0 %v997
    %3045 = vmatmul.bf16.gmra.mxu0 %v2984
    %v3046 = vpop.f32.mrf.mxu0
    %v3047 = vadd.f32 0.0, %v3046
    %v3048 = vpop.f32.mrf.mxu0
    %3049 = vdwg.mxu0
    %3050 = vmatpush.bf16.msra.mxu0 %v1040
    %3051 = vmatpush.bf16.msra.mxu0 %v1034
    %3052 = vmatpush.bf16.msra.mxu0 %v1028
    %3053 = vmatpush.bf16.msra.mxu0 %v1022
    %3054 = vmatpush.bf16.msra.mxu0 %v1016
    %3055 = vmatpush.bf16.msra.mxu0 %v1010
    %3056 = vmatpush.bf16.msra.mxu0 %v1004
    %3057 = vmatpush.bf16.msra.mxu0 %v998
    %3058 = vmatmul.bf16.gmra.mxu0 %v2984
    %v3059 = vpop.f32.mrf.mxu0
    %v3060 = vadd.f32 0.0, %v3059
    %v3061 = vpop.f32.mrf.mxu0
    %3062 = vdwg.mxu0
    %v3063 = vxor.u32 %v2995, 2147483648
    %v3064 = vmul.f32 %v3063, 1.442695
    %v3065 = vpow.pop %v3064
    %v3066 = vadd.f32 %v3065, 1.0
    %v3067 = vrcp.pop %v3066
    %v3068 = vmul.f32 %v3066, %v3067
    %v3069 = vsub.f32 1.0, %v3068
    %v3070 = vmul.f32 %v3067, %v3069
    %v3071 = vadd.f32 %v3067, %v3070
    %vm3072 = vweird.f32 %v3066
    %vm3073 = vweird.f32 %v3067
    %vm3074 = vmor %vm3072, %vm3073
    %v3075 = vsel %vm3074, %v3067, %v3071
    %v3076 = vand.u32 2147483647, %v3066
    %vm3077 = vcmp.eq.f32.partialorder %v3076, 8.507059e+37
    %v3078 = vand.u32 %v3066, 2147483648
    %v3079 = vor.u32 1.1754944e-38, %v3078
    %v3080 = vsel %vm3077, %v3079, %v3075
    %v3081 = vmul.f32 1.0, %v3080
    %v3082 = vmax.f32 %v3008, 0.0
    %v3083 = vsub.f32 %v3082, %v2983
    %v3084 = vmul.f32 %v3081, %v3083
    %v3085 = vadd.f32 %v2983, %v3084
    %v3086 = vxor.u32 %v3021, 2147483648
    %v3087 = vmul.f32 %v3086, 1.442695
    %v3088 = vpow.pop %v3087
    %v3089 = vadd.f32 %v3088, 1.0
    %v3090 = vrcp.pop %v3089
    %v3091 = vmul.f32 %v3089, %v3090
    %v3092 = vsub.f32 1.0, %v3091
    %v3093 = vmul.f32 %v3090, %v3092
    %v3094 = vadd.f32 %v3090, %v3093
    %vm3095 = vweird.f32 %v3089
    %vm3096 = vweird.f32 %v3090
    %vm3097 = vmor %vm3095, %vm3096
    %v3098 = vsel %vm3097, %v3090, %v3094
    %v3099 = vand.u32 2147483647, %v3089
    %vm3100 = vcmp.eq.f32.partialorder %v3099, 8.507059e+37
    %v3101 = vand.u32 %v3089, 2147483648
    %v3102 = vor.u32 1.1754944e-38, %v3101
    %v3103 = vsel %vm3100, %v3102, %v3098
    %v3104 = vmul.f32 1.0, %v3103
    %v3105 = vmax.f32 %v3034, 0.0
    %v3106 = vsub.f32 %v3105, %v2983
    %v3107 = vmul.f32 %v3104, %v3106
    %v3108 = vadd.f32 %v2983, %v3107
    %v3109 = vxor.u32 %v3047, 2147483648
    %v3110 = vmul.f32 %v3109, 1.442695
    %v3111 = vpow.pop %v3110
    %v3112 = vadd.f32 %v3111, 1.0
    %v3113 = vrcp.pop %v3112
    %v3114 = vmul.f32 %v3112, %v3113
    %v3115 = vsub.f32 1.0, %v3114
    %v3116 = vmul.f32 %v3113, %v3115
    %v3117 = vadd.f32 %v3113, %v3116
    %vm3118 = vweird.f32 %v3112
    %vm3119 = vweird.f32 %v3113
    %vm3120 = vmor %vm3118, %vm3119
    %v3121 = vsel %vm3120, %v3113, %v3117
    %v3122 = vand.u32 2147483647, %v3112
    %vm3123 = vcmp.eq.f32.partialorder %v3122, 8.507059e+37
    %v3124 = vand.u32 %v3112, 2147483648
    %v3125 = vor.u32 1.1754944e-38, %v3124
    %v3126 = vsel %vm3123, %v3125, %v3121
    %v3127 = vmul.f32 1.0, %v3126
    %v3128 = vsub.f32 %v3060, %v2983
    %v3129 = vmul.f32 %v3127, %v3128
    %v3130 = vadd.f32 %v2983, %v3129
    %v3131 = vpack.c.bf16 %v3085, %v3085
    %3132 = vmatpush.bf16.msra.mxu0 %v1314
    %3133 = vmatpush.bf16.msra.mxu0 %v1312
    %3134 = vmatpush.bf16.msra.mxu0 %v1310
    %3135 = vmatpush.bf16.msra.mxu0 %v1308
    %3136 = vmatpush.bf16.msra.mxu0 %v1306
    %3137 = vmatpush.bf16.msra.mxu0 %v1304
    %3138 = vmatpush.bf16.msra.mxu0 %v1302
    %3139 = vmatpush.bf16.msra.mxu0 %v1300
    %3140 = vmatmul.bf16.gmra.mxu0 %v3131
    %v3141 = vpop.f32.mrf.mxu0
    %v3142 = vadd.f32 0.0, %v3141
    %v3143 = vpop.f32.mrf.mxu0
    %3144 = vdwg.mxu0
    %3145 = vmatpush.bf16.msra.mxu0 %v1315
    %3146 = vmatpush.bf16.msra.mxu0 %v1313
    %3147 = vmatpush.bf16.msra.mxu0 %v1311
    %3148 = vmatpush.bf16.msra.mxu0 %v1309
    %3149 = vmatpush.bf16.msra.mxu0 %v1307
    %3150 = vmatpush.bf16.msra.mxu0 %v1305
    %3151 = vmatpush.bf16.msra.mxu0 %v1303
    %3152 = vmatpush.bf16.msra.mxu0 %v1301
    %3153 = vmatmul.bf16.gmra.mxu0 %v3131
    %v3154 = vpop.f32.mrf.mxu0
    %v3155 = vadd.f32 0.0, %v3154
    %v3156 = vpop.f32.mrf.mxu0
    %3157 = vdwg.mxu0
    %v3158 = vxor.u32 %v3142, 2147483648
    %v3159 = vmul.f32 %v3158, 1.442695
    %v3160 = vpow.pop %v3159
    %v3161 = vadd.f32 %v3160, 1.0
    %v3162 = vrcp.pop %v3161
    %v3163 = vmul.f32 %v3161, %v3162
    %v3164 = vsub.f32 1.0, %v3163
    %v3165 = vmul.f32 %v3162, %v3164
    %v3166 = vadd.f32 %v3162, %v3165
    %vm3167 = vweird.f32 %v3161
    %vm3168 = vweird.f32 %v3162
    %vm3169 = vmor %vm3167, %vm3168
    %v3170 = vsel %vm3169, %v3162, %v3166
    %v3171 = vand.u32 2147483647, %v3161
    %vm3172 = vcmp.eq.f32.partialorder %v3171, 8.507059e+37
    %v3173 = vand.u32 %v3161, 2147483648
    %v3174 = vor.u32 1.1754944e-38, %v3173
    %v3175 = vsel %vm3172, %v3174, %v3170
    %v3176 = vmul.f32 1.0, %v3175
    %v3177 = vtanh.pop %v3155
    %v3178 = vsub.f32 %v3177, %v3085
    %v3179 = vmul.f32 %v3176, %v3178
    %v3180 = vadd.f32 %v3085, %v3179
    %v3181 = vpack.c.bf16 %v3108, %v3108
    %3182 = vmatpush.bf16.msra.mxu0 %v1460
    %3183 = vmatpush.bf16.msra.mxu0 %v1458
    %3184 = vmatpush.bf16.msra.mxu0 %v1456
    %3185 = vmatpush.bf16.msra.mxu0 %v1454
    %3186 = vmatpush.bf16.msra.mxu0 %v1452
    %3187 = vmatpush.bf16.msra.mxu0 %v1450
    %3188 = vmatpush.bf16.msra.mxu0 %v1448
    %3189 = vmatpush.bf16.msra.mxu0 %v1446
    %3190 = vmatmul.bf16.gmra.mxu0 %v3181
    %v3191 = vpop.f32.mrf.mxu0
    %v3192 = vadd.f32 0.0, %v3191
    %v3193 = vpop.f32.mrf.mxu0
    %3194 = vdwg.mxu0
    %3195 = vmatpush.bf16.msra.mxu0 %v1461
    %3196 = vmatpush.bf16.msra.mxu0 %v1459
    %3197 = vmatpush.bf16.msra.mxu0 %v1457
    %3198 = vmatpush.bf16.msra.mxu0 %v1455
    %3199 = vmatpush.bf16.msra.mxu0 %v1453
    %3200 = vmatpush.bf16.msra.mxu0 %v1451
    %3201 = vmatpush.bf16.msra.mxu0 %v1449
    %3202 = vmatpush.bf16.msra.mxu0 %v1447
    %3203 = vmatmul.bf16.gmra.mxu0 %v3181
    %v3204 = vpop.f32.mrf.mxu0
    %v3205 = vadd.f32 0.0, %v3204
    %v3206 = vpop.f32.mrf.mxu0
    %3207 = vdwg.mxu0
    %v3208 = vxor.u32 %v3192, 2147483648
    %v3209 = vmul.f32 %v3208, 1.442695
    %v3210 = vpow.pop %v3209
    %v3211 = vadd.f32 %v3210, 1.0
    %v3212 = vrcp.pop %v3211
    %v3213 = vmul.f32 %v3211, %v3212
    %v3214 = vsub.f32 1.0, %v3213
    %v3215 = vmul.f32 %v3212, %v3214
    %v3216 = vadd.f32 %v3212, %v3215
    %vm3217 = vweird.f32 %v3211
    %vm3218 = vweird.f32 %v3212
    %vm3219 = vmor %vm3217, %vm3218
    %v3220 = vsel %vm3219, %v3212, %v3216
    %v3221 = vand.u32 2147483647, %v3211
    %vm3222 = vcmp.eq.f32.partialorder %v3221, 8.507059e+37
    %v3223 = vand.u32 %v3211, 2147483648
    %v3224 = vor.u32 1.1754944e-38, %v3223
    %v3225 = vsel %vm3222, %v3224, %v3220
    %v3226 = vmul.f32 1.0, %v3225
    %v3227 = vtanh.pop %v3205
    %v3228 = vsub.f32 %v3227, %v3108
    %v3229 = vmul.f32 %v3226, %v3228
    %v3230 = vadd.f32 %v3108, %v3229
    %v3231 = vpack.c.bf16 %v3180, %v3180
    %3232 = vmatpush.bf16.msra.mxu0 %v1684
    %3233 = vmatpush.bf16.msra.mxu0 %v1680
    %3234 = vmatpush.bf16.msra.mxu0 %v1676
    %3235 = vmatpush.bf16.msra.mxu0 %v1672
    %3236 = vmatpush.bf16.msra.mxu0 %v1668
    %3237 = vmatpush.bf16.msra.mxu0 %v1664
    %3238 = vmatpush.bf16.msra.mxu0 %v1660
    %3239 = vmatpush.bf16.msra.mxu0 %v1656
    %3240 = vmatmul.bf16.gmra.mxu0 %v3231
    %v3241 = vpop.f32.mrf.mxu0
    %v3242 = vadd.f32 0.0, %v3241
    %v3243 = vpop.f32.mrf.mxu0
    %3244 = vdwg.mxu0
    %3245 = vmatpush.bf16.msra.mxu0 %v1685
    %3246 = vmatpush.bf16.msra.mxu0 %v1681
    %3247 = vmatpush.bf16.msra.mxu0 %v1677
    %3248 = vmatpush.bf16.msra.mxu0 %v1673
    %3249 = vmatpush.bf16.msra.mxu0 %v1669
    %3250 = vmatpush.bf16.msra.mxu0 %v1665
    %3251 = vmatpush.bf16.msra.mxu0 %v1661
    %3252 = vmatpush.bf16.msra.mxu0 %v1657
    %3253 = vmatmul.bf16.gmra.mxu0 %v3231
    %v3254 = vpop.f32.mrf.mxu0
    %v3255 = vadd.f32 0.0, %v3254
    %v3256 = vpop.f32.mrf.mxu0
    %3257 = vdwg.mxu0
    %3258 = vmatpush.bf16.msra.mxu0 %v1686
    %3259 = vmatpush.bf16.msra.mxu0 %v1682
    %3260 = vmatpush.bf16.msra.mxu0 %v1678
    %3261 = vmatpush.bf16.msra.mxu0 %v1674
    %3262 = vmatpush.bf16.msra.mxu0 %v1670
    %3263 = vmatpush.bf16.msra.mxu0 %v1666
    %3264 = vmatpush.bf16.msra.mxu0 %v1662
    %3265 = vmatpush.bf16.msra.mxu0 %v1658
    %3266 = vmatmul.bf16.gmra.mxu0 %v3231
    %v3267 = vpop.f32.mrf.mxu0
    %v3268 = vadd.f32 0.0, %v3267
    %v3269 = vpop.f32.mrf.mxu0
    %3270 = vdwg.mxu0
    %3271 = vmatpush.bf16.msra.mxu0 %v1687
    %3272 = vmatpush.bf16.msra.mxu0 %v1683
    %3273 = vmatpush.bf16.msra.mxu0 %v1679
    %3274 = vmatpush.bf16.msra.mxu0 %v1675
    %3275 = vmatpush.bf16.msra.mxu0 %v1671
    %3276 = vmatpush.bf16.msra.mxu0 %v1667
    %3277 = vmatpush.bf16.msra.mxu0 %v1663
    %3278 = vmatpush.bf16.msra.mxu0 %v1659
    %3279 = vmatmul.bf16.gmra.mxu0 %v3231
    %v3280 = vpop.f32.mrf.mxu0
    %v3281 = vadd.f32 0.0, %v3280
    %v3282 = vpop.f32.mrf.mxu0
    %3283 = vdwg.mxu0
    %v3284 = vxor.u32 %v3242, 2147483648
    %v3285 = vmul.f32 %v3284, 1.442695
    %v3286 = vpow.pop %v3285
    %v3287 = vadd.f32 %v3286, 1.0
    %v3288 = vrcp.pop %v3287
    %v3289 = vmul.f32 %v3287, %v3288
    %v3290 = vsub.f32 1.0, %v3289
    %v3291 = vmul.f32 %v3288, %v3290
    %v3292 = vadd.f32 %v3288, %v3291
    %vm3293 = vweird.f32 %v3287
    %vm3294 = vweird.f32 %v3288
    %vm3295 = vmor %vm3293, %vm3294
    %v3296 = vsel %vm3295, %v3288, %v3292
    %v3297 = vand.u32 2147483647, %v3287
    %vm3298 = vcmp.eq.f32.partialorder %v3297, 8.507059e+37
    %v3299 = vand.u32 %v3287, 2147483648
    %v3300 = vor.u32 1.1754944e-38, %v3299
    %v3301 = vsel %vm3298, %v3300, %v3296
    %v3302 = vmul.f32 1.0, %v3301
    %v3303 = vxor.u32 %v3255, 2147483648
    %v3304 = vmul.f32 %v3303, 1.442695
    %v3305 = vpow.pop %v3304
    %v3306 = vadd.f32 %v3305, 1.0
    %v3307 = vrcp.pop %v3306
    %v3308 = vmul.f32 %v3306, %v3307
    %v3309 = vsub.f32 1.0, %v3308
    %v3310 = vmul.f32 %v3307, %v3309
    %v3311 = vadd.f32 %v3307, %v3310
    %vm3312 = vweird.f32 %v3306
    %vm3313 = vweird.f32 %v3307
    %vm3314 = vmor %vm3312, %vm3313
    %v3315 = vsel %vm3314, %v3307, %v3311
    %v3316 = vand.u32 2147483647, %v3306
    %vm3317 = vcmp.eq.f32.partialorder %v3316, 8.507059e+37
    %v3318 = vand.u32 %v3306, 2147483648
    %v3319 = vor.u32 1.1754944e-38, %v3318
    %v3320 = vsel %vm3317, %v3319, %v3315
    %v3321 = vmul.f32 1.0, %v3320
    %v3322 = vsub.f32 %v3321, %v3180
    %v3323 = vmul.f32 %v3302, %v3322
    %v3324 = vadd.f32 %v3180, %v3323
    %v3325 = vxor.u32 %v3268, 2147483648
    %v3326 = vmul.f32 %v3325, 1.442695
    %v3327 = vpow.pop %v3326
    %v3328 = vadd.f32 %v3327, 1.0
    %v3329 = vrcp.pop %v3328
    %v3330 = vmul.f32 %v3328, %v3329
    %v3331 = vsub.f32 1.0, %v3330
    %v3332 = vmul.f32 %v3329, %v3331
    %v3333 = vadd.f32 %v3329, %v3332
    %vm3334 = vweird.f32 %v3328
    %vm3335 = vweird.f32 %v3329
    %vm3336 = vmor %vm3334, %vm3335
    %v3337 = vsel %vm3336, %v3329, %v3333
    %v3338 = vand.u32 2147483647, %v3328
    %vm3339 = vcmp.eq.f32.partialorder %v3338, 8.507059e+37
    %v3340 = vand.u32 %v3328, 2147483648
    %v3341 = vor.u32 1.1754944e-38, %v3340
    %v3342 = vsel %vm3339, %v3341, %v3337
    %v3343 = vmul.f32 1.0, %v3342
    %v3344 = vmax.f32 %v3281, 0.0
    %v3345 = vsub.f32 %v3344, %v3180
    %v3346 = vmul.f32 %v3343, %v3345
    %v3347 = vadd.f32 %v3180, %v3346
    %v3348 = vadd.f32 %v2983, %v3085
    %v3349 = vadd.f32 %v3348, %v3108
    %v3350 = vadd.f32 %v3349, %v3130
    %v3351 = vadd.f32 %v3350, %v3180
    %v3352 = vadd.f32 %v3351, %v3324
    %v3353 = vadd.f32 %v3352, %v3230
    %v3354 = vadd.f32 %v3353, %v3347
    %v3355 = vmul.f32 %v3354, 0.125
    %v3356 = vpack.c.bf16 %v3355, %v3355
    %3357 = vmatpush.bf16.msra.mxu0 %v567
    %3358 = vmatpush.bf16.msra.mxu0 %v565
    %3359 = vmatpush.bf16.msra.mxu0 %v563
    %3360 = vmatpush.bf16.msra.mxu0 %v561
    %3361 = vmatpush.bf16.msra.mxu0 %v559
    %3362 = vmatpush.bf16.msra.mxu0 %v557
    %3363 = vmatpush.bf16.msra.mxu0 %v555
    %3364 = vmatpush.bf16.msra.mxu0 %v553
    %3365 = vmatmul.bf16.gmra.mxu0 %v3356
    %v3366 = vpop.f32.mrf.mxu0
    %v3367 = vadd.f32 0.0, %v3366
    %v3368 = vpop.f32.mrf.mxu0
    %3369 = vdwg.mxu0
    %3370 = vmatpush.bf16.msra.mxu0 %v568
    %3371 = vmatpush.bf16.msra.mxu0 %v566
    %3372 = vmatpush.bf16.msra.mxu0 %v564
    %3373 = vmatpush.bf16.msra.mxu0 %v562
    %3374 = vmatpush.bf16.msra.mxu0 %v560
    %3375 = vmatpush.bf16.msra.mxu0 %v558
    %3376 = vmatpush.bf16.msra.mxu0 %v556
    %3377 = vmatpush.bf16.msra.mxu0 %v554
    %3378 = vmatmul.bf16.gmra.mxu0 %v3356
    %v3379 = vpop.f32.mrf.mxu0
    %v3380 = vadd.f32 0.0, %v3379
    %v3381 = vpop.f32.mrf.mxu0
    %3382 = vdwg.mxu0
    %v3383 = vadd.f32 %v471, %v3367
    %v3384 = vadd.f32 %v485, %v3380
    %v3385 = vxor.u32 %v3383, 2147483648
    %v3386 = vmul.f32 %v3385, 1.442695
    %v3387 = vpow.pop %v3386
    %v3388 = vadd.f32 %v3387, 1.0
    %v3389 = vrcp.pop %v3388
    %v3390 = vmul.f32 %v3388, %v3389
    %v3391 = vsub.f32 1.0, %v3390
    %v3392 = vmul.f32 %v3389, %v3391
    %v3393 = vadd.f32 %v3389, %v3392
    %vm3394 = vweird.f32 %v3388
    %vm3395 = vweird.f32 %v3389
    %vm3396 = vmor %vm3394, %vm3395
    %v3397 = vsel %vm3396, %v3389, %v3393
    %v3398 = vand.u32 2147483647, %v3388
    %vm3399 = vcmp.eq.f32.partialorder %v3398, 8.507059e+37
    %v3400 = vand.u32 %v3388, 2147483648
    %v3401 = vor.u32 1.1754944e-38, %v3400
    %v3402 = vsel %vm3399, %v3401, %v3397
    %v3403 = vmul.f32 1.0, %v3402
    %v3404 = vtanh.pop %v3384
    %v3405 = vsub.f32 %v3404, %v3355
    %v3406 = vmul.f32 %v3403, %v3405
    %v3407 = vadd.f32 %v3355, %v3406
    %v3408 = vpack.c.bf16 %v3407, %v3407
    %3409 = vmatpush.bf16.msra.mxu0 %v715
    %3410 = vmatpush.bf16.msra.mxu0 %v713
    %3411 = vmatpush.bf16.msra.mxu0 %v711
    %3412 = vmatpush.bf16.msra.mxu0 %v709
    %3413 = vmatpush.bf16.msra.mxu0 %v707
    %3414 = vmatpush.bf16.msra.mxu0 %v705
    %3415 = vmatpush.bf16.msra.mxu0 %v703
    %3416 = vmatpush.bf16.msra.mxu0 %v701
    %3417 = vmatmul.bf16.gmra.mxu0 %v3408
    %v3418 = vpop.f32.mrf.mxu0
    %v3419 = vadd.f32 0.0, %v3418
    %v3420 = vpop.f32.mrf.mxu0
    %3421 = vdwg.mxu0
    %3422 = vmatpush.bf16.msra.mxu0 %v716
    %3423 = vmatpush.bf16.msra.mxu0 %v714
    %3424 = vmatpush.bf16.msra.mxu0 %v712
    %3425 = vmatpush.bf16.msra.mxu0 %v710
    %3426 = vmatpush.bf16.msra.mxu0 %v708
    %3427 = vmatpush.bf16.msra.mxu0 %v706
    %3428 = vmatpush.bf16.msra.mxu0 %v704
    %3429 = vmatpush.bf16.msra.mxu0 %v702
    %3430 = vmatmul.bf16.gmra.mxu0 %v3408
    %v3431 = vpop.f32.mrf.mxu0
    %v3432 = vadd.f32 0.0, %v3431
    %v3433 = vpop.f32.mrf.mxu0
    %3434 = vdwg.mxu0
    %v3435 = vxor.u32 %v3419, 2147483648
    %v3436 = vmul.f32 %v3435, 1.442695
    %v3437 = vpow.pop %v3436
    %v3438 = vadd.f32 %v3437, 1.0
    %v3439 = vrcp.pop %v3438
    %v3440 = vmul.f32 %v3438, %v3439
    %v3441 = vsub.f32 1.0, %v3440
    %v3442 = vmul.f32 %v3439, %v3441
    %v3443 = vadd.f32 %v3439, %v3442
    %vm3444 = vweird.f32 %v3438
    %vm3445 = vweird.f32 %v3439
    %vm3446 = vmor %vm3444, %vm3445
    %v3447 = vsel %vm3446, %v3439, %v3443
    %v3448 = vand.u32 2147483647, %v3438
    %vm3449 = vcmp.eq.f32.partialorder %v3448, 8.507059e+37
    %v3450 = vand.u32 %v3438, 2147483648
    %v3451 = vor.u32 1.1754944e-38, %v3450
    %v3452 = vsel %vm3449, %v3451, %v3447
    %v3453 = vmul.f32 1.0, %v3452
    %v3454 = vxor.u32 %v3432, 2147483648
    %v3455 = vmul.f32 %v3454, 1.442695
    %v3456 = vpow.pop %v3455
    %v3457 = vadd.f32 %v3456, 1.0
    %v3458 = vrcp.pop %v3457
    %v3459 = vmul.f32 %v3457, %v3458
    %v3460 = vsub.f32 1.0, %v3459
    %v3461 = vmul.f32 %v3458, %v3460
    %v3462 = vadd.f32 %v3458, %v3461
    %vm3463 = vweird.f32 %v3457
    %vm3464 = vweird.f32 %v3458
    %vm3465 = vmor %vm3463, %vm3464
    %v3466 = vsel %vm3465, %v3458, %v3462
    %v3467 = vand.u32 2147483647, %v3457
    %vm3468 = vcmp.eq.f32.partialorder %v3467, 8.507059e+37
    %v3469 = vand.u32 %v3457, 2147483648
    %v3470 = vor.u32 1.1754944e-38, %v3469
    %v3471 = vsel %vm3468, %v3470, %v3466
    %v3472 = vmul.f32 1.0, %v3471
    %v3473 = vsub.f32 %v3472, %v3407
    %v3474 = vmul.f32 %v3453, %v3473
    %v3475 = vadd.f32 %v3407, %v3474
    %v3476 = vpack.c.bf16 %v3475, %v3475
    %3477 = vmatpush.bf16.msra.mxu0 %v1035
    %3478 = vmatpush.bf16.msra.mxu0 %v1029
    %3479 = vmatpush.bf16.msra.mxu0 %v1023
    %3480 = vmatpush.bf16.msra.mxu0 %v1017
    %3481 = vmatpush.bf16.msra.mxu0 %v1011
    %3482 = vmatpush.bf16.msra.mxu0 %v1005
    %3483 = vmatpush.bf16.msra.mxu0 %v999
    %3484 = vmatpush.bf16.msra.mxu0 %v993
    %3485 = vmatmul.bf16.gmra.mxu0 %v3476
    %v3486 = vpop.f32.mrf.mxu0
    %v3487 = vadd.f32 0.0, %v3486
    %v3488 = vpop.f32.mrf.mxu0
    %3489 = vdwg.mxu0
    %3490 = vmatpush.bf16.msra.mxu0 %v1036
    %3491 = vmatpush.bf16.msra.mxu0 %v1030
    %3492 = vmatpush.bf16.msra.mxu0 %v1024
    %3493 = vmatpush.bf16.msra.mxu0 %v1018
    %3494 = vmatpush.bf16.msra.mxu0 %v1012
    %3495 = vmatpush.bf16.msra.mxu0 %v1006
    %3496 = vmatpush.bf16.msra.mxu0 %v1000
    %3497 = vmatpush.bf16.msra.mxu0 %v994
    %3498 = vmatmul.bf16.gmra.mxu0 %v3476
    %v3499 = vpop.f32.mrf.mxu0
    %v3500 = vadd.f32 0.0, %v3499
    %v3501 = vpop.f32.mrf.mxu0
    %3502 = vdwg.mxu0
    %3503 = vmatpush.bf16.msra.mxu0 %v1037
    %3504 = vmatpush.bf16.msra.mxu0 %v1031
    %3505 = vmatpush.bf16.msra.mxu0 %v1025
    %3506 = vmatpush.bf16.msra.mxu0 %v1019
    %3507 = vmatpush.bf16.msra.mxu0 %v1013
    %3508 = vmatpush.bf16.msra.mxu0 %v1007
    %3509 = vmatpush.bf16.msra.mxu0 %v1001
    %3510 = vmatpush.bf16.msra.mxu0 %v995
    %3511 = vmatmul.bf16.gmra.mxu0 %v3476
    %v3512 = vpop.f32.mrf.mxu0
    %v3513 = vadd.f32 0.0, %v3512
    %v3514 = vpop.f32.mrf.mxu0
    %3515 = vdwg.mxu0
    %3516 = vmatpush.bf16.msra.mxu0 %v1038
    %3517 = vmatpush.bf16.msra.mxu0 %v1032
    %3518 = vmatpush.bf16.msra.mxu0 %v1026
    %3519 = vmatpush.bf16.msra.mxu0 %v1020
    %3520 = vmatpush.bf16.msra.mxu0 %v1014
    %3521 = vmatpush.bf16.msra.mxu0 %v1008
    %3522 = vmatpush.bf16.msra.mxu0 %v1002
    %3523 = vmatpush.bf16.msra.mxu0 %v996
    %3524 = vmatmul.bf16.gmra.mxu0 %v3476
    %v3525 = vpop.f32.mrf.mxu0
    %v3526 = vadd.f32 0.0, %v3525
    %v3527 = vpop.f32.mrf.mxu0
    %3528 = vdwg.mxu0
    %3529 = vmatpush.bf16.msra.mxu0 %v1039
    %3530 = vmatpush.bf16.msra.mxu0 %v1033
    %3531 = vmatpush.bf16.msra.mxu0 %v1027
    %3532 = vmatpush.bf16.msra.mxu0 %v1021
    %3533 = vmatpush.bf16.msra.mxu0 %v1015
    %3534 = vmatpush.bf16.msra.mxu0 %v1009
    %3535 = vmatpush.bf16.msra.mxu0 %v1003
    %3536 = vmatpush.bf16.msra.mxu0 %v997
    %3537 = vmatmul.bf16.gmra.mxu0 %v3476
    %v3538 = vpop.f32.mrf.mxu0
    %v3539 = vadd.f32 0.0, %v3538
    %v3540 = vpop.f32.mrf.mxu0
    %3541 = vdwg.mxu0
    %3542 = vmatpush.bf16.msra.mxu0 %v1040
    %3543 = vmatpush.bf16.msra.mxu0 %v1034
    %3544 = vmatpush.bf16.msra.mxu0 %v1028
    %3545 = vmatpush.bf16.msra.mxu0 %v1022
    %3546 = vmatpush.bf16.msra.mxu0 %v1016
    %3547 = vmatpush.bf16.msra.mxu0 %v1010
    %3548 = vmatpush.bf16.msra.mxu0 %v1004
    %3549 = vmatpush.bf16.msra.mxu0 %v998
    %3550 = vmatmul.bf16.gmra.mxu0 %v3476
    %v3551 = vpop.f32.mrf.mxu0
    %v3552 = vadd.f32 0.0, %v3551
    %v3553 = vpop.f32.mrf.mxu0
    %3554 = vdwg.mxu0
    %v3555 = vxor.u32 %v3487, 2147483648
    %v3556 = vmul.f32 %v3555, 1.442695
    %v3557 = vpow.pop %v3556
    %v3558 = vadd.f32 %v3557, 1.0
    %v3559 = vrcp.pop %v3558
    %v3560 = vmul.f32 %v3558, %v3559
    %v3561 = vsub.f32 1.0, %v3560
    %v3562 = vmul.f32 %v3559, %v3561
    %v3563 = vadd.f32 %v3559, %v3562
    %vm3564 = vweird.f32 %v3558
    %vm3565 = vweird.f32 %v3559
    %vm3566 = vmor %vm3564, %vm3565
    %v3567 = vsel %vm3566, %v3559, %v3563
    %v3568 = vand.u32 2147483647, %v3558
    %vm3569 = vcmp.eq.f32.partialorder %v3568, 8.507059e+37
    %v3570 = vand.u32 %v3558, 2147483648
    %v3571 = vor.u32 1.1754944e-38, %v3570
    %v3572 = vsel %vm3569, %v3571, %v3567
    %v3573 = vmul.f32 1.0, %v3572
    %v3574 = vmax.f32 %v3500, 0.0
    %v3575 = vsub.f32 %v3574, %v3475
    %v3576 = vmul.f32 %v3573, %v3575
    %v3577 = vadd.f32 %v3475, %v3576
    %v3578 = vxor.u32 %v3513, 2147483648
    %v3579 = vmul.f32 %v3578, 1.442695
    %v3580 = vpow.pop %v3579
    %v3581 = vadd.f32 %v3580, 1.0
    %v3582 = vrcp.pop %v3581
    %v3583 = vmul.f32 %v3581, %v3582
    %v3584 = vsub.f32 1.0, %v3583
    %v3585 = vmul.f32 %v3582, %v3584
    %v3586 = vadd.f32 %v3582, %v3585
    %vm3587 = vweird.f32 %v3581
    %vm3588 = vweird.f32 %v3582
    %vm3589 = vmor %vm3587, %vm3588
    %v3590 = vsel %vm3589, %v3582, %v3586
    %v3591 = vand.u32 2147483647, %v3581
    %vm3592 = vcmp.eq.f32.partialorder %v3591, 8.507059e+37
    %v3593 = vand.u32 %v3581, 2147483648
    %v3594 = vor.u32 1.1754944e-38, %v3593
    %v3595 = vsel %vm3592, %v3594, %v3590
    %v3596 = vmul.f32 1.0, %v3595
    %v3597 = vmax.f32 %v3526, 0.0
    %v3598 = vsub.f32 %v3597, %v3475
    %v3599 = vmul.f32 %v3596, %v3598
    %v3600 = vadd.f32 %v3475, %v3599
    %v3601 = vxor.u32 %v3539, 2147483648
    %v3602 = vmul.f32 %v3601, 1.442695
    %v3603 = vpow.pop %v3602
    %v3604 = vadd.f32 %v3603, 1.0
    %v3605 = vrcp.pop %v3604
    %v3606 = vmul.f32 %v3604, %v3605
    %v3607 = vsub.f32 1.0, %v3606
    %v3608 = vmul.f32 %v3605, %v3607
    %v3609 = vadd.f32 %v3605, %v3608
    %vm3610 = vweird.f32 %v3604
    %vm3611 = vweird.f32 %v3605
    %vm3612 = vmor %vm3610, %vm3611
    %v3613 = vsel %vm3612, %v3605, %v3609
    %v3614 = vand.u32 2147483647, %v3604
    %vm3615 = vcmp.eq.f32.partialorder %v3614, 8.507059e+37
    %v3616 = vand.u32 %v3604, 2147483648
    %v3617 = vor.u32 1.1754944e-38, %v3616
    %v3618 = vsel %vm3615, %v3617, %v3613
    %v3619 = vmul.f32 1.0, %v3618
    %v3620 = vsub.f32 %v3552, %v3475
    %v3621 = vmul.f32 %v3619, %v3620
    %v3622 = vadd.f32 %v3475, %v3621
    %v3623 = vpack.c.bf16 %v3577, %v3577
    %3624 = vmatpush.bf16.msra.mxu0 %v1314
    %3625 = vmatpush.bf16.msra.mxu0 %v1312
    %3626 = vmatpush.bf16.msra.mxu0 %v1310
    %3627 = vmatpush.bf16.msra.mxu0 %v1308
    %3628 = vmatpush.bf16.msra.mxu0 %v1306
    %3629 = vmatpush.bf16.msra.mxu0 %v1304
    %3630 = vmatpush.bf16.msra.mxu0 %v1302
    %3631 = vmatpush.bf16.msra.mxu0 %v1300
    %3632 = vmatmul.bf16.gmra.mxu0 %v3623
    %v3633 = vpop.f32.mrf.mxu0
    %v3634 = vadd.f32 0.0, %v3633
    %v3635 = vpop.f32.mrf.mxu0
    %3636 = vdwg.mxu0
    %3637 = vmatpush.bf16.msra.mxu0 %v1315
    %3638 = vmatpush.bf16.msra.mxu0 %v1313
    %3639 = vmatpush.bf16.msra.mxu0 %v1311
    %3640 = vmatpush.bf16.msra.mxu0 %v1309
    %3641 = vmatpush.bf16.msra.mxu0 %v1307
    %3642 = vmatpush.bf16.msra.mxu0 %v1305
    %3643 = vmatpush.bf16.msra.mxu0 %v1303
    %3644 = vmatpush.bf16.msra.mxu0 %v1301
    %3645 = vmatmul.bf16.gmra.mxu0 %v3623
    %v3646 = vpop.f32.mrf.mxu0
    %v3647 = vadd.f32 0.0, %v3646
    %v3648 = vpop.f32.mrf.mxu0
    %3649 = vdwg.mxu0
    %v3650 = vxor.u32 %v3634, 2147483648
    %v3651 = vmul.f32 %v3650, 1.442695
    %v3652 = vpow.pop %v3651
    %v3653 = vadd.f32 %v3652, 1.0
    %v3654 = vrcp.pop %v3653
    %v3655 = vmul.f32 %v3653, %v3654
    %v3656 = vsub.f32 1.0, %v3655
    %v3657 = vmul.f32 %v3654, %v3656
    %v3658 = vadd.f32 %v3654, %v3657
    %vm3659 = vweird.f32 %v3653
    %vm3660 = vweird.f32 %v3654
    %vm3661 = vmor %vm3659, %vm3660
    %v3662 = vsel %vm3661, %v3654, %v3658
    %v3663 = vand.u32 2147483647, %v3653
    %vm3664 = vcmp.eq.f32.partialorder %v3663, 8.507059e+37
    %v3665 = vand.u32 %v3653, 2147483648
    %v3666 = vor.u32 1.1754944e-38, %v3665
    %v3667 = vsel %vm3664, %v3666, %v3662
    %v3668 = vmul.f32 1.0, %v3667
    %v3669 = vtanh.pop %v3647
    %v3670 = vsub.f32 %v3669, %v3577
    %v3671 = vmul.f32 %v3668, %v3670
    %v3672 = vadd.f32 %v3577, %v3671
    %v3673 = vpack.c.bf16 %v3600, %v3600
    %3674 = vmatpush.bf16.msra.mxu0 %v1460
    %3675 = vmatpush.bf16.msra.mxu0 %v1458
    %3676 = vmatpush.bf16.msra.mxu0 %v1456
    %3677 = vmatpush.bf16.msra.mxu0 %v1454
    %3678 = vmatpush.bf16.msra.mxu0 %v1452
    %3679 = vmatpush.bf16.msra.mxu0 %v1450
    %3680 = vmatpush.bf16.msra.mxu0 %v1448
    %3681 = vmatpush.bf16.msra.mxu0 %v1446
    %3682 = vmatmul.bf16.gmra.mxu0 %v3673
    %v3683 = vpop.f32.mrf.mxu0
    %v3684 = vadd.f32 0.0, %v3683
    %v3685 = vpop.f32.mrf.mxu0
    %3686 = vdwg.mxu0
    %3687 = vmatpush.bf16.msra.mxu0 %v1461
    %3688 = vmatpush.bf16.msra.mxu0 %v1459
    %3689 = vmatpush.bf16.msra.mxu0 %v1457
    %3690 = vmatpush.bf16.msra.mxu0 %v1455
    %3691 = vmatpush.bf16.msra.mxu0 %v1453
    %3692 = vmatpush.bf16.msra.mxu0 %v1451
    %3693 = vmatpush.bf16.msra.mxu0 %v1449
    %3694 = vmatpush.bf16.msra.mxu0 %v1447
    %3695 = vmatmul.bf16.gmra.mxu0 %v3673
    %v3696 = vpop.f32.mrf.mxu0
    %v3697 = vadd.f32 0.0, %v3696
    %v3698 = vpop.f32.mrf.mxu0
    %3699 = vdwg.mxu0
    %v3700 = vxor.u32 %v3684, 2147483648
    %v3701 = vmul.f32 %v3700, 1.442695
    %v3702 = vpow.pop %v3701
    %v3703 = vadd.f32 %v3702, 1.0
    %v3704 = vrcp.pop %v3703
    %v3705 = vmul.f32 %v3703, %v3704
    %v3706 = vsub.f32 1.0, %v3705
    %v3707 = vmul.f32 %v3704, %v3706
    %v3708 = vadd.f32 %v3704, %v3707
    %vm3709 = vweird.f32 %v3703
    %vm3710 = vweird.f32 %v3704
    %vm3711 = vmor %vm3709, %vm3710
    %v3712 = vsel %vm3711, %v3704, %v3708
    %v3713 = vand.u32 2147483647, %v3703
    %vm3714 = vcmp.eq.f32.partialorder %v3713, 8.507059e+37
    %v3715 = vand.u32 %v3703, 2147483648
    %v3716 = vor.u32 1.1754944e-38, %v3715
    %v3717 = vsel %vm3714, %v3716, %v3712
    %v3718 = vmul.f32 1.0, %v3717
    %v3719 = vtanh.pop %v3697
    %v3720 = vsub.f32 %v3719, %v3600
    %v3721 = vmul.f32 %v3718, %v3720
    %v3722 = vadd.f32 %v3600, %v3721
    %v3723 = vpack.c.bf16 %v3672, %v3672
    %3724 = vmatpush.bf16.msra.mxu0 %v1684
    %3725 = vmatpush.bf16.msra.mxu0 %v1680
    %3726 = vmatpush.bf16.msra.mxu0 %v1676
    %3727 = vmatpush.bf16.msra.mxu0 %v1672
    %3728 = vmatpush.bf16.msra.mxu0 %v1668
    %3729 = vmatpush.bf16.msra.mxu0 %v1664
    %3730 = vmatpush.bf16.msra.mxu0 %v1660
    %3731 = vmatpush.bf16.msra.mxu0 %v1656
    %3732 = vmatmul.bf16.gmra.mxu0 %v3723
    %v3733 = vpop.f32.mrf.mxu0
    %v3734 = vadd.f32 0.0, %v3733
    %v3735 = vpop.f32.mrf.mxu0
    %3736 = vdwg.mxu0
    %3737 = vmatpush.bf16.msra.mxu0 %v1685
    %3738 = vmatpush.bf16.msra.mxu0 %v1681
    %3739 = vmatpush.bf16.msra.mxu0 %v1677
    %3740 = vmatpush.bf16.msra.mxu0 %v1673
    %3741 = vmatpush.bf16.msra.mxu0 %v1669
    %3742 = vmatpush.bf16.msra.mxu0 %v1665
    %3743 = vmatpush.bf16.msra.mxu0 %v1661
    %3744 = vmatpush.bf16.msra.mxu0 %v1657
    %3745 = vmatmul.bf16.gmra.mxu0 %v3723
    %v3746 = vpop.f32.mrf.mxu0
    %v3747 = vadd.f32 0.0, %v3746
    %v3748 = vpop.f32.mrf.mxu0
    %3749 = vdwg.mxu0
    %3750 = vmatpush.bf16.msra.mxu0 %v1686
    %3751 = vmatpush.bf16.msra.mxu0 %v1682
    %3752 = vmatpush.bf16.msra.mxu0 %v1678
    %3753 = vmatpush.bf16.msra.mxu0 %v1674
    %3754 = vmatpush.bf16.msra.mxu0 %v1670
    %3755 = vmatpush.bf16.msra.mxu0 %v1666
    %3756 = vmatpush.bf16.msra.mxu0 %v1662
    %3757 = vmatpush.bf16.msra.mxu0 %v1658
    %3758 = vmatmul.bf16.gmra.mxu0 %v3723
    %v3759 = vpop.f32.mrf.mxu0
    %v3760 = vadd.f32 0.0, %v3759
    %v3761 = vpop.f32.mrf.mxu0
    %3762 = vdwg.mxu0
    %3763 = vmatpush.bf16.msra.mxu0 %v1687
    %3764 = vmatpush.bf16.msra.mxu0 %v1683
    %3765 = vmatpush.bf16.msra.mxu0 %v1679
    %3766 = vmatpush.bf16.msra.mxu0 %v1675
    %3767 = vmatpush.bf16.msra.mxu0 %v1671
    %3768 = vmatpush.bf16.msra.mxu0 %v1667
    %3769 = vmatpush.bf16.msra.mxu0 %v1663
    %3770 = vmatpush.bf16.msra.mxu0 %v1659
    %3771 = vmatmul.bf16.gmra.mxu0 %v3723
    %v3772 = vpop.f32.mrf.mxu0
    %v3773 = vadd.f32 0.0, %v3772
    %v3774 = vpop.f32.mrf.mxu0
    %3775 = vdwg.mxu0
    %v3776 = vxor.u32 %v3734, 2147483648
    %v3777 = vmul.f32 %v3776, 1.442695
    %v3778 = vpow.pop %v3777
    %v3779 = vadd.f32 %v3778, 1.0
    %v3780 = vrcp.pop %v3779
    %v3781 = vmul.f32 %v3779, %v3780
    %v3782 = vsub.f32 1.0, %v3781
    %v3783 = vmul.f32 %v3780, %v3782
    %v3784 = vadd.f32 %v3780, %v3783
    %vm3785 = vweird.f32 %v3779
    %vm3786 = vweird.f32 %v3780
    %vm3787 = vmor %vm3785, %vm3786
    %v3788 = vsel %vm3787, %v3780, %v3784
    %v3789 = vand.u32 2147483647, %v3779
    %vm3790 = vcmp.eq.f32.partialorder %v3789, 8.507059e+37
    %v3791 = vand.u32 %v3779, 2147483648
    %v3792 = vor.u32 1.1754944e-38, %v3791
    %v3793 = vsel %vm3790, %v3792, %v3788
    %v3794 = vmul.f32 1.0, %v3793
    %v3795 = vxor.u32 %v3747, 2147483648
    %v3796 = vmul.f32 %v3795, 1.442695
    %v3797 = vpow.pop %v3796
    %v3798 = vadd.f32 %v3797, 1.0
    %v3799 = vrcp.pop %v3798
    %v3800 = vmul.f32 %v3798, %v3799
    %v3801 = vsub.f32 1.0, %v3800
    %v3802 = vmul.f32 %v3799, %v3801
    %v3803 = vadd.f32 %v3799, %v3802
    %vm3804 = vweird.f32 %v3798
    %vm3805 = vweird.f32 %v3799
    %vm3806 = vmor %vm3804, %vm3805
    %v3807 = vsel %vm3806, %v3799, %v3803
    %v3808 = vand.u32 2147483647, %v3798
    %vm3809 = vcmp.eq.f32.partialorder %v3808, 8.507059e+37
    %v3810 = vand.u32 %v3798, 2147483648
    %v3811 = vor.u32 1.1754944e-38, %v3810
    %v3812 = vsel %vm3809, %v3811, %v3807
    %v3813 = vmul.f32 1.0, %v3812
    %v3814 = vsub.f32 %v3813, %v3672
    %v3815 = vmul.f32 %v3794, %v3814
    %v3816 = vadd.f32 %v3672, %v3815
    %v3817 = vxor.u32 %v3760, 2147483648
    %v3818 = vmul.f32 %v3817, 1.442695
    %v3819 = vpow.pop %v3818
    %v3820 = vadd.f32 %v3819, 1.0
    %v3821 = vrcp.pop %v3820
    %v3822 = vmul.f32 %v3820, %v3821
    %v3823 = vsub.f32 1.0, %v3822
    %v3824 = vmul.f32 %v3821, %v3823
    %v3825 = vadd.f32 %v3821, %v3824
    %vm3826 = vweird.f32 %v3820
    %vm3827 = vweird.f32 %v3821
    %vm3828 = vmor %vm3826, %vm3827
    %v3829 = vsel %vm3828, %v3821, %v3825
    %v3830 = vand.u32 2147483647, %v3820
    %vm3831 = vcmp.eq.f32.partialorder %v3830, 8.507059e+37
    %v3832 = vand.u32 %v3820, 2147483648
    %v3833 = vor.u32 1.1754944e-38, %v3832
    %v3834 = vsel %vm3831, %v3833, %v3829
    %v3835 = vmul.f32 1.0, %v3834
    %v3836 = vmax.f32 %v3773, 0.0
    %v3837 = vsub.f32 %v3836, %v3672
    %v3838 = vmul.f32 %v3835, %v3837
    %v3839 = vadd.f32 %v3672, %v3838
    %v3840 = vadd.f32 %v3475, %v3577
    %v3841 = vadd.f32 %v3840, %v3600
    %v3842 = vadd.f32 %v3841, %v3622
    %v3843 = vadd.f32 %v3842, %v3672
    %v3844 = vadd.f32 %v3843, %v3816
    %v3845 = vadd.f32 %v3844, %v3722
    %v3846 = vadd.f32 %v3845, %v3839
    %v3847 = vmul.f32 %v3846, 0.125
    %v3848 = vpack.c.bf16 %v3847, %v3847
    %3849 = vmatpush.bf16.msra.mxu0 %v567
    %3850 = vmatpush.bf16.msra.mxu0 %v565
    %3851 = vmatpush.bf16.msra.mxu0 %v563
    %3852 = vmatpush.bf16.msra.mxu0 %v561
    %3853 = vmatpush.bf16.msra.mxu0 %v559
    %3854 = vmatpush.bf16.msra.mxu0 %v557
    %3855 = vmatpush.bf16.msra.mxu0 %v555
    %3856 = vmatpush.bf16.msra.mxu0 %v553
    %3857 = vmatmul.bf16.gmra.mxu0 %v3848
    %v3858 = vpop.f32.mrf.mxu0
    %v3859 = vadd.f32 0.0, %v3858
    %v3860 = vpop.f32.mrf.mxu0
    %3861 = vdwg.mxu0
    %3862 = vmatpush.bf16.msra.mxu0 %v568
    %3863 = vmatpush.bf16.msra.mxu0 %v566
    %3864 = vmatpush.bf16.msra.mxu0 %v564
    %3865 = vmatpush.bf16.msra.mxu0 %v562
    %3866 = vmatpush.bf16.msra.mxu0 %v560
    %3867 = vmatpush.bf16.msra.mxu0 %v558
    %3868 = vmatpush.bf16.msra.mxu0 %v556
    %3869 = vmatpush.bf16.msra.mxu0 %v554
    %3870 = vmatmul.bf16.gmra.mxu0 %v3848
    %v3871 = vpop.f32.mrf.mxu0
    %v3872 = vadd.f32 0.0, %v3871
    %v3873 = vpop.f32.mrf.mxu0
    %3874 = vdwg.mxu0
    %v3877 = vrot.slane %v3859, 6
    %v3878 = vrot.slane %v3872, 6
    %v3881 = vadd.f32 %v471, %v3877
    %v3882 = vadd.f32 %v485, %v3878
    %v3883 = vxor.u32 %v3881, 2147483648
    %v3884 = vmul.f32 %v3883, 1.442695
    %v3885 = vpow.pop %v3884
    %v3886 = vadd.f32 %v3885, 1.0
    %v3887 = vrcp.pop %v3886
    %v3888 = vmul.f32 %v3886, %v3887
    %v3889 = vsub.f32 1.0, %v3888
    %v3890 = vmul.f32 %v3887, %v3889
    %v3891 = vadd.f32 %v3887, %v3890
    %vm3892 = vweird.f32 %v3886
    %vm3893 = vweird.f32 %v3887
    %vm3894 = vmor %vm3892, %vm3893
    %v3895 = vsel %vm3894, %v3887, %v3891
    %v3896 = vand.u32 2147483647, %v3886
    %vm3897 = vcmp.eq.f32.partialorder %v3896, 8.507059e+37
    %v3898 = vand.u32 %v3886, 2147483648
    %v3899 = vor.u32 1.1754944e-38, %v3898
    %v3900 = vsel %vm3897, %v3899, %v3895
    %v3901 = vmul.f32 1.0, %v3900
    %v3902 = vtanh.pop %v3882
    %v3904 = vrot.slane %v3847, 6
    %v3906 = vsub.f32 %v3902, %v3904
    %v3907 = vmul.f32 %v3901, %v3906
    %v3909 = vrot.slane %v3907, 2
    %v3911 = vadd.f32 %v3847, %v3909
    %v3912 = vpack.c.bf16 %v3911, %v3911
    %3913 = vmatpush.bf16.msra.mxu0 %v715
    %3914 = vmatpush.bf16.msra.mxu0 %v713
    %3915 = vmatpush.bf16.msra.mxu0 %v711
    %3916 = vmatpush.bf16.msra.mxu0 %v709
    %3917 = vmatpush.bf16.msra.mxu0 %v707
    %3918 = vmatpush.bf16.msra.mxu0 %v705
    %3919 = vmatpush.bf16.msra.mxu0 %v703
    %3920 = vmatpush.bf16.msra.mxu0 %v701
    %3921 = vmatmul.bf16.gmra.mxu0 %v3912
    %v3922 = vpop.f32.mrf.mxu0
    %v3923 = vadd.f32 0.0, %v3922
    %v3924 = vpop.f32.mrf.mxu0
    %3925 = vdwg.mxu0
    %3926 = vmatpush.bf16.msra.mxu0 %v716
    %3927 = vmatpush.bf16.msra.mxu0 %v714
    %3928 = vmatpush.bf16.msra.mxu0 %v712
    %3929 = vmatpush.bf16.msra.mxu0 %v710
    %3930 = vmatpush.bf16.msra.mxu0 %v708
    %3931 = vmatpush.bf16.msra.mxu0 %v706
    %3932 = vmatpush.bf16.msra.mxu0 %v704
    %3933 = vmatpush.bf16.msra.mxu0 %v702
    %3934 = vmatmul.bf16.gmra.mxu0 %v3912
    %v3935 = vpop.f32.mrf.mxu0
    %v3936 = vadd.f32 0.0, %v3935
    %v3937 = vpop.f32.mrf.mxu0
    %3938 = vdwg.mxu0
    %v3939 = vxor.u32 %v3923, 2147483648
    %v3940 = vmul.f32 %v3939, 1.442695
    %v3941 = vpow.pop %v3940
    %v3942 = vadd.f32 %v3941, 1.0
    %v3943 = vrcp.pop %v3942
    %v3944 = vmul.f32 %v3942, %v3943
    %v3945 = vsub.f32 1.0, %v3944
    %v3946 = vmul.f32 %v3943, %v3945
    %v3947 = vadd.f32 %v3943, %v3946
    %vm3948 = vweird.f32 %v3942
    %vm3949 = vweird.f32 %v3943
    %vm3950 = vmor %vm3948, %vm3949
    %v3951 = vsel %vm3950, %v3943, %v3947
    %v3952 = vand.u32 2147483647, %v3942
    %vm3953 = vcmp.eq.f32.partialorder %v3952, 8.507059e+37
    %v3954 = vand.u32 %v3942, 2147483648
    %v3955 = vor.u32 1.1754944e-38, %v3954
    %v3956 = vsel %vm3953, %v3955, %v3951
    %v3957 = vmul.f32 1.0, %v3956
    %v3958 = vxor.u32 %v3936, 2147483648
    %v3959 = vmul.f32 %v3958, 1.442695
    %v3960 = vpow.pop %v3959
    %v3961 = vadd.f32 %v3960, 1.0
    %v3962 = vrcp.pop %v3961
    %v3963 = vmul.f32 %v3961, %v3962
    %v3964 = vsub.f32 1.0, %v3963
    %v3965 = vmul.f32 %v3962, %v3964
    %v3966 = vadd.f32 %v3962, %v3965
    %vm3967 = vweird.f32 %v3961
    %vm3968 = vweird.f32 %v3962
    %vm3969 = vmor %vm3967, %vm3968
    %v3970 = vsel %vm3969, %v3962, %v3966
    %v3971 = vand.u32 2147483647, %v3961
    %vm3972 = vcmp.eq.f32.partialorder %v3971, 8.507059e+37
    %v3973 = vand.u32 %v3961, 2147483648
    %v3974 = vor.u32 1.1754944e-38, %v3973
    %v3975 = vsel %vm3972, %v3974, %v3970
    %v3976 = vmul.f32 1.0, %v3975
    %v3977 = vsub.f32 %v3976, %v3911
    %v3978 = vmul.f32 %v3957, %v3977
    %v3979 = vadd.f32 %v3911, %v3978
    %v3980 = vpack.c.bf16 %v3979, %v3979
    %3981 = vmatpush.bf16.msra.mxu0 %v1035
    %3982 = vmatpush.bf16.msra.mxu0 %v1029
    %3983 = vmatpush.bf16.msra.mxu0 %v1023
    %3984 = vmatpush.bf16.msra.mxu0 %v1017
    %3985 = vmatpush.bf16.msra.mxu0 %v1011
    %3986 = vmatpush.bf16.msra.mxu0 %v1005
    %3987 = vmatpush.bf16.msra.mxu0 %v999
    %3988 = vmatpush.bf16.msra.mxu0 %v993
    %3989 = vmatmul.bf16.gmra.mxu0 %v3980
    %v3990 = vpop.f32.mrf.mxu0
    %v3991 = vadd.f32 0.0, %v3990
    %v3992 = vpop.f32.mrf.mxu0
    %3993 = vdwg.mxu0
    %3994 = vmatpush.bf16.msra.mxu0 %v1036
    %3995 = vmatpush.bf16.msra.mxu0 %v1030
    %3996 = vmatpush.bf16.msra.mxu0 %v1024
    %3997 = vmatpush.bf16.msra.mxu0 %v1018
    %3998 = vmatpush.bf16.msra.mxu0 %v1012
    %3999 = vmatpush.bf16.msra.mxu0 %v1006
    %4000 = vmatpush.bf16.msra.mxu0 %v1000
    %4001 = vmatpush.bf16.msra.mxu0 %v994
    %4002 = vmatmul.bf16.gmra.mxu0 %v3980
    %v4003 = vpop.f32.mrf.mxu0
    %v4004 = vadd.f32 0.0, %v4003
    %v4005 = vpop.f32.mrf.mxu0
    %4006 = vdwg.mxu0
    %4007 = vmatpush.bf16.msra.mxu0 %v1037
    %4008 = vmatpush.bf16.msra.mxu0 %v1031
    %4009 = vmatpush.bf16.msra.mxu0 %v1025
    %4010 = vmatpush.bf16.msra.mxu0 %v1019
    %4011 = vmatpush.bf16.msra.mxu0 %v1013
    %4012 = vmatpush.bf16.msra.mxu0 %v1007
    %4013 = vmatpush.bf16.msra.mxu0 %v1001
    %4014 = vmatpush.bf16.msra.mxu0 %v995
    %4015 = vmatmul.bf16.gmra.mxu0 %v3980
    %v4016 = vpop.f32.mrf.mxu0
    %v4017 = vadd.f32 0.0, %v4016
    %v4018 = vpop.f32.mrf.mxu0
    %4019 = vdwg.mxu0
    %4020 = vmatpush.bf16.msra.mxu0 %v1038
    %4021 = vmatpush.bf16.msra.mxu0 %v1032
    %4022 = vmatpush.bf16.msra.mxu0 %v1026
    %4023 = vmatpush.bf16.msra.mxu0 %v1020
    %4024 = vmatpush.bf16.msra.mxu0 %v1014
    %4025 = vmatpush.bf16.msra.mxu0 %v1008
    %4026 = vmatpush.bf16.msra.mxu0 %v1002
    %4027 = vmatpush.bf16.msra.mxu0 %v996
    %4028 = vmatmul.bf16.gmra.mxu0 %v3980
    %v4029 = vpop.f32.mrf.mxu0
    %v4030 = vadd.f32 0.0, %v4029
    %v4031 = vpop.f32.mrf.mxu0
    %4032 = vdwg.mxu0
    %4033 = vmatpush.bf16.msra.mxu0 %v1039
    %4034 = vmatpush.bf16.msra.mxu0 %v1033
    %4035 = vmatpush.bf16.msra.mxu0 %v1027
    %4036 = vmatpush.bf16.msra.mxu0 %v1021
    %4037 = vmatpush.bf16.msra.mxu0 %v1015
    %4038 = vmatpush.bf16.msra.mxu0 %v1009
    %4039 = vmatpush.bf16.msra.mxu0 %v1003
    %4040 = vmatpush.bf16.msra.mxu0 %v997
    %4041 = vmatmul.bf16.gmra.mxu0 %v3980
    %v4042 = vpop.f32.mrf.mxu0
    %v4043 = vadd.f32 0.0, %v4042
    %v4044 = vpop.f32.mrf.mxu0
    %4045 = vdwg.mxu0
    %4046 = vmatpush.bf16.msra.mxu0 %v1040
    %4047 = vmatpush.bf16.msra.mxu0 %v1034
    %4048 = vmatpush.bf16.msra.mxu0 %v1028
    %4049 = vmatpush.bf16.msra.mxu0 %v1022
    %4050 = vmatpush.bf16.msra.mxu0 %v1016
    %4051 = vmatpush.bf16.msra.mxu0 %v1010
    %4052 = vmatpush.bf16.msra.mxu0 %v1004
    %4053 = vmatpush.bf16.msra.mxu0 %v998
    %4054 = vmatmul.bf16.gmra.mxu0 %v3980
    %v4055 = vpop.f32.mrf.mxu0
    %v4056 = vadd.f32 0.0, %v4055
    %v4057 = vpop.f32.mrf.mxu0
    %4058 = vdwg.mxu0
    %v4059 = vxor.u32 %v3991, 2147483648
    %v4060 = vmul.f32 %v4059, 1.442695
    %v4061 = vpow.pop %v4060
    %v4062 = vadd.f32 %v4061, 1.0
    %v4063 = vrcp.pop %v4062
    %v4064 = vmul.f32 %v4062, %v4063
    %v4065 = vsub.f32 1.0, %v4064
    %v4066 = vmul.f32 %v4063, %v4065
    %v4067 = vadd.f32 %v4063, %v4066
    %vm4068 = vweird.f32 %v4062
    %vm4069 = vweird.f32 %v4063
    %vm4070 = vmor %vm4068, %vm4069
    %v4071 = vsel %vm4070, %v4063, %v4067
    %v4072 = vand.u32 2147483647, %v4062
    %vm4073 = vcmp.eq.f32.partialorder %v4072, 8.507059e+37
    %v4074 = vand.u32 %v4062, 2147483648
    %v4075 = vor.u32 1.1754944e-38, %v4074
    %v4076 = vsel %vm4073, %v4075, %v4071
    %v4077 = vmul.f32 1.0, %v4076
    %v4078 = vmax.f32 %v4004, 0.0
    %v4079 = vsub.f32 %v4078, %v3979
    %v4080 = vmul.f32 %v4077, %v4079
    %v4081 = vadd.f32 %v3979, %v4080
    %v4082 = vxor.u32 %v4017, 2147483648
    %v4083 = vmul.f32 %v4082, 1.442695
    %v4084 = vpow.pop %v4083
    %v4085 = vadd.f32 %v4084, 1.0
    %v4086 = vrcp.pop %v4085
    %v4087 = vmul.f32 %v4085, %v4086
    %v4088 = vsub.f32 1.0, %v4087
    %v4089 = vmul.f32 %v4086, %v4088
    %v4090 = vadd.f32 %v4086, %v4089
    %vm4091 = vweird.f32 %v4085
    %vm4092 = vweird.f32 %v4086
    %vm4093 = vmor %vm4091, %vm4092
    %v4094 = vsel %vm4093, %v4086, %v4090
    %v4095 = vand.u32 2147483647, %v4085
    %vm4096 = vcmp.eq.f32.partialorder %v4095, 8.507059e+37
    %v4097 = vand.u32 %v4085, 2147483648
    %v4098 = vor.u32 1.1754944e-38, %v4097
    %v4099 = vsel %vm4096, %v4098, %v4094
    %v4100 = vmul.f32 1.0, %v4099
    %v4101 = vmax.f32 %v4030, 0.0
    %v4102 = vsub.f32 %v4101, %v3979
    %v4103 = vmul.f32 %v4100, %v4102
    %v4104 = vadd.f32 %v3979, %v4103
    %v4105 = vxor.u32 %v4043, 2147483648
    %v4106 = vmul.f32 %v4105, 1.442695
    %v4107 = vpow.pop %v4106
    %v4108 = vadd.f32 %v4107, 1.0
    %v4109 = vrcp.pop %v4108
    %v4110 = vmul.f32 %v4108, %v4109
    %v4111 = vsub.f32 1.0, %v4110
    %v4112 = vmul.f32 %v4109, %v4111
    %v4113 = vadd.f32 %v4109, %v4112
    %vm4114 = vweird.f32 %v4108
    %vm4115 = vweird.f32 %v4109
    %vm4116 = vmor %vm4114, %vm4115
    %v4117 = vsel %vm4116, %v4109, %v4113
    %v4118 = vand.u32 2147483647, %v4108
    %vm4119 = vcmp.eq.f32.partialorder %v4118, 8.507059e+37
    %v4120 = vand.u32 %v4108, 2147483648
    %v4121 = vor.u32 1.1754944e-38, %v4120
    %v4122 = vsel %vm4119, %v4121, %v4117
    %v4123 = vmul.f32 1.0, %v4122
    %v4124 = vsub.f32 %v4056, %v3979
    %v4125 = vmul.f32 %v4123, %v4124
    %v4126 = vadd.f32 %v3979, %v4125
    %v4127 = vpack.c.bf16 %v4081, %v4081
    %4128 = vmatpush.bf16.msra.mxu0 %v1314
    %4129 = vmatpush.bf16.msra.mxu0 %v1312
    %4130 = vmatpush.bf16.msra.mxu0 %v1310
    %4131 = vmatpush.bf16.msra.mxu0 %v1308
    %4132 = vmatpush.bf16.msra.mxu0 %v1306
    %4133 = vmatpush.bf16.msra.mxu0 %v1304
    %4134 = vmatpush.bf16.msra.mxu0 %v1302
    %4135 = vmatpush.bf16.msra.mxu0 %v1300
    %4136 = vmatmul.bf16.gmra.mxu0 %v4127
    %v4137 = vpop.f32.mrf.mxu0
    %v4138 = vadd.f32 0.0, %v4137
    %v4139 = vpop.f32.mrf.mxu0
    %4140 = vdwg.mxu0
    %4141 = vmatpush.bf16.msra.mxu0 %v1315
    %4142 = vmatpush.bf16.msra.mxu0 %v1313
    %4143 = vmatpush.bf16.msra.mxu0 %v1311
    %4144 = vmatpush.bf16.msra.mxu0 %v1309
    %4145 = vmatpush.bf16.msra.mxu0 %v1307
    %4146 = vmatpush.bf16.msra.mxu0 %v1305
    %4147 = vmatpush.bf16.msra.mxu0 %v1303
    %4148 = vmatpush.bf16.msra.mxu0 %v1301
    %4149 = vmatmul.bf16.gmra.mxu0 %v4127
    %v4150 = vpop.f32.mrf.mxu0
    %v4151 = vadd.f32 0.0, %v4150
    %v4152 = vpop.f32.mrf.mxu0
    %4153 = vdwg.mxu0
    %v4154 = vxor.u32 %v4138, 2147483648
    %v4155 = vmul.f32 %v4154, 1.442695
    %v4156 = vpow.pop %v4155
    %v4157 = vadd.f32 %v4156, 1.0
    %v4158 = vrcp.pop %v4157
    %v4159 = vmul.f32 %v4157, %v4158
    %v4160 = vsub.f32 1.0, %v4159
    %v4161 = vmul.f32 %v4158, %v4160
    %v4162 = vadd.f32 %v4158, %v4161
    %vm4163 = vweird.f32 %v4157
    %vm4164 = vweird.f32 %v4158
    %vm4165 = vmor %vm4163, %vm4164
    %v4166 = vsel %vm4165, %v4158, %v4162
    %v4167 = vand.u32 2147483647, %v4157
    %vm4168 = vcmp.eq.f32.partialorder %v4167, 8.507059e+37
    %v4169 = vand.u32 %v4157, 2147483648
    %v4170 = vor.u32 1.1754944e-38, %v4169
    %v4171 = vsel %vm4168, %v4170, %v4166
    %v4172 = vmul.f32 1.0, %v4171
    %v4173 = vtanh.pop %v4151
    %v4174 = vsub.f32 %v4173, %v4081
    %v4175 = vmul.f32 %v4172, %v4174
    %v4176 = vadd.f32 %v4081, %v4175
    %v4177 = vpack.c.bf16 %v4104, %v4104
    %4178 = vmatpush.bf16.msra.mxu0 %v1460
    %4179 = vmatpush.bf16.msra.mxu0 %v1458
    %4180 = vmatpush.bf16.msra.mxu0 %v1456
    %4181 = vmatpush.bf16.msra.mxu0 %v1454
    %4182 = vmatpush.bf16.msra.mxu0 %v1452
    %4183 = vmatpush.bf16.msra.mxu0 %v1450
    %4184 = vmatpush.bf16.msra.mxu0 %v1448
    %4185 = vmatpush.bf16.msra.mxu0 %v1446
    %4186 = vmatmul.bf16.gmra.mxu0 %v4177
    %v4187 = vpop.f32.mrf.mxu0
    %v4188 = vadd.f32 0.0, %v4187
    %v4189 = vpop.f32.mrf.mxu0
    %4190 = vdwg.mxu0
    %4191 = vmatpush.bf16.msra.mxu0 %v1461
    %4192 = vmatpush.bf16.msra.mxu0 %v1459
    %4193 = vmatpush.bf16.msra.mxu0 %v1457
    %4194 = vmatpush.bf16.msra.mxu0 %v1455
    %4195 = vmatpush.bf16.msra.mxu0 %v1453
    %4196 = vmatpush.bf16.msra.mxu0 %v1451
    %4197 = vmatpush.bf16.msra.mxu0 %v1449
    %4198 = vmatpush.bf16.msra.mxu0 %v1447
    %4199 = vmatmul.bf16.gmra.mxu0 %v4177
    %v4200 = vpop.f32.mrf.mxu0
    %v4201 = vadd.f32 0.0, %v4200
    %v4202 = vpop.f32.mrf.mxu0
    %4203 = vdwg.mxu0
    %v4204 = vxor.u32 %v4188, 2147483648
    %v4205 = vmul.f32 %v4204, 1.442695
    %v4206 = vpow.pop %v4205
    %v4207 = vadd.f32 %v4206, 1.0
    %v4208 = vrcp.pop %v4207
    %v4209 = vmul.f32 %v4207, %v4208
    %v4210 = vsub.f32 1.0, %v4209
    %v4211 = vmul.f32 %v4208, %v4210
    %v4212 = vadd.f32 %v4208, %v4211
    %vm4213 = vweird.f32 %v4207
    %vm4214 = vweird.f32 %v4208
    %vm4215 = vmor %vm4213, %vm4214
    %v4216 = vsel %vm4215, %v4208, %v4212
    %v4217 = vand.u32 2147483647, %v4207
    %vm4218 = vcmp.eq.f32.partialorder %v4217, 8.507059e+37
    %v4219 = vand.u32 %v4207, 2147483648
    %v4220 = vor.u32 1.1754944e-38, %v4219
    %v4221 = vsel %vm4218, %v4220, %v4216
    %v4222 = vmul.f32 1.0, %v4221
    %v4223 = vtanh.pop %v4201
    %v4224 = vsub.f32 %v4223, %v4104
    %v4225 = vmul.f32 %v4222, %v4224
    %v4226 = vadd.f32 %v4104, %v4225
    %v4227 = vpack.c.bf16 %v4176, %v4176
    %4228 = vmatpush.bf16.msra.mxu0 %v1684
    %4229 = vmatpush.bf16.msra.mxu0 %v1680
    %4230 = vmatpush.bf16.msra.mxu0 %v1676
    %4231 = vmatpush.bf16.msra.mxu0 %v1672
    %4232 = vmatpush.bf16.msra.mxu0 %v1668
    %4233 = vmatpush.bf16.msra.mxu0 %v1664
    %4234 = vmatpush.bf16.msra.mxu0 %v1660
    %4235 = vmatpush.bf16.msra.mxu0 %v1656
    %4236 = vmatmul.bf16.gmra.mxu0 %v4227
    %v4237 = vpop.f32.mrf.mxu0
    %v4238 = vadd.f32 0.0, %v4237
    %v4239 = vpop.f32.mrf.mxu0
    %4240 = vdwg.mxu0
    %4241 = vmatpush.bf16.msra.mxu0 %v1685
    %4242 = vmatpush.bf16.msra.mxu0 %v1681
    %4243 = vmatpush.bf16.msra.mxu0 %v1677
    %4244 = vmatpush.bf16.msra.mxu0 %v1673
    %4245 = vmatpush.bf16.msra.mxu0 %v1669
    %4246 = vmatpush.bf16.msra.mxu0 %v1665
    %4247 = vmatpush.bf16.msra.mxu0 %v1661
    %4248 = vmatpush.bf16.msra.mxu0 %v1657
    %4249 = vmatmul.bf16.gmra.mxu0 %v4227
    %v4250 = vpop.f32.mrf.mxu0
    %v4251 = vadd.f32 0.0, %v4250
    %v4252 = vpop.f32.mrf.mxu0
    %4253 = vdwg.mxu0
    %4254 = vmatpush.bf16.msra.mxu0 %v1686
    %4255 = vmatpush.bf16.msra.mxu0 %v1682
    %4256 = vmatpush.bf16.msra.mxu0 %v1678
    %4257 = vmatpush.bf16.msra.mxu0 %v1674
    %4258 = vmatpush.bf16.msra.mxu0 %v1670
    %4259 = vmatpush.bf16.msra.mxu0 %v1666
    %4260 = vmatpush.bf16.msra.mxu0 %v1662
    %4261 = vmatpush.bf16.msra.mxu0 %v1658
    %4262 = vmatmul.bf16.gmra.mxu0 %v4227
    %v4263 = vpop.f32.mrf.mxu0
    %v4264 = vadd.f32 0.0, %v4263
    %v4265 = vpop.f32.mrf.mxu0
    %4266 = vdwg.mxu0
    %4267 = vmatpush.bf16.msra.mxu0 %v1687
    %4268 = vmatpush.bf16.msra.mxu0 %v1683
    %4269 = vmatpush.bf16.msra.mxu0 %v1679
    %4270 = vmatpush.bf16.msra.mxu0 %v1675
    %4271 = vmatpush.bf16.msra.mxu0 %v1671
    %4272 = vmatpush.bf16.msra.mxu0 %v1667
    %4273 = vmatpush.bf16.msra.mxu0 %v1663
    %4274 = vmatpush.bf16.msra.mxu0 %v1659
    %4275 = vmatmul.bf16.gmra.mxu0 %v4227
    %v4276 = vpop.f32.mrf.mxu0
    %v4277 = vadd.f32 0.0, %v4276
    %v4278 = vpop.f32.mrf.mxu0
    %4279 = vdwg.mxu0
    %v4280 = vxor.u32 %v4238, 2147483648
    %v4281 = vmul.f32 %v4280, 1.442695
    %v4282 = vpow.pop %v4281
    %v4283 = vadd.f32 %v4282, 1.0
    %v4284 = vrcp.pop %v4283
    %v4285 = vmul.f32 %v4283, %v4284
    %v4286 = vsub.f32 1.0, %v4285
    %v4287 = vmul.f32 %v4284, %v4286
    %v4288 = vadd.f32 %v4284, %v4287
    %vm4289 = vweird.f32 %v4283
    %vm4290 = vweird.f32 %v4284
    %vm4291 = vmor %vm4289, %vm4290
    %v4292 = vsel %vm4291, %v4284, %v4288
    %v4293 = vand.u32 2147483647, %v4283
    %vm4294 = vcmp.eq.f32.partialorder %v4293, 8.507059e+37
    %v4295 = vand.u32 %v4283, 2147483648
    %v4296 = vor.u32 1.1754944e-38, %v4295
    %v4297 = vsel %vm4294, %v4296, %v4292
    %v4298 = vmul.f32 1.0, %v4297
    %v4299 = vxor.u32 %v4251, 2147483648
    %v4300 = vmul.f32 %v4299, 1.442695
    %v4301 = vpow.pop %v4300
    %v4302 = vadd.f32 %v4301, 1.0
    %v4303 = vrcp.pop %v4302
    %v4304 = vmul.f32 %v4302, %v4303
    %v4305 = vsub.f32 1.0, %v4304
    %v4306 = vmul.f32 %v4303, %v4305
    %v4307 = vadd.f32 %v4303, %v4306
    %vm4308 = vweird.f32 %v4302
    %vm4309 = vweird.f32 %v4303
    %vm4310 = vmor %vm4308, %vm4309
    %v4311 = vsel %vm4310, %v4303, %v4307
    %v4312 = vand.u32 2147483647, %v4302
    %vm4313 = vcmp.eq.f32.partialorder %v4312, 8.507059e+37
    %v4314 = vand.u32 %v4302, 2147483648
    %v4315 = vor.u32 1.1754944e-38, %v4314
    %v4316 = vsel %vm4313, %v4315, %v4311
    %v4317 = vmul.f32 1.0, %v4316
    %v4318 = vsub.f32 %v4317, %v4176
    %v4319 = vmul.f32 %v4298, %v4318
    %v4320 = vadd.f32 %v4176, %v4319
    %v4321 = vxor.u32 %v4264, 2147483648
    %v4322 = vmul.f32 %v4321, 1.442695
    %v4323 = vpow.pop %v4322
    %v4324 = vadd.f32 %v4323, 1.0
    %v4325 = vrcp.pop %v4324
    %v4326 = vmul.f32 %v4324, %v4325
    %v4327 = vsub.f32 1.0, %v4326
    %v4328 = vmul.f32 %v4325, %v4327
    %v4329 = vadd.f32 %v4325, %v4328
    %vm4330 = vweird.f32 %v4324
    %vm4331 = vweird.f32 %v4325
    %vm4332 = vmor %vm4330, %vm4331
    %v4333 = vsel %vm4332, %v4325, %v4329
    %v4334 = vand.u32 2147483647, %v4324
    %vm4335 = vcmp.eq.f32.partialorder %v4334, 8.507059e+37
    %v4336 = vand.u32 %v4324, 2147483648
    %v4337 = vor.u32 1.1754944e-38, %v4336
    %v4338 = vsel %vm4335, %v4337, %v4333
    %v4339 = vmul.f32 1.0, %v4338
    %v4340 = vmax.f32 %v4277, 0.0
    %v4341 = vsub.f32 %v4340, %v4176
    %v4342 = vmul.f32 %v4339, %v4341
    %v4343 = vadd.f32 %v4176, %v4342
    %v4344 = vadd.f32 %v3979, %v4081
    %v4345 = vadd.f32 %v4344, %v4104
    %v4346 = vadd.f32 %v4345, %v4126
    %v4347 = vadd.f32 %v4346, %v4176
    %v4348 = vadd.f32 %v4347, %v4320
    %v4349 = vadd.f32 %v4348, %v4226
    %v4350 = vadd.f32 %v4349, %v4343
    %v4351 = vmul.f32 %v4350, 0.125
    %v4352 = vpack.c.bf16 %v4351, %v4351
    %4353 = vmatpush.bf16.msra.mxu0 %v567
    %4354 = vmatpush.bf16.msra.mxu0 %v565
    %4355 = vmatpush.bf16.msra.mxu0 %v563
    %4356 = vmatpush.bf16.msra.mxu0 %v561
    %4357 = vmatpush.bf16.msra.mxu0 %v559
    %4358 = vmatpush.bf16.msra.mxu0 %v557
    %4359 = vmatpush.bf16.msra.mxu0 %v555
    %4360 = vmatpush.bf16.msra.mxu0 %v553
    %4361 = vmatmul.bf16.gmra.mxu0 %v4352
    %v4362 = vpop.f32.mrf.mxu0
    %v4363 = vadd.f32 0.0, %v4362
    %v4364 = vpop.f32.mrf.mxu0
    %4365 = vdwg.mxu0
    %4366 = vmatpush.bf16.msra.mxu0 %v568
    %4367 = vmatpush.bf16.msra.mxu0 %v566
    %4368 = vmatpush.bf16.msra.mxu0 %v564
    %4369 = vmatpush.bf16.msra.mxu0 %v562
    %4370 = vmatpush.bf16.msra.mxu0 %v560
    %4371 = vmatpush.bf16.msra.mxu0 %v558
    %4372 = vmatpush.bf16.msra.mxu0 %v556
    %4373 = vmatpush.bf16.msra.mxu0 %v554
    %4374 = vmatmul.bf16.gmra.mxu0 %v4352
    %v4375 = vpop.f32.mrf.mxu0
    %v4376 = vadd.f32 0.0, %v4375
    %v4377 = vpop.f32.mrf.mxu0
    %4378 = vdwg.mxu0
    %v4381 = vrot.slane %v4363, 4
    %v4382 = vrot.slane %v4376, 4
    %v4385 = vadd.f32 %v471, %v4381
    %v4386 = vadd.f32 %v485, %v4382
    %v4387 = vxor.u32 %v4385, 2147483648
    %v4388 = vmul.f32 %v4387, 1.442695
    %v4389 = vpow.pop %v4388
    %v4390 = vadd.f32 %v4389, 1.0
    %v4391 = vrcp.pop %v4390
    %v4392 = vmul.f32 %v4390, %v4391
    %v4393 = vsub.f32 1.0, %v4392
    %v4394 = vmul.f32 %v4391, %v4393
    %v4395 = vadd.f32 %v4391, %v4394
    %vm4396 = vweird.f32 %v4390
    %vm4397 = vweird.f32 %v4391
    %vm4398 = vmor %vm4396, %vm4397
    %v4399 = vsel %vm4398, %v4391, %v4395
    %v4400 = vand.u32 2147483647, %v4390
    %vm4401 = vcmp.eq.f32.partialorder %v4400, 8.507059e+37
    %v4402 = vand.u32 %v4390, 2147483648
    %v4403 = vor.u32 1.1754944e-38, %v4402
    %v4404 = vsel %vm4401, %v4403, %v4399
    %v4405 = vmul.f32 1.0, %v4404
    %v4406 = vtanh.pop %v4386
    %v4408 = vrot.slane %v4351, 4
    %v4410 = vsub.f32 %v4406, %v4408
    %v4411 = vmul.f32 %v4405, %v4410
    %v4413 = vrot.slane %v4411, 4
    %v4415 = vadd.f32 %v4351, %v4413
    %v4416 = vpack.c.bf16 %v4415, %v4415
    %4417 = vmatpush.bf16.msra.mxu0 %v715
    %4418 = vmatpush.bf16.msra.mxu0 %v713
    %4419 = vmatpush.bf16.msra.mxu0 %v711
    %4420 = vmatpush.bf16.msra.mxu0 %v709
    %4421 = vmatpush.bf16.msra.mxu0 %v707
    %4422 = vmatpush.bf16.msra.mxu0 %v705
    %4423 = vmatpush.bf16.msra.mxu0 %v703
    %4424 = vmatpush.bf16.msra.mxu0 %v701
    %4425 = vmatmul.bf16.gmra.mxu0 %v4416
    %v4426 = vpop.f32.mrf.mxu0
    %v4427 = vadd.f32 0.0, %v4426
    %v4428 = vpop.f32.mrf.mxu0
    %4429 = vdwg.mxu0
    %4430 = vmatpush.bf16.msra.mxu0 %v716
    %4431 = vmatpush.bf16.msra.mxu0 %v714
    %4432 = vmatpush.bf16.msra.mxu0 %v712
    %4433 = vmatpush.bf16.msra.mxu0 %v710
    %4434 = vmatpush.bf16.msra.mxu0 %v708
    %4435 = vmatpush.bf16.msra.mxu0 %v706
    %4436 = vmatpush.bf16.msra.mxu0 %v704
    %4437 = vmatpush.bf16.msra.mxu0 %v702
    %4438 = vmatmul.bf16.gmra.mxu0 %v4416
    %v4439 = vpop.f32.mrf.mxu0
    %v4440 = vadd.f32 0.0, %v4439
    %v4441 = vpop.f32.mrf.mxu0
    %4442 = vdwg.mxu0
    %v4443 = vxor.u32 %v4427, 2147483648
    %v4444 = vmul.f32 %v4443, 1.442695
    %v4445 = vpow.pop %v4444
    %v4446 = vadd.f32 %v4445, 1.0
    %v4447 = vrcp.pop %v4446
    %v4448 = vmul.f32 %v4446, %v4447
    %v4449 = vsub.f32 1.0, %v4448
    %v4450 = vmul.f32 %v4447, %v4449
    %v4451 = vadd.f32 %v4447, %v4450
    %vm4452 = vweird.f32 %v4446
    %vm4453 = vweird.f32 %v4447
    %vm4454 = vmor %vm4452, %vm4453
    %v4455 = vsel %vm4454, %v4447, %v4451
    %v4456 = vand.u32 2147483647, %v4446
    %vm4457 = vcmp.eq.f32.partialorder %v4456, 8.507059e+37
    %v4458 = vand.u32 %v4446, 2147483648
    %v4459 = vor.u32 1.1754944e-38, %v4458
    %v4460 = vsel %vm4457, %v4459, %v4455
    %v4461 = vmul.f32 1.0, %v4460
    %v4462 = vxor.u32 %v4440, 2147483648
    %v4463 = vmul.f32 %v4462, 1.442695
    %v4464 = vpow.pop %v4463
    %v4465 = vadd.f32 %v4464, 1.0
    %v4466 = vrcp.pop %v4465
    %v4467 = vmul.f32 %v4465, %v4466
    %v4468 = vsub.f32 1.0, %v4467
    %v4469 = vmul.f32 %v4466, %v4468
    %v4470 = vadd.f32 %v4466, %v4469
    %vm4471 = vweird.f32 %v4465
    %vm4472 = vweird.f32 %v4466
    %vm4473 = vmor %vm4471, %vm4472
    %v4474 = vsel %vm4473, %v4466, %v4470
    %v4475 = vand.u32 2147483647, %v4465
    %vm4476 = vcmp.eq.f32.partialorder %v4475, 8.507059e+37
    %v4477 = vand.u32 %v4465, 2147483648
    %v4478 = vor.u32 1.1754944e-38, %v4477
    %v4479 = vsel %vm4476, %v4478, %v4474
    %v4480 = vmul.f32 1.0, %v4479
    %v4481 = vsub.f32 %v4480, %v4415
    %v4482 = vmul.f32 %v4461, %v4481
    %v4483 = vadd.f32 %v4415, %v4482
    %v4484 = vpack.c.bf16 %v4483, %v4483
    %4485 = vmatpush.bf16.msra.mxu0 %v1035
    %4486 = vmatpush.bf16.msra.mxu0 %v1029
    %4487 = vmatpush.bf16.msra.mxu0 %v1023
    %4488 = vmatpush.bf16.msra.mxu0 %v1017
    %4489 = vmatpush.bf16.msra.mxu0 %v1011
    %4490 = vmatpush.bf16.msra.mxu0 %v1005
    %4491 = vmatpush.bf16.msra.mxu0 %v999
    %4492 = vmatpush.bf16.msra.mxu0 %v993
    %4493 = vmatmul.bf16.gmra.mxu0 %v4484
    %v4494 = vpop.f32.mrf.mxu0
    %v4495 = vadd.f32 0.0, %v4494
    %v4496 = vpop.f32.mrf.mxu0
    %4497 = vdwg.mxu0
    %4498 = vmatpush.bf16.msra.mxu0 %v1036
    %4499 = vmatpush.bf16.msra.mxu0 %v1030
    %4500 = vmatpush.bf16.msra.mxu0 %v1024
    %4501 = vmatpush.bf16.msra.mxu0 %v1018
    %4502 = vmatpush.bf16.msra.mxu0 %v1012
    %4503 = vmatpush.bf16.msra.mxu0 %v1006
    %4504 = vmatpush.bf16.msra.mxu0 %v1000
    %4505 = vmatpush.bf16.msra.mxu0 %v994
    %4506 = vmatmul.bf16.gmra.mxu0 %v4484
    %v4507 = vpop.f32.mrf.mxu0
    %v4508 = vadd.f32 0.0, %v4507
    %v4509 = vpop.f32.mrf.mxu0
    %4510 = vdwg.mxu0
    %4511 = vmatpush.bf16.msra.mxu0 %v1037
    %4512 = vmatpush.bf16.msra.mxu0 %v1031
    %4513 = vmatpush.bf16.msra.mxu0 %v1025
    %4514 = vmatpush.bf16.msra.mxu0 %v1019
    %4515 = vmatpush.bf16.msra.mxu0 %v1013
    %4516 = vmatpush.bf16.msra.mxu0 %v1007
    %4517 = vmatpush.bf16.msra.mxu0 %v1001
    %4518 = vmatpush.bf16.msra.mxu0 %v995
    %4519 = vmatmul.bf16.gmra.mxu0 %v4484
    %v4520 = vpop.f32.mrf.mxu0
    %v4521 = vadd.f32 0.0, %v4520
    %v4522 = vpop.f32.mrf.mxu0
    %4523 = vdwg.mxu0
    %4524 = vmatpush.bf16.msra.mxu0 %v1038
    %4525 = vmatpush.bf16.msra.mxu0 %v1032
    %4526 = vmatpush.bf16.msra.mxu0 %v1026
    %4527 = vmatpush.bf16.msra.mxu0 %v1020
    %4528 = vmatpush.bf16.msra.mxu0 %v1014
    %4529 = vmatpush.bf16.msra.mxu0 %v1008
    %4530 = vmatpush.bf16.msra.mxu0 %v1002
    %4531 = vmatpush.bf16.msra.mxu0 %v996
    %4532 = vmatmul.bf16.gmra.mxu0 %v4484
    %v4533 = vpop.f32.mrf.mxu0
    %v4534 = vadd.f32 0.0, %v4533
    %v4535 = vpop.f32.mrf.mxu0
    %4536 = vdwg.mxu0
    %4537 = vmatpush.bf16.msra.mxu0 %v1039
    %4538 = vmatpush.bf16.msra.mxu0 %v1033
    %4539 = vmatpush.bf16.msra.mxu0 %v1027
    %4540 = vmatpush.bf16.msra.mxu0 %v1021
    %4541 = vmatpush.bf16.msra.mxu0 %v1015
    %4542 = vmatpush.bf16.msra.mxu0 %v1009
    %4543 = vmatpush.bf16.msra.mxu0 %v1003
    %4544 = vmatpush.bf16.msra.mxu0 %v997
    %4545 = vmatmul.bf16.gmra.mxu0 %v4484
    %v4546 = vpop.f32.mrf.mxu0
    %v4547 = vadd.f32 0.0, %v4546
    %v4548 = vpop.f32.mrf.mxu0
    %4549 = vdwg.mxu0
    %4550 = vmatpush.bf16.msra.mxu0 %v1040
    %4551 = vmatpush.bf16.msra.mxu0 %v1034
    %4552 = vmatpush.bf16.msra.mxu0 %v1028
    %4553 = vmatpush.bf16.msra.mxu0 %v1022
    %4554 = vmatpush.bf16.msra.mxu0 %v1016
    %4555 = vmatpush.bf16.msra.mxu0 %v1010
    %4556 = vmatpush.bf16.msra.mxu0 %v1004
    %4557 = vmatpush.bf16.msra.mxu0 %v998
    %4558 = vmatmul.bf16.gmra.mxu0 %v4484
    %v4559 = vpop.f32.mrf.mxu0
    %v4560 = vadd.f32 0.0, %v4559
    %v4561 = vpop.f32.mrf.mxu0
    %4562 = vdwg.mxu0
    %v4563 = vxor.u32 %v4495, 2147483648
    %v4564 = vmul.f32 %v4563, 1.442695
    %v4565 = vpow.pop %v4564
    %v4566 = vadd.f32 %v4565, 1.0
    %v4567 = vrcp.pop %v4566
    %v4568 = vmul.f32 %v4566, %v4567
    %v4569 = vsub.f32 1.0, %v4568
    %v4570 = vmul.f32 %v4567, %v4569
    %v4571 = vadd.f32 %v4567, %v4570
    %vm4572 = vweird.f32 %v4566
    %vm4573 = vweird.f32 %v4567
    %vm4574 = vmor %vm4572, %vm4573
    %v4575 = vsel %vm4574, %v4567, %v4571
    %v4576 = vand.u32 2147483647, %v4566
    %vm4577 = vcmp.eq.f32.partialorder %v4576, 8.507059e+37
    %v4578 = vand.u32 %v4566, 2147483648
    %v4579 = vor.u32 1.1754944e-38, %v4578
    %v4580 = vsel %vm4577, %v4579, %v4575
    %v4581 = vmul.f32 1.0, %v4580
    %v4582 = vmax.f32 %v4508, 0.0
    %v4583 = vsub.f32 %v4582, %v4483
    %v4584 = vmul.f32 %v4581, %v4583
    %v4585 = vadd.f32 %v4483, %v4584
    %v4586 = vxor.u32 %v4521, 2147483648
    %v4587 = vmul.f32 %v4586, 1.442695
    %v4588 = vpow.pop %v4587
    %v4589 = vadd.f32 %v4588, 1.0
    %v4590 = vrcp.pop %v4589
    %v4591 = vmul.f32 %v4589, %v4590
    %v4592 = vsub.f32 1.0, %v4591
    %v4593 = vmul.f32 %v4590, %v4592
    %v4594 = vadd.f32 %v4590, %v4593
    %vm4595 = vweird.f32 %v4589
    %vm4596 = vweird.f32 %v4590
    %vm4597 = vmor %vm4595, %vm4596
    %v4598 = vsel %vm4597, %v4590, %v4594
    %v4599 = vand.u32 2147483647, %v4589
    %vm4600 = vcmp.eq.f32.partialorder %v4599, 8.507059e+37
    %v4601 = vand.u32 %v4589, 2147483648
    %v4602 = vor.u32 1.1754944e-38, %v4601
    %v4603 = vsel %vm4600, %v4602, %v4598
    %v4604 = vmul.f32 1.0, %v4603
    %v4605 = vmax.f32 %v4534, 0.0
    %v4606 = vsub.f32 %v4605, %v4483
    %v4607 = vmul.f32 %v4604, %v4606
    %v4608 = vadd.f32 %v4483, %v4607
    %v4609 = vxor.u32 %v4547, 2147483648
    %v4610 = vmul.f32 %v4609, 1.442695
    %v4611 = vpow.pop %v4610
    %v4612 = vadd.f32 %v4611, 1.0
    %v4613 = vrcp.pop %v4612
    %v4614 = vmul.f32 %v4612, %v4613
    %v4615 = vsub.f32 1.0, %v4614
    %v4616 = vmul.f32 %v4613, %v4615
    %v4617 = vadd.f32 %v4613, %v4616
    %vm4618 = vweird.f32 %v4612
    %vm4619 = vweird.f32 %v4613
    %vm4620 = vmor %vm4618, %vm4619
    %v4621 = vsel %vm4620, %v4613, %v4617
    %v4622 = vand.u32 2147483647, %v4612
    %vm4623 = vcmp.eq.f32.partialorder %v4622, 8.507059e+37
    %v4624 = vand.u32 %v4612, 2147483648
    %v4625 = vor.u32 1.1754944e-38, %v4624
    %v4626 = vsel %vm4623, %v4625, %v4621
    %v4627 = vmul.f32 1.0, %v4626
    %v4628 = vsub.f32 %v4560, %v4483
    %v4629 = vmul.f32 %v4627, %v4628
    %v4630 = vadd.f32 %v4483, %v4629
    %v4631 = vpack.c.bf16 %v4585, %v4585
    %4632 = vmatpush.bf16.msra.mxu0 %v1314
    %4633 = vmatpush.bf16.msra.mxu0 %v1312
    %4634 = vmatpush.bf16.msra.mxu0 %v1310
    %4635 = vmatpush.bf16.msra.mxu0 %v1308
    %4636 = vmatpush.bf16.msra.mxu0 %v1306
    %4637 = vmatpush.bf16.msra.mxu0 %v1304
    %4638 = vmatpush.bf16.msra.mxu0 %v1302
    %4639 = vmatpush.bf16.msra.mxu0 %v1300
    %4640 = vmatmul.bf16.gmra.mxu0 %v4631
    %v4641 = vpop.f32.mrf.mxu0
    %v4642 = vadd.f32 0.0, %v4641
    %v4643 = vpop.f32.mrf.mxu0
    %4644 = vdwg.mxu0
    %4645 = vmatpush.bf16.msra.mxu0 %v1315
    %4646 = vmatpush.bf16.msra.mxu0 %v1313
    %4647 = vmatpush.bf16.msra.mxu0 %v1311
    %4648 = vmatpush.bf16.msra.mxu0 %v1309
    %4649 = vmatpush.bf16.msra.mxu0 %v1307
    %4650 = vmatpush.bf16.msra.mxu0 %v1305
    %4651 = vmatpush.bf16.msra.mxu0 %v1303
    %4652 = vmatpush.bf16.msra.mxu0 %v1301
    %4653 = vmatmul.bf16.gmra.mxu0 %v4631
    %v4654 = vpop.f32.mrf.mxu0
    %v4655 = vadd.f32 0.0, %v4654
    %v4656 = vpop.f32.mrf.mxu0
    %4657 = vdwg.mxu0
    %v4658 = vxor.u32 %v4642, 2147483648
    %v4659 = vmul.f32 %v4658, 1.442695
    %v4660 = vpow.pop %v4659
    %v4661 = vadd.f32 %v4660, 1.0
    %v4662 = vrcp.pop %v4661
    %v4663 = vmul.f32 %v4661, %v4662
    %v4664 = vsub.f32 1.0, %v4663
    %v4665 = vmul.f32 %v4662, %v4664
    %v4666 = vadd.f32 %v4662, %v4665
    %vm4667 = vweird.f32 %v4661
    %vm4668 = vweird.f32 %v4662
    %vm4669 = vmor %vm4667, %vm4668
    %v4670 = vsel %vm4669, %v4662, %v4666
    %v4671 = vand.u32 2147483647, %v4661
    %vm4672 = vcmp.eq.f32.partialorder %v4671, 8.507059e+37
    %v4673 = vand.u32 %v4661, 2147483648
    %v4674 = vor.u32 1.1754944e-38, %v4673
    %v4675 = vsel %vm4672, %v4674, %v4670
    %v4676 = vmul.f32 1.0, %v4675
    %v4677 = vtanh.pop %v4655
    %v4678 = vsub.f32 %v4677, %v4585
    %v4679 = vmul.f32 %v4676, %v4678
    %v4680 = vadd.f32 %v4585, %v4679
    %v4681 = vpack.c.bf16 %v4608, %v4608
    %4682 = vmatpush.bf16.msra.mxu0 %v1460
    %4683 = vmatpush.bf16.msra.mxu0 %v1458
    %4684 = vmatpush.bf16.msra.mxu0 %v1456
    %4685 = vmatpush.bf16.msra.mxu0 %v1454
    %4686 = vmatpush.bf16.msra.mxu0 %v1452
    %4687 = vmatpush.bf16.msra.mxu0 %v1450
    %4688 = vmatpush.bf16.msra.mxu0 %v1448
    %4689 = vmatpush.bf16.msra.mxu0 %v1446
    %4690 = vmatmul.bf16.gmra.mxu0 %v4681
    %v4691 = vpop.f32.mrf.mxu0
    %v4692 = vadd.f32 0.0, %v4691
    %v4693 = vpop.f32.mrf.mxu0
    %4694 = vdwg.mxu0
    %4695 = vmatpush.bf16.msra.mxu0 %v1461
    %4696 = vmatpush.bf16.msra.mxu0 %v1459
    %4697 = vmatpush.bf16.msra.mxu0 %v1457
    %4698 = vmatpush.bf16.msra.mxu0 %v1455
    %4699 = vmatpush.bf16.msra.mxu0 %v1453
    %4700 = vmatpush.bf16.msra.mxu0 %v1451
    %4701 = vmatpush.bf16.msra.mxu0 %v1449
    %4702 = vmatpush.bf16.msra.mxu0 %v1447
    %4703 = vmatmul.bf16.gmra.mxu0 %v4681
    %v4704 = vpop.f32.mrf.mxu0
    %v4705 = vadd.f32 0.0, %v4704
    %v4706 = vpop.f32.mrf.mxu0
    %4707 = vdwg.mxu0
    %v4708 = vxor.u32 %v4692, 2147483648
    %v4709 = vmul.f32 %v4708, 1.442695
    %v4710 = vpow.pop %v4709
    %v4711 = vadd.f32 %v4710, 1.0
    %v4712 = vrcp.pop %v4711
    %v4713 = vmul.f32 %v4711, %v4712
    %v4714 = vsub.f32 1.0, %v4713
    %v4715 = vmul.f32 %v4712, %v4714
    %v4716 = vadd.f32 %v4712, %v4715
    %vm4717 = vweird.f32 %v4711
    %vm4718 = vweird.f32 %v4712
    %vm4719 = vmor %vm4717, %vm4718
    %v4720 = vsel %vm4719, %v4712, %v4716
    %v4721 = vand.u32 2147483647, %v4711
    %vm4722 = vcmp.eq.f32.partialorder %v4721, 8.507059e+37
    %v4723 = vand.u32 %v4711, 2147483648
    %v4724 = vor.u32 1.1754944e-38, %v4723
    %v4725 = vsel %vm4722, %v4724, %v4720
    %v4726 = vmul.f32 1.0, %v4725
    %v4727 = vtanh.pop %v4705
    %v4728 = vsub.f32 %v4727, %v4608
    %v4729 = vmul.f32 %v4726, %v4728
    %v4730 = vadd.f32 %v4608, %v4729
    %v4731 = vpack.c.bf16 %v4680, %v4680
    %4732 = vmatpush.bf16.msra.mxu0 %v1684
    %4733 = vmatpush.bf16.msra.mxu0 %v1680
    %4734 = vmatpush.bf16.msra.mxu0 %v1676
    %4735 = vmatpush.bf16.msra.mxu0 %v1672
    %4736 = vmatpush.bf16.msra.mxu0 %v1668
    %4737 = vmatpush.bf16.msra.mxu0 %v1664
    %4738 = vmatpush.bf16.msra.mxu0 %v1660
    %4739 = vmatpush.bf16.msra.mxu0 %v1656
    %4740 = vmatmul.bf16.gmra.mxu0 %v4731
    %v4741 = vpop.f32.mrf.mxu0
    %v4742 = vadd.f32 0.0, %v4741
    %v4743 = vpop.f32.mrf.mxu0
    %4744 = vdwg.mxu0
    %4745 = vmatpush.bf16.msra.mxu0 %v1685
    %4746 = vmatpush.bf16.msra.mxu0 %v1681
    %4747 = vmatpush.bf16.msra.mxu0 %v1677
    %4748 = vmatpush.bf16.msra.mxu0 %v1673
    %4749 = vmatpush.bf16.msra.mxu0 %v1669
    %4750 = vmatpush.bf16.msra.mxu0 %v1665
    %4751 = vmatpush.bf16.msra.mxu0 %v1661
    %4752 = vmatpush.bf16.msra.mxu0 %v1657
    %4753 = vmatmul.bf16.gmra.mxu0 %v4731
    %v4754 = vpop.f32.mrf.mxu0
    %v4755 = vadd.f32 0.0, %v4754
    %v4756 = vpop.f32.mrf.mxu0
    %4757 = vdwg.mxu0
    %4758 = vmatpush.bf16.msra.mxu0 %v1686
    %4759 = vmatpush.bf16.msra.mxu0 %v1682
    %4760 = vmatpush.bf16.msra.mxu0 %v1678
    %4761 = vmatpush.bf16.msra.mxu0 %v1674
    %4762 = vmatpush.bf16.msra.mxu0 %v1670
    %4763 = vmatpush.bf16.msra.mxu0 %v1666
    %4764 = vmatpush.bf16.msra.mxu0 %v1662
    %4765 = vmatpush.bf16.msra.mxu0 %v1658
    %4766 = vmatmul.bf16.gmra.mxu0 %v4731
    %v4767 = vpop.f32.mrf.mxu0
    %v4768 = vadd.f32 0.0, %v4767
    %v4769 = vpop.f32.mrf.mxu0
    %4770 = vdwg.mxu0
    %4771 = vmatpush.bf16.msra.mxu0 %v1687
    %4772 = vmatpush.bf16.msra.mxu0 %v1683
    %4773 = vmatpush.bf16.msra.mxu0 %v1679
    %4774 = vmatpush.bf16.msra.mxu0 %v1675
    %4775 = vmatpush.bf16.msra.mxu0 %v1671
    %4776 = vmatpush.bf16.msra.mxu0 %v1667
    %4777 = vmatpush.bf16.msra.mxu0 %v1663
    %4778 = vmatpush.bf16.msra.mxu0 %v1659
    %4779 = vmatmul.bf16.gmra.mxu0 %v4731
    %v4780 = vpop.f32.mrf.mxu0
    %v4781 = vadd.f32 0.0, %v4780
    %v4782 = vpop.f32.mrf.mxu0
    %4783 = vdwg.mxu0
    %v4784 = vxor.u32 %v4742, 2147483648
    %v4785 = vmul.f32 %v4784, 1.442695
    %v4786 = vpow.pop %v4785
    %v4787 = vadd.f32 %v4786, 1.0
    %v4788 = vrcp.pop %v4787
    %v4789 = vmul.f32 %v4787, %v4788
    %v4790 = vsub.f32 1.0, %v4789
    %v4791 = vmul.f32 %v4788, %v4790
    %v4792 = vadd.f32 %v4788, %v4791
    %vm4793 = vweird.f32 %v4787
    %vm4794 = vweird.f32 %v4788
    %vm4795 = vmor %vm4793, %vm4794
    %v4796 = vsel %vm4795, %v4788, %v4792
    %v4797 = vand.u32 2147483647, %v4787
    %vm4798 = vcmp.eq.f32.partialorder %v4797, 8.507059e+37
    %v4799 = vand.u32 %v4787, 2147483648
    %v4800 = vor.u32 1.1754944e-38, %v4799
    %v4801 = vsel %vm4798, %v4800, %v4796
    %v4802 = vmul.f32 1.0, %v4801
    %v4803 = vxor.u32 %v4755, 2147483648
    %v4804 = vmul.f32 %v4803, 1.442695
    %v4805 = vpow.pop %v4804
    %v4806 = vadd.f32 %v4805, 1.0
    %v4807 = vrcp.pop %v4806
    %v4808 = vmul.f32 %v4806, %v4807
    %v4809 = vsub.f32 1.0, %v4808
    %v4810 = vmul.f32 %v4807, %v4809
    %v4811 = vadd.f32 %v4807, %v4810
    %vm4812 = vweird.f32 %v4806
    %vm4813 = vweird.f32 %v4807
    %vm4814 = vmor %vm4812, %vm4813
    %v4815 = vsel %vm4814, %v4807, %v4811
    %v4816 = vand.u32 2147483647, %v4806
    %vm4817 = vcmp.eq.f32.partialorder %v4816, 8.507059e+37
    %v4818 = vand.u32 %v4806, 2147483648
    %v4819 = vor.u32 1.1754944e-38, %v4818
    %v4820 = vsel %vm4817, %v4819, %v4815
    %v4821 = vmul.f32 1.0, %v4820
    %v4822 = vsub.f32 %v4821, %v4680
    %v4823 = vmul.f32 %v4802, %v4822
    %v4824 = vadd.f32 %v4680, %v4823
    %v4825 = vxor.u32 %v4768, 2147483648
    %v4826 = vmul.f32 %v4825, 1.442695
    %v4827 = vpow.pop %v4826
    %v4828 = vadd.f32 %v4827, 1.0
    %v4829 = vrcp.pop %v4828
    %v4830 = vmul.f32 %v4828, %v4829
    %v4831 = vsub.f32 1.0, %v4830
    %v4832 = vmul.f32 %v4829, %v4831
    %v4833 = vadd.f32 %v4829, %v4832
    %vm4834 = vweird.f32 %v4828
    %vm4835 = vweird.f32 %v4829
    %vm4836 = vmor %vm4834, %vm4835
    %v4837 = vsel %vm4836, %v4829, %v4833
    %v4838 = vand.u32 2147483647, %v4828
    %vm4839 = vcmp.eq.f32.partialorder %v4838, 8.507059e+37
    %v4840 = vand.u32 %v4828, 2147483648
    %v4841 = vor.u32 1.1754944e-38, %v4840
    %v4842 = vsel %vm4839, %v4841, %v4837
    %v4843 = vmul.f32 1.0, %v4842
    %v4844 = vmax.f32 %v4781, 0.0
    %v4845 = vsub.f32 %v4844, %v4680
    %v4846 = vmul.f32 %v4843, %v4845
    %v4847 = vadd.f32 %v4680, %v4846
    %v4848 = vadd.f32 %v4483, %v4585
    %v4849 = vadd.f32 %v4848, %v4608
    %v4850 = vadd.f32 %v4849, %v4630
    %v4851 = vadd.f32 %v4850, %v4680
    %v4852 = vadd.f32 %v4851, %v4824
    %v4853 = vadd.f32 %v4852, %v4730
    %v4854 = vadd.f32 %v4853, %v4847
    %v4855 = vmul.f32 %v4854, 0.125
    %v4856 = vpack.c.bf16 %v4855, %v4855
    %4857 = vmatpush.bf16.msra.mxu0 %v567
    %4858 = vmatpush.bf16.msra.mxu0 %v565
    %4859 = vmatpush.bf16.msra.mxu0 %v563
    %4860 = vmatpush.bf16.msra.mxu0 %v561
    %4861 = vmatpush.bf16.msra.mxu0 %v559
    %4862 = vmatpush.bf16.msra.mxu0 %v557
    %4863 = vmatpush.bf16.msra.mxu0 %v555
    %4864 = vmatpush.bf16.msra.mxu0 %v553
    %4865 = vmatmul.bf16.gmra.mxu0 %v4856
    %v4866 = vpop.f32.mrf.mxu0
    %v4867 = vadd.f32 0.0, %v4866
    %v4868 = vpop.f32.mrf.mxu0
    %4869 = vdwg.mxu0
    %4870 = vmatpush.bf16.msra.mxu0 %v568
    %4871 = vmatpush.bf16.msra.mxu0 %v566
    %4872 = vmatpush.bf16.msra.mxu0 %v564
    %4873 = vmatpush.bf16.msra.mxu0 %v562
    %4874 = vmatpush.bf16.msra.mxu0 %v560
    %4875 = vmatpush.bf16.msra.mxu0 %v558
    %4876 = vmatpush.bf16.msra.mxu0 %v556
    %4877 = vmatpush.bf16.msra.mxu0 %v554
    %4878 = vmatmul.bf16.gmra.mxu0 %v4856
    %v4879 = vpop.f32.mrf.mxu0
    %v4880 = vadd.f32 0.0, %v4879
    %v4881 = vpop.f32.mrf.mxu0
    %4882 = vdwg.mxu0
    %v4885 = vrot.slane %v4867, 2
    %v4886 = vrot.slane %v4880, 2
    %v4889 = vadd.f32 %v471, %v4885
    %v4890 = vadd.f32 %v485, %v4886
    %v4891 = vxor.u32 %v4889, 2147483648
    %v4892 = vmul.f32 %v4891, 1.442695
    %v4893 = vpow.pop %v4892
    %v4894 = vadd.f32 %v4893, 1.0
    %v4895 = vrcp.pop %v4894
    %v4896 = vmul.f32 %v4894, %v4895
    %v4897 = vsub.f32 1.0, %v4896
    %v4898 = vmul.f32 %v4895, %v4897
    %v4899 = vadd.f32 %v4895, %v4898
    %vm4900 = vweird.f32 %v4894
    %vm4901 = vweird.f32 %v4895
    %vm4902 = vmor %vm4900, %vm4901
    %v4903 = vsel %vm4902, %v4895, %v4899
    %v4904 = vand.u32 2147483647, %v4894
    %vm4905 = vcmp.eq.f32.partialorder %v4904, 8.507059e+37
    %v4906 = vand.u32 %v4894, 2147483648
    %v4907 = vor.u32 1.1754944e-38, %v4906
    %v4908 = vsel %vm4905, %v4907, %v4903
    %v4909 = vmul.f32 1.0, %v4908
    %v4910 = vtanh.pop %v4890
    %v4912 = vrot.slane %v4855, 2
    %v4914 = vsub.f32 %v4910, %v4912
    %v4915 = vmul.f32 %v4909, %v4914
    %v4917 = vrot.slane %v4915, 6
    %v4919 = vadd.f32 %v4855, %v4917
    %v4920 = vpack.c.bf16 %v4919, %v4919
    %4921 = vmatpush.bf16.msra.mxu0 %v715
    %4922 = vmatpush.bf16.msra.mxu0 %v713
    %4923 = vmatpush.bf16.msra.mxu0 %v711
    %4924 = vmatpush.bf16.msra.mxu0 %v709
    %4925 = vmatpush.bf16.msra.mxu0 %v707
    %4926 = vmatpush.bf16.msra.mxu0 %v705
    %4927 = vmatpush.bf16.msra.mxu0 %v703
    %4928 = vmatpush.bf16.msra.mxu0 %v701
    %4929 = vmatmul.bf16.gmra.mxu0 %v4920
    %v4930 = vpop.f32.mrf.mxu0
    %v4931 = vadd.f32 0.0, %v4930
    %v4932 = vpop.f32.mrf.mxu0
    %4933 = vdwg.mxu0
    %4934 = vmatpush.bf16.msra.mxu0 %v716
    %4935 = vmatpush.bf16.msra.mxu0 %v714
    %4936 = vmatpush.bf16.msra.mxu0 %v712
    %4937 = vmatpush.bf16.msra.mxu0 %v710
    %4938 = vmatpush.bf16.msra.mxu0 %v708
    %4939 = vmatpush.bf16.msra.mxu0 %v706
    %4940 = vmatpush.bf16.msra.mxu0 %v704
    %4941 = vmatpush.bf16.msra.mxu0 %v702
    %4942 = vmatmul.bf16.gmra.mxu0 %v4920
    %v4943 = vpop.f32.mrf.mxu0
    %v4944 = vadd.f32 0.0, %v4943
    %v4945 = vpop.f32.mrf.mxu0
    %4946 = vdwg.mxu0
    %v4947 = vxor.u32 %v4931, 2147483648
    %v4948 = vmul.f32 %v4947, 1.442695
    %v4949 = vpow.pop %v4948
    %v4950 = vadd.f32 %v4949, 1.0
    %v4951 = vrcp.pop %v4950
    %v4952 = vmul.f32 %v4950, %v4951
    %v4953 = vsub.f32 1.0, %v4952
    %v4954 = vmul.f32 %v4951, %v4953
    %v4955 = vadd.f32 %v4951, %v4954
    %vm4956 = vweird.f32 %v4950
    %vm4957 = vweird.f32 %v4951
    %vm4958 = vmor %vm4956, %vm4957
    %v4959 = vsel %vm4958, %v4951, %v4955
    %v4960 = vand.u32 2147483647, %v4950
    %vm4961 = vcmp.eq.f32.partialorder %v4960, 8.507059e+37
    %v4962 = vand.u32 %v4950, 2147483648
    %v4963 = vor.u32 1.1754944e-38, %v4962
    %v4964 = vsel %vm4961, %v4963, %v4959
    %v4965 = vmul.f32 1.0, %v4964
    %v4966 = vxor.u32 %v4944, 2147483648
    %v4967 = vmul.f32 %v4966, 1.442695
    %v4968 = vpow.pop %v4967
    %v4969 = vadd.f32 %v4968, 1.0
    %v4970 = vrcp.pop %v4969
    %v4971 = vmul.f32 %v4969, %v4970
    %v4972 = vsub.f32 1.0, %v4971
    %v4973 = vmul.f32 %v4970, %v4972
    %v4974 = vadd.f32 %v4970, %v4973
    %vm4975 = vweird.f32 %v4969
    %vm4976 = vweird.f32 %v4970
    %vm4977 = vmor %vm4975, %vm4976
    %v4978 = vsel %vm4977, %v4970, %v4974
    %v4979 = vand.u32 2147483647, %v4969
    %vm4980 = vcmp.eq.f32.partialorder %v4979, 8.507059e+37
    %v4981 = vand.u32 %v4969, 2147483648
    %v4982 = vor.u32 1.1754944e-38, %v4981
    %v4983 = vsel %vm4980, %v4982, %v4978
    %v4984 = vmul.f32 1.0, %v4983
    %v4985 = vsub.f32 %v4984, %v4919
    %v4986 = vmul.f32 %v4965, %v4985
    %v4987 = vadd.f32 %v4919, %v4986
    %v4988 = vpack.c.bf16 %v4987, %v4987
    %4989 = vmatpush.bf16.msra.mxu0 %v1035
    %4990 = vmatpush.bf16.msra.mxu0 %v1029
    %4991 = vmatpush.bf16.msra.mxu0 %v1023
    %4992 = vmatpush.bf16.msra.mxu0 %v1017
    %4993 = vmatpush.bf16.msra.mxu0 %v1011
    %4994 = vmatpush.bf16.msra.mxu0 %v1005
    %4995 = vmatpush.bf16.msra.mxu0 %v999
    %4996 = vmatpush.bf16.msra.mxu0 %v993
    %4997 = vmatmul.bf16.gmra.mxu0 %v4988
    %v4998 = vpop.f32.mrf.mxu0
    %v4999 = vadd.f32 0.0, %v4998
    %v5000 = vpop.f32.mrf.mxu0
    %5001 = vdwg.mxu0
    %5002 = vmatpush.bf16.msra.mxu0 %v1036
    %5003 = vmatpush.bf16.msra.mxu0 %v1030
    %5004 = vmatpush.bf16.msra.mxu0 %v1024
    %5005 = vmatpush.bf16.msra.mxu0 %v1018
    %5006 = vmatpush.bf16.msra.mxu0 %v1012
    %5007 = vmatpush.bf16.msra.mxu0 %v1006
    %5008 = vmatpush.bf16.msra.mxu0 %v1000
    %5009 = vmatpush.bf16.msra.mxu0 %v994
    %5010 = vmatmul.bf16.gmra.mxu0 %v4988
    %v5011 = vpop.f32.mrf.mxu0
    %v5012 = vadd.f32 0.0, %v5011
    %v5013 = vpop.f32.mrf.mxu0
    %5014 = vdwg.mxu0
    %5015 = vmatpush.bf16.msra.mxu0 %v1037
    %5016 = vmatpush.bf16.msra.mxu0 %v1031
    %5017 = vmatpush.bf16.msra.mxu0 %v1025
    %5018 = vmatpush.bf16.msra.mxu0 %v1019
    %5019 = vmatpush.bf16.msra.mxu0 %v1013
    %5020 = vmatpush.bf16.msra.mxu0 %v1007
    %5021 = vmatpush.bf16.msra.mxu0 %v1001
    %5022 = vmatpush.bf16.msra.mxu0 %v995
    %5023 = vmatmul.bf16.gmra.mxu0 %v4988
    %v5024 = vpop.f32.mrf.mxu0
    %v5025 = vadd.f32 0.0, %v5024
    %v5026 = vpop.f32.mrf.mxu0
    %5027 = vdwg.mxu0
    %5028 = vmatpush.bf16.msra.mxu0 %v1038
    %5029 = vmatpush.bf16.msra.mxu0 %v1032
    %5030 = vmatpush.bf16.msra.mxu0 %v1026
    %5031 = vmatpush.bf16.msra.mxu0 %v1020
    %5032 = vmatpush.bf16.msra.mxu0 %v1014
    %5033 = vmatpush.bf16.msra.mxu0 %v1008
    %5034 = vmatpush.bf16.msra.mxu0 %v1002
    %5035 = vmatpush.bf16.msra.mxu0 %v996
    %5036 = vmatmul.bf16.gmra.mxu0 %v4988
    %v5037 = vpop.f32.mrf.mxu0
    %v5038 = vadd.f32 0.0, %v5037
    %v5039 = vpop.f32.mrf.mxu0
    %5040 = vdwg.mxu0
    %5041 = vmatpush.bf16.msra.mxu0 %v1039
    %5042 = vmatpush.bf16.msra.mxu0 %v1033
    %5043 = vmatpush.bf16.msra.mxu0 %v1027
    %5044 = vmatpush.bf16.msra.mxu0 %v1021
    %5045 = vmatpush.bf16.msra.mxu0 %v1015
    %5046 = vmatpush.bf16.msra.mxu0 %v1009
    %5047 = vmatpush.bf16.msra.mxu0 %v1003
    %5048 = vmatpush.bf16.msra.mxu0 %v997
    %5049 = vmatmul.bf16.gmra.mxu0 %v4988
    %v5050 = vpop.f32.mrf.mxu0
    %v5051 = vadd.f32 0.0, %v5050
    %v5052 = vpop.f32.mrf.mxu0
    %5053 = vdwg.mxu0
    %5054 = vmatpush.bf16.msra.mxu0 %v1040
    %5055 = vmatpush.bf16.msra.mxu0 %v1034
    %5056 = vmatpush.bf16.msra.mxu0 %v1028
    %5057 = vmatpush.bf16.msra.mxu0 %v1022
    %5058 = vmatpush.bf16.msra.mxu0 %v1016
    %5059 = vmatpush.bf16.msra.mxu0 %v1010
    %5060 = vmatpush.bf16.msra.mxu0 %v1004
    %5061 = vmatpush.bf16.msra.mxu0 %v998
    %5062 = vmatmul.bf16.gmra.mxu0 %v4988
    %v5063 = vpop.f32.mrf.mxu0
    %v5064 = vadd.f32 0.0, %v5063
    %v5065 = vpop.f32.mrf.mxu0
    %5066 = vdwg.mxu0
    %v5067 = vxor.u32 %v4999, 2147483648
    %v5068 = vmul.f32 %v5067, 1.442695
    %v5069 = vpow.pop %v5068
    %v5070 = vadd.f32 %v5069, 1.0
    %v5071 = vrcp.pop %v5070
    %v5072 = vmul.f32 %v5070, %v5071
    %v5073 = vsub.f32 1.0, %v5072
    %v5074 = vmul.f32 %v5071, %v5073
    %v5075 = vadd.f32 %v5071, %v5074
    %vm5076 = vweird.f32 %v5070
    %vm5077 = vweird.f32 %v5071
    %vm5078 = vmor %vm5076, %vm5077
    %v5079 = vsel %vm5078, %v5071, %v5075
    %v5080 = vand.u32 2147483647, %v5070
    %vm5081 = vcmp.eq.f32.partialorder %v5080, 8.507059e+37
    %v5082 = vand.u32 %v5070, 2147483648
    %v5083 = vor.u32 1.1754944e-38, %v5082
    %v5084 = vsel %vm5081, %v5083, %v5079
    %v5085 = vmul.f32 1.0, %v5084
    %v5086 = vmax.f32 %v5012, 0.0
    %v5087 = vsub.f32 %v5086, %v4987
    %v5088 = vmul.f32 %v5085, %v5087
    %v5089 = vadd.f32 %v4987, %v5088
    %v5090 = vxor.u32 %v5025, 2147483648
    %v5091 = vmul.f32 %v5090, 1.442695
    %v5092 = vpow.pop %v5091
    %v5093 = vadd.f32 %v5092, 1.0
    %v5094 = vrcp.pop %v5093
    %v5095 = vmul.f32 %v5093, %v5094
    %v5096 = vsub.f32 1.0, %v5095
    %v5097 = vmul.f32 %v5094, %v5096
    %v5098 = vadd.f32 %v5094, %v5097
    %vm5099 = vweird.f32 %v5093
    %vm5100 = vweird.f32 %v5094
    %vm5101 = vmor %vm5099, %vm5100
    %v5102 = vsel %vm5101, %v5094, %v5098
    %v5103 = vand.u32 2147483647, %v5093
    %vm5104 = vcmp.eq.f32.partialorder %v5103, 8.507059e+37
    %v5105 = vand.u32 %v5093, 2147483648
    %v5106 = vor.u32 1.1754944e-38, %v5105
    %v5107 = vsel %vm5104, %v5106, %v5102
    %v5108 = vmul.f32 1.0, %v5107
    %v5109 = vmax.f32 %v5038, 0.0
    %v5110 = vsub.f32 %v5109, %v4987
    %v5111 = vmul.f32 %v5108, %v5110
    %v5112 = vadd.f32 %v4987, %v5111
    %v5113 = vxor.u32 %v5051, 2147483648
    %v5114 = vmul.f32 %v5113, 1.442695
    %v5115 = vpow.pop %v5114
    %v5116 = vadd.f32 %v5115, 1.0
    %v5117 = vrcp.pop %v5116
    %v5118 = vmul.f32 %v5116, %v5117
    %v5119 = vsub.f32 1.0, %v5118
    %v5120 = vmul.f32 %v5117, %v5119
    %v5121 = vadd.f32 %v5117, %v5120
    %vm5122 = vweird.f32 %v5116
    %vm5123 = vweird.f32 %v5117
    %vm5124 = vmor %vm5122, %vm5123
    %v5125 = vsel %vm5124, %v5117, %v5121
    %v5126 = vand.u32 2147483647, %v5116
    %vm5127 = vcmp.eq.f32.partialorder %v5126, 8.507059e+37
    %v5128 = vand.u32 %v5116, 2147483648
    %v5129 = vor.u32 1.1754944e-38, %v5128
    %v5130 = vsel %vm5127, %v5129, %v5125
    %v5131 = vmul.f32 1.0, %v5130
    %v5132 = vsub.f32 %v5064, %v4987
    %v5133 = vmul.f32 %v5131, %v5132
    %v5134 = vadd.f32 %v4987, %v5133
    %v5135 = vpack.c.bf16 %v5089, %v5089
    %5136 = vmatpush.bf16.msra.mxu0 %v1314
    %5137 = vmatpush.bf16.msra.mxu0 %v1312
    %5138 = vmatpush.bf16.msra.mxu0 %v1310
    %5139 = vmatpush.bf16.msra.mxu0 %v1308
    %5140 = vmatpush.bf16.msra.mxu0 %v1306
    %5141 = vmatpush.bf16.msra.mxu0 %v1304
    %5142 = vmatpush.bf16.msra.mxu0 %v1302
    %5143 = vmatpush.bf16.msra.mxu0 %v1300
    %5144 = vmatmul.bf16.gmra.mxu0 %v5135
    %v5145 = vpop.f32.mrf.mxu0
    %v5146 = vadd.f32 0.0, %v5145
    %v5147 = vpop.f32.mrf.mxu0
    %5148 = vdwg.mxu0
    %5149 = vmatpush.bf16.msra.mxu0 %v1315
    %5150 = vmatpush.bf16.msra.mxu0 %v1313
    %5151 = vmatpush.bf16.msra.mxu0 %v1311
    %5152 = vmatpush.bf16.msra.mxu0 %v1309
    %5153 = vmatpush.bf16.msra.mxu0 %v1307
    %5154 = vmatpush.bf16.msra.mxu0 %v1305
    %5155 = vmatpush.bf16.msra.mxu0 %v1303
    %5156 = vmatpush.bf16.msra.mxu0 %v1301
    %5157 = vmatmul.bf16.gmra.mxu0 %v5135
    %v5158 = vpop.f32.mrf.mxu0
    %v5159 = vadd.f32 0.0, %v5158
    %v5160 = vpop.f32.mrf.mxu0
    %5161 = vdwg.mxu0
    %v5162 = vxor.u32 %v5146, 2147483648
    %v5163 = vmul.f32 %v5162, 1.442695
    %v5164 = vpow.pop %v5163
    %v5165 = vadd.f32 %v5164, 1.0
    %v5166 = vrcp.pop %v5165
    %v5167 = vmul.f32 %v5165, %v5166
    %v5168 = vsub.f32 1.0, %v5167
    %v5169 = vmul.f32 %v5166, %v5168
    %v5170 = vadd.f32 %v5166, %v5169
    %vm5171 = vweird.f32 %v5165
    %vm5172 = vweird.f32 %v5166
    %vm5173 = vmor %vm5171, %vm5172
    %v5174 = vsel %vm5173, %v5166, %v5170
    %v5175 = vand.u32 2147483647, %v5165
    %vm5176 = vcmp.eq.f32.partialorder %v5175, 8.507059e+37
    %v5177 = vand.u32 %v5165, 2147483648
    %v5178 = vor.u32 1.1754944e-38, %v5177
    %v5179 = vsel %vm5176, %v5178, %v5174
    %v5180 = vmul.f32 1.0, %v5179
    %v5181 = vtanh.pop %v5159
    %v5182 = vsub.f32 %v5181, %v5089
    %v5183 = vmul.f32 %v5180, %v5182
    %v5184 = vadd.f32 %v5089, %v5183
    %v5185 = vpack.c.bf16 %v5112, %v5112
    %5186 = vmatpush.bf16.msra.mxu0 %v1460
    %5187 = vmatpush.bf16.msra.mxu0 %v1458
    %5188 = vmatpush.bf16.msra.mxu0 %v1456
    %5189 = vmatpush.bf16.msra.mxu0 %v1454
    %5190 = vmatpush.bf16.msra.mxu0 %v1452
    %5191 = vmatpush.bf16.msra.mxu0 %v1450
    %5192 = vmatpush.bf16.msra.mxu0 %v1448
    %5193 = vmatpush.bf16.msra.mxu0 %v1446
    %5194 = vmatmul.bf16.gmra.mxu0 %v5185
    %v5195 = vpop.f32.mrf.mxu0
    %v5196 = vadd.f32 0.0, %v5195
    %v5197 = vpop.f32.mrf.mxu0
    %5198 = vdwg.mxu0
    %5199 = vmatpush.bf16.msra.mxu0 %v1461
    %5200 = vmatpush.bf16.msra.mxu0 %v1459
    %5201 = vmatpush.bf16.msra.mxu0 %v1457
    %5202 = vmatpush.bf16.msra.mxu0 %v1455
    %5203 = vmatpush.bf16.msra.mxu0 %v1453
    %5204 = vmatpush.bf16.msra.mxu0 %v1451
    %5205 = vmatpush.bf16.msra.mxu0 %v1449
    %5206 = vmatpush.bf16.msra.mxu0 %v1447
    %5207 = vmatmul.bf16.gmra.mxu0 %v5185
    %v5208 = vpop.f32.mrf.mxu0
    %v5209 = vadd.f32 0.0, %v5208
    %v5210 = vpop.f32.mrf.mxu0
    %5211 = vdwg.mxu0
    %v5212 = vxor.u32 %v5196, 2147483648
    %v5213 = vmul.f32 %v5212, 1.442695
    %v5214 = vpow.pop %v5213
    %v5215 = vadd.f32 %v5214, 1.0
    %v5216 = vrcp.pop %v5215
    %v5217 = vmul.f32 %v5215, %v5216
    %v5218 = vsub.f32 1.0, %v5217
    %v5219 = vmul.f32 %v5216, %v5218
    %v5220 = vadd.f32 %v5216, %v5219
    %vm5221 = vweird.f32 %v5215
    %vm5222 = vweird.f32 %v5216
    %vm5223 = vmor %vm5221, %vm5222
    %v5224 = vsel %vm5223, %v5216, %v5220
    %v5225 = vand.u32 2147483647, %v5215
    %vm5226 = vcmp.eq.f32.partialorder %v5225, 8.507059e+37
    %v5227 = vand.u32 %v5215, 2147483648
    %v5228 = vor.u32 1.1754944e-38, %v5227
    %v5229 = vsel %vm5226, %v5228, %v5224
    %v5230 = vmul.f32 1.0, %v5229
    %v5231 = vtanh.pop %v5209
    %v5232 = vsub.f32 %v5231, %v5112
    %v5233 = vmul.f32 %v5230, %v5232
    %v5234 = vadd.f32 %v5112, %v5233
    %v5235 = vpack.c.bf16 %v5184, %v5184
    %5236 = vmatpush.bf16.msra.mxu0 %v1684
    %5237 = vmatpush.bf16.msra.mxu0 %v1680
    %5238 = vmatpush.bf16.msra.mxu0 %v1676
    %5239 = vmatpush.bf16.msra.mxu0 %v1672
    %5240 = vmatpush.bf16.msra.mxu0 %v1668
    %5241 = vmatpush.bf16.msra.mxu0 %v1664
    %5242 = vmatpush.bf16.msra.mxu0 %v1660
    %5243 = vmatpush.bf16.msra.mxu0 %v1656
    %5244 = vmatmul.bf16.gmra.mxu0 %v5235
    %v5245 = vpop.f32.mrf.mxu0
    %v5246 = vadd.f32 0.0, %v5245
    %v5247 = vpop.f32.mrf.mxu0
    %5248 = vdwg.mxu0
    %5249 = vmatpush.bf16.msra.mxu0 %v1685
    %5250 = vmatpush.bf16.msra.mxu0 %v1681
    %5251 = vmatpush.bf16.msra.mxu0 %v1677
    %5252 = vmatpush.bf16.msra.mxu0 %v1673
    %5253 = vmatpush.bf16.msra.mxu0 %v1669
    %5254 = vmatpush.bf16.msra.mxu0 %v1665
    %5255 = vmatpush.bf16.msra.mxu0 %v1661
    %5256 = vmatpush.bf16.msra.mxu0 %v1657
    %5257 = vmatmul.bf16.gmra.mxu0 %v5235
    %v5258 = vpop.f32.mrf.mxu0
    %v5259 = vadd.f32 0.0, %v5258
    %v5260 = vpop.f32.mrf.mxu0
    %5261 = vdwg.mxu0
    %5262 = vmatpush.bf16.msra.mxu0 %v1686
    %5263 = vmatpush.bf16.msra.mxu0 %v1682
    %5264 = vmatpush.bf16.msra.mxu0 %v1678
    %5265 = vmatpush.bf16.msra.mxu0 %v1674
    %5266 = vmatpush.bf16.msra.mxu0 %v1670
    %5267 = vmatpush.bf16.msra.mxu0 %v1666
    %5268 = vmatpush.bf16.msra.mxu0 %v1662
    %5269 = vmatpush.bf16.msra.mxu0 %v1658
    %5270 = vmatmul.bf16.gmra.mxu0 %v5235
    %v5271 = vpop.f32.mrf.mxu0
    %v5272 = vadd.f32 0.0, %v5271
    %v5273 = vpop.f32.mrf.mxu0
    %5274 = vdwg.mxu0
    %5275 = vmatpush.bf16.msra.mxu0 %v1687
    %5276 = vmatpush.bf16.msra.mxu0 %v1683
    %5277 = vmatpush.bf16.msra.mxu0 %v1679
    %5278 = vmatpush.bf16.msra.mxu0 %v1675
    %5279 = vmatpush.bf16.msra.mxu0 %v1671
    %5280 = vmatpush.bf16.msra.mxu0 %v1667
    %5281 = vmatpush.bf16.msra.mxu0 %v1663
    %5282 = vmatpush.bf16.msra.mxu0 %v1659
    %5283 = vmatmul.bf16.gmra.mxu0 %v5235
    %v5284 = vpop.f32.mrf.mxu0
    %v5285 = vadd.f32 0.0, %v5284
    %v5286 = vpop.f32.mrf.mxu0
    %5287 = vdwg.mxu0
    %v5288 = vxor.u32 %v5246, 2147483648
    %v5289 = vmul.f32 %v5288, 1.442695
    %v5290 = vpow.pop %v5289
    %v5291 = vadd.f32 %v5290, 1.0
    %v5292 = vrcp.pop %v5291
    %v5293 = vmul.f32 %v5291, %v5292
    %v5294 = vsub.f32 1.0, %v5293
    %v5295 = vmul.f32 %v5292, %v5294
    %v5296 = vadd.f32 %v5292, %v5295
    %vm5297 = vweird.f32 %v5291
    %vm5298 = vweird.f32 %v5292
    %vm5299 = vmor %vm5297, %vm5298
    %v5300 = vsel %vm5299, %v5292, %v5296
    %v5301 = vand.u32 2147483647, %v5291
    %vm5302 = vcmp.eq.f32.partialorder %v5301, 8.507059e+37
    %v5303 = vand.u32 %v5291, 2147483648
    %v5304 = vor.u32 1.1754944e-38, %v5303
    %v5305 = vsel %vm5302, %v5304, %v5300
    %v5306 = vmul.f32 1.0, %v5305
    %v5307 = vxor.u32 %v5259, 2147483648
    %v5308 = vmul.f32 %v5307, 1.442695
    %v5309 = vpow.pop %v5308
    %v5310 = vadd.f32 %v5309, 1.0
    %v5311 = vrcp.pop %v5310
    %v5312 = vmul.f32 %v5310, %v5311
    %v5313 = vsub.f32 1.0, %v5312
    %v5314 = vmul.f32 %v5311, %v5313
    %v5315 = vadd.f32 %v5311, %v5314
    %vm5316 = vweird.f32 %v5310
    %vm5317 = vweird.f32 %v5311
    %vm5318 = vmor %vm5316, %vm5317
    %v5319 = vsel %vm5318, %v5311, %v5315
    %v5320 = vand.u32 2147483647, %v5310
    %vm5321 = vcmp.eq.f32.partialorder %v5320, 8.507059e+37
    %v5322 = vand.u32 %v5310, 2147483648
    %v5323 = vor.u32 1.1754944e-38, %v5322
    %v5324 = vsel %vm5321, %v5323, %v5319
    %v5325 = vmul.f32 1.0, %v5324
    %v5326 = vsub.f32 %v5325, %v5184
    %v5327 = vmul.f32 %v5306, %v5326
    %v5328 = vadd.f32 %v5184, %v5327
    %v5329 = vxor.u32 %v5272, 2147483648
    %v5330 = vmul.f32 %v5329, 1.442695
    %v5331 = vpow.pop %v5330
    %v5332 = vadd.f32 %v5331, 1.0
    %v5333 = vrcp.pop %v5332
    %v5334 = vmul.f32 %v5332, %v5333
    %v5335 = vsub.f32 1.0, %v5334
    %v5336 = vmul.f32 %v5333, %v5335
    %v5337 = vadd.f32 %v5333, %v5336
    %vm5338 = vweird.f32 %v5332
    %vm5339 = vweird.f32 %v5333
    %vm5340 = vmor %vm5338, %vm5339
    %v5341 = vsel %vm5340, %v5333, %v5337
    %v5342 = vand.u32 2147483647, %v5332
    %vm5343 = vcmp.eq.f32.partialorder %v5342, 8.507059e+37
    %v5344 = vand.u32 %v5332, 2147483648
    %v5345 = vor.u32 1.1754944e-38, %v5344
    %v5346 = vsel %vm5343, %v5345, %v5341
    %v5347 = vmul.f32 1.0, %v5346
    %v5348 = vmax.f32 %v5285, 0.0
    %v5349 = vsub.f32 %v5348, %v5184
    %v5350 = vmul.f32 %v5347, %v5349
    %v5351 = vadd.f32 %v5184, %v5350
    %v5352 = vadd.f32 %v4987, %v5089
    %v5353 = vadd.f32 %v5352, %v5112
    %v5354 = vadd.f32 %v5353, %v5134
    %v5355 = vadd.f32 %v5354, %v5184
    %v5356 = vadd.f32 %v5355, %v5328
    %v5357 = vadd.f32 %v5356, %v5234
    %v5358 = vadd.f32 %v5357, %v5351
    %v5359 = vmul.f32 %v5358, 0.125
    %5360 = vst [vmem:[#allocation18] sm:$0x3] %v5359
    %v5361 = vrot.slane %v2347, 6
    %v5363 = vrot.slane %v2851, 4
    %v5366 = vrot.slane %v3355, 2
    %v5368 = vrot.slane %v4351, 6
    %v5370 = vrot.slane %v4855, 4
    %v5373 = vrot.slane %v5359, 2
    %vm5375 = vcmask 1041408
    %v5376 = vsel %vm5375, %v1843, %v5361
    %vm5377 = vcmask 1043456
    %v5378 = vsel %vm5377, %v5376, %v5363
    %vm5379 = vcmask 1045504
    %v5380 = vsel %vm5379, %v5378, %v5366
    %v5381 = vsel %vm5375, %v3847, %v5368
    %v5382 = vsel %vm5377, %v5381, %v5370
    %v5383 = vsel %vm5379, %v5382, %v5373
    %v5384 = vpack.c.bf16 %v5383, %v5380
    %v5385 = vld [vmem:[#allocation5] sm:$0xff]
    %v5386 = vld [vmem:[#allocation5 + $0x8] sm:$0xff]
    %v5387 = vld [vmem:[#allocation5 + $0x10] sm:$0xff]
    %v5388 = vld [vmem:[#allocation5 + $0x18] sm:$0xff]
    %v5389 = vld [vmem:[#allocation5 + $0x20] sm:$0xff]
    %v5390 = vld [vmem:[#allocation5 + $0x28] sm:$0xff]
    %v5391 = vld [vmem:[#allocation5 + $0x30] sm:$0xff]
    %v5392 = vld [vmem:[#allocation5 + $0x38] sm:$0xff]
    %v5393 = vld [vmem:[#allocation5 + $0x40] sm:$0xff]
    %v5394 = vld [vmem:[#allocation5 + $0x48] sm:$0xff]
    %v5395 = vld [vmem:[#allocation5 + $0x50] sm:$0xff]
    %v5396 = vld [vmem:[#allocation5 + $0x58] sm:$0xff]
    %v5397 = vld [vmem:[#allocation5 + $0x60] sm:$0xff]
    %v5398 = vld [vmem:[#allocation5 + $0x68] sm:$0xff]
    %v5399 = vld [vmem:[#allocation5 + $0x70] sm:$0xff]
    %v5400 = vld [vmem:[#allocation5 + $0x78] sm:$0xff]
    %v5401 = vld [vmem:[%s11] sm:$0x3]
    %v5403 = vperm.slane %v5401, 0
    %v5404 = vperm.slane %v5401, 1
    %v5423 = vunpack.c.l.b16 %v5385
    %v5424 = vunpack.c.h.b16 %v5385
    %v5425 = vunpack.c.l.b16 %v5386
    %v5426 = vunpack.c.h.b16 %v5386
    %v5427 = vunpack.c.l.b16 %v5387
    %v5428 = vunpack.c.h.b16 %v5387
    %v5429 = vunpack.c.l.b16 %v5388
    %v5430 = vunpack.c.h.b16 %v5388
    %v5431 = vunpack.c.l.b16 %v5389
    %v5432 = vunpack.c.h.b16 %v5389
    %v5433 = vunpack.c.l.b16 %v5390
    %v5434 = vunpack.c.h.b16 %v5390
    %v5435 = vunpack.c.l.b16 %v5391
    %v5436 = vunpack.c.h.b16 %v5391
    %v5437 = vunpack.c.l.b16 %v5392
    %v5438 = vunpack.c.h.b16 %v5392
    %v5439 = vunpack.c.l.b16 %v5393
    %v5440 = vunpack.c.h.b16 %v5393
    %v5441 = vunpack.c.l.b16 %v5394
    %v5442 = vunpack.c.h.b16 %v5394
    %v5443 = vunpack.c.l.b16 %v5395
    %v5444 = vunpack.c.h.b16 %v5395
    %v5445 = vunpack.c.l.b16 %v5396
    %v5446 = vunpack.c.h.b16 %v5396
    %v5447 = vunpack.c.l.b16 %v5397
    %v5448 = vunpack.c.h.b16 %v5397
    %v5449 = vunpack.c.l.b16 %v5398
    %v5450 = vunpack.c.h.b16 %v5398
    %v5451 = vunpack.c.l.b16 %v5399
    %v5452 = vunpack.c.h.b16 %v5399
    %v5453 = vunpack.c.l.b16 %v5400
    %v5454 = vunpack.c.h.b16 %v5400
    %v5455 = vpack.c.b16 %v5425, %v5423
    %v5456 = vpack.c.b16 %v5426, %v5424
    %v5457 = vpack.c.b16 %v5429, %v5427
    %v5458 = vpack.c.b16 %v5430, %v5428
    %v5459 = vpack.c.b16 %v5433, %v5431
    %v5460 = vpack.c.b16 %v5434, %v5432
    %v5461 = vpack.c.b16 %v5437, %v5435
    %v5462 = vpack.c.b16 %v5438, %v5436
    %v5463 = vpack.c.b16 %v5441, %v5439
    %v5464 = vpack.c.b16 %v5442, %v5440
    %v5465 = vpack.c.b16 %v5445, %v5443
    %v5466 = vpack.c.b16 %v5446, %v5444
    %v5467 = vpack.c.b16 %v5449, %v5447
    %v5468 = vpack.c.b16 %v5450, %v5448
    %v5469 = vpack.c.b16 %v5453, %v5451
    %v5470 = vpack.c.b16 %v5454, %v5452
    %5487 = vmatpush.bf16.msra.mxu0 %v5469
    %5488 = vmatpush.bf16.msra.mxu0 %v5467
    %5489 = vmatpush.bf16.msra.mxu0 %v5465
    %5490 = vmatpush.bf16.msra.mxu0 %v5463
    %5491 = vmatpush.bf16.msra.mxu0 %v5461
    %5492 = vmatpush.bf16.msra.mxu0 %v5459
    %5493 = vmatpush.bf16.msra.mxu0 %v5457
    %5494 = vmatpush.bf16.msra.mxu0 %v5455
    %5495 = vmatmul.bf16.gmra.mxu0 %v5384
    %v5496 = vpop.f32.mrf.mxu0
    %v5497 = vadd.f32 %v5403, %v5496
    %v5498 = vpop.f32.mrf.mxu0
    %v5499 = vadd.f32 %v5403, %v5498
    %5500 = vdwg.mxu0
    %5501 = vmatpush.bf16.msra.mxu0 %v5470
    %5502 = vmatpush.bf16.msra.mxu0 %v5468
    %5503 = vmatpush.bf16.msra.mxu0 %v5466
    %5504 = vmatpush.bf16.msra.mxu0 %v5464
    %5505 = vmatpush.bf16.msra.mxu0 %v5462
    %5506 = vmatpush.bf16.msra.mxu0 %v5460
    %5507 = vmatpush.bf16.msra.mxu0 %v5458
    %5508 = vmatpush.bf16.msra.mxu0 %v5456
    %5509 = vmatmul.bf16.gmra.mxu0 %v5384
    %v5510 = vpop.f32.mrf.mxu0
    %v5511 = vadd.f32 %v5404, %v5510
    %v5512 = vpop.f32.mrf.mxu0
    %v5513 = vadd.f32 %v5404, %v5512
    %5514 = vdwg.mxu0
    %v5515 = vmax.f32 %v5497, %v5511
    %5516 = vmax.xlane.f32.xlu0 %v5515
    %v5517 = vpop.xlane.xlu0 %5516
    %v5518 = vmax.f32 %v5499, %v5513
    %5519 = vmax.xlane.f32.xlu0 %v5518
    %v5520 = vpop.xlane.xlu0 %5519
    %v5521 = vsub.f32 %v5497, %v5517
    %v5522 = vsub.f32 %v5511, %v5517
    %v5523 = vsub.f32 %v5499, %v5520
    %v5524 = vsub.f32 %v5513, %v5520
    %v5525 = vmul.f32 %v5521, 1.442695
    %v5526 = vpow.pop %v5525
    %v5527 = vmul.f32 %v5522, 1.442695
    %v5528 = vpow.pop %v5527
    %v5529 = vmul.f32 %v5523, 1.442695
    %v5530 = vpow.pop %v5529
    %v5531 = vmul.f32 %v5524, 1.442695
    %v5532 = vpow.pop %v5531
    %v5533 = vadd.f32 %v5526, %v5528
    %5534 = vadd.xlane.f32.xlu0 %v5533
    %v5535 = vpop.xlane.xlu0 %5534
    %v5536 = vadd.f32 %v5530, %v5532
    %5537 = vadd.xlane.f32.xlu0 %v5536
    %v5538 = vpop.xlane.xlu0 %5537
    %v5539 = vlog2.pop %v5535
    %v5540 = vmul.f32 %v5539, 0.6931472
    %v5541 = vlog2.pop %v5538
    %v5542 = vmul.f32 %v5541, 0.6931472
    %v5543 = vadd.f32 %v5517, %v5540
    %v5544 = vadd.f32 %v5520, %v5542
    %v5545 = vsub.f32 %v5497, %v5543
    %v5546 = vsub.f32 %v5511, %v5543
    %v5547 = vsub.f32 %v5499, %v5544
    %v5548 = vsub.f32 %v5513, %v5544
    %5549 = vst [vmem:[#allocation17] sm:$0xff] %v5545
    %5550 = vst [vmem:[#allocation17 + $0x8] sm:$0xff] %v5546
    %5551 = vst [vmem:[#allocation17 + $0x10] sm:$0xff] %v5547
    %5552 = vst [vmem:[#allocation17 + $0x18] sm:$0xff] %v5548
    // Predicated region
    $region86: #{tpu_custom_call.1} parent=1 // pred_check
      _
    $region87: #{tpu_custom_call.1} parent=1 // pred_check_branch
      %5554 = sbr.rel (0) target = $region89
    $region88: #{tpu_custom_call.1} parent=1 // pred_region
      %5556 = vsyncadd [#allocation4], 0
      %s5557 = sshll.u32 [#allocation17], 4
      %s5558 = int_to_ptr.vmem [resolvable:$true] %s5557
      %s5559 = sshll.u32 %s12, 4
      %s5560 = int_to_ptr.hbm [resolvable:$true] %s5559
      %5565 = dma.vmem_to_hbm [thread:$0]  %s5558, 512, %s5560, [#allocation4], 256, 256, 16
    $region89: #{tpu_custom_call.1} parent=1 // pred_fallthru
      _
    // Predicated region
    $region90: #{tpu_custom_call.1} parent=1 // pred_check
      _
    $region91: #{tpu_custom_call.1} parent=1 // pred_check_branch
      %5567 = sbr.rel (0) target = $region93
    $region92: #{tpu_custom_call.1} parent=1 // pred_region
      %5569 = vsyncadd [#allocation19], 0
      %s5571 = sshll.u32 [#allocation18], 4
      %s5572 = int_to_ptr.vmem [resolvable:$true] %s5571
      %s5573 = sshll.u32 %s13, 4
      %s5574 = int_to_ptr.hbm [resolvable:$true] %s5573
      %5576 = dma.vmem_to_hbm [thread:$0]  %s5572, 32, %s5574, [#allocation19]
    $region93: #{tpu_custom_call.1} parent=1 // pred_fallthru
      _
    // Predicated region
    $region94: #{tpu_custom_call.1} parent=1 // pred_check
      _
    $region95: #{tpu_custom_call.1} parent=1 // pred_check_branch
      %5578 = sbr.rel (0) target = $region97
    $region96: #{tpu_custom_call.1} parent=1 // pred_region
      %5580 = dma.done [#allocation4], 512
    $region97: #{tpu_custom_call.1} parent=1 // pred_fallthru
      _
    // Predicated region
    $region98: #{tpu_custom_call.1} parent=1 // pred_check
      _
    $region99: #{tpu_custom_call.1} parent=1 // pred_check_branch
      %5582 = sbr.rel (0) target = $region101
    $region100: #{tpu_custom_call.1} parent=1 // pred_region
      %5584 = dma.done [#allocation19], 32
    $region101: #{tpu_custom_call.1} parent=1 // pred_fallthru
      _
    %5585 = vsyncpa [#allocation3], 1
    %5586 = vsyncpa [#allocation6], 1
    %5587 = vsyncpa [#allocation9], 1
    %5588 = vsyncpa [#allocation12], 1
    %5589 = vsyncpa [#allocation15], 1
    %5590 = vsyncpa [#allocation4], 1
    %5591 = vsyncpa [#allocation19], 1

</llo_original>
